<compile_context>
chip_gen: v5e
topology: v5e:2x2
jax: 0.10.0
libtpu: 0.0.40
codegen_flags: <defaults>
</compile_context>

<pallas_src>
import functools

import jax
import jax.numpy as jnp
from jax.experimental import pallas as pl
from jax.experimental.pallas import tpu as pltpu

WIDTHS = (8, 16, 32, 64)   # scaled-down ResNet widths (real ResNet: 64/128/256/512)
FC_DIM = 32                # scaled-down fc_dim (module default 64)
LANE = 128
VMEM_LIMIT = 48 * 1024 * 1024   # explicit scoped-VMEM budget; < v7x 64 MiB physical


def _round_up(x, m):
    return (x + m - 1) // m * m


def _choose_tm(M):
    """Row-tile size: multiple of 16 (bf16 sublane pack), capped at 512, and
    split into >=2 grid tiles when possible so both v7x TensorCores get work."""
    if M >= 1024:
        return 512
    if M >= 32:
        return max(16, _round_up((M + 1) // 2, 16))
    return 16


def _compiler_params():
    return pltpu.CompilerParams(dimension_semantics=("parallel",),
                                vmem_limit_bytes=VMEM_LIMIT)


# --------------------------- Pallas kernels ---------------------------------

def _make_matmul_kernel(relu: bool, has_res: bool):
    """out = maybe_relu(A @ W + shift [+ residual]); BN scale folded into W."""
    if has_res:
        def kernel(a_ref, w_ref, sh_ref, r_ref, o_ref):
            acc = jnp.dot(a_ref[...], w_ref[...],
                          preferred_element_type=jnp.float32)
            acc = acc + sh_ref[...] + r_ref[...]
            if relu:
                acc = jnp.maximum(acc, 0.0)
            o_ref[...] = acc
    else:
        def kernel(a_ref, w_ref, sh_ref, o_ref):
            acc = jnp.dot(a_ref[...], w_ref[...],
                          preferred_element_type=jnp.float32)
            acc = acc + sh_ref[...]
            if relu:
                acc = jnp.maximum(acc, 0.0)
            o_ref[...] = acc
    return kernel


def matmul_bias_act(a, wm, shift, residual=None, relu=False):
    """a: (M, K) f32; wm: (Kpad, Cpad) bf16 (K/Cout zero-padded, BN scale folded);
    shift: (1, Cpad) f32; residual: (M, Cout) f32 or None.
    Returns (M, Cpad) f32 — caller slices the live channels."""
    M, K = a.shape
    Kp, Cp = wm.shape
    TM = _choose_tm(M)
    Mp = _round_up(M, TM)
    if (Mp, Kp) != (M, K):
        a = jnp.pad(a, ((0, Mp - M), (0, Kp - K)))
    a = a.astype(jnp.bfloat16)           # MXU-native; accumulate in f32

    has_res = residual is not None
    operands = [a, wm, shift]
    in_specs = [
        pl.BlockSpec((TM, Kp), lambda i: (i, 0)),
        pl.BlockSpec((Kp, Cp), lambda i: (0, 0)),
        pl.BlockSpec((1, Cp), lambda i: (0, 0)),
    ]
    if has_res:
        rM, rC = residual.shape
        if (Mp, Cp) != (rM, rC):
            residual = jnp.pad(residual, ((0, Mp - rM), (0, Cp - rC)))
        operands.append(residual)
        in_specs.append(pl.BlockSpec((TM, Cp), lambda i: (i, 0)))

    out = pl.pallas_call(
        _make_matmul_kernel(relu, has_res),
        out_shape=jax.ShapeDtypeStruct((Mp, Cp), jnp.float32),
        grid=(Mp // TM,),
        in_specs=in_specs,
        out_specs=pl.BlockSpec((TM, Cp), lambda i: (i, 0)),
        compiler_params=_compiler_params(),
    )(*operands)
    return out[:M]


def _make_pool_max_kernel(taps: int):
    """Max over the tap axis with C on lanes — pure VPU maxes, lane-dense store."""
    def kernel(x_ref, o_ref):
        acc = x_ref[:, 0, :]
        for t in range(1, taps):
            acc = jnp.maximum(acc, x_ref[:, t, :])
        o_ref[...] = acc
    return kernel


def window_max_channels_last(p):
    """p: (M, taps, C) -> (M, C) max over taps. C padded to 128 lanes."""
    M, T, C = p.shape
    Cp = _round_up(C, LANE)
    TM = _choose_tm(M)
    Mp = _round_up(M, TM)
    if (Mp, Cp) != (M, C):
        p = jnp.pad(p, ((0, Mp - M), (0, 0), (0, Cp - C)))
    out = pl.pallas_call(
        _make_pool_max_kernel(T),
        out_shape=jax.ShapeDtypeStruct((Mp, Cp), p.dtype),
        grid=(Mp // TM,),
        in_specs=[pl.BlockSpec((TM, T, Cp), lambda i: (i, 0, 0))],
        out_specs=pl.BlockSpec((TM, Cp), lambda i: (i, 0)),
        compiler_params=_compiler_params(),
    )(p)
    return out[:M, :C]


# --------------------------- im2col glue (plain JAX, NHWC) -------------------
# TODO(synk): patch extraction is still materialized in XLA; fully fusing it
# into the Pallas matmul (k*k taps read via pl.ds from an NHWC input block)
# would remove the ~k*k activation blow-up for large inputs.

def extract_patches_nhwc(x, k, stride, padding, dilation, pad_value=0.0):
    """x: (N, H, W, C) -> patches (N, Ho, Wo, k*k, C); channels stay last."""
    N, H, W, C = x.shape
    xp = jnp.pad(x, ((0, 0), (padding, padding), (padding, padding), (0, 0)),
                 constant_values=pad_value)
    Hp, Wp = H + 2 * padding, W + 2 * padding
    span = dilation * (k - 1) + 1
    Ho = (Hp - span) // stride + 1
    Wo = (Wp - span) // stride + 1
    taps = []
    for i in range(k):
        for j in range(k):
            hs, ws = i * dilation, j * dilation
            taps.append(xp[:, hs:hs + stride * (Ho - 1) + 1:stride,
                           ws:ws + stride * (Wo - 1) + 1:stride, :])
    p = jnp.stack(taps, axis=3)                      # (N, Ho, Wo, k*k, C)
    return p, Ho, Wo


def conv2d_pallas(x, wm, shift, cout, k, *, stride=1, padding=0, dilation=1,
                  relu=False, residual=None):
    """PyTorch-semantics Conv2d (+ folded BN/bias, + residual, + ReLU). NHWC in/out."""
    N, H, W, Cin = x.shape
    p, Ho, Wo = extract_patches_nhwc(x, k, stride, padding, dilation)
    M = N * Ho * Wo
    A = p.reshape(M, k * k * Cin)
    res2d = None
    if residual is not None:
        res2d = residual.reshape(M, residual.shape[-1])     # NHWC -> (M, C), no transpose
    out = matmul_bias_act(A, wm, shift, res2d, relu)
    return out[:, :cout].reshape(N, Ho, Wo, cout)


def maxpool2d_pallas(x, k=3, stride=2, padding=1):
    N, H, W, C = x.shape
    p, Ho, Wo = extract_patches_nhwc(x, k, stride, padding, 1, pad_value=-jnp.inf)
    out = window_max_channels_last(p.reshape(N * Ho * Wo, k * k, C))
    return out.reshape(N, Ho, Wo, C)


def global_maxpool_pallas(x):
    """adaptive_max_pool2d(x, 1).view(N, C) — reduce over H*W with C on lanes."""
    N, H, W, C = x.shape
    return window_max_channels_last(x.reshape(N, H * W, C))


# --------------------------- parameters (deterministic) ----------------------

def _fold_bn(gamma, beta, mean, var, eps=1e-5):
    scale = gamma / jnp.sqrt(var + eps)
    shift = beta - mean * scale
    return scale, shift


def _pack_conv(w, scale, shift):
    """Fold BN scale into w, build matmul-ready (Kpad, Cpad) bf16 weight + shift."""
    cout, cin, k, _ = w.shape
    K = k * k * cin
    wm = jnp.transpose(w, (2, 3, 1, 0)).reshape(K, cout) * scale[None, :]
    Kp, Cp = _round_up(K, LANE), _round_up(cout, LANE)
    wm = jnp.pad(wm, ((0, Kp - K), (0, Cp - cout))).astype(jnp.bfloat16)
    sh = jnp.pad(shift.reshape(1, cout), ((0, 0), (0, Cp - cout))).astype(jnp.float32)
    return dict(wm=wm, shift=sh)


def init_conv_bn(key, cin, cout, k):
    ks = jax.random.split(key, 5)
    w = jax.random.normal(ks[0], (cout, cin, k, k), jnp.float32) / ((cin * k * k) ** 0.5)
    gamma = 1.0 + 0.1 * jax.random.normal(ks[1], (cout,), jnp.float32)
    beta = 0.1 * jax.random.normal(ks[2], (cout,), jnp.float32)
    mean = 0.1 * jax.random.normal(ks[3], (cout,), jnp.float32)
    var = 0.5 + 0.1 * jnp.abs(jax.random.normal(ks[4], (cout,), jnp.float32))
    scale, shift = _fold_bn(gamma, beta, mean, var)
    return _pack_conv(w, scale, shift)


def init_basic_block(key, cin, cout, downsample):
    k1, k2, k3 = jax.random.split(key, 3)
    p = dict(conv1=init_conv_bn(k1, cin, cout, 3),
             conv2=init_conv_bn(k2, cout, cout, 3))
    if downsample:
        p["down"] = init_conv_bn(k3, cin, cout, 1)
    return p


def init_params(key):
    keys = jax.random.split(key, 7)
    params = dict(
        stem=init_conv_bn(keys[0], 3, WIDTHS[0], 7),
        layer1=init_basic_block(keys[1], WIDTHS[0], WIDTHS[0], False),
        layer2=init_basic_block(keys[2], WIDTHS[0], WIDTHS[1], True),
        layer3=init_basic_block(keys[3], WIDTHS[1], WIDTHS[2], True),
        layer4=init_basic_block(keys[4], WIDTHS[2], WIDTHS[3], True),
    )
    kfw, kfb = jax.random.split(keys[5])
    fc_w = jax.random.normal(kfw, (FC_DIM, WIDTHS[3], 3, 3),
                             jnp.float32) / ((WIDTHS[3] * 9) ** 0.5)
    fc_b = 0.1 * jax.random.normal(kfb, (FC_DIM,), jnp.float32)
    params["fc"] = _pack_conv(fc_w, jnp.ones((FC_DIM,), jnp.float32), fc_b)
    return params


# --------------------------- model forward -----------------------------------

def basic_block_forward(x, p, cout, *, stride1, pad1, dil1, pad2, dil2, down_stride):
    if "down" in p:
        identity = conv2d_pallas(x, p["down"]["wm"], p["down"]["shift"], cout, 1,
                                 stride=down_stride, padding=0, dilation=1, relu=False)
    else:
        identity = x
    h = conv2d_pallas(x, p["conv1"]["wm"], p["conv1"]["shift"], cout, 3,
                      stride=stride1, padding=pad1, dilation=dil1, relu=True)
    # relu(bn2(conv2(h)) + identity) — residual add + relu fused in the kernel
    return conv2d_pallas(h, p["conv2"]["wm"], p["conv2"]["shift"], cout, 3,
                         stride=1, padding=pad2, dilation=dil2, relu=True,
                         residual=identity)


def resnet_dilated_forward(params, x, pool=True, pool_type="maxpool"):
    h = jnp.transpose(x, (0, 2, 3, 1))          # NCHW -> NHWC once at entry
    # ---- self.features ----
    h = conv2d_pallas(h, params["stem"]["wm"], params["stem"]["shift"], WIDTHS[0], 7,
                      stride=2, padding=3, dilation=1, relu=True)
    h = maxpool2d_pallas(h, 3, 2, 1)
    h = basic_block_forward(h, params["layer1"], WIDTHS[0], stride1=1, pad1=1, dil1=1,
                            pad2=1, dil2=1, down_stride=1)
    h = basic_block_forward(h, params["layer2"], WIDTHS[1], stride1=2, pad1=1, dil1=1,
                            pad2=1, dil2=1, down_stride=2)
    h = basic_block_forward(h, params["layer3"], WIDTHS[2], stride1=2, pad1=1, dil1=1,
                            pad2=1, dil2=1, down_stride=2)
    # layer4 after _nostride_dilate(dilate=2):
    #   conv1 (was stride 2, 3x3): stride 1, dilation 1, padding 1
    #   conv2 (stride 1, 3x3):     dilation 2, padding 2
    #   downsample 1x1 (was stride 2): stride 1
    h = basic_block_forward(h, params["layer4"], WIDTHS[3], stride1=1, pad1=1, dil1=1,
                            pad2=2, dil2=2, down_stride=1)
    # ---- self.fc (Conv2d with bias, k=3, pad=1) ----
    h = conv2d_pallas(h, params["fc"]["wm"], params["fc"]["shift"], FC_DIM, 3,
                      stride=1, padding=1, dilation=1, relu=False)
    if not pool:
        return jnp.transpose(h, (0, 3, 1, 2))   # back to NCHW for PyTorch parity
    if pool_type == "maxpool":
        return global_maxpool_pallas(h)         # adaptive_max_pool2d(., 1).view(N, C)
    # TODO(synk): avgpool branch kept in plain JAX (module default is maxpool).
    N, H, W, C = h.shape
    return jnp.mean(h.reshape(N, H * W, C), axis=1)


# --------------------------- main ---------------------------------------------

if __name__ == "__main__":
    key = jax.random.PRNGKey(0)
    kp, kx = jax.random.split(key)
    params = init_params(kp)
    x = jax.random.normal(kx, (2, 3, 32, 32), jnp.float32)

    fwd = jax.jit(functools.partial(resnet_dilated_forward, pool=True,
                                    pool_type="maxpool"))
    out = fwd(params, x)
    jax.block_until_ready(out)
    assert out.shape == (2, FC_DIM), out.shape
    assert jnp.all(jnp.isfinite(out))
    print("KERNEL_OK")
</pallas_src>

<mosaic_0001>
module attributes {stable_mosaic.version = 11 : i64} {
  func.func @kernel(%arg0: i32, %arg1: memref<256x256xbf16, #tpu.memory_space<vmem>>, %arg2: memref<256x128xbf16, #tpu.memory_space<vmem>>, %arg3: memref<1x128xf32, #tpu.memory_space<vmem>>, %arg4: memref<256x128xf32, #tpu.memory_space<vmem>>) attributes {dimension_semantics = [#tpu.dimension_semantics<parallel>], iteration_bounds = array<i64: 2>, scalar_prefetch = 0 : i64, scratch_operands = 0 : i64, tpu.core_type = #tpu.core_type<tc>, window_params = [{transform_indices = @transform_0, window_bounds = array<i64: 256, 256>}, {pipeline_mode = #tpu.pipeline_mode<synchronous>, transform_indices = @transform_1, window_bounds = array<i64: 256, 128>}, {pipeline_mode = #tpu.pipeline_mode<synchronous>, transform_indices = @transform_2, window_bounds = array<i64: 1, 128>}, {transform_indices = @transform_3, window_bounds = array<i64: 256, 128>}]} {
    %c0 = arith.constant 0 : index
    %c0_0 = arith.constant 0 : index
    %0 = vector.load %arg1[%c0, %c0_0] : memref<256x256xbf16, #tpu.memory_space<vmem>>, vector<256x256xbf16>
    %c0_1 = arith.constant 0 : index
    %c0_2 = arith.constant 0 : index
    %1 = vector.load %arg2[%c0_1, %c0_2] : memref<256x128xbf16, #tpu.memory_space<vmem>>, vector<256x128xbf16>
    %cst = arith.constant dense<0.000000e+00> : vector<256x128xf32>
    %2 = tpu.matmul %0, %1, %cst {dimension_numbers = #tpu.dot_dimension_numbers<[1], [0], [0], [1], [0, 0, 1, 1], [], []>} : vector<256x256xbf16>, vector<256x128xbf16>, vector<256x128xf32> -> vector<256x128xf32>
    %c0_3 = arith.constant 0 : index
    %c0_4 = arith.constant 0 : index
    %3 = vector.load %arg3[%c0_3, %c0_4] : memref<1x128xf32, #tpu.memory_space<vmem>>, vector<1x128xf32>
    %4 = vector.broadcast %3 : vector<1x128xf32> to vector<256x128xf32>
    %5 = arith.addf %2, %4 : vector<256x128xf32>
    %cst_5 = arith.constant 0.000000e+00 : f32
    %6 = vector.broadcast %cst_5 : f32 to vector<256x128xf32>
    %7 = arith.maximumf %5, %6 : vector<256x128xf32>
    %c0_6 = arith.constant 0 : index
    %c0_7 = arith.constant 0 : index
    %8 = vector.load %arg4[%c0_6, %c0_7] : memref<256x128xf32, #tpu.memory_space<vmem>>, vector<256x128xf32>
    tpu.vector_store %arg4[%c0_6, %c0_7], %7 {strides = array<i32>} : memref<256x128xf32, #tpu.memory_space<vmem>>, vector<256x128xf32>,
    return
  }
  func.func @transform_0(%arg0: i32) -> (i32, i32) {
    %c0_i32 = arith.constant 0 : i32
    %c0_i32_0 = arith.constant 0 : i32
    return %arg0, %c0_i32 : i32, i32
  }
  func.func @transform_1(%arg0: i32) -> (i32, i32) {
    %c0_i32 = arith.constant 0 : i32
    %c0_i32_0 = arith.constant 0 : i32
    %c0_i32_1 = arith.constant 0 : i32
    return %c0_i32, %c0_i32_0 : i32, i32
  }
  func.func @transform_2(%arg0: i32) -> (i32, i32) {
    %c0_i32 = arith.constant 0 : i32
    %c0_i32_0 = arith.constant 0 : i32
    %c0_i32_1 = arith.constant 0 : i32
    return %c0_i32, %c0_i32_0 : i32, i32
  }
  func.func @transform_3(%arg0: i32) -> (i32, i32) {
    %c0_i32 = arith.constant 0 : i32
    %c0_i32_0 = arith.constant 0 : i32
    return %arg0, %c0_i32 : i32, i32
  }
}

module attributes {stable_mosaic.version = 11 : i64} {
  func.func @kernel(%arg0: i32, %arg1: memref<64x9x128xf32, #tpu.memory_space<vmem>>, %arg2: memref<64x128xf32, #tpu.memory_space<vmem>>) attributes {dimension_semantics = [#tpu.dimension_semantics<parallel>], iteration_bounds = array<i64: 2>, scalar_prefetch = 0 : i64, scratch_operands = 0 : i64, tpu.core_type = #tpu.core_type<tc>, window_params = [{transform_indices = @transform_0, window_bounds = array<i64: 64, 9, 128>}, {transform_indices = @transform_1, window_bounds = array<i64: 64, 128>}]} {
    %c0 = arith.constant 0 : index
    %c0_0 = arith.constant 0 : index
    %c0_1 = arith.constant 0 : index
    %0 = vector.load %arg1[%c0, %c0_0, %c0_1] : memref<64x9x128xf32, #tpu.memory_space<vmem>>, vector<64x1x128xf32>
    %1 = vector.shape_cast %0 : vector<64x1x128xf32> to vector<64x128xf32>
    %c0_2 = arith.constant 0 : index
    %c1 = arith.constant 1 : index
    %c0_3 = arith.constant 0 : index
    %2 = vector.load %arg1[%c0_2, %c1, %c0_3] : memref<64x9x128xf32, #tpu.memory_space<vmem>>, vector<64x1x128xf32>
    %3 = vector.shape_cast %2 : vector<64x1x128xf32> to vector<64x128xf32>
    %4 = arith.maximumf %1, %3 : vector<64x128xf32>
    %c0_4 = arith.constant 0 : index
    %c2 = arith.constant 2 : index
    %c0_5 = arith.constant 0 : index
    %5 = vector.load %arg1[%c0_4, %c2, %c0_5] : memref<64x9x128xf32, #tpu.memory_space<vmem>>, vector<64x1x128xf32>
    %6 = vector.shape_cast %5 : vector<64x1x128xf32> to vector<64x128xf32>
    %7 = arith.maximumf %4, %6 : vector<64x128xf32>
    %c0_6 = arith.constant 0 : index
    %c3 = arith.constant 3 : index
    %c0_7 = arith.constant 0 : index
    %8 = vector.load %arg1[%c0_6, %c3, %c0_7] : memref<64x9x128xf32, #tpu.memory_space<vmem>>, vector<64x1x128xf32>
    %9 = vector.shape_cast %8 : vector<64x1x128xf32> to vector<64x128xf32>
    %10 = arith.maximumf %7, %9 : vector<64x128xf32>
    %c0_8 = arith.constant 0 : index
    %c4 = arith.constant 4 : index
    %c0_9 = arith.constant 0 : index
    %11 = vector.load %arg1[%c0_8, %c4, %c0_9] : memref<64x9x128xf32, #tpu.memory_space<vmem>>, vector<64x1x128xf32>
    %12 = vector.shape_cast %11 : vector<64x1x128xf32> to vector<64x128xf32>
    %13 = arith.maximumf %10, %12 : vector<64x128xf32>
    %c0_10 = arith.constant 0 : index
    %c5 = arith.constant 5 : index
    %c0_11 = arith.constant 0 : index
    %14 = vector.load %arg1[%c0_10, %c5, %c0_11] : memref<64x9x128xf32, #tpu.memory_space<vmem>>, vector<64x1x128xf32>
    %15 = vector.shape_cast %14 : vector<64x1x128xf32> to vector<64x128xf32>
    %16 = arith.maximumf %13, %15 : vector<64x128xf32>
    %c0_12 = arith.constant 0 : index
    %c6 = arith.constant 6 : index
    %c0_13 = arith.constant 0 : index
    %17 = vector.load %arg1[%c0_12, %c6, %c0_13] : memref<64x9x128xf32, #tpu.memory_space<vmem>>, vector<64x1x128xf32>
    %18 = vector.shape_cast %17 : vector<64x1x128xf32> to vector<64x128xf32>
    %19 = arith.maximumf %16, %18 : vector<64x128xf32>
    %c0_14 = arith.constant 0 : index
    %c7 = arith.constant 7 : index
    %c0_15 = arith.constant 0 : index
    %20 = vector.load %arg1[%c0_14, %c7, %c0_15] : memref<64x9x128xf32, #tpu.memory_space<vmem>>, vector<64x1x128xf32>
    %21 = vector.shape_cast %20 : vector<64x1x128xf32> to vector<64x128xf32>
    %22 = arith.maximumf %19, %21 : vector<64x128xf32>
    %c0_16 = arith.constant 0 : index
    %c8 = arith.constant 8 : index
    %c0_17 = arith.constant 0 : index
    %23 = vector.load %arg1[%c0_16, %c8, %c0_17] : memref<64x9x128xf32, #tpu.memory_space<vmem>>, vector<64x1x128xf32>
    %24 = vector.shape_cast %23 : vector<64x1x128xf32> to vector<64x128xf32>
    %25 = arith.maximumf %22, %24 : vector<64x128xf32>
    %c0_18 = arith.constant 0 : index
    %c0_19 = arith.constant 0 : index
    %26 = vector.load %arg2[%c0_18, %c0_19] : memref<64x128xf32, #tpu.memory_space<vmem>>, vector<64x128xf32>
    tpu.vector_store %arg2[%c0_18, %c0_19], %25 {strides = array<i32>} : memref<64x128xf32, #tpu.memory_space<vmem>>, vector<64x128xf32>,
    return
  }
  func.func @transform_0(%arg0: i32) -> (i32, i32, i32) {
    %c0_i32 = arith.constant 0 : i32
    %c0_i32_0 = arith.constant 0 : i32
    %c0_i32_1 = arith.constant 0 : i32
    return %arg0, %c0_i32, %c0_i32_0 : i32, i32, i32
  }
  func.func @transform_1(%arg0: i32) -> (i32, i32) {
    %c0_i32 = arith.constant 0 : i32
    %c0_i32_0 = arith.constant 0 : i32
    return %arg0, %c0_i32 : i32, i32
  }
}

module attributes {stable_mosaic.version = 11 : i64} {
  func.func @kernel(%arg0: i32, %arg1: memref<64x128xbf16, #tpu.memory_space<vmem>>, %arg2: memref<128x128xbf16, #tpu.memory_space<vmem>>, %arg3: memref<1x128xf32, #tpu.memory_space<vmem>>, %arg4: memref<64x128xf32, #tpu.memory_space<vmem>>) attributes {dimension_semantics = [#tpu.dimension_semantics<parallel>], iteration_bounds = array<i64: 2>, scalar_prefetch = 0 : i64, scratch_operands = 0 : i64, tpu.core_type = #tpu.core_type<tc>, window_params = [{transform_indices = @transform_0, window_bounds = array<i64: 64, 128>}, {pipeline_mode = #tpu.pipeline_mode<synchronous>, transform_indices = @transform_1, window_bounds = array<i64: 128, 128>}, {pipeline_mode = #tpu.pipeline_mode<synchronous>, transform_indices = @transform_2, window_bounds = array<i64: 1, 128>}, {transform_indices = @transform_3, window_bounds = array<i64: 64, 128>}]} {
    %c0 = arith.constant 0 : index
    %c0_0 = arith.constant 0 : index
    %0 = vector.load %arg1[%c0, %c0_0] : memref<64x128xbf16, #tpu.memory_space<vmem>>, vector<64x128xbf16>
    %c0_1 = arith.constant 0 : index
    %c0_2 = arith.constant 0 : index
    %1 = vector.load %arg2[%c0_1, %c0_2] : memref<128x128xbf16, #tpu.memory_space<vmem>>, vector<128x128xbf16>
    %cst = arith.constant dense<0.000000e+00> : vector<64x128xf32>
    %2 = tpu.matmul %0, %1, %cst {dimension_numbers = #tpu.dot_dimension_numbers<[1], [0], [0], [1], [0, 0, 1, 1], [], []>} : vector<64x128xbf16>, vector<128x128xbf16>, vector<64x128xf32> -> vector<64x128xf32>
    %c0_3 = arith.constant 0 : index
    %c0_4 = arith.constant 0 : index
    %3 = vector.load %arg3[%c0_3, %c0_4] : memref<1x128xf32, #tpu.memory_space<vmem>>, vector<1x128xf32>
    %4 = vector.broadcast %3 : vector<1x128xf32> to vector<64x128xf32>
    %5 = arith.addf %2, %4 : vector<64x128xf32>
    %cst_5 = arith.constant 0.000000e+00 : f32
    %6 = vector.broadcast %cst_5 : f32 to vector<64x128xf32>
    %7 = arith.maximumf %5, %6 : vector<64x128xf32>
    %c0_6 = arith.constant 0 : index
    %c0_7 = arith.constant 0 : index
    %8 = vector.load %arg4[%c0_6, %c0_7] : memref<64x128xf32, #tpu.memory_space<vmem>>, vector<64x128xf32>
    tpu.vector_store %arg4[%c0_6, %c0_7], %7 {strides = array<i32>} : memref<64x128xf32, #tpu.memory_space<vmem>>, vector<64x128xf32>,
    return
  }
  func.func @transform_0(%arg0: i32) -> (i32, i32) {
    %c0_i32 = arith.constant 0 : i32
    %c0_i32_0 = arith.constant 0 : i32
    return %arg0, %c0_i32 : i32, i32
  }
  func.func @transform_1(%arg0: i32) -> (i32, i32) {
    %c0_i32 = arith.constant 0 : i32
    %c0_i32_0 = arith.constant 0 : i32
    %c0_i32_1 = arith.constant 0 : i32
    return %c0_i32, %c0_i32_0 : i32, i32
  }
  func.func @transform_2(%arg0: i32) -> (i32, i32) {
    %c0_i32 = arith.constant 0 : i32
    %c0_i32_0 = arith.constant 0 : i32
    %c0_i32_1 = arith.constant 0 : i32
    return %c0_i32, %c0_i32_0 : i32, i32
  }
  func.func @transform_3(%arg0: i32) -> (i32, i32) {
    %c0_i32 = arith.constant 0 : i32
    %c0_i32_0 = arith.constant 0 : i32
    return %arg0, %c0_i32 : i32, i32
  }
}

module attributes {stable_mosaic.version = 11 : i64} {
  func.func @kernel(%arg0: i32, %arg1: memref<64x128xbf16, #tpu.memory_space<vmem>>, %arg2: memref<128x128xbf16, #tpu.memory_space<vmem>>, %arg3: memref<1x128xf32, #tpu.memory_space<vmem>>, %arg4: memref<64x128xf32, #tpu.memory_space<vmem>>, %arg5: memref<64x128xf32, #tpu.memory_space<vmem>>) attributes {dimension_semantics = [#tpu.dimension_semantics<parallel>], iteration_bounds = array<i64: 2>, scalar_prefetch = 0 : i64, scratch_operands = 0 : i64, tpu.core_type = #tpu.core_type<tc>, window_params = [{transform_indices = @transform_0, window_bounds = array<i64: 64, 128>}, {pipeline_mode = #tpu.pipeline_mode<synchronous>, transform_indices = @transform_1, window_bounds = array<i64: 128, 128>}, {pipeline_mode = #tpu.pipeline_mode<synchronous>, transform_indices = @transform_2, window_bounds = array<i64: 1, 128>}, {transform_indices = @transform_3, window_bounds = array<i64: 64, 128>}, {transform_indices = @transform_4, window_bounds = array<i64: 64, 128>}]} {
    %c0 = arith.constant 0 : index
    %c0_0 = arith.constant 0 : index
    %0 = vector.load %arg1[%c0, %c0_0] : memref<64x128xbf16, #tpu.memory_space<vmem>>, vector<64x128xbf16>
    %c0_1 = arith.constant 0 : index
    %c0_2 = arith.constant 0 : index
    %1 = vector.load %arg2[%c0_1, %c0_2] : memref<128x128xbf16, #tpu.memory_space<vmem>>, vector<128x128xbf16>
    %cst = arith.constant dense<0.000000e+00> : vector<64x128xf32>
    %2 = tpu.matmul %0, %1, %cst {dimension_numbers = #tpu.dot_dimension_numbers<[1], [0], [0], [1], [0, 0, 1, 1], [], []>} : vector<64x128xbf16>, vector<128x128xbf16>, vector<64x128xf32> -> vector<64x128xf32>
    %c0_3 = arith.constant 0 : index
    %c0_4 = arith.constant 0 : index
    %3 = vector.load %arg3[%c0_3, %c0_4] : memref<1x128xf32, #tpu.memory_space<vmem>>, vector<1x128xf32>
    %4 = vector.broadcast %3 : vector<1x128xf32> to vector<64x128xf32>
    %5 = arith.addf %2, %4 : vector<64x128xf32>
    %c0_5 = arith.constant 0 : index
    %c0_6 = arith.constant 0 : index
    %6 = vector.load %arg4[%c0_5, %c0_6] : memref<64x128xf32, #tpu.memory_space<vmem>>, vector<64x128xf32>
    %7 = arith.addf %5, %6 : vector<64x128xf32>
    %cst_7 = arith.constant 0.000000e+00 : f32
    %8 = vector.broadcast %cst_7 : f32 to vector<64x128xf32>
    %9 = arith.maximumf %7, %8 : vector<64x128xf32>
    %c0_8 = arith.constant 0 : index
    %c0_9 = arith.constant 0 : index
    %10 = vector.load %arg5[%c0_8, %c0_9] : memref<64x128xf32, #tpu.memory_space<vmem>>, vector<64x128xf32>
    tpu.vector_store %arg5[%c0_8, %c0_9], %9 {strides = array<i32>} : memref<64x128xf32, #tpu.memory_space<vmem>>, vector<64x128xf32>,
    return
  }
  func.func @transform_0(%arg0: i32) -> (i32, i32) {
    %c0_i32 = arith.constant 0 : i32
    %c0_i32_0 = arith.constant 0 : i32
    return %arg0, %c0_i32 : i32, i32
  }
  func.func @transform_1(%arg0: i32) -> (i32, i32) {
    %c0_i32 = arith.constant 0 : i32
    %c0_i32_0 = arith.constant 0 : i32
    %c0_i32_1 = arith.constant 0 : i32
    return %c0_i32, %c0_i32_0 : i32, i32
  }
  func.func @transform_2(%arg0: i32) -> (i32, i32) {
    %c0_i32 = arith.constant 0 : i32
    %c0_i32_0 = arith.constant 0 : i32
    %c0_i32_1 = arith.constant 0 : i32
    return %c0_i32, %c0_i32_0 : i32, i32
  }
  func.func @transform_3(%arg0: i32) -> (i32, i32) {
    %c0_i32 = arith.constant 0 : i32
    %c0_i32_0 = arith.constant 0 : i32
    return %arg0, %c0_i32 : i32, i32
  }
  func.func @transform_4(%arg0: i32) -> (i32, i32) {
    %c0_i32 = arith.constant 0 : i32
    %c0_i32_0 = arith.constant 0 : i32
    return %arg0, %c0_i32 : i32, i32
  }
}

module attributes {stable_mosaic.version = 11 : i64} {
  func.func @kernel(%arg0: i32, %arg1: memref<16x128xbf16, #tpu.memory_space<vmem>>, %arg2: memref<128x128xbf16, #tpu.memory_space<vmem>>, %arg3: memref<1x128xf32, #tpu.memory_space<vmem>>, %arg4: memref<16x128xf32, #tpu.memory_space<vmem>>) attributes {dimension_semantics = [#tpu.dimension_semantics<parallel>], iteration_bounds = array<i64: 2>, scalar_prefetch = 0 : i64, scratch_operands = 0 : i64, tpu.core_type = #tpu.core_type<tc>, window_params = [{transform_indices = @transform_0, window_bounds = array<i64: 16, 128>}, {pipeline_mode = #tpu.pipeline_mode<synchronous>, transform_indices = @transform_1, window_bounds = array<i64: 128, 128>}, {pipeline_mode = #tpu.pipeline_mode<synchronous>, transform_indices = @transform_2, window_bounds = array<i64: 1, 128>}, {transform_indices = @transform_3, window_bounds = array<i64: 16, 128>}]} {
    %c0 = arith.constant 0 : index
    %c0_0 = arith.constant 0 : index
    %0 = vector.load %arg1[%c0, %c0_0] : memref<16x128xbf16, #tpu.memory_space<vmem>>, vector<16x128xbf16>
    %c0_1 = arith.constant 0 : index
    %c0_2 = arith.constant 0 : index
    %1 = vector.load %arg2[%c0_1, %c0_2] : memref<128x128xbf16, #tpu.memory_space<vmem>>, vector<128x128xbf16>
    %cst = arith.constant dense<0.000000e+00> : vector<16x128xf32>
    %2 = tpu.matmul %0, %1, %cst {dimension_numbers = #tpu.dot_dimension_numbers<[1], [0], [0], [1], [0, 0, 1, 1], [], []>} : vector<16x128xbf16>, vector<128x128xbf16>, vector<16x128xf32> -> vector<16x128xf32>
    %c0_3 = arith.constant 0 : index
    %c0_4 = arith.constant 0 : index
    %3 = vector.load %arg3[%c0_3, %c0_4] : memref<1x128xf32, #tpu.memory_space<vmem>>, vector<1x128xf32>
    %4 = vector.broadcast %3 : vector<1x128xf32> to vector<16x128xf32>
    %5 = arith.addf %2, %4 : vector<16x128xf32>
    %cst_5 = arith.constant 0.000000e+00 : f32
    %6 = vector.broadcast %cst_5 : f32 to vector<16x128xf32>
    %7 = arith.maximumf %5, %6 : vector<16x128xf32>
    %c0_6 = arith.constant 0 : index
    %c0_7 = arith.constant 0 : index
    %8 = vector.load %arg4[%c0_6, %c0_7] : memref<16x128xf32, #tpu.memory_space<vmem>>, vector<16x128xf32>
    tpu.vector_store %arg4[%c0_6, %c0_7], %7 {strides = array<i32>} : memref<16x128xf32, #tpu.memory_space<vmem>>, vector<16x128xf32>,
    return
  }
  func.func @transform_0(%arg0: i32) -> (i32, i32) {
    %c0_i32 = arith.constant 0 : i32
    %c0_i32_0 = arith.constant 0 : i32
    return %arg0, %c0_i32 : i32, i32
  }
  func.func @transform_1(%arg0: i32) -> (i32, i32) {
    %c0_i32 = arith.constant 0 : i32
    %c0_i32_0 = arith.constant 0 : i32
    %c0_i32_1 = arith.constant 0 : i32
    return %c0_i32, %c0_i32_0 : i32, i32
  }
  func.func @transform_2(%arg0: i32) -> (i32, i32) {
    %c0_i32 = arith.constant 0 : i32
    %c0_i32_0 = arith.constant 0 : i32
    %c0_i32_1 = arith.constant 0 : i32
    return %c0_i32, %c0_i32_0 : i32, i32
  }
  func.func @transform_3(%arg0: i32) -> (i32, i32) {
    %c0_i32 = arith.constant 0 : i32
    %c0_i32_0 = arith.constant 0 : i32
    return %arg0, %c0_i32 : i32, i32
  }
}

module attributes {stable_mosaic.version = 11 : i64} {
  func.func @kernel(%arg0: i32, %arg1: memref<16x128xbf16, #tpu.memory_space<vmem>>, %arg2: memref<128x128xbf16, #tpu.memory_space<vmem>>, %arg3: memref<1x128xf32, #tpu.memory_space<vmem>>, %arg4: memref<16x128xf32, #tpu.memory_space<vmem>>) attributes {dimension_semantics = [#tpu.dimension_semantics<parallel>], iteration_bounds = array<i64: 2>, scalar_prefetch = 0 : i64, scratch_operands = 0 : i64, tpu.core_type = #tpu.core_type<tc>, window_params = [{transform_indices = @transform_0, window_bounds = array<i64: 16, 128>}, {pipeline_mode = #tpu.pipeline_mode<synchronous>, transform_indices = @transform_1, window_bounds = array<i64: 128, 128>}, {pipeline_mode = #tpu.pipeline_mode<synchronous>, transform_indices = @transform_2, window_bounds = array<i64: 1, 128>}, {transform_indices = @transform_3, window_bounds = array<i64: 16, 128>}]} {
    %c0 = arith.constant 0 : index
    %c0_0 = arith.constant 0 : index
    %0 = vector.load %arg1[%c0, %c0_0] : memref<16x128xbf16, #tpu.memory_space<vmem>>, vector<16x128xbf16>
    %c0_1 = arith.constant 0 : index
    %c0_2 = arith.constant 0 : index
    %1 = vector.load %arg2[%c0_1, %c0_2] : memref<128x128xbf16, #tpu.memory_space<vmem>>, vector<128x128xbf16>
    %cst = arith.constant dense<0.000000e+00> : vector<16x128xf32>
    %2 = tpu.matmul %0, %1, %cst {dimension_numbers = #tpu.dot_dimension_numbers<[1], [0], [0], [1], [0, 0, 1, 1], [], []>} : vector<16x128xbf16>, vector<128x128xbf16>, vector<16x128xf32> -> vector<16x128xf32>
    %c0_3 = arith.constant 0 : index
    %c0_4 = arith.constant 0 : index
    %3 = vector.load %arg3[%c0_3, %c0_4] : memref<1x128xf32, #tpu.memory_space<vmem>>, vector<1x128xf32>
    %4 = vector.broadcast %3 : vector<1x128xf32> to vector<16x128xf32>
    %5 = arith.addf %2, %4 : vector<16x128xf32>
    %c0_5 = arith.constant 0 : index
    %c0_6 = arith.constant 0 : index
    %6 = vector.load %arg4[%c0_5, %c0_6] : memref<16x128xf32, #tpu.memory_space<vmem>>, vector<16x128xf32>
    tpu.vector_store %arg4[%c0_5, %c0_6], %5 {strides = array<i32>} : memref<16x128xf32, #tpu.memory_space<vmem>>, vector<16x128xf32>,
    return
  }
  func.func @transform_0(%arg0: i32) -> (i32, i32) {
    %c0_i32 = arith.constant 0 : i32
    %c0_i32_0 = arith.constant 0 : i32
    return %arg0, %c0_i32 : i32, i32
  }
  func.func @transform_1(%arg0: i32) -> (i32, i32) {
    %c0_i32 = arith.constant 0 : i32
    %c0_i32_0 = arith.constant 0 : i32
    %c0_i32_1 = arith.constant 0 : i32
    return %c0_i32, %c0_i32_0 : i32, i32
  }
  func.func @transform_2(%arg0: i32) -> (i32, i32) {
    %c0_i32 = arith.constant 0 : i32
    %c0_i32_0 = arith.constant 0 : i32
    %c0_i32_1 = arith.constant 0 : i32
    return %c0_i32, %c0_i32_0 : i32, i32
  }
  func.func @transform_3(%arg0: i32) -> (i32, i32) {
    %c0_i32 = arith.constant 0 : i32
    %c0_i32_0 = arith.constant 0 : i32
    return %arg0, %c0_i32 : i32, i32
  }
}

module attributes {stable_mosaic.version = 11 : i64} {
  func.func @kernel(%arg0: i32, %arg1: memref<16x256xbf16, #tpu.memory_space<vmem>>, %arg2: memref<256x128xbf16, #tpu.memory_space<vmem>>, %arg3: memref<1x128xf32, #tpu.memory_space<vmem>>, %arg4: memref<16x128xf32, #tpu.memory_space<vmem>>, %arg5: memref<16x128xf32, #tpu.memory_space<vmem>>) attributes {dimension_semantics = [#tpu.dimension_semantics<parallel>], iteration_bounds = array<i64: 2>, scalar_prefetch = 0 : i64, scratch_operands = 0 : i64, tpu.core_type = #tpu.core_type<tc>, window_params = [{transform_indices = @transform_0, window_bounds = array<i64: 16, 256>}, {pipeline_mode = #tpu.pipeline_mode<synchronous>, transform_indices = @transform_1, window_bounds = array<i64: 256, 128>}, {pipeline_mode = #tpu.pipeline_mode<synchronous>, transform_indices = @transform_2, window_bounds = array<i64: 1, 128>}, {transform_indices = @transform_3, window_bounds = array<i64: 16, 128>}, {transform_indices = @transform_4, window_bounds = array<i64: 16, 128>}]} {
    %c0 = arith.constant 0 : index
    %c0_0 = arith.constant 0 : index
    %0 = vector.load %arg1[%c0, %c0_0] : memref<16x256xbf16, #tpu.memory_space<vmem>>, vector<16x256xbf16>
    %c0_1 = arith.constant 0 : index
    %c0_2 = arith.constant 0 : index
    %1 = vector.load %arg2[%c0_1, %c0_2] : memref<256x128xbf16, #tpu.memory_space<vmem>>, vector<256x128xbf16>
    %cst = arith.constant dense<0.000000e+00> : vector<16x128xf32>
    %2 = tpu.matmul %0, %1, %cst {dimension_numbers = #tpu.dot_dimension_numbers<[1], [0], [0], [1], [0, 0, 1, 1], [], []>} : vector<16x256xbf16>, vector<256x128xbf16>, vector<16x128xf32> -> vector<16x128xf32>
    %c0_3 = arith.constant 0 : index
    %c0_4 = arith.constant 0 : index
    %3 = vector.load %arg3[%c0_3, %c0_4] : memref<1x128xf32, #tpu.memory_space<vmem>>, vector<1x128xf32>
    %4 = vector.broadcast %3 : vector<1x128xf32> to vector<16x128xf32>
    %5 = arith.addf %2, %4 : vector<16x128xf32>
    %c0_5 = arith.constant 0 : index
    %c0_6 = arith.constant 0 : index
    %6 = vector.load %arg4[%c0_5, %c0_6] : memref<16x128xf32, #tpu.memory_space<vmem>>, vector<16x128xf32>
    %7 = arith.addf %5, %6 : vector<16x128xf32>
    %cst_7 = arith.constant 0.000000e+00 : f32
    %8 = vector.broadcast %cst_7 : f32 to vector<16x128xf32>
    %9 = arith.maximumf %7, %8 : vector<16x128xf32>
    %c0_8 = arith.constant 0 : index
    %c0_9 = arith.constant 0 : index
    %10 = vector.load %arg5[%c0_8, %c0_9] : memref<16x128xf32, #tpu.memory_space<vmem>>, vector<16x128xf32>
    tpu.vector_store %arg5[%c0_8, %c0_9], %9 {strides = array<i32>} : memref<16x128xf32, #tpu.memory_space<vmem>>, vector<16x128xf32>,
    return
  }
  func.func @transform_0(%arg0: i32) -> (i32, i32) {
    %c0_i32 = arith.constant 0 : i32
    %c0_i32_0 = arith.constant 0 : i32
    return %arg0, %c0_i32 : i32, i32
  }
  func.func @transform_1(%arg0: i32) -> (i32, i32) {
    %c0_i32 = arith.constant 0 : i32
    %c0_i32_0 = arith.constant 0 : i32
    %c0_i32_1 = arith.constant 0 : i32
    return %c0_i32, %c0_i32_0 : i32, i32
  }
  func.func @transform_2(%arg0: i32) -> (i32, i32) {
    %c0_i32 = arith.constant 0 : i32
    %c0_i32_0 = arith.constant 0 : i32
    %c0_i32_1 = arith.constant 0 : i32
    return %c0_i32, %c0_i32_0 : i32, i32
  }
  func.func @transform_3(%arg0: i32) -> (i32, i32) {
    %c0_i32 = arith.constant 0 : i32
    %c0_i32_0 = arith.constant 0 : i32
    return %arg0, %c0_i32 : i32, i32
  }
  func.func @transform_4(%arg0: i32) -> (i32, i32) {
    %c0_i32 = arith.constant 0 : i32
    %c0_i32_0 = arith.constant 0 : i32
    return %arg0, %c0_i32 : i32, i32
  }
}

module attributes {stable_mosaic.version = 11 : i64} {
  func.func @kernel(%arg0: i32, %arg1: memref<16x256xbf16, #tpu.memory_space<vmem>>, %arg2: memref<256x128xbf16, #tpu.memory_space<vmem>>, %arg3: memref<1x128xf32, #tpu.memory_space<vmem>>, %arg4: memref<16x128xf32, #tpu.memory_space<vmem>>) attributes {dimension_semantics = [#tpu.dimension_semantics<parallel>], iteration_bounds = array<i64: 1>, scalar_prefetch = 0 : i64, scratch_operands = 0 : i64, tpu.core_type = #tpu.core_type<tc>, window_params = [{transform_indices = @transform_0, window_bounds = array<i64: 16, 256>}, {pipeline_mode = #tpu.pipeline_mode<synchronous>, transform_indices = @transform_1, window_bounds = array<i64: 256, 128>}, {pipeline_mode = #tpu.pipeline_mode<synchronous>, transform_indices = @transform_2, window_bounds = array<i64: 1, 128>}, {transform_indices = @transform_3, window_bounds = array<i64: 16, 128>}]} {
    %c0 = arith.constant 0 : index
    %c0_0 = arith.constant 0 : index
    %0 = vector.load %arg1[%c0, %c0_0] : memref<16x256xbf16, #tpu.memory_space<vmem>>, vector<16x256xbf16>
    %c0_1 = arith.constant 0 : index
    %c0_2 = arith.constant 0 : index
    %1 = vector.load %arg2[%c0_1, %c0_2] : memref<256x128xbf16, #tpu.memory_space<vmem>>, vector<256x128xbf16>
    %cst = arith.constant dense<0.000000e+00> : vector<16x128xf32>
    %2 = tpu.matmul %0, %1, %cst {dimension_numbers = #tpu.dot_dimension_numbers<[1], [0], [0], [1], [0, 0, 1, 1], [], []>} : vector<16x256xbf16>, vector<256x128xbf16>, vector<16x128xf32> -> vector<16x128xf32>
    %c0_3 = arith.constant 0 : index
    %c0_4 = arith.constant 0 : index
    %3 = vector.load %arg3[%c0_3, %c0_4] : memref<1x128xf32, #tpu.memory_space<vmem>>, vector<1x128xf32>
    %4 = vector.broadcast %3 : vector<1x128xf32> to vector<16x128xf32>
    %5 = arith.addf %2, %4 : vector<16x128xf32>
    %cst_5 = arith.constant 0.000000e+00 : f32
    %6 = vector.broadcast %cst_5 : f32 to vector<16x128xf32>
    %7 = arith.maximumf %5, %6 : vector<16x128xf32>
    %c0_6 = arith.constant 0 : index
    %c0_7 = arith.constant 0 : index
    %8 = vector.load %arg4[%c0_6, %c0_7] : memref<16x128xf32, #tpu.memory_space<vmem>>, vector<16x128xf32>
    tpu.vector_store %arg4[%c0_6, %c0_7], %7 {strides = array<i32>} : memref<16x128xf32, #tpu.memory_space<vmem>>, vector<16x128xf32>,
    return
  }
  func.func @transform_0(%arg0: i32) -> (i32, i32) {
    %c0_i32 = arith.constant 0 : i32
    %c0_i32_0 = arith.constant 0 : i32
    return %arg0, %c0_i32 : i32, i32
  }
  func.func @transform_1(%arg0: i32) -> (i32, i32) {
    %c0_i32 = arith.constant 0 : i32
    %c0_i32_0 = arith.constant 0 : i32
    %c0_i32_1 = arith.constant 0 : i32
    return %c0_i32, %c0_i32_0 : i32, i32
  }
  func.func @transform_2(%arg0: i32) -> (i32, i32) {
    %c0_i32 = arith.constant 0 : i32
    %c0_i32_0 = arith.constant 0 : i32
    %c0_i32_1 = arith.constant 0 : i32
    return %c0_i32, %c0_i32_0 : i32, i32
  }
  func.func @transform_3(%arg0: i32) -> (i32, i32) {
    %c0_i32 = arith.constant 0 : i32
    %c0_i32_0 = arith.constant 0 : i32
    return %arg0, %c0_i32 : i32, i32
  }
}

module attributes {stable_mosaic.version = 11 : i64} {
  func.func @kernel(%arg0: i32, %arg1: memref<16x384xbf16, #tpu.memory_space<vmem>>, %arg2: memref<384x128xbf16, #tpu.memory_space<vmem>>, %arg3: memref<1x128xf32, #tpu.memory_space<vmem>>, %arg4: memref<16x128xf32, #tpu.memory_space<vmem>>, %arg5: memref<16x128xf32, #tpu.memory_space<vmem>>) attributes {dimension_semantics = [#tpu.dimension_semantics<parallel>], iteration_bounds = array<i64: 1>, scalar_prefetch = 0 : i64, scratch_operands = 0 : i64, tpu.core_type = #tpu.core_type<tc>, window_params = [{transform_indices = @transform_0, window_bounds = array<i64: 16, 384>}, {pipeline_mode = #tpu.pipeline_mode<synchronous>, transform_indices = @transform_1, window_bounds = array<i64: 384, 128>}, {pipeline_mode = #tpu.pipeline_mode<synchronous>, transform_indices = @transform_2, window_bounds = array<i64: 1, 128>}, {transform_indices = @transform_3, window_bounds = array<i64: 16, 128>}, {transform_indices = @transform_4, window_bounds = array<i64: 16, 128>}]} {
    %c0 = arith.constant 0 : index
    %c0_0 = arith.constant 0 : index
    %0 = vector.load %arg1[%c0, %c0_0] : memref<16x384xbf16, #tpu.memory_space<vmem>>, vector<16x384xbf16>
    %c0_1 = arith.constant 0 : index
    %c0_2 = arith.constant 0 : index
    %1 = vector.load %arg2[%c0_1, %c0_2] : memref<384x128xbf16, #tpu.memory_space<vmem>>, vector<384x128xbf16>
    %cst = arith.constant dense<0.000000e+00> : vector<16x128xf32>
    %2 = tpu.matmul %0, %1, %cst {dimension_numbers = #tpu.dot_dimension_numbers<[1], [0], [0], [1], [0, 0, 1, 1], [], []>} : vector<16x384xbf16>, vector<384x128xbf16>, vector<16x128xf32> -> vector<16x128xf32>
    %c0_3 = arith.constant 0 : index
    %c0_4 = arith.constant 0 : index
    %3 = vector.load %arg3[%c0_3, %c0_4] : memref<1x128xf32, #tpu.memory_space<vmem>>, vector<1x128xf32>
    %4 = vector.broadcast %3 : vector<1x128xf32> to vector<16x128xf32>
    %5 = arith.addf %2, %4 : vector<16x128xf32>
    %c0_5 = arith.constant 0 : index
    %c0_6 = arith.constant 0 : index
    %6 = vector.load %arg4[%c0_5, %c0_6] : memref<16x128xf32, #tpu.memory_space<vmem>>, vector<16x128xf32>
    %7 = arith.addf %5, %6 : vector<16x128xf32>
    %cst_7 = arith.constant 0.000000e+00 : f32
    %8 = vector.broadcast %cst_7 : f32 to vector<16x128xf32>
    %9 = arith.maximumf %7, %8 : vector<16x128xf32>
    %c0_8 = arith.constant 0 : index
    %c0_9 = arith.constant 0 : index
    %10 = vector.load %arg5[%c0_8, %c0_9] : memref<16x128xf32, #tpu.memory_space<vmem>>, vector<16x128xf32>
    tpu.vector_store %arg5[%c0_8, %c0_9], %9 {strides = array<i32>} : memref<16x128xf32, #tpu.memory_space<vmem>>, vector<16x128xf32>,
    return
  }
  func.func @transform_0(%arg0: i32) -> (i32, i32) {
    %c0_i32 = arith.constant 0 : i32
    %c0_i32_0 = arith.constant 0 : i32
    return %arg0, %c0_i32 : i32, i32
  }
  func.func @transform_1(%arg0: i32) -> (i32, i32) {
    %c0_i32 = arith.constant 0 : i32
    %c0_i32_0 = arith.constant 0 : i32
    %c0_i32_1 = arith.constant 0 : i32
    return %c0_i32, %c0_i32_0 : i32, i32
  }
  func.func @transform_2(%arg0: i32) -> (i32, i32) {
    %c0_i32 = arith.constant 0 : i32
    %c0_i32_0 = arith.constant 0 : i32
    %c0_i32_1 = arith.constant 0 : i32
    return %c0_i32, %c0_i32_0 : i32, i32
  }
  func.func @transform_3(%arg0: i32) -> (i32, i32) {
    %c0_i32 = arith.constant 0 : i32
    %c0_i32_0 = arith.constant 0 : i32
    return %arg0, %c0_i32 : i32, i32
  }
  func.func @transform_4(%arg0: i32) -> (i32, i32) {
    %c0_i32 = arith.constant 0 : i32
    %c0_i32_0 = arith.constant 0 : i32
    return %arg0, %c0_i32 : i32, i32
  }
}

module attributes {stable_mosaic.version = 11 : i64} {
  func.func @kernel(%arg0: i32, %arg1: memref<16x128xbf16, #tpu.memory_space<vmem>>, %arg2: memref<128x128xbf16, #tpu.memory_space<vmem>>, %arg3: memref<1x128xf32, #tpu.memory_space<vmem>>, %arg4: memref<16x128xf32, #tpu.memory_space<vmem>>) attributes {dimension_semantics = [#tpu.dimension_semantics<parallel>], iteration_bounds = array<i64: 1>, scalar_prefetch = 0 : i64, scratch_operands = 0 : i64, tpu.core_type = #tpu.core_type<tc>, window_params = [{transform_indices = @transform_0, window_bounds = array<i64: 16, 128>}, {pipeline_mode = #tpu.pipeline_mode<synchronous>, transform_indices = @transform_1, window_bounds = array<i64: 128, 128>}, {pipeline_mode = #tpu.pipeline_mode<synchronous>, transform_indices = @transform_2, window_bounds = array<i64: 1, 128>}, {transform_indices = @transform_3, window_bounds = array<i64: 16, 128>}]} {
    %c0 = arith.constant 0 : index
    %c0_0 = arith.constant 0 : index
    %0 = vector.load %arg1[%c0, %c0_0] : memref<16x128xbf16, #tpu.memory_space<vmem>>, vector<16x128xbf16>
    %c0_1 = arith.constant 0 : index
    %c0_2 = arith.constant 0 : index
    %1 = vector.load %arg2[%c0_1, %c0_2] : memref<128x128xbf16, #tpu.memory_space<vmem>>, vector<128x128xbf16>
    %cst = arith.constant dense<0.000000e+00> : vector<16x128xf32>
    %2 = tpu.matmul %0, %1, %cst {dimension_numbers = #tpu.dot_dimension_numbers<[1], [0], [0], [1], [0, 0, 1, 1], [], []>} : vector<16x128xbf16>, vector<128x128xbf16>, vector<16x128xf32> -> vector<16x128xf32>
    %c0_3 = arith.constant 0 : index
    %c0_4 = arith.constant 0 : index
    %3 = vector.load %arg3[%c0_3, %c0_4] : memref<1x128xf32, #tpu.memory_space<vmem>>, vector<1x128xf32>
    %4 = vector.broadcast %3 : vector<1x128xf32> to vector<16x128xf32>
    %5 = arith.addf %2, %4 : vector<16x128xf32>
    %c0_5 = arith.constant 0 : index
    %c0_6 = arith.constant 0 : index
    %6 = vector.load %arg4[%c0_5, %c0_6] : memref<16x128xf32, #tpu.memory_space<vmem>>, vector<16x128xf32>
    tpu.vector_store %arg4[%c0_5, %c0_6], %5 {strides = array<i32>} : memref<16x128xf32, #tpu.memory_space<vmem>>, vector<16x128xf32>,
    return
  }
  func.func @transform_0(%arg0: i32) -> (i32, i32) {
    %c0_i32 = arith.constant 0 : i32
    %c0_i32_0 = arith.constant 0 : i32
    return %arg0, %c0_i32 : i32, i32
  }
  func.func @transform_1(%arg0: i32) -> (i32, i32) {
    %c0_i32 = arith.constant 0 : i32
    %c0_i32_0 = arith.constant 0 : i32
    %c0_i32_1 = arith.constant 0 : i32
    return %c0_i32, %c0_i32_0 : i32, i32
  }
  func.func @transform_2(%arg0: i32) -> (i32, i32) {
    %c0_i32 = arith.constant 0 : i32
    %c0_i32_0 = arith.constant 0 : i32
    %c0_i32_1 = arith.constant 0 : i32
    return %c0_i32, %c0_i32_0 : i32, i32
  }
  func.func @transform_3(%arg0: i32) -> (i32, i32) {
    %c0_i32 = arith.constant 0 : i32
    %c0_i32_0 = arith.constant 0 : i32
    return %arg0, %c0_i32 : i32, i32
  }
}

module attributes {stable_mosaic.version = 11 : i64} {
  func.func @kernel(%arg0: i32, %arg1: memref<16x384xbf16, #tpu.memory_space<vmem>>, %arg2: memref<384x128xbf16, #tpu.memory_space<vmem>>, %arg3: memref<1x128xf32, #tpu.memory_space<vmem>>, %arg4: memref<16x128xf32, #tpu.memory_space<vmem>>) attributes {dimension_semantics = [#tpu.dimension_semantics<parallel>], iteration_bounds = array<i64: 1>, scalar_prefetch = 0 : i64, scratch_operands = 0 : i64, tpu.core_type = #tpu.core_type<tc>, window_params = [{transform_indices = @transform_0, window_bounds = array<i64: 16, 384>}, {pipeline_mode = #tpu.pipeline_mode<synchronous>, transform_indices = @transform_1, window_bounds = array<i64: 384, 128>}, {pipeline_mode = #tpu.pipeline_mode<synchronous>, transform_indices = @transform_2, window_bounds = array<i64: 1, 128>}, {transform_indices = @transform_3, window_bounds = array<i64: 16, 128>}]} {
    %c0 = arith.constant 0 : index
    %c0_0 = arith.constant 0 : index
    %0 = vector.load %arg1[%c0, %c0_0] : memref<16x384xbf16, #tpu.memory_space<vmem>>, vector<16x384xbf16>
    %c0_1 = arith.constant 0 : index
    %c0_2 = arith.constant 0 : index
    %1 = vector.load %arg2[%c0_1, %c0_2] : memref<384x128xbf16, #tpu.memory_space<vmem>>, vector<384x128xbf16>
    %cst = arith.constant dense<0.000000e+00> : vector<16x128xf32>
    %2 = tpu.matmul %0, %1, %cst {dimension_numbers = #tpu.dot_dimension_numbers<[1], [0], [0], [1], [0, 0, 1, 1], [], []>} : vector<16x384xbf16>, vector<384x128xbf16>, vector<16x128xf32> -> vector<16x128xf32>
    %c0_3 = arith.constant 0 : index
    %c0_4 = arith.constant 0 : index
    %3 = vector.load %arg3[%c0_3, %c0_4] : memref<1x128xf32, #tpu.memory_space<vmem>>, vector<1x128xf32>
    %4 = vector.broadcast %3 : vector<1x128xf32> to vector<16x128xf32>
    %5 = arith.addf %2, %4 : vector<16x128xf32>
    %cst_5 = arith.constant 0.000000e+00 : f32
    %6 = vector.broadcast %cst_5 : f32 to vector<16x128xf32>
    %7 = arith.maximumf %5, %6 : vector<16x128xf32>
    %c0_6 = arith.constant 0 : index
    %c0_7 = arith.constant 0 : index
    %8 = vector.load %arg4[%c0_6, %c0_7] : memref<16x128xf32, #tpu.memory_space<vmem>>, vector<16x128xf32>
    tpu.vector_store %arg4[%c0_6, %c0_7], %7 {strides = array<i32>} : memref<16x128xf32, #tpu.memory_space<vmem>>, vector<16x128xf32>,
    return
  }
  func.func @transform_0(%arg0: i32) -> (i32, i32) {
    %c0_i32 = arith.constant 0 : i32
    %c0_i32_0 = arith.constant 0 : i32
    return %arg0, %c0_i32 : i32, i32
  }
  func.func @transform_1(%arg0: i32) -> (i32, i32) {
    %c0_i32 = arith.constant 0 : i32
    %c0_i32_0 = arith.constant 0 : i32
    %c0_i32_1 = arith.constant 0 : i32
    return %c0_i32, %c0_i32_0 : i32, i32
  }
  func.func @transform_2(%arg0: i32) -> (i32, i32) {
    %c0_i32 = arith.constant 0 : i32
    %c0_i32_0 = arith.constant 0 : i32
    %c0_i32_1 = arith.constant 0 : i32
    return %c0_i32, %c0_i32_0 : i32, i32
  }
  func.func @transform_3(%arg0: i32) -> (i32, i32) {
    %c0_i32 = arith.constant 0 : i32
    %c0_i32_0 = arith.constant 0 : i32
    return %arg0, %c0_i32 : i32, i32
  }
}

module attributes {stable_mosaic.version = 11 : i64} {
  func.func @kernel(%arg0: i32, %arg1: memref<16x640xbf16, #tpu.memory_space<vmem>>, %arg2: memref<640x128xbf16, #tpu.memory_space<vmem>>, %arg3: memref<1x128xf32, #tpu.memory_space<vmem>>, %arg4: memref<16x128xf32, #tpu.memory_space<vmem>>, %arg5: memref<16x128xf32, #tpu.memory_space<vmem>>) attributes {dimension_semantics = [#tpu.dimension_semantics<parallel>], iteration_bounds = array<i64: 1>, scalar_prefetch = 0 : i64, scratch_operands = 0 : i64, tpu.core_type = #tpu.core_type<tc>, window_params = [{transform_indices = @transform_0, window_bounds = array<i64: 16, 640>}, {pipeline_mode = #tpu.pipeline_mode<synchronous>, transform_indices = @transform_1, window_bounds = array<i64: 640, 128>}, {pipeline_mode = #tpu.pipeline_mode<synchronous>, transform_indices = @transform_2, window_bounds = array<i64: 1, 128>}, {transform_indices = @transform_3, window_bounds = array<i64: 16, 128>}, {transform_indices = @transform_4, window_bounds = array<i64: 16, 128>}]} {
    %c0 = arith.constant 0 : index
    %c0_0 = arith.constant 0 : index
    %0 = vector.load %arg1[%c0, %c0_0] : memref<16x640xbf16, #tpu.memory_space<vmem>>, vector<16x640xbf16>
    %c0_1 = arith.constant 0 : index
    %c0_2 = arith.constant 0 : index
    %1 = vector.load %arg2[%c0_1, %c0_2] : memref<640x128xbf16, #tpu.memory_space<vmem>>, vector<640x128xbf16>
    %cst = arith.constant dense<0.000000e+00> : vector<16x128xf32>
    %2 = tpu.matmul %0, %1, %cst {dimension_numbers = #tpu.dot_dimension_numbers<[1], [0], [0], [1], [0, 0, 1, 1], [], []>} : vector<16x640xbf16>, vector<640x128xbf16>, vector<16x128xf32> -> vector<16x128xf32>
    %c0_3 = arith.constant 0 : index
    %c0_4 = arith.constant 0 : index
    %3 = vector.load %arg3[%c0_3, %c0_4] : memref<1x128xf32, #tpu.memory_space<vmem>>, vector<1x128xf32>
    %4 = vector.broadcast %3 : vector<1x128xf32> to vector<16x128xf32>
    %5 = arith.addf %2, %4 : vector<16x128xf32>
    %c0_5 = arith.constant 0 : index
    %c0_6 = arith.constant 0 : index
    %6 = vector.load %arg4[%c0_5, %c0_6] : memref<16x128xf32, #tpu.memory_space<vmem>>, vector<16x128xf32>
    %7 = arith.addf %5, %6 : vector<16x128xf32>
    %cst_7 = arith.constant 0.000000e+00 : f32
    %8 = vector.broadcast %cst_7 : f32 to vector<16x128xf32>
    %9 = arith.maximumf %7, %8 : vector<16x128xf32>
    %c0_8 = arith.constant 0 : index
    %c0_9 = arith.constant 0 : index
    %10 = vector.load %arg5[%c0_8, %c0_9] : memref<16x128xf32, #tpu.memory_space<vmem>>, vector<16x128xf32>
    tpu.vector_store %arg5[%c0_8, %c0_9], %9 {strides = array<i32>} : memref<16x128xf32, #tpu.memory_space<vmem>>, vector<16x128xf32>,
    return
  }
  func.func @transform_0(%arg0: i32) -> (i32, i32) {
    %c0_i32 = arith.constant 0 : i32
    %c0_i32_0 = arith.constant 0 : i32
    return %arg0, %c0_i32 : i32, i32
  }
  func.func @transform_1(%arg0: i32) -> (i32, i32) {
    %c0_i32 = arith.constant 0 : i32
    %c0_i32_0 = arith.constant 0 : i32
    %c0_i32_1 = arith.constant 0 : i32
    return %c0_i32, %c0_i32_0 : i32, i32
  }
  func.func @transform_2(%arg0: i32) -> (i32, i32) {
    %c0_i32 = arith.constant 0 : i32
    %c0_i32_0 = arith.constant 0 : i32
    %c0_i32_1 = arith.constant 0 : i32
    return %c0_i32, %c0_i32_0 : i32, i32
  }
  func.func @transform_3(%arg0: i32) -> (i32, i32) {
    %c0_i32 = arith.constant 0 : i32
    %c0_i32_0 = arith.constant 0 : i32
    return %arg0, %c0_i32 : i32, i32
  }
  func.func @transform_4(%arg0: i32) -> (i32, i32) {
    %c0_i32 = arith.constant 0 : i32
    %c0_i32_0 = arith.constant 0 : i32
    return %arg0, %c0_i32 : i32, i32
  }
}

module attributes {stable_mosaic.version = 11 : i64} {
  func.func @kernel(%arg0: i32, %arg1: memref<16x640xbf16, #tpu.memory_space<vmem>>, %arg2: memref<640x128xbf16, #tpu.memory_space<vmem>>, %arg3: memref<1x128xf32, #tpu.memory_space<vmem>>, %arg4: memref<16x128xf32, #tpu.memory_space<vmem>>) attributes {dimension_semantics = [#tpu.dimension_semantics<parallel>], iteration_bounds = array<i64: 1>, scalar_prefetch = 0 : i64, scratch_operands = 0 : i64, tpu.core_type = #tpu.core_type<tc>, window_params = [{transform_indices = @transform_0, window_bounds = array<i64: 16, 640>}, {pipeline_mode = #tpu.pipeline_mode<synchronous>, transform_indices = @transform_1, window_bounds = array<i64: 640, 128>}, {pipeline_mode = #tpu.pipeline_mode<synchronous>, transform_indices = @transform_2, window_bounds = array<i64: 1, 128>}, {transform_indices = @transform_3, window_bounds = array<i64: 16, 128>}]} {
    %c0 = arith.constant 0 : index
    %c0_0 = arith.constant 0 : index
    %0 = vector.load %arg1[%c0, %c0_0] : memref<16x640xbf16, #tpu.memory_space<vmem>>, vector<16x640xbf16>
    %c0_1 = arith.constant 0 : index
    %c0_2 = arith.constant 0 : index
    %1 = vector.load %arg2[%c0_1, %c0_2] : memref<640x128xbf16, #tpu.memory_space<vmem>>, vector<640x128xbf16>
    %cst = arith.constant dense<0.000000e+00> : vector<16x128xf32>
    %2 = tpu.matmul %0, %1, %cst {dimension_numbers = #tpu.dot_dimension_numbers<[1], [0], [0], [1], [0, 0, 1, 1], [], []>} : vector<16x640xbf16>, vector<640x128xbf16>, vector<16x128xf32> -> vector<16x128xf32>
    %c0_3 = arith.constant 0 : index
    %c0_4 = arith.constant 0 : index
    %3 = vector.load %arg3[%c0_3, %c0_4] : memref<1x128xf32, #tpu.memory_space<vmem>>, vector<1x128xf32>
    %4 = vector.broadcast %3 : vector<1x128xf32> to vector<16x128xf32>
    %5 = arith.addf %2, %4 : vector<16x128xf32>
    %c0_5 = arith.constant 0 : index
    %c0_6 = arith.constant 0 : index
    %6 = vector.load %arg4[%c0_5, %c0_6] : memref<16x128xf32, #tpu.memory_space<vmem>>, vector<16x128xf32>
    tpu.vector_store %arg4[%c0_5, %c0_6], %5 {strides = array<i32>} : memref<16x128xf32, #tpu.memory_space<vmem>>, vector<16x128xf32>,
    return
  }
  func.func @transform_0(%arg0: i32) -> (i32, i32) {
    %c0_i32 = arith.constant 0 : i32
    %c0_i32_0 = arith.constant 0 : i32
    return %arg0, %c0_i32 : i32, i32
  }
  func.func @transform_1(%arg0: i32) -> (i32, i32) {
    %c0_i32 = arith.constant 0 : i32
    %c0_i32_0 = arith.constant 0 : i32
    %c0_i32_1 = arith.constant 0 : i32
    return %c0_i32, %c0_i32_0 : i32, i32
  }
  func.func @transform_2(%arg0: i32) -> (i32, i32) {
    %c0_i32 = arith.constant 0 : i32
    %c0_i32_0 = arith.constant 0 : i32
    %c0_i32_1 = arith.constant 0 : i32
    return %c0_i32, %c0_i32_0 : i32, i32
  }
  func.func @transform_3(%arg0: i32) -> (i32, i32) {
    %c0_i32 = arith.constant 0 : i32
    %c0_i32_0 = arith.constant 0 : i32
    return %arg0, %c0_i32 : i32, i32
  }
}

module attributes {stable_mosaic.version = 11 : i64} {
  func.func @kernel(%arg0: i32, %arg1: memref<16x4x128xf32, #tpu.memory_space<vmem>>, %arg2: memref<16x128xf32, #tpu.memory_space<vmem>>) attributes {dimension_semantics = [#tpu.dimension_semantics<parallel>], iteration_bounds = array<i64: 1>, scalar_prefetch = 0 : i64, scratch_operands = 0 : i64, tpu.core_type = #tpu.core_type<tc>, window_params = [{transform_indices = @transform_0, window_bounds = array<i64: 16, 4, 128>}, {transform_indices = @transform_1, window_bounds = array<i64: 16, 128>}]} {
    %c0 = arith.constant 0 : index
    %c0_0 = arith.constant 0 : index
    %c0_1 = arith.constant 0 : index
    %0 = vector.load %arg1[%c0, %c0_0, %c0_1] : memref<16x4x128xf32, #tpu.memory_space<vmem>>, vector<16x1x128xf32>
    %1 = vector.shape_cast %0 : vector<16x1x128xf32> to vector<16x128xf32>
    %c0_2 = arith.constant 0 : index
    %c1 = arith.constant 1 : index
    %c0_3 = arith.constant 0 : index
    %2 = vector.load %arg1[%c0_2, %c1, %c0_3] : memref<16x4x128xf32, #tpu.memory_space<vmem>>, vector<16x1x128xf32>
    %3 = vector.shape_cast %2 : vector<16x1x128xf32> to vector<16x128xf32>
    %4 = arith.maximumf %1, %3 : vector<16x128xf32>
    %c0_4 = arith.constant 0 : index
    %c2 = arith.constant 2 : index
    %c0_5 = arith.constant 0 : index
    %5 = vector.load %arg1[%c0_4, %c2, %c0_5] : memref<16x4x128xf32, #tpu.memory_space<vmem>>, vector<16x1x128xf32>
    %6 = vector.shape_cast %5 : vector<16x1x128xf32> to vector<16x128xf32>
    %7 = arith.maximumf %4, %6 : vector<16x128xf32>
    %c0_6 = arith.constant 0 : index
    %c3 = arith.constant 3 : index
    %c0_7 = arith.constant 0 : index
    %8 = vector.load %arg1[%c0_6, %c3, %c0_7] : memref<16x4x128xf32, #tpu.memory_space<vmem>>, vector<16x1x128xf32>
    %9 = vector.shape_cast %8 : vector<16x1x128xf32> to vector<16x128xf32>
    %10 = arith.maximumf %7, %9 : vector<16x128xf32>
    %c0_8 = arith.constant 0 : index
    %c0_9 = arith.constant 0 : index
    %11 = vector.load %arg2[%c0_8, %c0_9] : memref<16x128xf32, #tpu.memory_space<vmem>>, vector<16x128xf32>
    tpu.vector_store %arg2[%c0_8, %c0_9], %10 {strides = array<i32>} : memref<16x128xf32, #tpu.memory_space<vmem>>, vector<16x128xf32>,
    return
  }
  func.func @transform_0(%arg0: i32) -> (i32, i32, i32) {
    %c0_i32 = arith.constant 0 : i32
    %c0_i32_0 = arith.constant 0 : i32
    %c0_i32_1 = arith.constant 0 : i32
    return %arg0, %c0_i32, %c0_i32_0 : i32, i32, i32
  }
  func.func @transform_1(%arg0: i32) -> (i32, i32) {
    %c0_i32 = arith.constant 0 : i32
    %c0_i32_0 = arith.constant 0 : i32
    return %arg0, %c0_i32 : i32, i32
  }
}

</mosaic_0001>

<llo_original>
// kernel: resnet_dilated_forward.15
$region0: #{resnet_dilated_forward.15}
  #allocation0 [shape = 'u32[]', space=smem, size = 0x4, offset = 0x4, fixed_abs, tag = 'smem constant byte address 0x4 - core index']
  #allocation1 [shape = 'u32[72,128]{1,0:T(1,128)}', space=vmem, size = 0x9000, scoped, tag = 'internal scratch']
  %s0 = inlined_call_operand.vmem [shape: bf16[512,256], index: 0, kind: input, shape index: {}]
  %s1 = inlined_call_operand.vmem [shape: bf16[256,128], index: 1, kind: input, shape index: {}]
  %s2 = inlined_call_operand.vmem [shape: f32[1,128], index: 2, kind: input, shape index: {}]
  %s3 = inlined_call_operand.vmem [shape: f32[512,128], index: 3, kind: output, shape index: {}]
  %s4 = sld [smem:[#allocation0]]
  $region45: #{resnet_dilated_forward.15} parent=0
    _
  %s6 = ssub.s32 1, %s4
  %s7 = scalar_select 0, %s6, %s4
  loop: start=0, step=1, limit=4
  $region2: #{resnet_dilated_forward.15} parent=0 // loop_pre_header
    _
  $region3: #{resnet_dilated_forward.15} parent=0 // loop_header
    %s9 = sphi 0, %s13
    %p10 = scmp.ge.s32.totalorder %s9, 4
    %s19 = sphi 0, %s21
    %s22 = sphi 0, %s19
    %s23 = sphi 0, %s22
    %s39 = sphi 0, %s23
    %s43 = sphi 0, %s43
    %s45 = sphi 0, %s43
    %s46 = sphi 0, %s45
    %s60 = sphi 0, %s46
    %s64 = sphi 0, %s64
    %s66 = sphi 0, %s64
    %s67 = sphi 0, %s66
    %s81 = sphi 0, %s67
    %s87 = sphi 0, %s89
    %s90 = sphi 0, %s87
    %s91 = sphi 0, %s90
    %s107 = sphi 0, %s91
  $region4: #{resnet_dilated_forward.15} parent=0 // loop_header_branch
    %12 = sbr.rel (%p10) target = $region8
  $region5: #{resnet_dilated_forward.15} parent=0 // loop_body
    %s14 = ssub.s32 %s9, 1
    %s15 = ssub.s32 %s9, 2
    %s16 = sadd.s32 %s9, 1
    %s17 = ssub.s32 %s9, %s16
    %p18 = scmp.eq.s32.totalorder %s17, 0
    %s20 = sadd.s32 %s19, 1
    %s21 = scalar_select %p18, %s19, %s20
    %p24 = pneg %p18
    %p25 = scmp.eq.s32.totalorder %s9, 1
    %p26 = por %p24, %p25
    %p27 = scmp.ne.s32.totalorder %s19, %s22
    %p28 = scmp.eq.s32.totalorder %s9, 0
    %p29 = por %p27, %p28
    %p30 = scmp.ne.s32.totalorder %s19, %s22
    %p31 = scmp.eq.s32.totalorder %s14, 1
    %p32 = por %p30, %p31
    %p33 = scmp.ne.s32.totalorder %s22, %s23
    %p34 = scmp.eq.s32.totalorder %s14, 0
    %p35 = por %p33, %p34
    %p36 = scmp.ne.s32.totalorder %s22, %s23
    %p37 = scmp.eq.s32.totalorder %s15, 1
    %p38 = por %p36, %p37
    %p40 = scmp.ne.s32.totalorder %s23, %s39
    %p41 = scmp.eq.s32.totalorder %s15, 0
    %p42 = por %p40, %p41
    %s44 = sadd.s32 %s43, 1
    %p47 = scmp.eq.s32.totalorder %s9, 1
    %p48 = scmp.ne.s32.totalorder %s43, %s45
    %p49 = scmp.eq.s32.totalorder %s9, 0
    %p50 = por %p48, %p49
    %p51 = scmp.ne.s32.totalorder %s43, %s45
    %p52 = scmp.eq.s32.totalorder %s14, 1
    %p53 = por %p51, %p52
    %p54 = scmp.ne.s32.totalorder %s45, %s46
    %p55 = scmp.eq.s32.totalorder %s14, 0
    %p56 = por %p54, %p55
    %p57 = scmp.ne.s32.totalorder %s45, %s46
    %p58 = scmp.eq.s32.totalorder %s15, 1
    %p59 = por %p57, %p58
    %p61 = scmp.ne.s32.totalorder %s46, %s60
    %p62 = scmp.eq.s32.totalorder %s15, 0
    %p63 = por %p61, %p62
    %s65 = sadd.s32 %s64, 1
    %p68 = scmp.eq.s32.totalorder %s9, 1
    %p69 = scmp.ne.s32.totalorder %s64, %s66
    %p70 = scmp.eq.s32.totalorder %s9, 0
    %p71 = por %p69, %p70
    %p72 = scmp.ne.s32.totalorder %s64, %s66
    %p73 = scmp.eq.s32.totalorder %s14, 1
    %p74 = por %p72, %p73
    %p75 = scmp.ne.s32.totalorder %s66, %s67
    %p76 = scmp.eq.s32.totalorder %s14, 0
    %p77 = por %p75, %p76
    %p78 = scmp.ne.s32.totalorder %s66, %s67
    %p79 = scmp.eq.s32.totalorder %s15, 1
    %p80 = por %p78, %p79
    %p82 = scmp.ne.s32.totalorder %s67, %s81
    %p83 = scmp.eq.s32.totalorder %s15, 0
    %p84 = por %p82, %p83
    %s85 = ssub.s32 %s9, %s16
    %p86 = scmp.eq.s32.totalorder %s85, 0
    %s88 = sadd.s32 %s87, 1
    %s89 = scalar_select %p86, %s87, %s88
    %p92 = pneg %p86
    %p93 = scmp.eq.s32.totalorder %s9, 1
    %p94 = por %p92, %p93
    %p95 = scmp.ne.s32.totalorder %s87, %s90
    %p96 = scmp.eq.s32.totalorder %s9, 0
    %p97 = por %p95, %p96
    %p98 = scmp.ne.s32.totalorder %s87, %s90
    %p99 = scmp.eq.s32.totalorder %s14, 1
    %p100 = por %p98, %p99
    %p101 = scmp.ne.s32.totalorder %s90, %s91
    %p102 = scmp.eq.s32.totalorder %s14, 0
    %p103 = por %p101, %p102
    %p104 = scmp.ne.s32.totalorder %s90, %s91
    %p105 = scmp.eq.s32.totalorder %s15, 1
    %p106 = por %p104, %p105
    %p108 = scmp.ne.s32.totalorder %s91, %s107
    %p109 = scmp.eq.s32.totalorder %s15, 0
    %p110 = por %p108, %p109
    %p111 = scmp.le.s32.totalorder 1, %s9
    %p112 = scmp.lt.s32.totalorder %s9, 3
    %p113 = pnand %p111, %p112
    %p114 = pneg %p113
    // Predicated region
    $region9: #{resnet_dilated_forward.15} parent=5 // pred_check
      _
    $region10: #{resnet_dilated_forward.15} parent=5 // pred_check_branch
      %116 = sbr.rel (%p113) target = $region12
    $region11: #{resnet_dilated_forward.15} parent=5 // pred_region
      %s117 = ssub.s32 %s9, 1
      // Predicated region
      $region13: #{resnet_dilated_forward.15} parent=11 // pred_check
        %p118 = pneg %p56
      $region14: #{resnet_dilated_forward.15} parent=11 // pred_check_branch
        %120 = sbr.rel (%p118) target = $region16
      $region15: #{resnet_dilated_forward.15} parent=11 // pred_region
        _
      $region16: #{resnet_dilated_forward.15} parent=11 // pred_fallthru
        _
      // Predicated region
      $region17: #{resnet_dilated_forward.15} parent=11 // pred_check
        %p121 = pneg %p77
      $region18: #{resnet_dilated_forward.15} parent=11 // pred_check_branch
        %123 = sbr.rel (%p121) target = $region20
      $region19: #{resnet_dilated_forward.15} parent=11 // pred_region
        _
      $region20: #{resnet_dilated_forward.15} parent=11 // pred_fallthru
        _
    $region12: #{resnet_dilated_forward.15} parent=5 // pred_fallthru
      _
    %p124 = scmp.lt.s32.totalorder %s9, 2
    // Predicated region
    $region21: #{resnet_dilated_forward.15} parent=5 // pred_check
      %p125 = pneg %p124
    $region22: #{resnet_dilated_forward.15} parent=5 // pred_check_branch
      %127 = sbr.rel (%p125) target = $region24
    $region23: #{resnet_dilated_forward.15} parent=5 // pred_region
      // Predicated region
      $region25: #{resnet_dilated_forward.15} parent=23 // pred_check
        %p128 = pneg %p29
      $region26: #{resnet_dilated_forward.15} parent=23 // pred_check_branch
        %130 = sbr.rel (%p128) target = $region28
      $region27: #{resnet_dilated_forward.15} parent=23 // pred_region
        %s131 = smul.u32 32, %s9
        %p132 = scmp.lt.s32.totalorder %s131, 63
        %s133 = scalar_select %p132, %s131, 63
        %s134 = smul.addr %s133, 2
        %s135 = smul.addr %s134, 4
        %s136 = scalar_lea.vmem %s0, %s135
        %s137 = smul.u32 32, %s9
      $region28: #{resnet_dilated_forward.15} parent=23 // pred_fallthru
        _
    $region24: #{resnet_dilated_forward.15} parent=5 // pred_fallthru
      _
    %p138 = scmp.le.s32.totalorder 1, %s9
    %p139 = scmp.lt.s32.totalorder %s9, 3
    %p140 = pnand %p138, %p139
    %p141 = pneg %p140
    // Predicated region
    $region29: #{resnet_dilated_forward.15} parent=5 // pred_check
      _
    $region30: #{resnet_dilated_forward.15} parent=5 // pred_check_branch
      %143 = sbr.rel (%p140) target = $region32
    $region31: #{resnet_dilated_forward.15} parent=5 // pred_region
      %s144 = ssub.s32 %s9, 1
      %s145 = smul.u32 32, %s14
      %p146 = scmp.lt.s32.totalorder %s145, 63
      %s147 = scalar_select %p146, %s145, 63
      %s148 = smul.addr %s147, 2
      %s149 = smul.addr %s148, 4
      %s150 = scalar_lea.vmem %s0, %s149
      %p151 = pneg %p35
      %p152 = pneg %p32
      %p153 = pneg %p56
      %p154 = pneg %p53
      %p155 = pneg %p77
      %p156 = pneg %p74
      %p157 = pneg %p103
      %p158 = pneg %p100
      %s159 = smul.u32 32, %s14
      %p160 = scmp.lt.s32.totalorder %s159, 63
      %s161 = scalar_select %p160, %s159, 63
      %s162 = smul.addr %s161, 8
      %s163 = scalar_lea.vmem %s3, %s162
      %s164 = smul.u32 32, %s14
      %p165 = scmp.lt.s32.totalorder %s164, 63
      %s166 = scalar_select %p165, %s164, 63
      %s167 = smul.addr %s166, 2
      %s168 = smul.addr %s167, 4
      %s169 = scalar_lea.vmem %s0, %s168
      %s170 = smul.u32 32, %s14
      %s171 = smul.u32 32, %s14
      %p172 = scmp.lt.s32.totalorder %s171, 63
      %s173 = scalar_select %p172, %s171, 63
      %s174 = smul.addr %s173, 8
      %s175 = scalar_lea.vmem %s3, %s174
      %s176 = smul.u32 32, %s14
      %v177 = vld [vmem:[%s169] sm:$0xff]
      %v178 = vld [vmem:[%s169 + $0x8] sm:$0xff]
      %v179 = vld [vmem:[%s169 + $0x10] sm:$0xff]
      %v180 = vld [vmem:[%s169 + $0x18] sm:$0xff]
      %v181 = vld [vmem:[%s169 + $0x20] sm:$0xff]
      %v182 = vld [vmem:[%s169 + $0x28] sm:$0xff]
      %v183 = vld [vmem:[%s169 + $0x30] sm:$0xff]
      %v184 = vld [vmem:[%s169 + $0x38] sm:$0xff]
      %v185 = vld [vmem:[%s169 + $0x40] sm:$0xff]
      %v186 = vld [vmem:[%s169 + $0x48] sm:$0xff]
      %v187 = vld [vmem:[%s169 + $0x50] sm:$0xff]
      %v188 = vld [vmem:[%s169 + $0x58] sm:$0xff]
      %v189 = vld [vmem:[%s169 + $0x60] sm:$0xff]
      %v190 = vld [vmem:[%s169 + $0x68] sm:$0xff]
      %v191 = vld [vmem:[%s169 + $0x70] sm:$0xff]
      %v192 = vld [vmem:[%s169 + $0x78] sm:$0xff]
      %v193 = vld [vmem:[%s169 + $0x80] sm:$0xff]
      %v194 = vld [vmem:[%s169 + $0x88] sm:$0xff]
      %v195 = vld [vmem:[%s169 + $0x90] sm:$0xff]
      %v196 = vld [vmem:[%s169 + $0x98] sm:$0xff]
      %v197 = vld [vmem:[%s169 + $0xa0] sm:$0xff]
      %v198 = vld [vmem:[%s169 + $0xa8] sm:$0xff]
      %v199 = vld [vmem:[%s169 + $0xb0] sm:$0xff]
      %v200 = vld [vmem:[%s169 + $0xb8] sm:$0xff]
      %v201 = vld [vmem:[%s169 + $0xc0] sm:$0xff]
      %v202 = vld [vmem:[%s169 + $0xc8] sm:$0xff]
      %v203 = vld [vmem:[%s169 + $0xd0] sm:$0xff]
      %v204 = vld [vmem:[%s169 + $0xd8] sm:$0xff]
      %v205 = vld [vmem:[%s169 + $0xe0] sm:$0xff]
      %v206 = vld [vmem:[%s169 + $0xe8] sm:$0xff]
      %v207 = vld [vmem:[%s169 + $0xf0] sm:$0xff]
      %v208 = vld [vmem:[%s169 + $0xf8] sm:$0xff]
      %v209 = vld [vmem:[%s1] sm:$0xf]
      %v210 = vld [vmem:[%s1 + $0x4] sm:$0xf]
      %v211 = vld [vmem:[%s1 + $0x8] sm:$0xf]
      %v212 = vld [vmem:[%s1 + $0xc] sm:$0xf]
      %v213 = vld [vmem:[%s1 + $0x10] sm:$0xf]
      %v214 = vld [vmem:[%s1 + $0x14] sm:$0xf]
      %v215 = vld [vmem:[%s1 + $0x18] sm:$0xf]
      %v216 = vld [vmem:[%s1 + $0x1c] sm:$0xf]
      %v217 = vld [vmem:[%s1 + $0x20] sm:$0xf]
      %v218 = vld [vmem:[%s1 + $0x24] sm:$0xf]
      %v219 = vld [vmem:[%s1 + $0x28] sm:$0xf]
      %v220 = vld [vmem:[%s1 + $0x2c] sm:$0xf]
      %v221 = vld [vmem:[%s1 + $0x30] sm:$0xf]
      %v222 = vld [vmem:[%s1 + $0x34] sm:$0xf]
      %v223 = vld [vmem:[%s1 + $0x38] sm:$0xf]
      %v224 = vld [vmem:[%s1 + $0x3c] sm:$0xf]
      %v225 = vld [vmem:[%s1 + $0x40] sm:$0xf]
      %v226 = vld [vmem:[%s1 + $0x44] sm:$0xf]
      %v227 = vld [vmem:[%s1 + $0x48] sm:$0xf]
      %v228 = vld [vmem:[%s1 + $0x4c] sm:$0xf]
      %v229 = vld [vmem:[%s1 + $0x50] sm:$0xf]
      %v230 = vld [vmem:[%s1 + $0x54] sm:$0xf]
      %v231 = vld [vmem:[%s1 + $0x58] sm:$0xf]
      %v232 = vld [vmem:[%s1 + $0x5c] sm:$0xf]
      %v233 = vld [vmem:[%s1 + $0x60] sm:$0xf]
      %v234 = vld [vmem:[%s1 + $0x64] sm:$0xf]
      %v235 = vld [vmem:[%s1 + $0x68] sm:$0xf]
      %v236 = vld [vmem:[%s1 + $0x6c] sm:$0xf]
      %v237 = vld [vmem:[%s1 + $0x70] sm:$0xf]
      %v238 = vld [vmem:[%s1 + $0x74] sm:$0xf]
      %v239 = vld [vmem:[%s1 + $0x78] sm:$0xf]
      %v240 = vld [vmem:[%s1 + $0x7c] sm:$0xf]
      %v241 = vld [vmem:[%s2] sm:$0x1]
      %v243 = vperm.slane %v241, 0
      %v277 = vunpack.c.l.b16 %v177
      %v278 = vunpack.c.h.b16 %v177
      %v279 = vunpack.c.l.b16 %v178
      %v280 = vunpack.c.h.b16 %v178
      %v281 = vunpack.c.l.b16 %v179
      %v282 = vunpack.c.h.b16 %v179
      %v283 = vunpack.c.l.b16 %v180
      %v284 = vunpack.c.h.b16 %v180
      %v285 = vunpack.c.l.b16 %v181
      %v286 = vunpack.c.h.b16 %v181
      %v287 = vunpack.c.l.b16 %v182
      %v288 = vunpack.c.h.b16 %v182
      %v289 = vunpack.c.l.b16 %v183
      %v290 = vunpack.c.h.b16 %v183
      %v291 = vunpack.c.l.b16 %v184
      %v292 = vunpack.c.h.b16 %v184
      %v293 = vunpack.c.l.b16 %v185
      %v294 = vunpack.c.h.b16 %v185
      %v295 = vunpack.c.l.b16 %v186
      %v296 = vunpack.c.h.b16 %v186
      %v297 = vunpack.c.l.b16 %v187
      %v298 = vunpack.c.h.b16 %v187
      %v299 = vunpack.c.l.b16 %v188
      %v300 = vunpack.c.h.b16 %v188
      %v301 = vunpack.c.l.b16 %v189
      %v302 = vunpack.c.h.b16 %v189
      %v303 = vunpack.c.l.b16 %v190
      %v304 = vunpack.c.h.b16 %v190
      %v305 = vunpack.c.l.b16 %v191
      %v306 = vunpack.c.h.b16 %v191
      %v307 = vunpack.c.l.b16 %v192
      %v308 = vunpack.c.h.b16 %v192
      %v309 = vunpack.c.l.b16 %v193
      %v310 = vunpack.c.h.b16 %v193
      %v311 = vunpack.c.l.b16 %v194
      %v312 = vunpack.c.h.b16 %v194
      %v313 = vunpack.c.l.b16 %v195
      %v314 = vunpack.c.h.b16 %v195
      %v315 = vunpack.c.l.b16 %v196
      %v316 = vunpack.c.h.b16 %v196
      %v317 = vunpack.c.l.b16 %v197
      %v318 = vunpack.c.h.b16 %v197
      %v319 = vunpack.c.l.b16 %v198
      %v320 = vunpack.c.h.b16 %v198
      %v321 = vunpack.c.l.b16 %v199
      %v322 = vunpack.c.h.b16 %v199
      %v323 = vunpack.c.l.b16 %v200
      %v324 = vunpack.c.h.b16 %v200
      %v325 = vunpack.c.l.b16 %v201
      %v326 = vunpack.c.h.b16 %v201
      %v327 = vunpack.c.l.b16 %v202
      %v328 = vunpack.c.h.b16 %v202
      %v329 = vunpack.c.l.b16 %v203
      %v330 = vunpack.c.h.b16 %v203
      %v331 = vunpack.c.l.b16 %v204
      %v332 = vunpack.c.h.b16 %v204
      %v333 = vunpack.c.l.b16 %v205
      %v334 = vunpack.c.h.b16 %v205
      %v335 = vunpack.c.l.b16 %v206
      %v336 = vunpack.c.h.b16 %v206
      %v337 = vunpack.c.l.b16 %v207
      %v338 = vunpack.c.h.b16 %v207
      %v339 = vunpack.c.l.b16 %v208
      %v340 = vunpack.c.h.b16 %v208
      %v341 = vpack.c.b16 %v279, %v277
      %v342 = vpack.c.b16 %v280, %v278
      %v343 = vpack.c.b16 %v283, %v281
      %v344 = vpack.c.b16 %v284, %v282
      %v345 = vpack.c.b16 %v287, %v285
      %v346 = vpack.c.b16 %v288, %v286
      %v347 = vpack.c.b16 %v291, %v289
      %v348 = vpack.c.b16 %v292, %v290
      %v349 = vpack.c.b16 %v295, %v293
      %v350 = vpack.c.b16 %v296, %v294
      %v351 = vpack.c.b16 %v299, %v297
      %v352 = vpack.c.b16 %v300, %v298
      %v353 = vpack.c.b16 %v303, %v301
      %v354 = vpack.c.b16 %v304, %v302
      %v355 = vpack.c.b16 %v307, %v305
      %v356 = vpack.c.b16 %v308, %v306
      %v357 = vpack.c.b16 %v311, %v309
      %v358 = vpack.c.b16 %v312, %v310
      %v359 = vpack.c.b16 %v315, %v313
      %v360 = vpack.c.b16 %v316, %v314
      %v361 = vpack.c.b16 %v319, %v317
      %v362 = vpack.c.b16 %v320, %v318
      %v363 = vpack.c.b16 %v323, %v321
      %v364 = vpack.c.b16 %v324, %v322
      %v365 = vpack.c.b16 %v327, %v325
      %v366 = vpack.c.b16 %v328, %v326
      %v367 = vpack.c.b16 %v331, %v329
      %v368 = vpack.c.b16 %v332, %v330
      %v369 = vpack.c.b16 %v335, %v333
      %v370 = vpack.c.b16 %v336, %v334
      %v371 = vpack.c.b16 %v339, %v337
      %v372 = vpack.c.b16 %v340, %v338
      %v437 = vunpack.c.l.b16 %v209
      %v438 = vunpack.c.l.b16 %v210
      %v439 = vunpack.c.l.b16 %v211
      %v440 = vunpack.c.l.b16 %v212
      %v441 = vunpack.c.l.b16 %v213
      %v442 = vunpack.c.l.b16 %v214
      %v443 = vunpack.c.l.b16 %v215
      %v444 = vunpack.c.l.b16 %v216
      %v445 = vunpack.c.l.b16 %v217
      %v446 = vunpack.c.l.b16 %v218
      %v447 = vunpack.c.l.b16 %v219
      %v448 = vunpack.c.l.b16 %v220
      %v449 = vunpack.c.l.b16 %v221
      %v450 = vunpack.c.l.b16 %v222
      %v451 = vunpack.c.l.b16 %v223
      %v452 = vunpack.c.l.b16 %v224
      %v453 = vunpack.c.l.b16 %v225
      %v454 = vunpack.c.l.b16 %v226
      %v455 = vunpack.c.l.b16 %v227
      %v456 = vunpack.c.l.b16 %v228
      %v457 = vunpack.c.l.b16 %v229
      %v458 = vunpack.c.l.b16 %v230
      %v459 = vunpack.c.l.b16 %v231
      %v460 = vunpack.c.l.b16 %v232
      %v461 = vunpack.c.l.b16 %v233
      %v462 = vunpack.c.l.b16 %v234
      %v463 = vunpack.c.l.b16 %v235
      %v464 = vunpack.c.l.b16 %v236
      %v465 = vunpack.c.l.b16 %v237
      %v466 = vunpack.c.l.b16 %v238
      %v467 = vunpack.c.l.b16 %v239
      %v468 = vunpack.c.l.b16 %v240
      %v469 = vpack.c.b16 %v438, %v437
      %v470 = vpack.c.b16 %v440, %v439
      %v471 = vpack.c.b16 %v442, %v441
      %v472 = vpack.c.b16 %v444, %v443
      %v473 = vpack.c.b16 %v446, %v445
      %v474 = vpack.c.b16 %v448, %v447
      %v475 = vpack.c.b16 %v450, %v449
      %v476 = vpack.c.b16 %v452, %v451
      %v477 = vpack.c.b16 %v454, %v453
      %v478 = vpack.c.b16 %v456, %v455
      %v479 = vpack.c.b16 %v458, %v457
      %v480 = vpack.c.b16 %v460, %v459
      %v481 = vpack.c.b16 %v462, %v461
      %v482 = vpack.c.b16 %v464, %v463
      %v483 = vpack.c.b16 %v466, %v465
      %v484 = vpack.c.b16 %v468, %v467
      %501 = vmatpush.bf16.msra.mxu0 %v476
      %502 = vmatpush.bf16.msra.mxu0 %v475
      %503 = vmatpush.bf16.msra.mxu0 %v474
      %504 = vmatpush.bf16.msra.mxu0 %v473
      %505 = vmatpush.bf16.msra.mxu0 %v472
      %506 = vmatpush.bf16.msra.mxu0 %v471
      %507 = vmatpush.bf16.msra.mxu0 %v470
      %508 = vmatpush.bf16.msra.mxu0 %v469
      %509 = vmatmul.bf16.gmra.mxu0 %v341
      %v510 = vpop.f32.mrf.mxu0
      %v511 = vadd.f32 %v243, %v510
      %v512 = vpop.f32.mrf.mxu0
      %v513 = vadd.f32 %v243, %v512
      %514 = vmatmul.bf16.gmra.mxu0 %v343
      %v515 = vpop.f32.mrf.mxu0
      %v516 = vadd.f32 %v243, %v515
      %v517 = vpop.f32.mrf.mxu0
      %v518 = vadd.f32 %v243, %v517
      %519 = vmatmul.bf16.gmra.mxu0 %v345
      %v520 = vpop.f32.mrf.mxu0
      %v521 = vadd.f32 %v243, %v520
      %v522 = vpop.f32.mrf.mxu0
      %v523 = vadd.f32 %v243, %v522
      %524 = vmatmul.bf16.gmra.mxu0 %v347
      %v525 = vpop.f32.mrf.mxu0
      %v526 = vadd.f32 %v243, %v525
      %v527 = vpop.f32.mrf.mxu0
      %v528 = vadd.f32 %v243, %v527
      %529 = vmatmul.bf16.gmra.mxu0 %v349
      %v530 = vpop.f32.mrf.mxu0
      %v531 = vadd.f32 %v243, %v530
      %v532 = vpop.f32.mrf.mxu0
      %v533 = vadd.f32 %v243, %v532
      %534 = vmatmul.bf16.gmra.mxu0 %v351
      %v535 = vpop.f32.mrf.mxu0
      %v536 = vadd.f32 %v243, %v535
      %v537 = vpop.f32.mrf.mxu0
      %v538 = vadd.f32 %v243, %v537
      %539 = vmatmul.bf16.gmra.mxu0 %v353
      %v540 = vpop.f32.mrf.mxu0
      %v541 = vadd.f32 %v243, %v540
      %v542 = vpop.f32.mrf.mxu0
      %v543 = vadd.f32 %v243, %v542
      %544 = vmatmul.bf16.gmra.mxu0 %v355
      %v545 = vpop.f32.mrf.mxu0
      %v546 = vadd.f32 %v243, %v545
      %v547 = vpop.f32.mrf.mxu0
      %v548 = vadd.f32 %v243, %v547
      %549 = vmatmul.bf16.gmra.mxu0 %v357
      %v550 = vpop.f32.mrf.mxu0
      %v551 = vadd.f32 %v243, %v550
      %v552 = vpop.f32.mrf.mxu0
      %v553 = vadd.f32 %v243, %v552
      %554 = vmatmul.bf16.gmra.mxu0 %v359
      %v555 = vpop.f32.mrf.mxu0
      %v556 = vadd.f32 %v243, %v555
      %v557 = vpop.f32.mrf.mxu0
      %v558 = vadd.f32 %v243, %v557
      %559 = vmatmul.bf16.gmra.mxu0 %v361
      %v560 = vpop.f32.mrf.mxu0
      %v561 = vadd.f32 %v243, %v560
      %v562 = vpop.f32.mrf.mxu0
      %v563 = vadd.f32 %v243, %v562
      %564 = vmatmul.bf16.gmra.mxu0 %v363
      %v565 = vpop.f32.mrf.mxu0
      %v566 = vadd.f32 %v243, %v565
      %v567 = vpop.f32.mrf.mxu0
      %v568 = vadd.f32 %v243, %v567
      %569 = vmatmul.bf16.gmra.mxu0 %v365
      %v570 = vpop.f32.mrf.mxu0
      %v571 = vadd.f32 %v243, %v570
      %v572 = vpop.f32.mrf.mxu0
      %v573 = vadd.f32 %v243, %v572
      %574 = vmatmul.bf16.gmra.mxu0 %v367
      %v575 = vpop.f32.mrf.mxu0
      %v576 = vadd.f32 %v243, %v575
      %v577 = vpop.f32.mrf.mxu0
      %v578 = vadd.f32 %v243, %v577
      %579 = vmatmul.bf16.gmra.mxu0 %v369
      %v580 = vpop.f32.mrf.mxu0
      %v581 = vadd.f32 %v243, %v580
      %v582 = vpop.f32.mrf.mxu0
      %v583 = vadd.f32 %v243, %v582
      %584 = vmatmul.bf16.gmra.mxu0 %v371
      %v585 = vpop.f32.mrf.mxu0
      %v586 = vadd.f32 %v243, %v585
      %v587 = vpop.f32.mrf.mxu0
      %v588 = vadd.f32 %v243, %v587
      %589 = vdwg.mxu0
      %590 = vmatpush.bf16.msra.mxu0 %v484
      %591 = vmatpush.bf16.msra.mxu0 %v483
      %592 = vmatpush.bf16.msra.mxu0 %v482
      %593 = vmatpush.bf16.msra.mxu0 %v481
      %594 = vmatpush.bf16.msra.mxu0 %v480
      %595 = vmatpush.bf16.msra.mxu0 %v479
      %596 = vmatpush.bf16.msra.mxu0 %v478
      %597 = vmatpush.bf16.msra.mxu0 %v477
      %598 = vmatmul.bf16.gmra.mxu0 %v342
      %v599 = vpop.f32.mrf.mxu0
      %v600 = vadd.f32 %v511, %v599
      %v601 = vpop.f32.mrf.mxu0
      %v602 = vadd.f32 %v513, %v601
      %603 = vmatmul.bf16.gmra.mxu0 %v344
      %v604 = vpop.f32.mrf.mxu0
      %v605 = vadd.f32 %v516, %v604
      %v606 = vpop.f32.mrf.mxu0
      %v607 = vadd.f32 %v518, %v606
      %608 = vmatmul.bf16.gmra.mxu0 %v346
      %v609 = vpop.f32.mrf.mxu0
      %v610 = vadd.f32 %v521, %v609
      %v611 = vpop.f32.mrf.mxu0
      %v612 = vadd.f32 %v523, %v611
      %613 = vmatmul.bf16.gmra.mxu0 %v348
      %v614 = vpop.f32.mrf.mxu0
      %v615 = vadd.f32 %v526, %v614
      %v616 = vpop.f32.mrf.mxu0
      %v617 = vadd.f32 %v528, %v616
      %618 = vmatmul.bf16.gmra.mxu0 %v350
      %v619 = vpop.f32.mrf.mxu0
      %v620 = vadd.f32 %v531, %v619
      %v621 = vpop.f32.mrf.mxu0
      %v622 = vadd.f32 %v533, %v621
      %623 = vmatmul.bf16.gmra.mxu0 %v352
      %v624 = vpop.f32.mrf.mxu0
      %v625 = vadd.f32 %v536, %v624
      %v626 = vpop.f32.mrf.mxu0
      %v627 = vadd.f32 %v538, %v626
      %628 = vmatmul.bf16.gmra.mxu0 %v354
      %v629 = vpop.f32.mrf.mxu0
      %v630 = vadd.f32 %v541, %v629
      %v631 = vpop.f32.mrf.mxu0
      %v632 = vadd.f32 %v543, %v631
      %633 = vmatmul.bf16.gmra.mxu0 %v356
      %v634 = vpop.f32.mrf.mxu0
      %v635 = vadd.f32 %v546, %v634
      %v636 = vpop.f32.mrf.mxu0
      %v637 = vadd.f32 %v548, %v636
      %638 = vmatmul.bf16.gmra.mxu0 %v358
      %v639 = vpop.f32.mrf.mxu0
      %v640 = vadd.f32 %v551, %v639
      %v641 = vpop.f32.mrf.mxu0
      %v642 = vadd.f32 %v553, %v641
      %643 = vmatmul.bf16.gmra.mxu0 %v360
      %v644 = vpop.f32.mrf.mxu0
      %v645 = vadd.f32 %v556, %v644
      %v646 = vpop.f32.mrf.mxu0
      %v647 = vadd.f32 %v558, %v646
      %648 = vmatmul.bf16.gmra.mxu0 %v362
      %v649 = vpop.f32.mrf.mxu0
      %v650 = vadd.f32 %v561, %v649
      %v651 = vpop.f32.mrf.mxu0
      %v652 = vadd.f32 %v563, %v651
      %653 = vmatmul.bf16.gmra.mxu0 %v364
      %v654 = vpop.f32.mrf.mxu0
      %v655 = vadd.f32 %v566, %v654
      %v656 = vpop.f32.mrf.mxu0
      %v657 = vadd.f32 %v568, %v656
      %658 = vmatmul.bf16.gmra.mxu0 %v366
      %v659 = vpop.f32.mrf.mxu0
      %v660 = vadd.f32 %v571, %v659
      %v661 = vpop.f32.mrf.mxu0
      %v662 = vadd.f32 %v573, %v661
      %663 = vmatmul.bf16.gmra.mxu0 %v368
      %v664 = vpop.f32.mrf.mxu0
      %v665 = vadd.f32 %v576, %v664
      %v666 = vpop.f32.mrf.mxu0
      %v667 = vadd.f32 %v578, %v666
      %668 = vmatmul.bf16.gmra.mxu0 %v370
      %v669 = vpop.f32.mrf.mxu0
      %v670 = vadd.f32 %v581, %v669
      %v671 = vpop.f32.mrf.mxu0
      %v672 = vadd.f32 %v583, %v671
      %673 = vmatmul.bf16.gmra.mxu0 %v372
      %v674 = vpop.f32.mrf.mxu0
      %v675 = vadd.f32 %v586, %v674
      %v676 = vpop.f32.mrf.mxu0
      %v677 = vadd.f32 %v588, %v676
      %678 = vdwg.mxu0
      %v679 = vmax.f32 %v600, 0.0
      %v680 = vmax.f32 %v602, 0.0
      %v681 = vmax.f32 %v605, 0.0
      %v682 = vmax.f32 %v607, 0.0
      %v683 = vmax.f32 %v610, 0.0
      %v684 = vmax.f32 %v612, 0.0
      %v685 = vmax.f32 %v615, 0.0
      %v686 = vmax.f32 %v617, 0.0
      %v687 = vmax.f32 %v620, 0.0
      %v688 = vmax.f32 %v622, 0.0
      %v689 = vmax.f32 %v625, 0.0
      %v690 = vmax.f32 %v627, 0.0
      %v691 = vmax.f32 %v630, 0.0
      %v692 = vmax.f32 %v632, 0.0
      %v693 = vmax.f32 %v635, 0.0
      %v694 = vmax.f32 %v637, 0.0
      %v695 = vmax.f32 %v640, 0.0
      %v696 = vmax.f32 %v642, 0.0
      %v697 = vmax.f32 %v645, 0.0
      %v698 = vmax.f32 %v647, 0.0
      %v699 = vmax.f32 %v650, 0.0
      %v700 = vmax.f32 %v652, 0.0
      %v701 = vmax.f32 %v655, 0.0
      %v702 = vmax.f32 %v657, 0.0
      %v703 = vmax.f32 %v660, 0.0
      %v704 = vmax.f32 %v662, 0.0
      %v705 = vmax.f32 %v665, 0.0
      %v706 = vmax.f32 %v667, 0.0
      %v707 = vmax.f32 %v670, 0.0
      %v708 = vmax.f32 %v672, 0.0
      %v709 = vmax.f32 %v675, 0.0
      %v710 = vmax.f32 %v677, 0.0
      %711 = vst [vmem:[%s175] sm:$0xff] %v679
      %712 = vst [vmem:[%s175 + $0x8] sm:$0xff] %v680
      %713 = vst [vmem:[%s175 + $0x10] sm:$0xff] %v681
      %714 = vst [vmem:[%s175 + $0x18] sm:$0xff] %v682
      %715 = vst [vmem:[%s175 + $0x20] sm:$0xff] %v683
      %716 = vst [vmem:[%s175 + $0x28] sm:$0xff] %v684
      %717 = vst [vmem:[%s175 + $0x30] sm:$0xff] %v685
      %718 = vst [vmem:[%s175 + $0x38] sm:$0xff] %v686
      %719 = vst [vmem:[%s175 + $0x40] sm:$0xff] %v687
      %720 = vst [vmem:[%s175 + $0x48] sm:$0xff] %v688
      %721 = vst [vmem:[%s175 + $0x50] sm:$0xff] %v689
      %722 = vst [vmem:[%s175 + $0x58] sm:$0xff] %v690
      %723 = vst [vmem:[%s175 + $0x60] sm:$0xff] %v691
      %724 = vst [vmem:[%s175 + $0x68] sm:$0xff] %v692
      %725 = vst [vmem:[%s175 + $0x70] sm:$0xff] %v693
      %726 = vst [vmem:[%s175 + $0x78] sm:$0xff] %v694
      %727 = vst [vmem:[%s175 + $0x80] sm:$0xff] %v695
      %728 = vst [vmem:[%s175 + $0x88] sm:$0xff] %v696
      %729 = vst [vmem:[%s175 + $0x90] sm:$0xff] %v697
      %730 = vst [vmem:[%s175 + $0x98] sm:$0xff] %v698
      %731 = vst [vmem:[%s175 + $0xa0] sm:$0xff] %v699
      %732 = vst [vmem:[%s175 + $0xa8] sm:$0xff] %v700
      %733 = vst [vmem:[%s175 + $0xb0] sm:$0xff] %v701
      %734 = vst [vmem:[%s175 + $0xb8] sm:$0xff] %v702
      %735 = vst [vmem:[%s175 + $0xc0] sm:$0xff] %v703
      %736 = vst [vmem:[%s175 + $0xc8] sm:$0xff] %v704
      %737 = vst [vmem:[%s175 + $0xd0] sm:$0xff] %v705
      %738 = vst [vmem:[%s175 + $0xd8] sm:$0xff] %v706
      %739 = vst [vmem:[%s175 + $0xe0] sm:$0xff] %v707
      %740 = vst [vmem:[%s175 + $0xe8] sm:$0xff] %v708
      %741 = vst [vmem:[%s175 + $0xf0] sm:$0xff] %v709
      %742 = vst [vmem:[%s175 + $0xf8] sm:$0xff] %v710
      %s743 = smul.u32 32, %s14
      %p744 = scmp.lt.s32.totalorder %s743, 63
      %s745 = scalar_select %p744, %s743, 63
      %s746 = smul.addr %s745, 8
      %s747 = scalar_lea.vmem %s3, %s746
      // Predicated region
      $region33: #{resnet_dilated_forward.15} parent=31 // pred_check
        %p748 = pneg %p100
      $region34: #{resnet_dilated_forward.15} parent=31 // pred_check_branch
        %750 = sbr.rel (%p748) target = $region36
      $region35: #{resnet_dilated_forward.15} parent=31 // pred_region
        %s751 = smul.u32 32, %s14
      $region36: #{resnet_dilated_forward.15} parent=31 // pred_fallthru
        _
    $region32: #{resnet_dilated_forward.15} parent=5 // pred_fallthru
      _
    %p752 = scmp.le.s32.totalorder 2, %s9
    // Predicated region
    $region37: #{resnet_dilated_forward.15} parent=5 // pred_check
      %p753 = pneg %p752
    $region38: #{resnet_dilated_forward.15} parent=5 // pred_check_branch
      %755 = sbr.rel (%p753) target = $region40
    $region39: #{resnet_dilated_forward.15} parent=5 // pred_region
      %s756 = ssub.s32 %s9, 2
      // Predicated region
      $region41: #{resnet_dilated_forward.15} parent=39 // pred_check
        %p757 = pneg %p106
      $region42: #{resnet_dilated_forward.15} parent=39 // pred_check_branch
        %759 = sbr.rel (%p757) target = $region44
      $region43: #{resnet_dilated_forward.15} parent=39 // pred_region
        %s760 = smul.u32 32, %s15
        %p761 = scmp.lt.s32.totalorder %s760, 63
        %s762 = scalar_select %p761, %s760, 63
        %s763 = smul.addr %s762, 8
        %s764 = scalar_lea.vmem %s3, %s763
      $region44: #{resnet_dilated_forward.15} parent=39 // pred_fallthru
        _
    $region40: #{resnet_dilated_forward.15} parent=5 // pred_fallthru
      _
  $region6: #{resnet_dilated_forward.15} parent=0 // loop_footer
    %s13 = sadd.s32 1, %s9
  $region7: #{resnet_dilated_forward.15} parent=0 // loop_footer_branch
    %8 = sbr.rel target = $region3
  $region8: #{resnet_dilated_forward.15} parent=0 // loop_exit
    _

// kernel: resnet_dilated_forward.16
$region0: #{resnet_dilated_forward.16}
  #allocation0 [shape = 'u32[]', space=smem, size = 0x4, offset = 0x4, fixed_abs, tag = 'smem constant byte address 0x4 - core index']
  #allocation1 [shape = 'u32[72,128]{1,0:T(1,128)}', space=vmem, size = 0x9000, scoped, tag = 'internal scratch']
  %s0 = inlined_call_operand.vmem [shape: f32[128,9,128], index: 0, kind: input, shape index: {}]
  %s1 = inlined_call_operand.vmem [shape: f32[128,128], index: 1, kind: output, shape index: {}]
  %s2 = sld [smem:[#allocation0]]
  $region37: #{resnet_dilated_forward.16} parent=0
    _
  %s4 = ssub.s32 1, %s2
  %s5 = scalar_select 0, %s4, %s2
  loop: start=0, step=1, limit=4
  $region2: #{resnet_dilated_forward.16} parent=0 // loop_pre_header
    _
  $region3: #{resnet_dilated_forward.16} parent=0 // loop_header
    %s7 = sphi 0, %s11
    %p8 = scmp.ge.s32.totalorder %s7, 4
    %s17 = sphi 0, %s19
    %s20 = sphi 0, %s17
    %s21 = sphi 0, %s20
    %s37 = sphi 0, %s21
    %s43 = sphi 0, %s45
    %s46 = sphi 0, %s43
    %s47 = sphi 0, %s46
    %s63 = sphi 0, %s47
  $region4: #{resnet_dilated_forward.16} parent=0 // loop_header_branch
    %10 = sbr.rel (%p8) target = $region8
  $region5: #{resnet_dilated_forward.16} parent=0 // loop_body
    %s12 = ssub.s32 %s7, 1
    %s13 = ssub.s32 %s7, 2
    %s14 = sadd.s32 %s7, 1
    %s15 = ssub.s32 %s7, %s14
    %p16 = scmp.eq.s32.totalorder %s15, 0
    %s18 = sadd.s32 %s17, 1
    %s19 = scalar_select %p16, %s17, %s18
    %p22 = pneg %p16
    %p23 = scmp.eq.s32.totalorder %s7, 1
    %p24 = por %p22, %p23
    %p25 = scmp.ne.s32.totalorder %s17, %s20
    %p26 = scmp.eq.s32.totalorder %s7, 0
    %p27 = por %p25, %p26
    %p28 = scmp.ne.s32.totalorder %s17, %s20
    %p29 = scmp.eq.s32.totalorder %s12, 1
    %p30 = por %p28, %p29
    %p31 = scmp.ne.s32.totalorder %s20, %s21
    %p32 = scmp.eq.s32.totalorder %s12, 0
    %p33 = por %p31, %p32
    %p34 = scmp.ne.s32.totalorder %s20, %s21
    %p35 = scmp.eq.s32.totalorder %s13, 1
    %p36 = por %p34, %p35
    %p38 = scmp.ne.s32.totalorder %s21, %s37
    %p39 = scmp.eq.s32.totalorder %s13, 0
    %p40 = por %p38, %p39
    %s41 = ssub.s32 %s7, %s14
    %p42 = scmp.eq.s32.totalorder %s41, 0
    %s44 = sadd.s32 %s43, 1
    %s45 = scalar_select %p42, %s43, %s44
    %p48 = pneg %p42
    %p49 = scmp.eq.s32.totalorder %s7, 1
    %p50 = por %p48, %p49
    %p51 = scmp.ne.s32.totalorder %s43, %s46
    %p52 = scmp.eq.s32.totalorder %s7, 0
    %p53 = por %p51, %p52
    %p54 = scmp.ne.s32.totalorder %s43, %s46
    %p55 = scmp.eq.s32.totalorder %s12, 1
    %p56 = por %p54, %p55
    %p57 = scmp.ne.s32.totalorder %s46, %s47
    %p58 = scmp.eq.s32.totalorder %s12, 0
    %p59 = por %p57, %p58
    %p60 = scmp.ne.s32.totalorder %s46, %s47
    %p61 = scmp.eq.s32.totalorder %s13, 1
    %p62 = por %p60, %p61
    %p64 = scmp.ne.s32.totalorder %s47, %s63
    %p65 = scmp.eq.s32.totalorder %s13, 0
    %p66 = por %p64, %p65
    %p67 = scmp.le.s32.totalorder 1, %s7
    %p68 = scmp.lt.s32.totalorder %s7, 3
    %p69 = pnand %p67, %p68
    %p70 = pneg %p69
    // Predicated region
    $region9: #{resnet_dilated_forward.16} parent=5 // pred_check
      _
    $region10: #{resnet_dilated_forward.16} parent=5 // pred_check_branch
      %72 = sbr.rel (%p69) target = $region12
    $region11: #{resnet_dilated_forward.16} parent=5 // pred_region
      %s73 = ssub.s32 %s7, 1
    $region12: #{resnet_dilated_forward.16} parent=5 // pred_fallthru
      _
    %p74 = scmp.lt.s32.totalorder %s7, 2
    // Predicated region
    $region13: #{resnet_dilated_forward.16} parent=5 // pred_check
      %p75 = pneg %p74
    $region14: #{resnet_dilated_forward.16} parent=5 // pred_check_branch
      %77 = sbr.rel (%p75) target = $region16
    $region15: #{resnet_dilated_forward.16} parent=5 // pred_region
      // Predicated region
      $region17: #{resnet_dilated_forward.16} parent=15 // pred_check
        %p78 = pneg %p27
      $region18: #{resnet_dilated_forward.16} parent=15 // pred_check_branch
        %80 = sbr.rel (%p78) target = $region20
      $region19: #{resnet_dilated_forward.16} parent=15 // pred_region
        %s81 = smul.u32 64, %s7
        %p82 = scmp.lt.s32.totalorder %s81, 127
        %s83 = scalar_select %p82, %s81, 127
        %s84 = smul.addr %s83, 2
        %s85 = smul.addr %s84, 8
        %s86 = scalar_lea.vmem %s0, %s85
        %s87 = smul.u32 64, %s7
      $region20: #{resnet_dilated_forward.16} parent=15 // pred_fallthru
        _
    $region16: #{resnet_dilated_forward.16} parent=5 // pred_fallthru
      _
    %p88 = scmp.le.s32.totalorder 1, %s7
    %p89 = scmp.lt.s32.totalorder %s7, 3
    %p90 = pnand %p88, %p89
    %p91 = pneg %p90
    // Predicated region
    $region21: #{resnet_dilated_forward.16} parent=5 // pred_check
      _
    $region22: #{resnet_dilated_forward.16} parent=5 // pred_check_branch
      %93 = sbr.rel (%p90) target = $region24
    $region23: #{resnet_dilated_forward.16} parent=5 // pred_region
      %s94 = ssub.s32 %s7, 1
      %s95 = smul.u32 64, %s12
      %p96 = scmp.lt.s32.totalorder %s95, 127
      %s97 = scalar_select %p96, %s95, 127
      %s98 = smul.addr %s97, 2
      %s99 = smul.addr %s98, 8
      %s100 = scalar_lea.vmem %s0, %s99
      %p101 = pneg %p33
      %p102 = pneg %p30
      %p103 = pneg %p59
      %p104 = pneg %p56
      %s105 = smul.u32 8, %s12
      %p106 = scmp.lt.s32.totalorder %s105, 15
      %s107 = scalar_select %p106, %s105, 15
      %s108 = smul.addr %s107, 8
      %s109 = scalar_lea.vmem %s1, %s108
      %s110 = smul.u32 64, %s12
      %p111 = scmp.lt.s32.totalorder %s110, 127
      %s112 = scalar_select %p111, %s110, 127
      %s113 = smul.addr %s112, 2
      %s114 = smul.addr %s113, 8
      %s115 = scalar_lea.vmem %s0, %s114
      %s116 = smul.u32 64, %s12
      %s117 = smul.u32 8, %s12
      %p118 = scmp.lt.s32.totalorder %s117, 15
      %s119 = scalar_select %p118, %s117, 15
      %s120 = smul.addr %s119, 8
      %s121 = scalar_lea.vmem %s1, %s120
      %s122 = smul.u32 8, %s12
      %v123 = vld [vmem:[%s115] sm:$0x1]
      %v124 = vld [vmem:[%s115 + $0x10] sm:$0x1]
      %v125 = vld [vmem:[%s115 + $0x20] sm:$0x1]
      %v126 = vld [vmem:[%s115 + $0x30] sm:$0x1]
      %v127 = vld [vmem:[%s115 + $0x40] sm:$0x1]
      %v128 = vld [vmem:[%s115 + $0x50] sm:$0x1]
      %v129 = vld [vmem:[%s115 + $0x60] sm:$0x1]
      %v130 = vld [vmem:[%s115 + $0x70] sm:$0x1]
      %v131 = vld [vmem:[%s115 + $0x80] sm:$0x1]
      %v132 = vld [vmem:[%s115 + $0x90] sm:$0x1]
      %v133 = vld [vmem:[%s115 + $0xa0] sm:$0x1]
      %v134 = vld [vmem:[%s115 + $0xb0] sm:$0x1]
      %v135 = vld [vmem:[%s115 + $0xc0] sm:$0x1]
      %v136 = vld [vmem:[%s115 + $0xd0] sm:$0x1]
      %v137 = vld [vmem:[%s115 + $0xe0] sm:$0x1]
      %v138 = vld [vmem:[%s115 + $0xf0] sm:$0x1]
      %v139 = vld [vmem:[%s115 + $0x100] sm:$0x1]
      %v140 = vld [vmem:[%s115 + $0x110] sm:$0x1]
      %v141 = vld [vmem:[%s115 + $0x120] sm:$0x1]
      %v142 = vld [vmem:[%s115 + $0x130] sm:$0x1]
      %v143 = vld [vmem:[%s115 + $0x140] sm:$0x1]
      %v144 = vld [vmem:[%s115 + $0x150] sm:$0x1]
      %v145 = vld [vmem:[%s115 + $0x160] sm:$0x1]
      %v146 = vld [vmem:[%s115 + $0x170] sm:$0x1]
      %v147 = vld [vmem:[%s115 + $0x180] sm:$0x1]
      %v148 = vld [vmem:[%s115 + $0x190] sm:$0x1]
      %v149 = vld [vmem:[%s115 + $0x1a0] sm:$0x1]
      %v150 = vld [vmem:[%s115 + $0x1b0] sm:$0x1]
      %v151 = vld [vmem:[%s115 + $0x1c0] sm:$0x1]
      %v152 = vld [vmem:[%s115 + $0x1d0] sm:$0x1]
      %v153 = vld [vmem:[%s115 + $0x1e0] sm:$0x1]
      %v154 = vld [vmem:[%s115 + $0x1f0] sm:$0x1]
      %v155 = vld [vmem:[%s115 + $0x200] sm:$0x1]
      %v156 = vld [vmem:[%s115 + $0x210] sm:$0x1]
      %v157 = vld [vmem:[%s115 + $0x220] sm:$0x1]
      %v158 = vld [vmem:[%s115 + $0x230] sm:$0x1]
      %v159 = vld [vmem:[%s115 + $0x240] sm:$0x1]
      %v160 = vld [vmem:[%s115 + $0x250] sm:$0x1]
      %v161 = vld [vmem:[%s115 + $0x260] sm:$0x1]
      %v162 = vld [vmem:[%s115 + $0x270] sm:$0x1]
      %v163 = vld [vmem:[%s115 + $0x280] sm:$0x1]
      %v164 = vld [vmem:[%s115 + $0x290] sm:$0x1]
      %v165 = vld [vmem:[%s115 + $0x2a0] sm:$0x1]
      %v166 = vld [vmem:[%s115 + $0x2b0] sm:$0x1]
      %v167 = vld [vmem:[%s115 + $0x2c0] sm:$0x1]
      %v168 = vld [vmem:[%s115 + $0x2d0] sm:$0x1]
      %v169 = vld [vmem:[%s115 + $0x2e0] sm:$0x1]
      %v170 = vld [vmem:[%s115 + $0x2f0] sm:$0x1]
      %v171 = vld [vmem:[%s115 + $0x300] sm:$0x1]
      %v172 = vld [vmem:[%s115 + $0x310] sm:$0x1]
      %v173 = vld [vmem:[%s115 + $0x320] sm:$0x1]
      %v174 = vld [vmem:[%s115 + $0x330] sm:$0x1]
      %v175 = vld [vmem:[%s115 + $0x340] sm:$0x1]
      %v176 = vld [vmem:[%s115 + $0x350] sm:$0x1]
      %v177 = vld [vmem:[%s115 + $0x360] sm:$0x1]
      %v178 = vld [vmem:[%s115 + $0x370] sm:$0x1]
      %v179 = vld [vmem:[%s115 + $0x380] sm:$0x1]
      %v180 = vld [vmem:[%s115 + $0x390] sm:$0x1]
      %v181 = vld [vmem:[%s115 + $0x3a0] sm:$0x1]
      %v182 = vld [vmem:[%s115 + $0x3b0] sm:$0x1]
      %v183 = vld [vmem:[%s115 + $0x3c0] sm:$0x1]
      %v184 = vld [vmem:[%s115 + $0x3d0] sm:$0x1]
      %v185 = vld [vmem:[%s115 + $0x3e0] sm:$0x1]
      %v186 = vld [vmem:[%s115 + $0x3f0] sm:$0x1]
      %v187 = vld [vmem:[%s115 + $0x1] sm:$0x1]
      %v188 = vld [vmem:[%s115 + $0x11] sm:$0x1]
      %v189 = vld [vmem:[%s115 + $0x21] sm:$0x1]
      %v190 = vld [vmem:[%s115 + $0x31] sm:$0x1]
      %v191 = vld [vmem:[%s115 + $0x41] sm:$0x1]
      %v192 = vld [vmem:[%s115 + $0x51] sm:$0x1]
      %v193 = vld [vmem:[%s115 + $0x61] sm:$0x1]
      %v194 = vld [vmem:[%s115 + $0x71] sm:$0x1]
      %v195 = vld [vmem:[%s115 + $0x81] sm:$0x1]
      %v196 = vld [vmem:[%s115 + $0x91] sm:$0x1]
      %v197 = vld [vmem:[%s115 + $0xa1] sm:$0x1]
      %v198 = vld [vmem:[%s115 + $0xb1] sm:$0x1]
      %v199 = vld [vmem:[%s115 + $0xc1] sm:$0x1]
      %v200 = vld [vmem:[%s115 + $0xd1] sm:$0x1]
      %v201 = vld [vmem:[%s115 + $0xe1] sm:$0x1]
      %v202 = vld [vmem:[%s115 + $0xf1] sm:$0x1]
      %v203 = vld [vmem:[%s115 + $0x101] sm:$0x1]
      %v204 = vld [vmem:[%s115 + $0x111] sm:$0x1]
      %v205 = vld [vmem:[%s115 + $0x121] sm:$0x1]
      %v206 = vld [vmem:[%s115 + $0x131] sm:$0x1]
      %v207 = vld [vmem:[%s115 + $0x141] sm:$0x1]
      %v208 = vld [vmem:[%s115 + $0x151] sm:$0x1]
      %v209 = vld [vmem:[%s115 + $0x161] sm:$0x1]
      %v210 = vld [vmem:[%s115 + $0x171] sm:$0x1]
      %v211 = vld [vmem:[%s115 + $0x181] sm:$0x1]
      %v212 = vld [vmem:[%s115 + $0x191] sm:$0x1]
      %v213 = vld [vmem:[%s115 + $0x1a1] sm:$0x1]
      %v214 = vld [vmem:[%s115 + $0x1b1] sm:$0x1]
      %v215 = vld [vmem:[%s115 + $0x1c1] sm:$0x1]
      %v216 = vld [vmem:[%s115 + $0x1d1] sm:$0x1]
      %v217 = vld [vmem:[%s115 + $0x1e1] sm:$0x1]
      %v218 = vld [vmem:[%s115 + $0x1f1] sm:$0x1]
      %v219 = vld [vmem:[%s115 + $0x201] sm:$0x1]
      %v220 = vld [vmem:[%s115 + $0x211] sm:$0x1]
      %v221 = vld [vmem:[%s115 + $0x221] sm:$0x1]
      %v222 = vld [vmem:[%s115 + $0x231] sm:$0x1]
      %v223 = vld [vmem:[%s115 + $0x241] sm:$0x1]
      %v224 = vld [vmem:[%s115 + $0x251] sm:$0x1]
      %v225 = vld [vmem:[%s115 + $0x261] sm:$0x1]
      %v226 = vld [vmem:[%s115 + $0x271] sm:$0x1]
      %v227 = vld [vmem:[%s115 + $0x281] sm:$0x1]
      %v228 = vld [vmem:[%s115 + $0x291] sm:$0x1]
      %v229 = vld [vmem:[%s115 + $0x2a1] sm:$0x1]
      %v230 = vld [vmem:[%s115 + $0x2b1] sm:$0x1]
      %v231 = vld [vmem:[%s115 + $0x2c1] sm:$0x1]
      %v232 = vld [vmem:[%s115 + $0x2d1] sm:$0x1]
      %v233 = vld [vmem:[%s115 + $0x2e1] sm:$0x1]
      %v234 = vld [vmem:[%s115 + $0x2f1] sm:$0x1]
      %v235 = vld [vmem:[%s115 + $0x301] sm:$0x1]
      %v236 = vld [vmem:[%s115 + $0x311] sm:$0x1]
      %v237 = vld [vmem:[%s115 + $0x321] sm:$0x1]
      %v238 = vld [vmem:[%s115 + $0x331] sm:$0x1]
      %v239 = vld [vmem:[%s115 + $0x341] sm:$0x1]
      %v240 = vld [vmem:[%s115 + $0x351] sm:$0x1]
      %v241 = vld [vmem:[%s115 + $0x361] sm:$0x1]
      %v242 = vld [vmem:[%s115 + $0x371] sm:$0x1]
      %v243 = vld [vmem:[%s115 + $0x381] sm:$0x1]
      %v244 = vld [vmem:[%s115 + $0x391] sm:$0x1]
      %v245 = vld [vmem:[%s115 + $0x3a1] sm:$0x1]
      %v246 = vld [vmem:[%s115 + $0x3b1] sm:$0x1]
      %v247 = vld [vmem:[%s115 + $0x3c1] sm:$0x1]
      %v248 = vld [vmem:[%s115 + $0x3d1] sm:$0x1]
      %v249 = vld [vmem:[%s115 + $0x3e1] sm:$0x1]
      %v250 = vld [vmem:[%s115 + $0x3f1] sm:$0x1]
      %v251 = vmax.f32 %v123, %v187
      %v252 = vmax.f32 %v124, %v188
      %v253 = vmax.f32 %v125, %v189
      %v254 = vmax.f32 %v126, %v190
      %v255 = vmax.f32 %v127, %v191
      %v256 = vmax.f32 %v128, %v192
      %v257 = vmax.f32 %v129, %v193
      %v258 = vmax.f32 %v130, %v194
      %v259 = vmax.f32 %v131, %v195
      %v260 = vmax.f32 %v132, %v196
      %v261 = vmax.f32 %v133, %v197
      %v262 = vmax.f32 %v134, %v198
      %v263 = vmax.f32 %v135, %v199
      %v264 = vmax.f32 %v136, %v200
      %v265 = vmax.f32 %v137, %v201
      %v266 = vmax.f32 %v138, %v202
      %v267 = vmax.f32 %v139, %v203
      %v268 = vmax.f32 %v140, %v204
      %v269 = vmax.f32 %v141, %v205
      %v270 = vmax.f32 %v142, %v206
      %v271 = vmax.f32 %v143, %v207
      %v272 = vmax.f32 %v144, %v208
      %v273 = vmax.f32 %v145, %v209
      %v274 = vmax.f32 %v146, %v210
      %v275 = vmax.f32 %v147, %v211
      %v276 = vmax.f32 %v148, %v212
      %v277 = vmax.f32 %v149, %v213
      %v278 = vmax.f32 %v150, %v214
      %v279 = vmax.f32 %v151, %v215
      %v280 = vmax.f32 %v152, %v216
      %v281 = vmax.f32 %v153, %v217
      %v282 = vmax.f32 %v154, %v218
      %v283 = vmax.f32 %v155, %v219
      %v284 = vmax.f32 %v156, %v220
      %v285 = vmax.f32 %v157, %v221
      %v286 = vmax.f32 %v158, %v222
      %v287 = vmax.f32 %v159, %v223
      %v288 = vmax.f32 %v160, %v224
      %v289 = vmax.f32 %v161, %v225
      %v290 = vmax.f32 %v162, %v226
      %v291 = vmax.f32 %v163, %v227
      %v292 = vmax.f32 %v164, %v228
      %v293 = vmax.f32 %v165, %v229
      %v294 = vmax.f32 %v166, %v230
      %v295 = vmax.f32 %v167, %v231
      %v296 = vmax.f32 %v168, %v232
      %v297 = vmax.f32 %v169, %v233
      %v298 = vmax.f32 %v170, %v234
      %v299 = vmax.f32 %v171, %v235
      %v300 = vmax.f32 %v172, %v236
      %v301 = vmax.f32 %v173, %v237
      %v302 = vmax.f32 %v174, %v238
      %v303 = vmax.f32 %v175, %v239
      %v304 = vmax.f32 %v176, %v240
      %v305 = vmax.f32 %v177, %v241
      %v306 = vmax.f32 %v178, %v242
      %v307 = vmax.f32 %v179, %v243
      %v308 = vmax.f32 %v180, %v244
      %v309 = vmax.f32 %v181, %v245
      %v310 = vmax.f32 %v182, %v246
      %v311 = vmax.f32 %v183, %v247
      %v312 = vmax.f32 %v184, %v248
      %v313 = vmax.f32 %v185, %v249
      %v314 = vmax.f32 %v186, %v250
      %v315 = vld [vmem:[%s115 + $0x2] sm:$0x1]
      %v316 = vld [vmem:[%s115 + $0x12] sm:$0x1]
      %v317 = vld [vmem:[%s115 + $0x22] sm:$0x1]
      %v318 = vld [vmem:[%s115 + $0x32] sm:$0x1]
      %v319 = vld [vmem:[%s115 + $0x42] sm:$0x1]
      %v320 = vld [vmem:[%s115 + $0x52] sm:$0x1]
      %v321 = vld [vmem:[%s115 + $0x62] sm:$0x1]
      %v322 = vld [vmem:[%s115 + $0x72] sm:$0x1]
      %v323 = vld [vmem:[%s115 + $0x82] sm:$0x1]
      %v324 = vld [vmem:[%s115 + $0x92] sm:$0x1]
      %v325 = vld [vmem:[%s115 + $0xa2] sm:$0x1]
      %v326 = vld [vmem:[%s115 + $0xb2] sm:$0x1]
      %v327 = vld [vmem:[%s115 + $0xc2] sm:$0x1]
      %v328 = vld [vmem:[%s115 + $0xd2] sm:$0x1]
      %v329 = vld [vmem:[%s115 + $0xe2] sm:$0x1]
      %v330 = vld [vmem:[%s115 + $0xf2] sm:$0x1]
      %v331 = vld [vmem:[%s115 + $0x102] sm:$0x1]
      %v332 = vld [vmem:[%s115 + $0x112] sm:$0x1]
      %v333 = vld [vmem:[%s115 + $0x122] sm:$0x1]
      %v334 = vld [vmem:[%s115 + $0x132] sm:$0x1]
      %v335 = vld [vmem:[%s115 + $0x142] sm:$0x1]
      %v336 = vld [vmem:[%s115 + $0x152] sm:$0x1]
      %v337 = vld [vmem:[%s115 + $0x162] sm:$0x1]
      %v338 = vld [vmem:[%s115 + $0x172] sm:$0x1]
      %v339 = vld [vmem:[%s115 + $0x182] sm:$0x1]
      %v340 = vld [vmem:[%s115 + $0x192] sm:$0x1]
      %v341 = vld [vmem:[%s115 + $0x1a2] sm:$0x1]
      %v342 = vld [vmem:[%s115 + $0x1b2] sm:$0x1]
      %v343 = vld [vmem:[%s115 + $0x1c2] sm:$0x1]
      %v344 = vld [vmem:[%s115 + $0x1d2] sm:$0x1]
      %v345 = vld [vmem:[%s115 + $0x1e2] sm:$0x1]
      %v346 = vld [vmem:[%s115 + $0x1f2] sm:$0x1]
      %v347 = vld [vmem:[%s115 + $0x202] sm:$0x1]
      %v348 = vld [vmem:[%s115 + $0x212] sm:$0x1]
      %v349 = vld [vmem:[%s115 + $0x222] sm:$0x1]
      %v350 = vld [vmem:[%s115 + $0x232] sm:$0x1]
      %v351 = vld [vmem:[%s115 + $0x242] sm:$0x1]
      %v352 = vld [vmem:[%s115 + $0x252] sm:$0x1]
      %v353 = vld [vmem:[%s115 + $0x262] sm:$0x1]
      %v354 = vld [vmem:[%s115 + $0x272] sm:$0x1]
      %v355 = vld [vmem:[%s115 + $0x282] sm:$0x1]
      %v356 = vld [vmem:[%s115 + $0x292] sm:$0x1]
      %v357 = vld [vmem:[%s115 + $0x2a2] sm:$0x1]
      %v358 = vld [vmem:[%s115 + $0x2b2] sm:$0x1]
      %v359 = vld [vmem:[%s115 + $0x2c2] sm:$0x1]
      %v360 = vld [vmem:[%s115 + $0x2d2] sm:$0x1]
      %v361 = vld [vmem:[%s115 + $0x2e2] sm:$0x1]
      %v362 = vld [vmem:[%s115 + $0x2f2] sm:$0x1]
      %v363 = vld [vmem:[%s115 + $0x302] sm:$0x1]
      %v364 = vld [vmem:[%s115 + $0x312] sm:$0x1]
      %v365 = vld [vmem:[%s115 + $0x322] sm:$0x1]
      %v366 = vld [vmem:[%s115 + $0x332] sm:$0x1]
      %v367 = vld [vmem:[%s115 + $0x342] sm:$0x1]
      %v368 = vld [vmem:[%s115 + $0x352] sm:$0x1]
      %v369 = vld [vmem:[%s115 + $0x362] sm:$0x1]
      %v370 = vld [vmem:[%s115 + $0x372] sm:$0x1]
      %v371 = vld [vmem:[%s115 + $0x382] sm:$0x1]
      %v372 = vld [vmem:[%s115 + $0x392] sm:$0x1]
      %v373 = vld [vmem:[%s115 + $0x3a2] sm:$0x1]
      %v374 = vld [vmem:[%s115 + $0x3b2] sm:$0x1]
      %v375 = vld [vmem:[%s115 + $0x3c2] sm:$0x1]
      %v376 = vld [vmem:[%s115 + $0x3d2] sm:$0x1]
      %v377 = vld [vmem:[%s115 + $0x3e2] sm:$0x1]
      %v378 = vld [vmem:[%s115 + $0x3f2] sm:$0x1]
      %v379 = vmax.f32 %v251, %v315
      %v380 = vmax.f32 %v252, %v316
      %v381 = vmax.f32 %v253, %v317
      %v382 = vmax.f32 %v254, %v318
      %v383 = vmax.f32 %v255, %v319
      %v384 = vmax.f32 %v256, %v320
      %v385 = vmax.f32 %v257, %v321
      %v386 = vmax.f32 %v258, %v322
      %v387 = vmax.f32 %v259, %v323
      %v388 = vmax.f32 %v260, %v324
      %v389 = vmax.f32 %v261, %v325
      %v390 = vmax.f32 %v262, %v326
      %v391 = vmax.f32 %v263, %v327
      %v392 = vmax.f32 %v264, %v328
      %v393 = vmax.f32 %v265, %v329
      %v394 = vmax.f32 %v266, %v330
      %v395 = vmax.f32 %v267, %v331
      %v396 = vmax.f32 %v268, %v332
      %v397 = vmax.f32 %v269, %v333
      %v398 = vmax.f32 %v270, %v334
      %v399 = vmax.f32 %v271, %v335
      %v400 = vmax.f32 %v272, %v336
      %v401 = vmax.f32 %v273, %v337
      %v402 = vmax.f32 %v274, %v338
      %v403 = vmax.f32 %v275, %v339
      %v404 = vmax.f32 %v276, %v340
      %v405 = vmax.f32 %v277, %v341
      %v406 = vmax.f32 %v278, %v342
      %v407 = vmax.f32 %v279, %v343
      %v408 = vmax.f32 %v280, %v344
      %v409 = vmax.f32 %v281, %v345
      %v410 = vmax.f32 %v282, %v346
      %v411 = vmax.f32 %v283, %v347
      %v412 = vmax.f32 %v284, %v348
      %v413 = vmax.f32 %v285, %v349
      %v414 = vmax.f32 %v286, %v350
      %v415 = vmax.f32 %v287, %v351
      %v416 = vmax.f32 %v288, %v352
      %v417 = vmax.f32 %v289, %v353
      %v418 = vmax.f32 %v290, %v354
      %v419 = vmax.f32 %v291, %v355
      %v420 = vmax.f32 %v292, %v356
      %v421 = vmax.f32 %v293, %v357
      %v422 = vmax.f32 %v294, %v358
      %v423 = vmax.f32 %v295, %v359
      %v424 = vmax.f32 %v296, %v360
      %v425 = vmax.f32 %v297, %v361
      %v426 = vmax.f32 %v298, %v362
      %v427 = vmax.f32 %v299, %v363
      %v428 = vmax.f32 %v300, %v364
      %v429 = vmax.f32 %v301, %v365
      %v430 = vmax.f32 %v302, %v366
      %v431 = vmax.f32 %v303, %v367
      %v432 = vmax.f32 %v304, %v368
      %v433 = vmax.f32 %v305, %v369
      %v434 = vmax.f32 %v306, %v370
      %v435 = vmax.f32 %v307, %v371
      %v436 = vmax.f32 %v308, %v372
      %v437 = vmax.f32 %v309, %v373
      %v438 = vmax.f32 %v310, %v374
      %v439 = vmax.f32 %v311, %v375
      %v440 = vmax.f32 %v312, %v376
      %v441 = vmax.f32 %v313, %v377
      %v442 = vmax.f32 %v314, %v378
      %v443 = vld [vmem:[%s115 + $0x3] sm:$0x1]
      %v444 = vld [vmem:[%s115 + $0x13] sm:$0x1]
      %v445 = vld [vmem:[%s115 + $0x23] sm:$0x1]
      %v446 = vld [vmem:[%s115 + $0x33] sm:$0x1]
      %v447 = vld [vmem:[%s115 + $0x43] sm:$0x1]
      %v448 = vld [vmem:[%s115 + $0x53] sm:$0x1]
      %v449 = vld [vmem:[%s115 + $0x63] sm:$0x1]
      %v450 = vld [vmem:[%s115 + $0x73] sm:$0x1]
      %v451 = vld [vmem:[%s115 + $0x83] sm:$0x1]
      %v452 = vld [vmem:[%s115 + $0x93] sm:$0x1]
      %v453 = vld [vmem:[%s115 + $0xa3] sm:$0x1]
      %v454 = vld [vmem:[%s115 + $0xb3] sm:$0x1]
      %v455 = vld [vmem:[%s115 + $0xc3] sm:$0x1]
      %v456 = vld [vmem:[%s115 + $0xd3] sm:$0x1]
      %v457 = vld [vmem:[%s115 + $0xe3] sm:$0x1]
      %v458 = vld [vmem:[%s115 + $0xf3] sm:$0x1]
      %v459 = vld [vmem:[%s115 + $0x103] sm:$0x1]
      %v460 = vld [vmem:[%s115 + $0x113] sm:$0x1]
      %v461 = vld [vmem:[%s115 + $0x123] sm:$0x1]
      %v462 = vld [vmem:[%s115 + $0x133] sm:$0x1]
      %v463 = vld [vmem:[%s115 + $0x143] sm:$0x1]
      %v464 = vld [vmem:[%s115 + $0x153] sm:$0x1]
      %v465 = vld [vmem:[%s115 + $0x163] sm:$0x1]
      %v466 = vld [vmem:[%s115 + $0x173] sm:$0x1]
      %v467 = vld [vmem:[%s115 + $0x183] sm:$0x1]
      %v468 = vld [vmem:[%s115 + $0x193] sm:$0x1]
      %v469 = vld [vmem:[%s115 + $0x1a3] sm:$0x1]
      %v470 = vld [vmem:[%s115 + $0x1b3] sm:$0x1]
      %v471 = vld [vmem:[%s115 + $0x1c3] sm:$0x1]
      %v472 = vld [vmem:[%s115 + $0x1d3] sm:$0x1]
      %v473 = vld [vmem:[%s115 + $0x1e3] sm:$0x1]
      %v474 = vld [vmem:[%s115 + $0x1f3] sm:$0x1]
      %v475 = vld [vmem:[%s115 + $0x203] sm:$0x1]
      %v476 = vld [vmem:[%s115 + $0x213] sm:$0x1]
      %v477 = vld [vmem:[%s115 + $0x223] sm:$0x1]
      %v478 = vld [vmem:[%s115 + $0x233] sm:$0x1]
      %v479 = vld [vmem:[%s115 + $0x243] sm:$0x1]
      %v480 = vld [vmem:[%s115 + $0x253] sm:$0x1]
      %v481 = vld [vmem:[%s115 + $0x263] sm:$0x1]
      %v482 = vld [vmem:[%s115 + $0x273] sm:$0x1]
      %v483 = vld [vmem:[%s115 + $0x283] sm:$0x1]
      %v484 = vld [vmem:[%s115 + $0x293] sm:$0x1]
      %v485 = vld [vmem:[%s115 + $0x2a3] sm:$0x1]
      %v486 = vld [vmem:[%s115 + $0x2b3] sm:$0x1]
      %v487 = vld [vmem:[%s115 + $0x2c3] sm:$0x1]
      %v488 = vld [vmem:[%s115 + $0x2d3] sm:$0x1]
      %v489 = vld [vmem:[%s115 + $0x2e3] sm:$0x1]
      %v490 = vld [vmem:[%s115 + $0x2f3] sm:$0x1]
      %v491 = vld [vmem:[%s115 + $0x303] sm:$0x1]
      %v492 = vld [vmem:[%s115 + $0x313] sm:$0x1]
      %v493 = vld [vmem:[%s115 + $0x323] sm:$0x1]
      %v494 = vld [vmem:[%s115 + $0x333] sm:$0x1]
      %v495 = vld [vmem:[%s115 + $0x343] sm:$0x1]
      %v496 = vld [vmem:[%s115 + $0x353] sm:$0x1]
      %v497 = vld [vmem:[%s115 + $0x363] sm:$0x1]
      %v498 = vld [vmem:[%s115 + $0x373] sm:$0x1]
      %v499 = vld [vmem:[%s115 + $0x383] sm:$0x1]
      %v500 = vld [vmem:[%s115 + $0x393] sm:$0x1]
      %v501 = vld [vmem:[%s115 + $0x3a3] sm:$0x1]
      %v502 = vld [vmem:[%s115 + $0x3b3] sm:$0x1]
      %v503 = vld [vmem:[%s115 + $0x3c3] sm:$0x1]
      %v504 = vld [vmem:[%s115 + $0x3d3] sm:$0x1]
      %v505 = vld [vmem:[%s115 + $0x3e3] sm:$0x1]
      %v506 = vld [vmem:[%s115 + $0x3f3] sm:$0x1]
      %v507 = vmax.f32 %v379, %v443
      %v508 = vmax.f32 %v380, %v444
      %v509 = vmax.f32 %v381, %v445
      %v510 = vmax.f32 %v382, %v446
      %v511 = vmax.f32 %v383, %v447
      %v512 = vmax.f32 %v384, %v448
      %v513 = vmax.f32 %v385, %v449
      %v514 = vmax.f32 %v386, %v450
      %v515 = vmax.f32 %v387, %v451
      %v516 = vmax.f32 %v388, %v452
      %v517 = vmax.f32 %v389, %v453
      %v518 = vmax.f32 %v390, %v454
      %v519 = vmax.f32 %v391, %v455
      %v520 = vmax.f32 %v392, %v456
      %v521 = vmax.f32 %v393, %v457
      %v522 = vmax.f32 %v394, %v458
      %v523 = vmax.f32 %v395, %v459
      %v524 = vmax.f32 %v396, %v460
      %v525 = vmax.f32 %v397, %v461
      %v526 = vmax.f32 %v398, %v462
      %v527 = vmax.f32 %v399, %v463
      %v528 = vmax.f32 %v400, %v464
      %v529 = vmax.f32 %v401, %v465
      %v530 = vmax.f32 %v402, %v466
      %v531 = vmax.f32 %v403, %v467
      %v532 = vmax.f32 %v404, %v468
      %v533 = vmax.f32 %v405, %v469
      %v534 = vmax.f32 %v406, %v470
      %v535 = vmax.f32 %v407, %v471
      %v536 = vmax.f32 %v408, %v472
      %v537 = vmax.f32 %v409, %v473
      %v538 = vmax.f32 %v410, %v474
      %v539 = vmax.f32 %v411, %v475
      %v540 = vmax.f32 %v412, %v476
      %v541 = vmax.f32 %v413, %v477
      %v542 = vmax.f32 %v414, %v478
      %v543 = vmax.f32 %v415, %v479
      %v544 = vmax.f32 %v416, %v480
      %v545 = vmax.f32 %v417, %v481
      %v546 = vmax.f32 %v418, %v482
      %v547 = vmax.f32 %v419, %v483
      %v548 = vmax.f32 %v420, %v484
      %v549 = vmax.f32 %v421, %v485
      %v550 = vmax.f32 %v422, %v486
      %v551 = vmax.f32 %v423, %v487
      %v552 = vmax.f32 %v424, %v488
      %v553 = vmax.f32 %v425, %v489
      %v554 = vmax.f32 %v426, %v490
      %v555 = vmax.f32 %v427, %v491
      %v556 = vmax.f32 %v428, %v492
      %v557 = vmax.f32 %v429, %v493
      %v558 = vmax.f32 %v430, %v494
      %v559 = vmax.f32 %v431, %v495
      %v560 = vmax.f32 %v432, %v496
      %v561 = vmax.f32 %v433, %v497
      %v562 = vmax.f32 %v434, %v498
      %v563 = vmax.f32 %v435, %v499
      %v564 = vmax.f32 %v436, %v500
      %v565 = vmax.f32 %v437, %v501
      %v566 = vmax.f32 %v438, %v502
      %v567 = vmax.f32 %v439, %v503
      %v568 = vmax.f32 %v440, %v504
      %v569 = vmax.f32 %v441, %v505
      %v570 = vmax.f32 %v442, %v506
      %v571 = vld [vmem:[%s115 + $0x4] sm:$0x1]
      %v572 = vld [vmem:[%s115 + $0x14] sm:$0x1]
      %v573 = vld [vmem:[%s115 + $0x24] sm:$0x1]
      %v574 = vld [vmem:[%s115 + $0x34] sm:$0x1]
      %v575 = vld [vmem:[%s115 + $0x44] sm:$0x1]
      %v576 = vld [vmem:[%s115 + $0x54] sm:$0x1]
      %v577 = vld [vmem:[%s115 + $0x64] sm:$0x1]
      %v578 = vld [vmem:[%s115 + $0x74] sm:$0x1]
      %v579 = vld [vmem:[%s115 + $0x84] sm:$0x1]
      %v580 = vld [vmem:[%s115 + $0x94] sm:$0x1]
      %v581 = vld [vmem:[%s115 + $0xa4] sm:$0x1]
      %v582 = vld [vmem:[%s115 + $0xb4] sm:$0x1]
      %v583 = vld [vmem:[%s115 + $0xc4] sm:$0x1]
      %v584 = vld [vmem:[%s115 + $0xd4] sm:$0x1]
      %v585 = vld [vmem:[%s115 + $0xe4] sm:$0x1]
      %v586 = vld [vmem:[%s115 + $0xf4] sm:$0x1]
      %v587 = vld [vmem:[%s115 + $0x104] sm:$0x1]
      %v588 = vld [vmem:[%s115 + $0x114] sm:$0x1]
      %v589 = vld [vmem:[%s115 + $0x124] sm:$0x1]
      %v590 = vld [vmem:[%s115 + $0x134] sm:$0x1]
      %v591 = vld [vmem:[%s115 + $0x144] sm:$0x1]
      %v592 = vld [vmem:[%s115 + $0x154] sm:$0x1]
      %v593 = vld [vmem:[%s115 + $0x164] sm:$0x1]
      %v594 = vld [vmem:[%s115 + $0x174] sm:$0x1]
      %v595 = vld [vmem:[%s115 + $0x184] sm:$0x1]
      %v596 = vld [vmem:[%s115 + $0x194] sm:$0x1]
      %v597 = vld [vmem:[%s115 + $0x1a4] sm:$0x1]
      %v598 = vld [vmem:[%s115 + $0x1b4] sm:$0x1]
      %v599 = vld [vmem:[%s115 + $0x1c4] sm:$0x1]
      %v600 = vld [vmem:[%s115 + $0x1d4] sm:$0x1]
      %v601 = vld [vmem:[%s115 + $0x1e4] sm:$0x1]
      %v602 = vld [vmem:[%s115 + $0x1f4] sm:$0x1]
      %v603 = vld [vmem:[%s115 + $0x204] sm:$0x1]
      %v604 = vld [vmem:[%s115 + $0x214] sm:$0x1]
      %v605 = vld [vmem:[%s115 + $0x224] sm:$0x1]
      %v606 = vld [vmem:[%s115 + $0x234] sm:$0x1]
      %v607 = vld [vmem:[%s115 + $0x244] sm:$0x1]
      %v608 = vld [vmem:[%s115 + $0x254] sm:$0x1]
      %v609 = vld [vmem:[%s115 + $0x264] sm:$0x1]
      %v610 = vld [vmem:[%s115 + $0x274] sm:$0x1]
      %v611 = vld [vmem:[%s115 + $0x284] sm:$0x1]
      %v612 = vld [vmem:[%s115 + $0x294] sm:$0x1]
      %v613 = vld [vmem:[%s115 + $0x2a4] sm:$0x1]
      %v614 = vld [vmem:[%s115 + $0x2b4] sm:$0x1]
      %v615 = vld [vmem:[%s115 + $0x2c4] sm:$0x1]
      %v616 = vld [vmem:[%s115 + $0x2d4] sm:$0x1]
      %v617 = vld [vmem:[%s115 + $0x2e4] sm:$0x1]
      %v618 = vld [vmem:[%s115 + $0x2f4] sm:$0x1]
      %v619 = vld [vmem:[%s115 + $0x304] sm:$0x1]
      %v620 = vld [vmem:[%s115 + $0x314] sm:$0x1]
      %v621 = vld [vmem:[%s115 + $0x324] sm:$0x1]
      %v622 = vld [vmem:[%s115 + $0x334] sm:$0x1]
      %v623 = vld [vmem:[%s115 + $0x344] sm:$0x1]
      %v624 = vld [vmem:[%s115 + $0x354] sm:$0x1]
      %v625 = vld [vmem:[%s115 + $0x364] sm:$0x1]
      %v626 = vld [vmem:[%s115 + $0x374] sm:$0x1]
      %v627 = vld [vmem:[%s115 + $0x384] sm:$0x1]
      %v628 = vld [vmem:[%s115 + $0x394] sm:$0x1]
      %v629 = vld [vmem:[%s115 + $0x3a4] sm:$0x1]
      %v630 = vld [vmem:[%s115 + $0x3b4] sm:$0x1]
      %v631 = vld [vmem:[%s115 + $0x3c4] sm:$0x1]
      %v632 = vld [vmem:[%s115 + $0x3d4] sm:$0x1]
      %v633 = vld [vmem:[%s115 + $0x3e4] sm:$0x1]
      %v634 = vld [vmem:[%s115 + $0x3f4] sm:$0x1]
      %v635 = vmax.f32 %v507, %v571
      %v636 = vmax.f32 %v508, %v572
      %v637 = vmax.f32 %v509, %v573
      %v638 = vmax.f32 %v510, %v574
      %v639 = vmax.f32 %v511, %v575
      %v640 = vmax.f32 %v512, %v576
      %v641 = vmax.f32 %v513, %v577
      %v642 = vmax.f32 %v514, %v578
      %v643 = vmax.f32 %v515, %v579
      %v644 = vmax.f32 %v516, %v580
      %v645 = vmax.f32 %v517, %v581
      %v646 = vmax.f32 %v518, %v582
      %v647 = vmax.f32 %v519, %v583
      %v648 = vmax.f32 %v520, %v584
      %v649 = vmax.f32 %v521, %v585
      %v650 = vmax.f32 %v522, %v586
      %v651 = vmax.f32 %v523, %v587
      %v652 = vmax.f32 %v524, %v588
      %v653 = vmax.f32 %v525, %v589
      %v654 = vmax.f32 %v526, %v590
      %v655 = vmax.f32 %v527, %v591
      %v656 = vmax.f32 %v528, %v592
      %v657 = vmax.f32 %v529, %v593
      %v658 = vmax.f32 %v530, %v594
      %v659 = vmax.f32 %v531, %v595
      %v660 = vmax.f32 %v532, %v596
      %v661 = vmax.f32 %v533, %v597
      %v662 = vmax.f32 %v534, %v598
      %v663 = vmax.f32 %v535, %v599
      %v664 = vmax.f32 %v536, %v600
      %v665 = vmax.f32 %v537, %v601
      %v666 = vmax.f32 %v538, %v602
      %v667 = vmax.f32 %v539, %v603
      %v668 = vmax.f32 %v540, %v604
      %v669 = vmax.f32 %v541, %v605
      %v670 = vmax.f32 %v542, %v606
      %v671 = vmax.f32 %v543, %v607
      %v672 = vmax.f32 %v544, %v608
      %v673 = vmax.f32 %v545, %v609
      %v674 = vmax.f32 %v546, %v610
      %v675 = vmax.f32 %v547, %v611
      %v676 = vmax.f32 %v548, %v612
      %v677 = vmax.f32 %v549, %v613
      %v678 = vmax.f32 %v550, %v614
      %v679 = vmax.f32 %v551, %v615
      %v680 = vmax.f32 %v552, %v616
      %v681 = vmax.f32 %v553, %v617
      %v682 = vmax.f32 %v554, %v618
      %v683 = vmax.f32 %v555, %v619
      %v684 = vmax.f32 %v556, %v620
      %v685 = vmax.f32 %v557, %v621
      %v686 = vmax.f32 %v558, %v622
      %v687 = vmax.f32 %v559, %v623
      %v688 = vmax.f32 %v560, %v624
      %v689 = vmax.f32 %v561, %v625
      %v690 = vmax.f32 %v562, %v626
      %v691 = vmax.f32 %v563, %v627
      %v692 = vmax.f32 %v564, %v628
      %v693 = vmax.f32 %v565, %v629
      %v694 = vmax.f32 %v566, %v630
      %v695 = vmax.f32 %v567, %v631
      %v696 = vmax.f32 %v568, %v632
      %v697 = vmax.f32 %v569, %v633
      %v698 = vmax.f32 %v570, %v634
      %v699 = vld [vmem:[%s115 + $0x5] sm:$0x1]
      %v700 = vld [vmem:[%s115 + $0x15] sm:$0x1]
      %v701 = vld [vmem:[%s115 + $0x25] sm:$0x1]
      %v702 = vld [vmem:[%s115 + $0x35] sm:$0x1]
      %v703 = vld [vmem:[%s115 + $0x45] sm:$0x1]
      %v704 = vld [vmem:[%s115 + $0x55] sm:$0x1]
      %v705 = vld [vmem:[%s115 + $0x65] sm:$0x1]
      %v706 = vld [vmem:[%s115 + $0x75] sm:$0x1]
      %v707 = vld [vmem:[%s115 + $0x85] sm:$0x1]
      %v708 = vld [vmem:[%s115 + $0x95] sm:$0x1]
      %v709 = vld [vmem:[%s115 + $0xa5] sm:$0x1]
      %v710 = vld [vmem:[%s115 + $0xb5] sm:$0x1]
      %v711 = vld [vmem:[%s115 + $0xc5] sm:$0x1]
      %v712 = vld [vmem:[%s115 + $0xd5] sm:$0x1]
      %v713 = vld [vmem:[%s115 + $0xe5] sm:$0x1]
      %v714 = vld [vmem:[%s115 + $0xf5] sm:$0x1]
      %v715 = vld [vmem:[%s115 + $0x105] sm:$0x1]
      %v716 = vld [vmem:[%s115 + $0x115] sm:$0x1]
      %v717 = vld [vmem:[%s115 + $0x125] sm:$0x1]
      %v718 = vld [vmem:[%s115 + $0x135] sm:$0x1]
      %v719 = vld [vmem:[%s115 + $0x145] sm:$0x1]
      %v720 = vld [vmem:[%s115 + $0x155] sm:$0x1]
      %v721 = vld [vmem:[%s115 + $0x165] sm:$0x1]
      %v722 = vld [vmem:[%s115 + $0x175] sm:$0x1]
      %v723 = vld [vmem:[%s115 + $0x185] sm:$0x1]
      %v724 = vld [vmem:[%s115 + $0x195] sm:$0x1]
      %v725 = vld [vmem:[%s115 + $0x1a5] sm:$0x1]
      %v726 = vld [vmem:[%s115 + $0x1b5] sm:$0x1]
      %v727 = vld [vmem:[%s115 + $0x1c5] sm:$0x1]
      %v728 = vld [vmem:[%s115 + $0x1d5] sm:$0x1]
      %v729 = vld [vmem:[%s115 + $0x1e5] sm:$0x1]
      %v730 = vld [vmem:[%s115 + $0x1f5] sm:$0x1]
      %v731 = vld [vmem:[%s115 + $0x205] sm:$0x1]
      %v732 = vld [vmem:[%s115 + $0x215] sm:$0x1]
      %v733 = vld [vmem:[%s115 + $0x225] sm:$0x1]
      %v734 = vld [vmem:[%s115 + $0x235] sm:$0x1]
      %v735 = vld [vmem:[%s115 + $0x245] sm:$0x1]
      %v736 = vld [vmem:[%s115 + $0x255] sm:$0x1]
      %v737 = vld [vmem:[%s115 + $0x265] sm:$0x1]
      %v738 = vld [vmem:[%s115 + $0x275] sm:$0x1]
      %v739 = vld [vmem:[%s115 + $0x285] sm:$0x1]
      %v740 = vld [vmem:[%s115 + $0x295] sm:$0x1]
      %v741 = vld [vmem:[%s115 + $0x2a5] sm:$0x1]
      %v742 = vld [vmem:[%s115 + $0x2b5] sm:$0x1]
      %v743 = vld [vmem:[%s115 + $0x2c5] sm:$0x1]
      %v744 = vld [vmem:[%s115 + $0x2d5] sm:$0x1]
      %v745 = vld [vmem:[%s115 + $0x2e5] sm:$0x1]
      %v746 = vld [vmem:[%s115 + $0x2f5] sm:$0x1]
      %v747 = vld [vmem:[%s115 + $0x305] sm:$0x1]
      %v748 = vld [vmem:[%s115 + $0x315] sm:$0x1]
      %v749 = vld [vmem:[%s115 + $0x325] sm:$0x1]
      %v750 = vld [vmem:[%s115 + $0x335] sm:$0x1]
      %v751 = vld [vmem:[%s115 + $0x345] sm:$0x1]
      %v752 = vld [vmem:[%s115 + $0x355] sm:$0x1]
      %v753 = vld [vmem:[%s115 + $0x365] sm:$0x1]
      %v754 = vld [vmem:[%s115 + $0x375] sm:$0x1]
      %v755 = vld [vmem:[%s115 + $0x385] sm:$0x1]
      %v756 = vld [vmem:[%s115 + $0x395] sm:$0x1]
      %v757 = vld [vmem:[%s115 + $0x3a5] sm:$0x1]
      %v758 = vld [vmem:[%s115 + $0x3b5] sm:$0x1]
      %v759 = vld [vmem:[%s115 + $0x3c5] sm:$0x1]
      %v760 = vld [vmem:[%s115 + $0x3d5] sm:$0x1]
      %v761 = vld [vmem:[%s115 + $0x3e5] sm:$0x1]
      %v762 = vld [vmem:[%s115 + $0x3f5] sm:$0x1]
      %v763 = vmax.f32 %v635, %v699
      %v764 = vmax.f32 %v636, %v700
      %v765 = vmax.f32 %v637, %v701
      %v766 = vmax.f32 %v638, %v702
      %v767 = vmax.f32 %v639, %v703
      %v768 = vmax.f32 %v640, %v704
      %v769 = vmax.f32 %v641, %v705
      %v770 = vmax.f32 %v642, %v706
      %v771 = vmax.f32 %v643, %v707
      %v772 = vmax.f32 %v644, %v708
      %v773 = vmax.f32 %v645, %v709
      %v774 = vmax.f32 %v646, %v710
      %v775 = vmax.f32 %v647, %v711
      %v776 = vmax.f32 %v648, %v712
      %v777 = vmax.f32 %v649, %v713
      %v778 = vmax.f32 %v650, %v714
      %v779 = vmax.f32 %v651, %v715
      %v780 = vmax.f32 %v652, %v716
      %v781 = vmax.f32 %v653, %v717
      %v782 = vmax.f32 %v654, %v718
      %v783 = vmax.f32 %v655, %v719
      %v784 = vmax.f32 %v656, %v720
      %v785 = vmax.f32 %v657, %v721
      %v786 = vmax.f32 %v658, %v722
      %v787 = vmax.f32 %v659, %v723
      %v788 = vmax.f32 %v660, %v724
      %v789 = vmax.f32 %v661, %v725
      %v790 = vmax.f32 %v662, %v726
      %v791 = vmax.f32 %v663, %v727
      %v792 = vmax.f32 %v664, %v728
      %v793 = vmax.f32 %v665, %v729
      %v794 = vmax.f32 %v666, %v730
      %v795 = vmax.f32 %v667, %v731
      %v796 = vmax.f32 %v668, %v732
      %v797 = vmax.f32 %v669, %v733
      %v798 = vmax.f32 %v670, %v734
      %v799 = vmax.f32 %v671, %v735
      %v800 = vmax.f32 %v672, %v736
      %v801 = vmax.f32 %v673, %v737
      %v802 = vmax.f32 %v674, %v738
      %v803 = vmax.f32 %v675, %v739
      %v804 = vmax.f32 %v676, %v740
      %v805 = vmax.f32 %v677, %v741
      %v806 = vmax.f32 %v678, %v742
      %v807 = vmax.f32 %v679, %v743
      %v808 = vmax.f32 %v680, %v744
      %v809 = vmax.f32 %v681, %v745
      %v810 = vmax.f32 %v682, %v746
      %v811 = vmax.f32 %v683, %v747
      %v812 = vmax.f32 %v684, %v748
      %v813 = vmax.f32 %v685, %v749
      %v814 = vmax.f32 %v686, %v750
      %v815 = vmax.f32 %v687, %v751
      %v816 = vmax.f32 %v688, %v752
      %v817 = vmax.f32 %v689, %v753
      %v818 = vmax.f32 %v690, %v754
      %v819 = vmax.f32 %v691, %v755
      %v820 = vmax.f32 %v692, %v756
      %v821 = vmax.f32 %v693, %v757
      %v822 = vmax.f32 %v694, %v758
      %v823 = vmax.f32 %v695, %v759
      %v824 = vmax.f32 %v696, %v760
      %v825 = vmax.f32 %v697, %v761
      %v826 = vmax.f32 %v698, %v762
      %v827 = vld [vmem:[%s115 + $0x6] sm:$0x1]
      %v828 = vld [vmem:[%s115 + $0x16] sm:$0x1]
      %v829 = vld [vmem:[%s115 + $0x26] sm:$0x1]
      %v830 = vld [vmem:[%s115 + $0x36] sm:$0x1]
      %v831 = vld [vmem:[%s115 + $0x46] sm:$0x1]
      %v832 = vld [vmem:[%s115 + $0x56] sm:$0x1]
      %v833 = vld [vmem:[%s115 + $0x66] sm:$0x1]
      %v834 = vld [vmem:[%s115 + $0x76] sm:$0x1]
      %v835 = vld [vmem:[%s115 + $0x86] sm:$0x1]
      %v836 = vld [vmem:[%s115 + $0x96] sm:$0x1]
      %v837 = vld [vmem:[%s115 + $0xa6] sm:$0x1]
      %v838 = vld [vmem:[%s115 + $0xb6] sm:$0x1]
      %v839 = vld [vmem:[%s115 + $0xc6] sm:$0x1]
      %v840 = vld [vmem:[%s115 + $0xd6] sm:$0x1]
      %v841 = vld [vmem:[%s115 + $0xe6] sm:$0x1]
      %v842 = vld [vmem:[%s115 + $0xf6] sm:$0x1]
      %v843 = vld [vmem:[%s115 + $0x106] sm:$0x1]
      %v844 = vld [vmem:[%s115 + $0x116] sm:$0x1]
      %v845 = vld [vmem:[%s115 + $0x126] sm:$0x1]
      %v846 = vld [vmem:[%s115 + $0x136] sm:$0x1]
      %v847 = vld [vmem:[%s115 + $0x146] sm:$0x1]
      %v848 = vld [vmem:[%s115 + $0x156] sm:$0x1]
      %v849 = vld [vmem:[%s115 + $0x166] sm:$0x1]
      %v850 = vld [vmem:[%s115 + $0x176] sm:$0x1]
      %v851 = vld [vmem:[%s115 + $0x186] sm:$0x1]
      %v852 = vld [vmem:[%s115 + $0x196] sm:$0x1]
      %v853 = vld [vmem:[%s115 + $0x1a6] sm:$0x1]
      %v854 = vld [vmem:[%s115 + $0x1b6] sm:$0x1]
      %v855 = vld [vmem:[%s115 + $0x1c6] sm:$0x1]
      %v856 = vld [vmem:[%s115 + $0x1d6] sm:$0x1]
      %v857 = vld [vmem:[%s115 + $0x1e6] sm:$0x1]
      %v858 = vld [vmem:[%s115 + $0x1f6] sm:$0x1]
      %v859 = vld [vmem:[%s115 + $0x206] sm:$0x1]
      %v860 = vld [vmem:[%s115 + $0x216] sm:$0x1]
      %v861 = vld [vmem:[%s115 + $0x226] sm:$0x1]
      %v862 = vld [vmem:[%s115 + $0x236] sm:$0x1]
      %v863 = vld [vmem:[%s115 + $0x246] sm:$0x1]
      %v864 = vld [vmem:[%s115 + $0x256] sm:$0x1]
      %v865 = vld [vmem:[%s115 + $0x266] sm:$0x1]
      %v866 = vld [vmem:[%s115 + $0x276] sm:$0x1]
      %v867 = vld [vmem:[%s115 + $0x286] sm:$0x1]
      %v868 = vld [vmem:[%s115 + $0x296] sm:$0x1]
      %v869 = vld [vmem:[%s115 + $0x2a6] sm:$0x1]
      %v870 = vld [vmem:[%s115 + $0x2b6] sm:$0x1]
      %v871 = vld [vmem:[%s115 + $0x2c6] sm:$0x1]
      %v872 = vld [vmem:[%s115 + $0x2d6] sm:$0x1]
      %v873 = vld [vmem:[%s115 + $0x2e6] sm:$0x1]
      %v874 = vld [vmem:[%s115 + $0x2f6] sm:$0x1]
      %v875 = vld [vmem:[%s115 + $0x306] sm:$0x1]
      %v876 = vld [vmem:[%s115 + $0x316] sm:$0x1]
      %v877 = vld [vmem:[%s115 + $0x326] sm:$0x1]
      %v878 = vld [vmem:[%s115 + $0x336] sm:$0x1]
      %v879 = vld [vmem:[%s115 + $0x346] sm:$0x1]
      %v880 = vld [vmem:[%s115 + $0x356] sm:$0x1]
      %v881 = vld [vmem:[%s115 + $0x366] sm:$0x1]
      %v882 = vld [vmem:[%s115 + $0x376] sm:$0x1]
      %v883 = vld [vmem:[%s115 + $0x386] sm:$0x1]
      %v884 = vld [vmem:[%s115 + $0x396] sm:$0x1]
      %v885 = vld [vmem:[%s115 + $0x3a6] sm:$0x1]
      %v886 = vld [vmem:[%s115 + $0x3b6] sm:$0x1]
      %v887 = vld [vmem:[%s115 + $0x3c6] sm:$0x1]
      %v888 = vld [vmem:[%s115 + $0x3d6] sm:$0x1]
      %v889 = vld [vmem:[%s115 + $0x3e6] sm:$0x1]
      %v890 = vld [vmem:[%s115 + $0x3f6] sm:$0x1]
      %v891 = vmax.f32 %v763, %v827
      %v892 = vmax.f32 %v764, %v828
      %v893 = vmax.f32 %v765, %v829
      %v894 = vmax.f32 %v766, %v830
      %v895 = vmax.f32 %v767, %v831
      %v896 = vmax.f32 %v768, %v832
      %v897 = vmax.f32 %v769, %v833
      %v898 = vmax.f32 %v770, %v834
      %v899 = vmax.f32 %v771, %v835
      %v900 = vmax.f32 %v772, %v836
      %v901 = vmax.f32 %v773, %v837
      %v902 = vmax.f32 %v774, %v838
      %v903 = vmax.f32 %v775, %v839
      %v904 = vmax.f32 %v776, %v840
      %v905 = vmax.f32 %v777, %v841
      %v906 = vmax.f32 %v778, %v842
      %v907 = vmax.f32 %v779, %v843
      %v908 = vmax.f32 %v780, %v844
      %v909 = vmax.f32 %v781, %v845
      %v910 = vmax.f32 %v782, %v846
      %v911 = vmax.f32 %v783, %v847
      %v912 = vmax.f32 %v784, %v848
      %v913 = vmax.f32 %v785, %v849
      %v914 = vmax.f32 %v786, %v850
      %v915 = vmax.f32 %v787, %v851
      %v916 = vmax.f32 %v788, %v852
      %v917 = vmax.f32 %v789, %v853
      %v918 = vmax.f32 %v790, %v854
      %v919 = vmax.f32 %v791, %v855
      %v920 = vmax.f32 %v792, %v856
      %v921 = vmax.f32 %v793, %v857
      %v922 = vmax.f32 %v794, %v858
      %v923 = vmax.f32 %v795, %v859
      %v924 = vmax.f32 %v796, %v860
      %v925 = vmax.f32 %v797, %v861
      %v926 = vmax.f32 %v798, %v862
      %v927 = vmax.f32 %v799, %v863
      %v928 = vmax.f32 %v800, %v864
      %v929 = vmax.f32 %v801, %v865
      %v930 = vmax.f32 %v802, %v866
      %v931 = vmax.f32 %v803, %v867
      %v932 = vmax.f32 %v804, %v868
      %v933 = vmax.f32 %v805, %v869
      %v934 = vmax.f32 %v806, %v870
      %v935 = vmax.f32 %v807, %v871
      %v936 = vmax.f32 %v808, %v872
      %v937 = vmax.f32 %v809, %v873
      %v938 = vmax.f32 %v810, %v874
      %v939 = vmax.f32 %v811, %v875
      %v940 = vmax.f32 %v812, %v876
      %v941 = vmax.f32 %v813, %v877
      %v942 = vmax.f32 %v814, %v878
      %v943 = vmax.f32 %v815, %v879
      %v944 = vmax.f32 %v816, %v880
      %v945 = vmax.f32 %v817, %v881
      %v946 = vmax.f32 %v818, %v882
      %v947 = vmax.f32 %v819, %v883
      %v948 = vmax.f32 %v820, %v884
      %v949 = vmax.f32 %v821, %v885
      %v950 = vmax.f32 %v822, %v886
      %v951 = vmax.f32 %v823, %v887
      %v952 = vmax.f32 %v824, %v888
      %v953 = vmax.f32 %v825, %v889
      %v954 = vmax.f32 %v826, %v890
      %v955 = vld [vmem:[%s115 + $0x7] sm:$0x1]
      %v956 = vld [vmem:[%s115 + $0x17] sm:$0x1]
      %v957 = vld [vmem:[%s115 + $0x27] sm:$0x1]
      %v958 = vld [vmem:[%s115 + $0x37] sm:$0x1]
      %v959 = vld [vmem:[%s115 + $0x47] sm:$0x1]
      %v960 = vld [vmem:[%s115 + $0x57] sm:$0x1]
      %v961 = vld [vmem:[%s115 + $0x67] sm:$0x1]
      %v962 = vld [vmem:[%s115 + $0x77] sm:$0x1]
      %v963 = vld [vmem:[%s115 + $0x87] sm:$0x1]
      %v964 = vld [vmem:[%s115 + $0x97] sm:$0x1]
      %v965 = vld [vmem:[%s115 + $0xa7] sm:$0x1]
      %v966 = vld [vmem:[%s115 + $0xb7] sm:$0x1]
      %v967 = vld [vmem:[%s115 + $0xc7] sm:$0x1]
      %v968 = vld [vmem:[%s115 + $0xd7] sm:$0x1]
      %v969 = vld [vmem:[%s115 + $0xe7] sm:$0x1]
      %v970 = vld [vmem:[%s115 + $0xf7] sm:$0x1]
      %v971 = vld [vmem:[%s115 + $0x107] sm:$0x1]
      %v972 = vld [vmem:[%s115 + $0x117] sm:$0x1]
      %v973 = vld [vmem:[%s115 + $0x127] sm:$0x1]
      %v974 = vld [vmem:[%s115 + $0x137] sm:$0x1]
      %v975 = vld [vmem:[%s115 + $0x147] sm:$0x1]
      %v976 = vld [vmem:[%s115 + $0x157] sm:$0x1]
      %v977 = vld [vmem:[%s115 + $0x167] sm:$0x1]
      %v978 = vld [vmem:[%s115 + $0x177] sm:$0x1]
      %v979 = vld [vmem:[%s115 + $0x187] sm:$0x1]
      %v980 = vld [vmem:[%s115 + $0x197] sm:$0x1]
      %v981 = vld [vmem:[%s115 + $0x1a7] sm:$0x1]
      %v982 = vld [vmem:[%s115 + $0x1b7] sm:$0x1]
      %v983 = vld [vmem:[%s115 + $0x1c7] sm:$0x1]
      %v984 = vld [vmem:[%s115 + $0x1d7] sm:$0x1]
      %v985 = vld [vmem:[%s115 + $0x1e7] sm:$0x1]
      %v986 = vld [vmem:[%s115 + $0x1f7] sm:$0x1]
      %v987 = vld [vmem:[%s115 + $0x207] sm:$0x1]
      %v988 = vld [vmem:[%s115 + $0x217] sm:$0x1]
      %v989 = vld [vmem:[%s115 + $0x227] sm:$0x1]
      %v990 = vld [vmem:[%s115 + $0x237] sm:$0x1]
      %v991 = vld [vmem:[%s115 + $0x247] sm:$0x1]
      %v992 = vld [vmem:[%s115 + $0x257] sm:$0x1]
      %v993 = vld [vmem:[%s115 + $0x267] sm:$0x1]
      %v994 = vld [vmem:[%s115 + $0x277] sm:$0x1]
      %v995 = vld [vmem:[%s115 + $0x287] sm:$0x1]
      %v996 = vld [vmem:[%s115 + $0x297] sm:$0x1]
      %v997 = vld [vmem:[%s115 + $0x2a7] sm:$0x1]
      %v998 = vld [vmem:[%s115 + $0x2b7] sm:$0x1]
      %v999 = vld [vmem:[%s115 + $0x2c7] sm:$0x1]
      %v1000 = vld [vmem:[%s115 + $0x2d7] sm:$0x1]
      %v1001 = vld [vmem:[%s115 + $0x2e7] sm:$0x1]
      %v1002 = vld [vmem:[%s115 + $0x2f7] sm:$0x1]
      %v1003 = vld [vmem:[%s115 + $0x307] sm:$0x1]
      %v1004 = vld [vmem:[%s115 + $0x317] sm:$0x1]
      %v1005 = vld [vmem:[%s115 + $0x327] sm:$0x1]
      %v1006 = vld [vmem:[%s115 + $0x337] sm:$0x1]
      %v1007 = vld [vmem:[%s115 + $0x347] sm:$0x1]
      %v1008 = vld [vmem:[%s115 + $0x357] sm:$0x1]
      %v1009 = vld [vmem:[%s115 + $0x367] sm:$0x1]
      %v1010 = vld [vmem:[%s115 + $0x377] sm:$0x1]
      %v1011 = vld [vmem:[%s115 + $0x387] sm:$0x1]
      %v1012 = vld [vmem:[%s115 + $0x397] sm:$0x1]
      %v1013 = vld [vmem:[%s115 + $0x3a7] sm:$0x1]
      %v1014 = vld [vmem:[%s115 + $0x3b7] sm:$0x1]
      %v1015 = vld [vmem:[%s115 + $0x3c7] sm:$0x1]
      %v1016 = vld [vmem:[%s115 + $0x3d7] sm:$0x1]
      %v1017 = vld [vmem:[%s115 + $0x3e7] sm:$0x1]
      %v1018 = vld [vmem:[%s115 + $0x3f7] sm:$0x1]
      %v1019 = vmax.f32 %v891, %v955
      %v1020 = vmax.f32 %v892, %v956
      %v1021 = vmax.f32 %v893, %v957
      %v1022 = vmax.f32 %v894, %v958
      %v1023 = vmax.f32 %v895, %v959
      %v1024 = vmax.f32 %v896, %v960
      %v1025 = vmax.f32 %v897, %v961
      %v1026 = vmax.f32 %v898, %v962
      %v1027 = vmax.f32 %v899, %v963
      %v1028 = vmax.f32 %v900, %v964
      %v1029 = vmax.f32 %v901, %v965
      %v1030 = vmax.f32 %v902, %v966
      %v1031 = vmax.f32 %v903, %v967
      %v1032 = vmax.f32 %v904, %v968
      %v1033 = vmax.f32 %v905, %v969
      %v1034 = vmax.f32 %v906, %v970
      %v1035 = vmax.f32 %v907, %v971
      %v1036 = vmax.f32 %v908, %v972
      %v1037 = vmax.f32 %v909, %v973
      %v1038 = vmax.f32 %v910, %v974
      %v1039 = vmax.f32 %v911, %v975
      %v1040 = vmax.f32 %v912, %v976
      %v1041 = vmax.f32 %v913, %v977
      %v1042 = vmax.f32 %v914, %v978
      %v1043 = vmax.f32 %v915, %v979
      %v1044 = vmax.f32 %v916, %v980
      %v1045 = vmax.f32 %v917, %v981
      %v1046 = vmax.f32 %v918, %v982
      %v1047 = vmax.f32 %v919, %v983
      %v1048 = vmax.f32 %v920, %v984
      %v1049 = vmax.f32 %v921, %v985
      %v1050 = vmax.f32 %v922, %v986
      %v1051 = vmax.f32 %v923, %v987
      %v1052 = vmax.f32 %v924, %v988
      %v1053 = vmax.f32 %v925, %v989
      %v1054 = vmax.f32 %v926, %v990
      %v1055 = vmax.f32 %v927, %v991
      %v1056 = vmax.f32 %v928, %v992
      %v1057 = vmax.f32 %v929, %v993
      %v1058 = vmax.f32 %v930, %v994
      %v1059 = vmax.f32 %v931, %v995
      %v1060 = vmax.f32 %v932, %v996
      %v1061 = vmax.f32 %v933, %v997
      %v1062 = vmax.f32 %v934, %v998
      %v1063 = vmax.f32 %v935, %v999
      %v1064 = vmax.f32 %v936, %v1000
      %v1065 = vmax.f32 %v937, %v1001
      %v1066 = vmax.f32 %v938, %v1002
      %v1067 = vmax.f32 %v939, %v1003
      %v1068 = vmax.f32 %v940, %v1004
      %v1069 = vmax.f32 %v941, %v1005
      %v1070 = vmax.f32 %v942, %v1006
      %v1071 = vmax.f32 %v943, %v1007
      %v1072 = vmax.f32 %v944, %v1008
      %v1073 = vmax.f32 %v945, %v1009
      %v1074 = vmax.f32 %v946, %v1010
      %v1075 = vmax.f32 %v947, %v1011
      %v1076 = vmax.f32 %v948, %v1012
      %v1077 = vmax.f32 %v949, %v1013
      %v1078 = vmax.f32 %v950, %v1014
      %v1079 = vmax.f32 %v951, %v1015
      %v1080 = vmax.f32 %v952, %v1016
      %v1081 = vmax.f32 %v953, %v1017
      %v1082 = vmax.f32 %v954, %v1018
      %v1083 = vld [vmem:[%s115 + $0x8] sm:$0x1]
      %v1084 = vld [vmem:[%s115 + $0x18] sm:$0x1]
      %v1085 = vld [vmem:[%s115 + $0x28] sm:$0x1]
      %v1086 = vld [vmem:[%s115 + $0x38] sm:$0x1]
      %v1087 = vld [vmem:[%s115 + $0x48] sm:$0x1]
      %v1088 = vld [vmem:[%s115 + $0x58] sm:$0x1]
      %v1089 = vld [vmem:[%s115 + $0x68] sm:$0x1]
      %v1090 = vld [vmem:[%s115 + $0x78] sm:$0x1]
      %v1091 = vld [vmem:[%s115 + $0x88] sm:$0x1]
      %v1092 = vld [vmem:[%s115 + $0x98] sm:$0x1]
      %v1093 = vld [vmem:[%s115 + $0xa8] sm:$0x1]
      %v1094 = vld [vmem:[%s115 + $0xb8] sm:$0x1]
      %v1095 = vld [vmem:[%s115 + $0xc8] sm:$0x1]
      %v1096 = vld [vmem:[%s115 + $0xd8] sm:$0x1]
      %v1097 = vld [vmem:[%s115 + $0xe8] sm:$0x1]
      %v1098 = vld [vmem:[%s115 + $0xf8] sm:$0x1]
      %v1099 = vld [vmem:[%s115 + $0x108] sm:$0x1]
      %v1100 = vld [vmem:[%s115 + $0x118] sm:$0x1]
      %v1101 = vld [vmem:[%s115 + $0x128] sm:$0x1]
      %v1102 = vld [vmem:[%s115 + $0x138] sm:$0x1]
      %v1103 = vld [vmem:[%s115 + $0x148] sm:$0x1]
      %v1104 = vld [vmem:[%s115 + $0x158] sm:$0x1]
      %v1105 = vld [vmem:[%s115 + $0x168] sm:$0x1]
      %v1106 = vld [vmem:[%s115 + $0x178] sm:$0x1]
      %v1107 = vld [vmem:[%s115 + $0x188] sm:$0x1]
      %v1108 = vld [vmem:[%s115 + $0x198] sm:$0x1]
      %v1109 = vld [vmem:[%s115 + $0x1a8] sm:$0x1]
      %v1110 = vld [vmem:[%s115 + $0x1b8] sm:$0x1]
      %v1111 = vld [vmem:[%s115 + $0x1c8] sm:$0x1]
      %v1112 = vld [vmem:[%s115 + $0x1d8] sm:$0x1]
      %v1113 = vld [vmem:[%s115 + $0x1e8] sm:$0x1]
      %v1114 = vld [vmem:[%s115 + $0x1f8] sm:$0x1]
      %v1115 = vld [vmem:[%s115 + $0x208] sm:$0x1]
      %v1116 = vld [vmem:[%s115 + $0x218] sm:$0x1]
      %v1117 = vld [vmem:[%s115 + $0x228] sm:$0x1]
      %v1118 = vld [vmem:[%s115 + $0x238] sm:$0x1]
      %v1119 = vld [vmem:[%s115 + $0x248] sm:$0x1]
      %v1120 = vld [vmem:[%s115 + $0x258] sm:$0x1]
      %v1121 = vld [vmem:[%s115 + $0x268] sm:$0x1]
      %v1122 = vld [vmem:[%s115 + $0x278] sm:$0x1]
      %v1123 = vld [vmem:[%s115 + $0x288] sm:$0x1]
      %v1124 = vld [vmem:[%s115 + $0x298] sm:$0x1]
      %v1125 = vld [vmem:[%s115 + $0x2a8] sm:$0x1]
      %v1126 = vld [vmem:[%s115 + $0x2b8] sm:$0x1]
      %v1127 = vld [vmem:[%s115 + $0x2c8] sm:$0x1]
      %v1128 = vld [vmem:[%s115 + $0x2d8] sm:$0x1]
      %v1129 = vld [vmem:[%s115 + $0x2e8] sm:$0x1]
      %v1130 = vld [vmem:[%s115 + $0x2f8] sm:$0x1]
      %v1131 = vld [vmem:[%s115 + $0x308] sm:$0x1]
      %v1132 = vld [vmem:[%s115 + $0x318] sm:$0x1]
      %v1133 = vld [vmem:[%s115 + $0x328] sm:$0x1]
      %v1134 = vld [vmem:[%s115 + $0x338] sm:$0x1]
      %v1135 = vld [vmem:[%s115 + $0x348] sm:$0x1]
      %v1136 = vld [vmem:[%s115 + $0x358] sm:$0x1]
      %v1137 = vld [vmem:[%s115 + $0x368] sm:$0x1]
      %v1138 = vld [vmem:[%s115 + $0x378] sm:$0x1]
      %v1139 = vld [vmem:[%s115 + $0x388] sm:$0x1]
      %v1140 = vld [vmem:[%s115 + $0x398] sm:$0x1]
      %v1141 = vld [vmem:[%s115 + $0x3a8] sm:$0x1]
      %v1142 = vld [vmem:[%s115 + $0x3b8] sm:$0x1]
      %v1143 = vld [vmem:[%s115 + $0x3c8] sm:$0x1]
      %v1144 = vld [vmem:[%s115 + $0x3d8] sm:$0x1]
      %v1145 = vld [vmem:[%s115 + $0x3e8] sm:$0x1]
      %v1146 = vld [vmem:[%s115 + $0x3f8] sm:$0x1]
      %v1147 = vmax.f32 %v1019, %v1083
      %v1148 = vmax.f32 %v1020, %v1084
      %v1149 = vmax.f32 %v1021, %v1085
      %v1150 = vmax.f32 %v1022, %v1086
      %v1151 = vmax.f32 %v1023, %v1087
      %v1152 = vmax.f32 %v1024, %v1088
      %v1153 = vmax.f32 %v1025, %v1089
      %v1154 = vmax.f32 %v1026, %v1090
      %v1155 = vmax.f32 %v1027, %v1091
      %v1156 = vmax.f32 %v1028, %v1092
      %v1157 = vmax.f32 %v1029, %v1093
      %v1158 = vmax.f32 %v1030, %v1094
      %v1159 = vmax.f32 %v1031, %v1095
      %v1160 = vmax.f32 %v1032, %v1096
      %v1161 = vmax.f32 %v1033, %v1097
      %v1162 = vmax.f32 %v1034, %v1098
      %v1163 = vmax.f32 %v1035, %v1099
      %v1164 = vmax.f32 %v1036, %v1100
      %v1165 = vmax.f32 %v1037, %v1101
      %v1166 = vmax.f32 %v1038, %v1102
      %v1167 = vmax.f32 %v1039, %v1103
      %v1168 = vmax.f32 %v1040, %v1104
      %v1169 = vmax.f32 %v1041, %v1105
      %v1170 = vmax.f32 %v1042, %v1106
      %v1171 = vmax.f32 %v1043, %v1107
      %v1172 = vmax.f32 %v1044, %v1108
      %v1173 = vmax.f32 %v1045, %v1109
      %v1174 = vmax.f32 %v1046, %v1110
      %v1175 = vmax.f32 %v1047, %v1111
      %v1176 = vmax.f32 %v1048, %v1112
      %v1177 = vmax.f32 %v1049, %v1113
      %v1178 = vmax.f32 %v1050, %v1114
      %v1179 = vmax.f32 %v1051, %v1115
      %v1180 = vmax.f32 %v1052, %v1116
      %v1181 = vmax.f32 %v1053, %v1117
      %v1182 = vmax.f32 %v1054, %v1118
      %v1183 = vmax.f32 %v1055, %v1119
      %v1184 = vmax.f32 %v1056, %v1120
      %v1185 = vmax.f32 %v1057, %v1121
      %v1186 = vmax.f32 %v1058, %v1122
      %v1187 = vmax.f32 %v1059, %v1123
      %v1188 = vmax.f32 %v1060, %v1124
      %v1189 = vmax.f32 %v1061, %v1125
      %v1190 = vmax.f32 %v1062, %v1126
      %v1191 = vmax.f32 %v1063, %v1127
      %v1192 = vmax.f32 %v1064, %v1128
      %v1193 = vmax.f32 %v1065, %v1129
      %v1194 = vmax.f32 %v1066, %v1130
      %v1195 = vmax.f32 %v1067, %v1131
      %v1196 = vmax.f32 %v1068, %v1132
      %v1197 = vmax.f32 %v1069, %v1133
      %v1198 = vmax.f32 %v1070, %v1134
      %v1199 = vmax.f32 %v1071, %v1135
      %v1200 = vmax.f32 %v1072, %v1136
      %v1201 = vmax.f32 %v1073, %v1137
      %v1202 = vmax.f32 %v1074, %v1138
      %v1203 = vmax.f32 %v1075, %v1139
      %v1204 = vmax.f32 %v1076, %v1140
      %v1205 = vmax.f32 %v1077, %v1141
      %v1206 = vmax.f32 %v1078, %v1142
      %v1207 = vmax.f32 %v1079, %v1143
      %v1208 = vmax.f32 %v1080, %v1144
      %v1209 = vmax.f32 %v1081, %v1145
      %v1210 = vmax.f32 %v1082, %v1146
      %v1275 = vrot.slane %v1148, 7
      %vm1276 = vcmask 1041409
      %v1277 = vsel %vm1276, %v1275, %v1147
      %v1278 = vrot.slane %v1149, 6
      %vm1279 = vcmask 1042434
      %v1280 = vsel %vm1279, %v1278, %v1277
      %v1281 = vrot.slane %v1150, 5
      %vm1282 = vcmask 1043459
      %v1283 = vsel %vm1282, %v1281, %v1280
      %v1284 = vrot.slane %v1151, 4
      %vm1285 = vcmask 1044484
      %v1286 = vsel %vm1285, %v1284, %v1283
      %v1287 = vrot.slane %v1152, 3
      %vm1288 = vcmask 1045509
      %v1289 = vsel %vm1288, %v1287, %v1286
      %v1290 = vrot.slane %v1153, 2
      %vm1291 = vcmask 1046534
      %v1292 = vsel %vm1291, %v1290, %v1289
      %v1293 = vrot.slane %v1154, 1
      %vm1294 = vcmask 1047559
      %v1295 = vsel %vm1294, %v1293, %v1292
      %v1296 = vrot.slane %v1156, 7
      %v1297 = vsel %vm1276, %v1296, %v1155
      %v1298 = vrot.slane %v1157, 6
      %v1299 = vsel %vm1279, %v1298, %v1297
      %v1300 = vrot.slane %v1158, 5
      %v1301 = vsel %vm1282, %v1300, %v1299
      %v1302 = vrot.slane %v1159, 4
      %v1303 = vsel %vm1285, %v1302, %v1301
      %v1304 = vrot.slane %v1160, 3
      %v1305 = vsel %vm1288, %v1304, %v1303
      %v1306 = vrot.slane %v1161, 2
      %v1307 = vsel %vm1291, %v1306, %v1305
      %v1308 = vrot.slane %v1162, 1
      %v1309 = vsel %vm1294, %v1308, %v1307
      %v1310 = vrot.slane %v1164, 7
      %v1311 = vsel %vm1276, %v1310, %v1163
      %v1312 = vrot.slane %v1165, 6
      %v1313 = vsel %vm1279, %v1312, %v1311
      %v1314 = vrot.slane %v1166, 5
      %v1315 = vsel %vm1282, %v1314, %v1313
      %v1316 = vrot.slane %v1167, 4
      %v1317 = vsel %vm1285, %v1316, %v1315
      %v1318 = vrot.slane %v1168, 3
      %v1319 = vsel %vm1288, %v1318, %v1317
      %v1320 = vrot.slane %v1169, 2
      %v1321 = vsel %vm1291, %v1320, %v1319
      %v1322 = vrot.slane %v1170, 1
      %v1323 = vsel %vm1294, %v1322, %v1321
      %v1324 = vrot.slane %v1172, 7
      %v1325 = vsel %vm1276, %v1324, %v1171
      %v1326 = vrot.slane %v1173, 6
      %v1327 = vsel %vm1279, %v1326, %v1325
      %v1328 = vrot.slane %v1174, 5
      %v1329 = vsel %vm1282, %v1328, %v1327
      %v1330 = vrot.slane %v1175, 4
      %v1331 = vsel %vm1285, %v1330, %v1329
      %v1332 = vrot.slane %v1176, 3
      %v1333 = vsel %vm1288, %v1332, %v1331
      %v1334 = vrot.slane %v1177, 2
      %v1335 = vsel %vm1291, %v1334, %v1333
      %v1336 = vrot.slane %v1178, 1
      %v1337 = vsel %vm1294, %v1336, %v1335
      %v1338 = vrot.slane %v1180, 7
      %v1339 = vsel %vm1276, %v1338, %v1179
      %v1340 = vrot.slane %v1181, 6
      %v1341 = vsel %vm1279, %v1340, %v1339
      %v1342 = vrot.slane %v1182, 5
      %v1343 = vsel %vm1282, %v1342, %v1341
      %v1344 = vrot.slane %v1183, 4
      %v1345 = vsel %vm1285, %v1344, %v1343
      %v1346 = vrot.slane %v1184, 3
      %v1347 = vsel %vm1288, %v1346, %v1345
      %v1348 = vrot.slane %v1185, 2
      %v1349 = vsel %vm1291, %v1348, %v1347
      %v1350 = vrot.slane %v1186, 1
      %v1351 = vsel %vm1294, %v1350, %v1349
      %v1352 = vrot.slane %v1188, 7
      %v1353 = vsel %vm1276, %v1352, %v1187
      %v1354 = vrot.slane %v1189, 6
      %v1355 = vsel %vm1279, %v1354, %v1353
      %v1356 = vrot.slane %v1190, 5
      %v1357 = vsel %vm1282, %v1356, %v1355
      %v1358 = vrot.slane %v1191, 4
      %v1359 = vsel %vm1285, %v1358, %v1357
      %v1360 = vrot.slane %v1192, 3
      %v1361 = vsel %vm1288, %v1360, %v1359
      %v1362 = vrot.slane %v1193, 2
      %v1363 = vsel %vm1291, %v1362, %v1361
      %v1364 = vrot.slane %v1194, 1
      %v1365 = vsel %vm1294, %v1364, %v1363
      %v1366 = vrot.slane %v1196, 7
      %v1367 = vsel %vm1276, %v1366, %v1195
      %v1368 = vrot.slane %v1197, 6
      %v1369 = vsel %vm1279, %v1368, %v1367
      %v1370 = vrot.slane %v1198, 5
      %v1371 = vsel %vm1282, %v1370, %v1369
      %v1372 = vrot.slane %v1199, 4
      %v1373 = vsel %vm1285, %v1372, %v1371
      %v1374 = vrot.slane %v1200, 3
      %v1375 = vsel %vm1288, %v1374, %v1373
      %v1376 = vrot.slane %v1201, 2
      %v1377 = vsel %vm1291, %v1376, %v1375
      %v1378 = vrot.slane %v1202, 1
      %v1379 = vsel %vm1294, %v1378, %v1377
      %v1380 = vrot.slane %v1204, 7
      %v1381 = vsel %vm1276, %v1380, %v1203
      %v1382 = vrot.slane %v1205, 6
      %v1383 = vsel %vm1279, %v1382, %v1381
      %v1384 = vrot.slane %v1206, 5
      %v1385 = vsel %vm1282, %v1384, %v1383
      %v1386 = vrot.slane %v1207, 4
      %v1387 = vsel %vm1285, %v1386, %v1385
      %v1388 = vrot.slane %v1208, 3
      %v1389 = vsel %vm1288, %v1388, %v1387
      %v1390 = vrot.slane %v1209, 2
      %v1391 = vsel %vm1291, %v1390, %v1389
      %v1392 = vrot.slane %v1210, 1
      %v1393 = vsel %vm1294, %v1392, %v1391
      %1402 = vst [vmem:[%s121] sm:$0xff] %v1295
      %1403 = vst [vmem:[%s121 + $0x8] sm:$0xff] %v1309
      %1404 = vst [vmem:[%s121 + $0x10] sm:$0xff] %v1323
      %1405 = vst [vmem:[%s121 + $0x18] sm:$0xff] %v1337
      %1406 = vst [vmem:[%s121 + $0x20] sm:$0xff] %v1351
      %1407 = vst [vmem:[%s121 + $0x28] sm:$0xff] %v1365
      %1408 = vst [vmem:[%s121 + $0x30] sm:$0xff] %v1379
      %1409 = vst [vmem:[%s121 + $0x38] sm:$0xff] %v1393
      %s1410 = smul.u32 8, %s12
      %p1411 = scmp.lt.s32.totalorder %s1410, 15
      %s1412 = scalar_select %p1411, %s1410, 15
      %s1413 = smul.addr %s1412, 8
      %s1414 = scalar_lea.vmem %s1, %s1413
      // Predicated region
      $region25: #{resnet_dilated_forward.16} parent=23 // pred_check
        %p1415 = pneg %p56
      $region26: #{resnet_dilated_forward.16} parent=23 // pred_check_branch
        %1417 = sbr.rel (%p1415) target = $region28
      $region27: #{resnet_dilated_forward.16} parent=23 // pred_region
        %s1418 = smul.u32 8, %s12
      $region28: #{resnet_dilated_forward.16} parent=23 // pred_fallthru
        _
    $region24: #{resnet_dilated_forward.16} parent=5 // pred_fallthru
      _
    %p1419 = scmp.le.s32.totalorder 2, %s7
    // Predicated region
    $region29: #{resnet_dilated_forward.16} parent=5 // pred_check
      %p1420 = pneg %p1419
    $region30: #{resnet_dilated_forward.16} parent=5 // pred_check_branch
      %1422 = sbr.rel (%p1420) target = $region32
    $region31: #{resnet_dilated_forward.16} parent=5 // pred_region
      %s1423 = ssub.s32 %s7, 2
      // Predicated region
      $region33: #{resnet_dilated_forward.16} parent=31 // pred_check
        %p1424 = pneg %p62
      $region34: #{resnet_dilated_forward.16} parent=31 // pred_check_branch
        %1426 = sbr.rel (%p1424) target = $region36
      $region35: #{resnet_dilated_forward.16} parent=31 // pred_region
        %s1427 = smul.u32 8, %s13
        %p1428 = scmp.lt.s32.totalorder %s1427, 15
        %s1429 = scalar_select %p1428, %s1427, 15
        %s1430 = smul.addr %s1429, 8
        %s1431 = scalar_lea.vmem %s1, %s1430
      $region36: #{resnet_dilated_forward.16} parent=31 // pred_fallthru
        _
    $region32: #{resnet_dilated_forward.16} parent=5 // pred_fallthru
      _
  $region6: #{resnet_dilated_forward.16} parent=0 // loop_footer
    %s11 = sadd.s32 1, %s7
  $region7: #{resnet_dilated_forward.16} parent=0 // loop_footer_branch
    %6 = sbr.rel target = $region3
  $region8: #{resnet_dilated_forward.16} parent=0 // loop_exit
    _

// kernel: resnet_dilated_forward.17
$region0: #{resnet_dilated_forward.17}
  #allocation0 [shape = 'u32[]', space=smem, size = 0x4, offset = 0x4, fixed_abs, tag = 'smem constant byte address 0x4 - core index']
  #allocation1 [shape = 'u32[72,128]{1,0:T(1,128)}', space=vmem, size = 0x9000, scoped, tag = 'internal scratch']
  %s0 = inlined_call_operand.vmem [shape: bf16[128,128], index: 0, kind: input, shape index: {}]
  %s1 = inlined_call_operand.vmem [shape: bf16[128,128], index: 1, kind: input, shape index: {}]
  %s2 = inlined_call_operand.vmem [shape: f32[1,128], index: 2, kind: input, shape index: {}]
  %s3 = inlined_call_operand.vmem [shape: f32[128,128], index: 3, kind: output, shape index: {}]
  %s4 = sld [smem:[#allocation0]]
  $region45: #{resnet_dilated_forward.17} parent=0
    _
  %s6 = ssub.s32 1, %s4
  %s7 = scalar_select 0, %s6, %s4
  loop: start=0, step=1, limit=4
  $region2: #{resnet_dilated_forward.17} parent=0 // loop_pre_header
    _
  $region3: #{resnet_dilated_forward.17} parent=0 // loop_header
    %s9 = sphi 0, %s13
    %p10 = scmp.ge.s32.totalorder %s9, 4
    %s19 = sphi 0, %s21
    %s22 = sphi 0, %s19
    %s23 = sphi 0, %s22
    %s39 = sphi 0, %s23
    %s43 = sphi 0, %s43
    %s45 = sphi 0, %s43
    %s46 = sphi 0, %s45
    %s60 = sphi 0, %s46
    %s64 = sphi 0, %s64
    %s66 = sphi 0, %s64
    %s67 = sphi 0, %s66
    %s81 = sphi 0, %s67
    %s87 = sphi 0, %s89
    %s90 = sphi 0, %s87
    %s91 = sphi 0, %s90
    %s107 = sphi 0, %s91
  $region4: #{resnet_dilated_forward.17} parent=0 // loop_header_branch
    %12 = sbr.rel (%p10) target = $region8
  $region5: #{resnet_dilated_forward.17} parent=0 // loop_body
    %s14 = ssub.s32 %s9, 1
    %s15 = ssub.s32 %s9, 2
    %s16 = sadd.s32 %s9, 1
    %s17 = ssub.s32 %s9, %s16
    %p18 = scmp.eq.s32.totalorder %s17, 0
    %s20 = sadd.s32 %s19, 1
    %s21 = scalar_select %p18, %s19, %s20
    %p24 = pneg %p18
    %p25 = scmp.eq.s32.totalorder %s9, 1
    %p26 = por %p24, %p25
    %p27 = scmp.ne.s32.totalorder %s19, %s22
    %p28 = scmp.eq.s32.totalorder %s9, 0
    %p29 = por %p27, %p28
    %p30 = scmp.ne.s32.totalorder %s19, %s22
    %p31 = scmp.eq.s32.totalorder %s14, 1
    %p32 = por %p30, %p31
    %p33 = scmp.ne.s32.totalorder %s22, %s23
    %p34 = scmp.eq.s32.totalorder %s14, 0
    %p35 = por %p33, %p34
    %p36 = scmp.ne.s32.totalorder %s22, %s23
    %p37 = scmp.eq.s32.totalorder %s15, 1
    %p38 = por %p36, %p37
    %p40 = scmp.ne.s32.totalorder %s23, %s39
    %p41 = scmp.eq.s32.totalorder %s15, 0
    %p42 = por %p40, %p41
    %s44 = sadd.s32 %s43, 1
    %p47 = scmp.eq.s32.totalorder %s9, 1
    %p48 = scmp.ne.s32.totalorder %s43, %s45
    %p49 = scmp.eq.s32.totalorder %s9, 0
    %p50 = por %p48, %p49
    %p51 = scmp.ne.s32.totalorder %s43, %s45
    %p52 = scmp.eq.s32.totalorder %s14, 1
    %p53 = por %p51, %p52
    %p54 = scmp.ne.s32.totalorder %s45, %s46
    %p55 = scmp.eq.s32.totalorder %s14, 0
    %p56 = por %p54, %p55
    %p57 = scmp.ne.s32.totalorder %s45, %s46
    %p58 = scmp.eq.s32.totalorder %s15, 1
    %p59 = por %p57, %p58
    %p61 = scmp.ne.s32.totalorder %s46, %s60
    %p62 = scmp.eq.s32.totalorder %s15, 0
    %p63 = por %p61, %p62
    %s65 = sadd.s32 %s64, 1
    %p68 = scmp.eq.s32.totalorder %s9, 1
    %p69 = scmp.ne.s32.totalorder %s64, %s66
    %p70 = scmp.eq.s32.totalorder %s9, 0
    %p71 = por %p69, %p70
    %p72 = scmp.ne.s32.totalorder %s64, %s66
    %p73 = scmp.eq.s32.totalorder %s14, 1
    %p74 = por %p72, %p73
    %p75 = scmp.ne.s32.totalorder %s66, %s67
    %p76 = scmp.eq.s32.totalorder %s14, 0
    %p77 = por %p75, %p76
    %p78 = scmp.ne.s32.totalorder %s66, %s67
    %p79 = scmp.eq.s32.totalorder %s15, 1
    %p80 = por %p78, %p79
    %p82 = scmp.ne.s32.totalorder %s67, %s81
    %p83 = scmp.eq.s32.totalorder %s15, 0
    %p84 = por %p82, %p83
    %s85 = ssub.s32 %s9, %s16
    %p86 = scmp.eq.s32.totalorder %s85, 0
    %s88 = sadd.s32 %s87, 1
    %s89 = scalar_select %p86, %s87, %s88
    %p92 = pneg %p86
    %p93 = scmp.eq.s32.totalorder %s9, 1
    %p94 = por %p92, %p93
    %p95 = scmp.ne.s32.totalorder %s87, %s90
    %p96 = scmp.eq.s32.totalorder %s9, 0
    %p97 = por %p95, %p96
    %p98 = scmp.ne.s32.totalorder %s87, %s90
    %p99 = scmp.eq.s32.totalorder %s14, 1
    %p100 = por %p98, %p99
    %p101 = scmp.ne.s32.totalorder %s90, %s91
    %p102 = scmp.eq.s32.totalorder %s14, 0
    %p103 = por %p101, %p102
    %p104 = scmp.ne.s32.totalorder %s90, %s91
    %p105 = scmp.eq.s32.totalorder %s15, 1
    %p106 = por %p104, %p105
    %p108 = scmp.ne.s32.totalorder %s91, %s107
    %p109 = scmp.eq.s32.totalorder %s15, 0
    %p110 = por %p108, %p109
    %p111 = scmp.le.s32.totalorder 1, %s9
    %p112 = scmp.lt.s32.totalorder %s9, 3
    %p113 = pnand %p111, %p112
    %p114 = pneg %p113
    // Predicated region
    $region9: #{resnet_dilated_forward.17} parent=5 // pred_check
      _
    $region10: #{resnet_dilated_forward.17} parent=5 // pred_check_branch
      %116 = sbr.rel (%p113) target = $region12
    $region11: #{resnet_dilated_forward.17} parent=5 // pred_region
      %s117 = ssub.s32 %s9, 1
      // Predicated region
      $region13: #{resnet_dilated_forward.17} parent=11 // pred_check
        %p118 = pneg %p56
      $region14: #{resnet_dilated_forward.17} parent=11 // pred_check_branch
        %120 = sbr.rel (%p118) target = $region16
      $region15: #{resnet_dilated_forward.17} parent=11 // pred_region
        _
      $region16: #{resnet_dilated_forward.17} parent=11 // pred_fallthru
        _
      // Predicated region
      $region17: #{resnet_dilated_forward.17} parent=11 // pred_check
        %p121 = pneg %p77
      $region18: #{resnet_dilated_forward.17} parent=11 // pred_check_branch
        %123 = sbr.rel (%p121) target = $region20
      $region19: #{resnet_dilated_forward.17} parent=11 // pred_region
        _
      $region20: #{resnet_dilated_forward.17} parent=11 // pred_fallthru
        _
    $region12: #{resnet_dilated_forward.17} parent=5 // pred_fallthru
      _
    %p124 = scmp.lt.s32.totalorder %s9, 2
    // Predicated region
    $region21: #{resnet_dilated_forward.17} parent=5 // pred_check
      %p125 = pneg %p124
    $region22: #{resnet_dilated_forward.17} parent=5 // pred_check_branch
      %127 = sbr.rel (%p125) target = $region24
    $region23: #{resnet_dilated_forward.17} parent=5 // pred_region
      // Predicated region
      $region25: #{resnet_dilated_forward.17} parent=23 // pred_check
        %p128 = pneg %p29
      $region26: #{resnet_dilated_forward.17} parent=23 // pred_check_branch
        %130 = sbr.rel (%p128) target = $region28
      $region27: #{resnet_dilated_forward.17} parent=23 // pred_region
        %s131 = smul.u32 8, %s9
        %p132 = scmp.lt.s32.totalorder %s131, 15
        %s133 = scalar_select %p132, %s131, 15
        %s134 = smul.addr %s133, 4
        %s135 = scalar_lea.vmem %s0, %s134
        %s136 = smul.u32 8, %s9
      $region28: #{resnet_dilated_forward.17} parent=23 // pred_fallthru
        _
    $region24: #{resnet_dilated_forward.17} parent=5 // pred_fallthru
      _
    %p137 = scmp.le.s32.totalorder 1, %s9
    %p138 = scmp.lt.s32.totalorder %s9, 3
    %p139 = pnand %p137, %p138
    %p140 = pneg %p139
    // Predicated region
    $region29: #{resnet_dilated_forward.17} parent=5 // pred_check
      _
    $region30: #{resnet_dilated_forward.17} parent=5 // pred_check_branch
      %142 = sbr.rel (%p139) target = $region32
    $region31: #{resnet_dilated_forward.17} parent=5 // pred_region
      %s143 = ssub.s32 %s9, 1
      %s144 = smul.u32 8, %s14
      %p145 = scmp.lt.s32.totalorder %s144, 15
      %s146 = scalar_select %p145, %s144, 15
      %s147 = smul.addr %s146, 4
      %s148 = scalar_lea.vmem %s0, %s147
      %p149 = pneg %p35
      %p150 = pneg %p32
      %p151 = pneg %p56
      %p152 = pneg %p53
      %p153 = pneg %p77
      %p154 = pneg %p74
      %p155 = pneg %p103
      %p156 = pneg %p100
      %s157 = smul.u32 8, %s14
      %p158 = scmp.lt.s32.totalorder %s157, 15
      %s159 = scalar_select %p158, %s157, 15
      %s160 = smul.addr %s159, 8
      %s161 = scalar_lea.vmem %s3, %s160
      %s162 = smul.u32 8, %s14
      %p163 = scmp.lt.s32.totalorder %s162, 15
      %s164 = scalar_select %p163, %s162, 15
      %s165 = smul.addr %s164, 4
      %s166 = scalar_lea.vmem %s0, %s165
      %s167 = smul.u32 8, %s14
      %s168 = smul.u32 8, %s14
      %p169 = scmp.lt.s32.totalorder %s168, 15
      %s170 = scalar_select %p169, %s168, 15
      %s171 = smul.addr %s170, 8
      %s172 = scalar_lea.vmem %s3, %s171
      %s173 = smul.u32 8, %s14
      %v174 = vld [vmem:[%s166] sm:$0xf]
      %v175 = vld [vmem:[%s166 + $0x4] sm:$0xf]
      %v176 = vld [vmem:[%s166 + $0x8] sm:$0xf]
      %v177 = vld [vmem:[%s166 + $0xc] sm:$0xf]
      %v178 = vld [vmem:[%s166 + $0x10] sm:$0xf]
      %v179 = vld [vmem:[%s166 + $0x14] sm:$0xf]
      %v180 = vld [vmem:[%s166 + $0x18] sm:$0xf]
      %v181 = vld [vmem:[%s166 + $0x1c] sm:$0xf]
      %v182 = vld [vmem:[%s1] sm:$0xf]
      %v183 = vld [vmem:[%s1 + $0x4] sm:$0xf]
      %v184 = vld [vmem:[%s1 + $0x8] sm:$0xf]
      %v185 = vld [vmem:[%s1 + $0xc] sm:$0xf]
      %v186 = vld [vmem:[%s1 + $0x10] sm:$0xf]
      %v187 = vld [vmem:[%s1 + $0x14] sm:$0xf]
      %v188 = vld [vmem:[%s1 + $0x18] sm:$0xf]
      %v189 = vld [vmem:[%s1 + $0x1c] sm:$0xf]
      %v190 = vld [vmem:[%s1 + $0x20] sm:$0xf]
      %v191 = vld [vmem:[%s1 + $0x24] sm:$0xf]
      %v192 = vld [vmem:[%s1 + $0x28] sm:$0xf]
      %v193 = vld [vmem:[%s1 + $0x2c] sm:$0xf]
      %v194 = vld [vmem:[%s1 + $0x30] sm:$0xf]
      %v195 = vld [vmem:[%s1 + $0x34] sm:$0xf]
      %v196 = vld [vmem:[%s1 + $0x38] sm:$0xf]
      %v197 = vld [vmem:[%s1 + $0x3c] sm:$0xf]
      %v198 = vld [vmem:[%s2] sm:$0x1]
      %v200 = vperm.slane %v198, 0
      %v210 = vunpack.c.l.b16 %v174
      %v211 = vunpack.c.l.b16 %v175
      %v212 = vunpack.c.l.b16 %v176
      %v213 = vunpack.c.l.b16 %v177
      %v214 = vunpack.c.l.b16 %v178
      %v215 = vunpack.c.l.b16 %v179
      %v216 = vunpack.c.l.b16 %v180
      %v217 = vunpack.c.l.b16 %v181
      %v218 = vpack.c.b16 %v211, %v210
      %v219 = vpack.c.b16 %v213, %v212
      %v220 = vpack.c.b16 %v215, %v214
      %v221 = vpack.c.b16 %v217, %v216
      %v242 = vunpack.c.l.b16 %v182
      %v243 = vunpack.c.l.b16 %v183
      %v244 = vunpack.c.l.b16 %v184
      %v245 = vunpack.c.l.b16 %v185
      %v246 = vunpack.c.l.b16 %v186
      %v247 = vunpack.c.l.b16 %v187
      %v248 = vunpack.c.l.b16 %v188
      %v249 = vunpack.c.l.b16 %v189
      %v250 = vunpack.c.l.b16 %v190
      %v251 = vunpack.c.l.b16 %v191
      %v252 = vunpack.c.l.b16 %v192
      %v253 = vunpack.c.l.b16 %v193
      %v254 = vunpack.c.l.b16 %v194
      %v255 = vunpack.c.l.b16 %v195
      %v256 = vunpack.c.l.b16 %v196
      %v257 = vunpack.c.l.b16 %v197
      %v258 = vpack.c.b16 %v243, %v242
      %v259 = vpack.c.b16 %v245, %v244
      %v260 = vpack.c.b16 %v247, %v246
      %v261 = vpack.c.b16 %v249, %v248
      %v262 = vpack.c.b16 %v251, %v250
      %v263 = vpack.c.b16 %v253, %v252
      %v264 = vpack.c.b16 %v255, %v254
      %v265 = vpack.c.b16 %v257, %v256
      %274 = vmatpush.bf16.msra.mxu0 %v265
      %275 = vmatpush.bf16.msra.mxu0 %v264
      %276 = vmatpush.bf16.msra.mxu0 %v263
      %277 = vmatpush.bf16.msra.mxu0 %v262
      %278 = vmatpush.bf16.msra.mxu0 %v261
      %279 = vmatpush.bf16.msra.mxu0 %v260
      %280 = vmatpush.bf16.msra.mxu0 %v259
      %281 = vmatpush.bf16.msra.mxu0 %v258
      %282 = vmatmul.bf16.gmra.mxu0 %v218
      %v283 = vpop.f32.mrf.mxu0
      %v284 = vadd.f32 %v200, %v283
      %v285 = vpop.f32.mrf.mxu0
      %v286 = vadd.f32 %v200, %v285
      %287 = vmatmul.bf16.gmra.mxu0 %v219
      %v288 = vpop.f32.mrf.mxu0
      %v289 = vadd.f32 %v200, %v288
      %v290 = vpop.f32.mrf.mxu0
      %v291 = vadd.f32 %v200, %v290
      %292 = vmatmul.bf16.gmra.mxu0 %v220
      %v293 = vpop.f32.mrf.mxu0
      %v294 = vadd.f32 %v200, %v293
      %v295 = vpop.f32.mrf.mxu0
      %v296 = vadd.f32 %v200, %v295
      %297 = vmatmul.bf16.gmra.mxu0 %v221
      %v298 = vpop.f32.mrf.mxu0
      %v299 = vadd.f32 %v200, %v298
      %v300 = vpop.f32.mrf.mxu0
      %v301 = vadd.f32 %v200, %v300
      %302 = vdwg.mxu0
      %v303 = vmax.f32 %v284, 0.0
      %v304 = vmax.f32 %v286, 0.0
      %v305 = vmax.f32 %v289, 0.0
      %v306 = vmax.f32 %v291, 0.0
      %v307 = vmax.f32 %v294, 0.0
      %v308 = vmax.f32 %v296, 0.0
      %v309 = vmax.f32 %v299, 0.0
      %v310 = vmax.f32 %v301, 0.0
      %311 = vst [vmem:[%s172] sm:$0xff] %v303
      %312 = vst [vmem:[%s172 + $0x8] sm:$0xff] %v304
      %313 = vst [vmem:[%s172 + $0x10] sm:$0xff] %v305
      %314 = vst [vmem:[%s172 + $0x18] sm:$0xff] %v306
      %315 = vst [vmem:[%s172 + $0x20] sm:$0xff] %v307
      %316 = vst [vmem:[%s172 + $0x28] sm:$0xff] %v308
      %317 = vst [vmem:[%s172 + $0x30] sm:$0xff] %v309
      %318 = vst [vmem:[%s172 + $0x38] sm:$0xff] %v310
      %s319 = smul.u32 8, %s14
      %p320 = scmp.lt.s32.totalorder %s319, 15
      %s321 = scalar_select %p320, %s319, 15
      %s322 = smul.addr %s321, 8
      %s323 = scalar_lea.vmem %s3, %s322
      // Predicated region
      $region33: #{resnet_dilated_forward.17} parent=31 // pred_check
        %p324 = pneg %p100
      $region34: #{resnet_dilated_forward.17} parent=31 // pred_check_branch
        %326 = sbr.rel (%p324) target = $region36
      $region35: #{resnet_dilated_forward.17} parent=31 // pred_region
        %s327 = smul.u32 8, %s14
      $region36: #{resnet_dilated_forward.17} parent=31 // pred_fallthru
        _
    $region32: #{resnet_dilated_forward.17} parent=5 // pred_fallthru
      _
    %p328 = scmp.le.s32.totalorder 2, %s9
    // Predicated region
    $region37: #{resnet_dilated_forward.17} parent=5 // pred_check
      %p329 = pneg %p328
    $region38: #{resnet_dilated_forward.17} parent=5 // pred_check_branch
      %331 = sbr.rel (%p329) target = $region40
    $region39: #{resnet_dilated_forward.17} parent=5 // pred_region
      %s332 = ssub.s32 %s9, 2
      // Predicated region
      $region41: #{resnet_dilated_forward.17} parent=39 // pred_check
        %p333 = pneg %p106
      $region42: #{resnet_dilated_forward.17} parent=39 // pred_check_branch
        %335 = sbr.rel (%p333) target = $region44
      $region43: #{resnet_dilated_forward.17} parent=39 // pred_region
        %s336 = smul.u32 8, %s15
        %p337 = scmp.lt.s32.totalorder %s336, 15
        %s338 = scalar_select %p337, %s336, 15
        %s339 = smul.addr %s338, 8
        %s340 = scalar_lea.vmem %s3, %s339
      $region44: #{resnet_dilated_forward.17} parent=39 // pred_fallthru
        _
    $region40: #{resnet_dilated_forward.17} parent=5 // pred_fallthru
      _
  $region6: #{resnet_dilated_forward.17} parent=0 // loop_footer
    %s13 = sadd.s32 1, %s9
  $region7: #{resnet_dilated_forward.17} parent=0 // loop_footer_branch
    %8 = sbr.rel target = $region3
  $region8: #{resnet_dilated_forward.17} parent=0 // loop_exit
    _

// kernel: resnet_dilated_forward.18
$region0: #{resnet_dilated_forward.18}
  #allocation0 [shape = 'u32[]', space=smem, size = 0x4, offset = 0x4, fixed_abs, tag = 'smem constant byte address 0x4 - core index']
  #allocation1 [shape = 'u32[72,128]{1,0:T(1,128)}', space=vmem, size = 0x9000, scoped, tag = 'internal scratch']
  %s0 = inlined_call_operand.vmem [shape: bf16[128,128], index: 0, kind: input, shape index: {}]
  %s1 = inlined_call_operand.vmem [shape: bf16[128,128], index: 1, kind: input, shape index: {}]
  %s2 = inlined_call_operand.vmem [shape: f32[1,128], index: 2, kind: input, shape index: {}]
  %s3 = inlined_call_operand.vmem [shape: f32[128,128], index: 3, kind: input, shape index: {}]
  %s4 = inlined_call_operand.vmem [shape: f32[128,128], index: 4, kind: output, shape index: {}]
  %s5 = sld [smem:[#allocation0]]
  $region49: #{resnet_dilated_forward.18} parent=0
    _
  %s7 = ssub.s32 1, %s5
  %s8 = scalar_select 0, %s7, %s5
  loop: start=0, step=1, limit=4
  $region2: #{resnet_dilated_forward.18} parent=0 // loop_pre_header
    _
  $region3: #{resnet_dilated_forward.18} parent=0 // loop_header
    %s10 = sphi 0, %s14
    %p11 = scmp.ge.s32.totalorder %s10, 4
    %s20 = sphi 0, %s22
    %s23 = sphi 0, %s20
    %s24 = sphi 0, %s23
    %s40 = sphi 0, %s24
    %s44 = sphi 0, %s44
    %s46 = sphi 0, %s44
    %s47 = sphi 0, %s46
    %s61 = sphi 0, %s47
    %s65 = sphi 0, %s65
    %s67 = sphi 0, %s65
    %s68 = sphi 0, %s67
    %s82 = sphi 0, %s68
    %s88 = sphi 0, %s90
    %s91 = sphi 0, %s88
    %s92 = sphi 0, %s91
    %s108 = sphi 0, %s92
    %s114 = sphi 0, %s116
    %s117 = sphi 0, %s114
    %s118 = sphi 0, %s117
    %s134 = sphi 0, %s118
  $region4: #{resnet_dilated_forward.18} parent=0 // loop_header_branch
    %13 = sbr.rel (%p11) target = $region8
  $region5: #{resnet_dilated_forward.18} parent=0 // loop_body
    %s15 = ssub.s32 %s10, 1
    %s16 = ssub.s32 %s10, 2
    %s17 = sadd.s32 %s10, 1
    %s18 = ssub.s32 %s10, %s17
    %p19 = scmp.eq.s32.totalorder %s18, 0
    %s21 = sadd.s32 %s20, 1
    %s22 = scalar_select %p19, %s20, %s21
    %p25 = pneg %p19
    %p26 = scmp.eq.s32.totalorder %s10, 1
    %p27 = por %p25, %p26
    %p28 = scmp.ne.s32.totalorder %s20, %s23
    %p29 = scmp.eq.s32.totalorder %s10, 0
    %p30 = por %p28, %p29
    %p31 = scmp.ne.s32.totalorder %s20, %s23
    %p32 = scmp.eq.s32.totalorder %s15, 1
    %p33 = por %p31, %p32
    %p34 = scmp.ne.s32.totalorder %s23, %s24
    %p35 = scmp.eq.s32.totalorder %s15, 0
    %p36 = por %p34, %p35
    %p37 = scmp.ne.s32.totalorder %s23, %s24
    %p38 = scmp.eq.s32.totalorder %s16, 1
    %p39 = por %p37, %p38
    %p41 = scmp.ne.s32.totalorder %s24, %s40
    %p42 = scmp.eq.s32.totalorder %s16, 0
    %p43 = por %p41, %p42
    %s45 = sadd.s32 %s44, 1
    %p48 = scmp.eq.s32.totalorder %s10, 1
    %p49 = scmp.ne.s32.totalorder %s44, %s46
    %p50 = scmp.eq.s32.totalorder %s10, 0
    %p51 = por %p49, %p50
    %p52 = scmp.ne.s32.totalorder %s44, %s46
    %p53 = scmp.eq.s32.totalorder %s15, 1
    %p54 = por %p52, %p53
    %p55 = scmp.ne.s32.totalorder %s46, %s47
    %p56 = scmp.eq.s32.totalorder %s15, 0
    %p57 = por %p55, %p56
    %p58 = scmp.ne.s32.totalorder %s46, %s47
    %p59 = scmp.eq.s32.totalorder %s16, 1
    %p60 = por %p58, %p59
    %p62 = scmp.ne.s32.totalorder %s47, %s61
    %p63 = scmp.eq.s32.totalorder %s16, 0
    %p64 = por %p62, %p63
    %s66 = sadd.s32 %s65, 1
    %p69 = scmp.eq.s32.totalorder %s10, 1
    %p70 = scmp.ne.s32.totalorder %s65, %s67
    %p71 = scmp.eq.s32.totalorder %s10, 0
    %p72 = por %p70, %p71
    %p73 = scmp.ne.s32.totalorder %s65, %s67
    %p74 = scmp.eq.s32.totalorder %s15, 1
    %p75 = por %p73, %p74
    %p76 = scmp.ne.s32.totalorder %s67, %s68
    %p77 = scmp.eq.s32.totalorder %s15, 0
    %p78 = por %p76, %p77
    %p79 = scmp.ne.s32.totalorder %s67, %s68
    %p80 = scmp.eq.s32.totalorder %s16, 1
    %p81 = por %p79, %p80
    %p83 = scmp.ne.s32.totalorder %s68, %s82
    %p84 = scmp.eq.s32.totalorder %s16, 0
    %p85 = por %p83, %p84
    %s86 = ssub.s32 %s10, %s17
    %p87 = scmp.eq.s32.totalorder %s86, 0
    %s89 = sadd.s32 %s88, 1
    %s90 = scalar_select %p87, %s88, %s89
    %p93 = pneg %p87
    %p94 = scmp.eq.s32.totalorder %s10, 1
    %p95 = por %p93, %p94
    %p96 = scmp.ne.s32.totalorder %s88, %s91
    %p97 = scmp.eq.s32.totalorder %s10, 0
    %p98 = por %p96, %p97
    %p99 = scmp.ne.s32.totalorder %s88, %s91
    %p100 = scmp.eq.s32.totalorder %s15, 1
    %p101 = por %p99, %p100
    %p102 = scmp.ne.s32.totalorder %s91, %s92
    %p103 = scmp.eq.s32.totalorder %s15, 0
    %p104 = por %p102, %p103
    %p105 = scmp.ne.s32.totalorder %s91, %s92
    %p106 = scmp.eq.s32.totalorder %s16, 1
    %p107 = por %p105, %p106
    %p109 = scmp.ne.s32.totalorder %s92, %s108
    %p110 = scmp.eq.s32.totalorder %s16, 0
    %p111 = por %p109, %p110
    %s112 = ssub.s32 %s10, %s17
    %p113 = scmp.eq.s32.totalorder %s112, 0
    %s115 = sadd.s32 %s114, 1
    %s116 = scalar_select %p113, %s114, %s115
    %p119 = pneg %p113
    %p120 = scmp.eq.s32.totalorder %s10, 1
    %p121 = por %p119, %p120
    %p122 = scmp.ne.s32.totalorder %s114, %s117
    %p123 = scmp.eq.s32.totalorder %s10, 0
    %p124 = por %p122, %p123
    %p125 = scmp.ne.s32.totalorder %s114, %s117
    %p126 = scmp.eq.s32.totalorder %s15, 1
    %p127 = por %p125, %p126
    %p128 = scmp.ne.s32.totalorder %s117, %s118
    %p129 = scmp.eq.s32.totalorder %s15, 0
    %p130 = por %p128, %p129
    %p131 = scmp.ne.s32.totalorder %s117, %s118
    %p132 = scmp.eq.s32.totalorder %s16, 1
    %p133 = por %p131, %p132
    %p135 = scmp.ne.s32.totalorder %s118, %s134
    %p136 = scmp.eq.s32.totalorder %s16, 0
    %p137 = por %p135, %p136
    %p138 = scmp.le.s32.totalorder 1, %s10
    %p139 = scmp.lt.s32.totalorder %s10, 3
    %p140 = pnand %p138, %p139
    %p141 = pneg %p140
    // Predicated region
    $region9: #{resnet_dilated_forward.18} parent=5 // pred_check
      _
    $region10: #{resnet_dilated_forward.18} parent=5 // pred_check_branch
      %143 = sbr.rel (%p140) target = $region12
    $region11: #{resnet_dilated_forward.18} parent=5 // pred_region
      %s144 = ssub.s32 %s10, 1
      // Predicated region
      $region13: #{resnet_dilated_forward.18} parent=11 // pred_check
        %p145 = pneg %p57
      $region14: #{resnet_dilated_forward.18} parent=11 // pred_check_branch
        %147 = sbr.rel (%p145) target = $region16
      $region15: #{resnet_dilated_forward.18} parent=11 // pred_region
        _
      $region16: #{resnet_dilated_forward.18} parent=11 // pred_fallthru
        _
      // Predicated region
      $region17: #{resnet_dilated_forward.18} parent=11 // pred_check
        %p148 = pneg %p78
      $region18: #{resnet_dilated_forward.18} parent=11 // pred_check_branch
        %150 = sbr.rel (%p148) target = $region20
      $region19: #{resnet_dilated_forward.18} parent=11 // pred_region
        _
      $region20: #{resnet_dilated_forward.18} parent=11 // pred_fallthru
        _
    $region12: #{resnet_dilated_forward.18} parent=5 // pred_fallthru
      _
    %p151 = scmp.lt.s32.totalorder %s10, 2
    // Predicated region
    $region21: #{resnet_dilated_forward.18} parent=5 // pred_check
      %p152 = pneg %p151
    $region22: #{resnet_dilated_forward.18} parent=5 // pred_check_branch
      %154 = sbr.rel (%p152) target = $region24
    $region23: #{resnet_dilated_forward.18} parent=5 // pred_region
      // Predicated region
      $region25: #{resnet_dilated_forward.18} parent=23 // pred_check
        %p155 = pneg %p30
      $region26: #{resnet_dilated_forward.18} parent=23 // pred_check_branch
        %157 = sbr.rel (%p155) target = $region28
      $region27: #{resnet_dilated_forward.18} parent=23 // pred_region
        %s158 = smul.u32 8, %s10
        %p159 = scmp.lt.s32.totalorder %s158, 15
        %s160 = scalar_select %p159, %s158, 15
        %s161 = smul.addr %s160, 4
        %s162 = scalar_lea.vmem %s0, %s161
        %s163 = smul.u32 8, %s10
      $region28: #{resnet_dilated_forward.18} parent=23 // pred_fallthru
        _
      // Predicated region
      $region29: #{resnet_dilated_forward.18} parent=23 // pred_check
        %p164 = pneg %p98
      $region30: #{resnet_dilated_forward.18} parent=23 // pred_check_branch
        %166 = sbr.rel (%p164) target = $region32
      $region31: #{resnet_dilated_forward.18} parent=23 // pred_region
        %s167 = smul.u32 8, %s10
        %p168 = scmp.lt.s32.totalorder %s167, 15
        %s169 = scalar_select %p168, %s167, 15
        %s170 = smul.addr %s169, 8
        %s171 = scalar_lea.vmem %s3, %s170
        %s172 = smul.u32 8, %s10
      $region32: #{resnet_dilated_forward.18} parent=23 // pred_fallthru
        _
    $region24: #{resnet_dilated_forward.18} parent=5 // pred_fallthru
      _
    %p173 = scmp.le.s32.totalorder 1, %s10
    %p174 = scmp.lt.s32.totalorder %s10, 3
    %p175 = pnand %p173, %p174
    %p176 = pneg %p175
    // Predicated region
    $region33: #{resnet_dilated_forward.18} parent=5 // pred_check
      _
    $region34: #{resnet_dilated_forward.18} parent=5 // pred_check_branch
      %178 = sbr.rel (%p175) target = $region36
    $region35: #{resnet_dilated_forward.18} parent=5 // pred_region
      %s179 = ssub.s32 %s10, 1
      %s180 = smul.u32 8, %s15
      %p181 = scmp.lt.s32.totalorder %s180, 15
      %s182 = scalar_select %p181, %s180, 15
      %s183 = smul.addr %s182, 4
      %s184 = scalar_lea.vmem %s0, %s183
      %p185 = pneg %p36
      %p186 = pneg %p33
      %p187 = pneg %p57
      %p188 = pneg %p54
      %p189 = pneg %p78
      %p190 = pneg %p75
      %s191 = smul.u32 8, %s15
      %p192 = scmp.lt.s32.totalorder %s191, 15
      %s193 = scalar_select %p192, %s191, 15
      %s194 = smul.addr %s193, 8
      %s195 = scalar_lea.vmem %s3, %s194
      %p196 = pneg %p104
      %p197 = pneg %p101
      %p198 = pneg %p130
      %p199 = pneg %p127
      %s200 = smul.u32 8, %s15
      %p201 = scmp.lt.s32.totalorder %s200, 15
      %s202 = scalar_select %p201, %s200, 15
      %s203 = smul.addr %s202, 8
      %s204 = scalar_lea.vmem %s4, %s203
      %s205 = smul.u32 8, %s15
      %p206 = scmp.lt.s32.totalorder %s205, 15
      %s207 = scalar_select %p206, %s205, 15
      %s208 = smul.addr %s207, 4
      %s209 = scalar_lea.vmem %s0, %s208
      %s210 = smul.u32 8, %s15
      %s211 = smul.u32 8, %s15
      %p212 = scmp.lt.s32.totalorder %s211, 15
      %s213 = scalar_select %p212, %s211, 15
      %s214 = smul.addr %s213, 8
      %s215 = scalar_lea.vmem %s3, %s214
      %s216 = smul.u32 8, %s15
      %s217 = smul.u32 8, %s15
      %p218 = scmp.lt.s32.totalorder %s217, 15
      %s219 = scalar_select %p218, %s217, 15
      %s220 = smul.addr %s219, 8
      %s221 = scalar_lea.vmem %s4, %s220
      %s222 = smul.u32 8, %s15
      %v223 = vld [vmem:[%s209] sm:$0xf]
      %v224 = vld [vmem:[%s209 + $0x4] sm:$0xf]
      %v225 = vld [vmem:[%s209 + $0x8] sm:$0xf]
      %v226 = vld [vmem:[%s209 + $0xc] sm:$0xf]
      %v227 = vld [vmem:[%s209 + $0x10] sm:$0xf]
      %v228 = vld [vmem:[%s209 + $0x14] sm:$0xf]
      %v229 = vld [vmem:[%s209 + $0x18] sm:$0xf]
      %v230 = vld [vmem:[%s209 + $0x1c] sm:$0xf]
      %v231 = vld [vmem:[%s1] sm:$0xf]
      %v232 = vld [vmem:[%s1 + $0x4] sm:$0xf]
      %v233 = vld [vmem:[%s1 + $0x8] sm:$0xf]
      %v234 = vld [vmem:[%s1 + $0xc] sm:$0xf]
      %v235 = vld [vmem:[%s1 + $0x10] sm:$0xf]
      %v236 = vld [vmem:[%s1 + $0x14] sm:$0xf]
      %v237 = vld [vmem:[%s1 + $0x18] sm:$0xf]
      %v238 = vld [vmem:[%s1 + $0x1c] sm:$0xf]
      %v239 = vld [vmem:[%s1 + $0x20] sm:$0xf]
      %v240 = vld [vmem:[%s1 + $0x24] sm:$0xf]
      %v241 = vld [vmem:[%s1 + $0x28] sm:$0xf]
      %v242 = vld [vmem:[%s1 + $0x2c] sm:$0xf]
      %v243 = vld [vmem:[%s1 + $0x30] sm:$0xf]
      %v244 = vld [vmem:[%s1 + $0x34] sm:$0xf]
      %v245 = vld [vmem:[%s1 + $0x38] sm:$0xf]
      %v246 = vld [vmem:[%s1 + $0x3c] sm:$0xf]
      %v247 = vld [vmem:[%s2] sm:$0x1]
      %v249 = vperm.slane %v247, 0
      %v259 = vunpack.c.l.b16 %v223
      %v260 = vunpack.c.l.b16 %v224
      %v261 = vunpack.c.l.b16 %v225
      %v262 = vunpack.c.l.b16 %v226
      %v263 = vunpack.c.l.b16 %v227
      %v264 = vunpack.c.l.b16 %v228
      %v265 = vunpack.c.l.b16 %v229
      %v266 = vunpack.c.l.b16 %v230
      %v267 = vpack.c.b16 %v260, %v259
      %v268 = vpack.c.b16 %v262, %v261
      %v269 = vpack.c.b16 %v264, %v263
      %v270 = vpack.c.b16 %v266, %v265
      %v291 = vunpack.c.l.b16 %v231
      %v292 = vunpack.c.l.b16 %v232
      %v293 = vunpack.c.l.b16 %v233
      %v294 = vunpack.c.l.b16 %v234
      %v295 = vunpack.c.l.b16 %v235
      %v296 = vunpack.c.l.b16 %v236
      %v297 = vunpack.c.l.b16 %v237
      %v298 = vunpack.c.l.b16 %v238
      %v299 = vunpack.c.l.b16 %v239
      %v300 = vunpack.c.l.b16 %v240
      %v301 = vunpack.c.l.b16 %v241
      %v302 = vunpack.c.l.b16 %v242
      %v303 = vunpack.c.l.b16 %v243
      %v304 = vunpack.c.l.b16 %v244
      %v305 = vunpack.c.l.b16 %v245
      %v306 = vunpack.c.l.b16 %v246
      %v307 = vpack.c.b16 %v292, %v291
      %v308 = vpack.c.b16 %v294, %v293
      %v309 = vpack.c.b16 %v296, %v295
      %v310 = vpack.c.b16 %v298, %v297
      %v311 = vpack.c.b16 %v300, %v299
      %v312 = vpack.c.b16 %v302, %v301
      %v313 = vpack.c.b16 %v304, %v303
      %v314 = vpack.c.b16 %v306, %v305
      %323 = vmatpush.bf16.msra.mxu0 %v314
      %324 = vmatpush.bf16.msra.mxu0 %v313
      %325 = vmatpush.bf16.msra.mxu0 %v312
      %326 = vmatpush.bf16.msra.mxu0 %v311
      %327 = vmatpush.bf16.msra.mxu0 %v310
      %328 = vmatpush.bf16.msra.mxu0 %v309
      %329 = vmatpush.bf16.msra.mxu0 %v308
      %330 = vmatpush.bf16.msra.mxu0 %v307
      %331 = vmatmul.bf16.gmra.mxu0 %v267
      %v332 = vpop.f32.mrf.mxu0
      %v333 = vadd.f32 %v249, %v332
      %v334 = vpop.f32.mrf.mxu0
      %v335 = vadd.f32 %v249, %v334
      %336 = vmatmul.bf16.gmra.mxu0 %v268
      %v337 = vpop.f32.mrf.mxu0
      %v338 = vadd.f32 %v249, %v337
      %v339 = vpop.f32.mrf.mxu0
      %v340 = vadd.f32 %v249, %v339
      %341 = vmatmul.bf16.gmra.mxu0 %v269
      %v342 = vpop.f32.mrf.mxu0
      %v343 = vadd.f32 %v249, %v342
      %v344 = vpop.f32.mrf.mxu0
      %v345 = vadd.f32 %v249, %v344
      %346 = vmatmul.bf16.gmra.mxu0 %v270
      %v347 = vpop.f32.mrf.mxu0
      %v348 = vadd.f32 %v249, %v347
      %v349 = vpop.f32.mrf.mxu0
      %v350 = vadd.f32 %v249, %v349
      %351 = vdwg.mxu0
      %v352 = vld [vmem:[%s215] sm:$0xff]
      %v353 = vld [vmem:[%s215 + $0x8] sm:$0xff]
      %v354 = vld [vmem:[%s215 + $0x10] sm:$0xff]
      %v355 = vld [vmem:[%s215 + $0x18] sm:$0xff]
      %v356 = vld [vmem:[%s215 + $0x20] sm:$0xff]
      %v357 = vld [vmem:[%s215 + $0x28] sm:$0xff]
      %v358 = vld [vmem:[%s215 + $0x30] sm:$0xff]
      %v359 = vld [vmem:[%s215 + $0x38] sm:$0xff]
      %v360 = vadd.f32 %v333, %v352
      %v361 = vadd.f32 %v335, %v353
      %v362 = vadd.f32 %v338, %v354
      %v363 = vadd.f32 %v340, %v355
      %v364 = vadd.f32 %v343, %v356
      %v365 = vadd.f32 %v345, %v357
      %v366 = vadd.f32 %v348, %v358
      %v367 = vadd.f32 %v350, %v359
      %v368 = vmax.f32 %v360, 0.0
      %v369 = vmax.f32 %v361, 0.0
      %v370 = vmax.f32 %v362, 0.0
      %v371 = vmax.f32 %v363, 0.0
      %v372 = vmax.f32 %v364, 0.0
      %v373 = vmax.f32 %v365, 0.0
      %v374 = vmax.f32 %v366, 0.0
      %v375 = vmax.f32 %v367, 0.0
      %376 = vst [vmem:[%s221] sm:$0xff] %v368
      %377 = vst [vmem:[%s221 + $0x8] sm:$0xff] %v369
      %378 = vst [vmem:[%s221 + $0x10] sm:$0xff] %v370
      %379 = vst [vmem:[%s221 + $0x18] sm:$0xff] %v371
      %380 = vst [vmem:[%s221 + $0x20] sm:$0xff] %v372
      %381 = vst [vmem:[%s221 + $0x28] sm:$0xff] %v373
      %382 = vst [vmem:[%s221 + $0x30] sm:$0xff] %v374
      %383 = vst [vmem:[%s221 + $0x38] sm:$0xff] %v375
      %s384 = smul.u32 8, %s15
      %p385 = scmp.lt.s32.totalorder %s384, 15
      %s386 = scalar_select %p385, %s384, 15
      %s387 = smul.addr %s386, 8
      %s388 = scalar_lea.vmem %s4, %s387
      // Predicated region
      $region37: #{resnet_dilated_forward.18} parent=35 // pred_check
        %p389 = pneg %p127
      $region38: #{resnet_dilated_forward.18} parent=35 // pred_check_branch
        %391 = sbr.rel (%p389) target = $region40
      $region39: #{resnet_dilated_forward.18} parent=35 // pred_region
        %s392 = smul.u32 8, %s15
      $region40: #{resnet_dilated_forward.18} parent=35 // pred_fallthru
        _
    $region36: #{resnet_dilated_forward.18} parent=5 // pred_fallthru
      _
    %p393 = scmp.le.s32.totalorder 2, %s10
    // Predicated region
    $region41: #{resnet_dilated_forward.18} parent=5 // pred_check
      %p394 = pneg %p393
    $region42: #{resnet_dilated_forward.18} parent=5 // pred_check_branch
      %396 = sbr.rel (%p394) target = $region44
    $region43: #{resnet_dilated_forward.18} parent=5 // pred_region
      %s397 = ssub.s32 %s10, 2
      // Predicated region
      $region45: #{resnet_dilated_forward.18} parent=43 // pred_check
        %p398 = pneg %p133
      $region46: #{resnet_dilated_forward.18} parent=43 // pred_check_branch
        %400 = sbr.rel (%p398) target = $region48
      $region47: #{resnet_dilated_forward.18} parent=43 // pred_region
        %s401 = smul.u32 8, %s16
        %p402 = scmp.lt.s32.totalorder %s401, 15
        %s403 = scalar_select %p402, %s401, 15
        %s404 = smul.addr %s403, 8
        %s405 = scalar_lea.vmem %s4, %s404
      $region48: #{resnet_dilated_forward.18} parent=43 // pred_fallthru
        _
    $region44: #{resnet_dilated_forward.18} parent=5 // pred_fallthru
      _
  $region6: #{resnet_dilated_forward.18} parent=0 // loop_footer
    %s14 = sadd.s32 1, %s10
  $region7: #{resnet_dilated_forward.18} parent=0 // loop_footer_branch
    %9 = sbr.rel target = $region3
  $region8: #{resnet_dilated_forward.18} parent=0 // loop_exit
    _

// kernel: resnet_dilated_forward.20
$region0: #{resnet_dilated_forward.20}
  #allocation0 [shape = 'u32[]', space=smem, size = 0x4, offset = 0x4, fixed_abs, tag = 'smem constant byte address 0x4 - core index']
  #allocation1 [shape = 'u32[72,128]{1,0:T(1,128)}', space=vmem, size = 0x9000, scoped, tag = 'internal scratch']
  %s0 = inlined_call_operand.vmem [shape: bf16[32,128], index: 0, kind: input, shape index: {}]
  %s1 = inlined_call_operand.vmem [shape: bf16[128,128], index: 1, kind: input, shape index: {}]
  %s2 = inlined_call_operand.vmem [shape: f32[1,128], index: 2, kind: input, shape index: {}]
  %s3 = inlined_call_operand.vmem [shape: f32[32,128], index: 3, kind: output, shape index: {}]
  %s4 = sld [smem:[#allocation0]]
  $region45: #{resnet_dilated_forward.20} parent=0
    _
  %s6 = ssub.s32 1, %s4
  %s7 = scalar_select 0, %s6, %s4
  loop: start=0, step=1, limit=4
  $region2: #{resnet_dilated_forward.20} parent=0 // loop_pre_header
    _
  $region3: #{resnet_dilated_forward.20} parent=0 // loop_header
    %s9 = sphi 0, %s13
    %p10 = scmp.ge.s32.totalorder %s9, 4
    %s19 = sphi 0, %s21
    %s22 = sphi 0, %s19
    %s23 = sphi 0, %s22
    %s39 = sphi 0, %s23
    %s43 = sphi 0, %s43
    %s45 = sphi 0, %s43
    %s46 = sphi 0, %s45
    %s60 = sphi 0, %s46
    %s64 = sphi 0, %s64
    %s66 = sphi 0, %s64
    %s67 = sphi 0, %s66
    %s81 = sphi 0, %s67
    %s87 = sphi 0, %s89
    %s90 = sphi 0, %s87
    %s91 = sphi 0, %s90
    %s107 = sphi 0, %s91
  $region4: #{resnet_dilated_forward.20} parent=0 // loop_header_branch
    %12 = sbr.rel (%p10) target = $region8
  $region5: #{resnet_dilated_forward.20} parent=0 // loop_body
    %s14 = ssub.s32 %s9, 1
    %s15 = ssub.s32 %s9, 2
    %s16 = sadd.s32 %s9, 1
    %s17 = ssub.s32 %s9, %s16
    %p18 = scmp.eq.s32.totalorder %s17, 0
    %s20 = sadd.s32 %s19, 1
    %s21 = scalar_select %p18, %s19, %s20
    %p24 = pneg %p18
    %p25 = scmp.eq.s32.totalorder %s9, 1
    %p26 = por %p24, %p25
    %p27 = scmp.ne.s32.totalorder %s19, %s22
    %p28 = scmp.eq.s32.totalorder %s9, 0
    %p29 = por %p27, %p28
    %p30 = scmp.ne.s32.totalorder %s19, %s22
    %p31 = scmp.eq.s32.totalorder %s14, 1
    %p32 = por %p30, %p31
    %p33 = scmp.ne.s32.totalorder %s22, %s23
    %p34 = scmp.eq.s32.totalorder %s14, 0
    %p35 = por %p33, %p34
    %p36 = scmp.ne.s32.totalorder %s22, %s23
    %p37 = scmp.eq.s32.totalorder %s15, 1
    %p38 = por %p36, %p37
    %p40 = scmp.ne.s32.totalorder %s23, %s39
    %p41 = scmp.eq.s32.totalorder %s15, 0
    %p42 = por %p40, %p41
    %s44 = sadd.s32 %s43, 1
    %p47 = scmp.eq.s32.totalorder %s9, 1
    %p48 = scmp.ne.s32.totalorder %s43, %s45
    %p49 = scmp.eq.s32.totalorder %s9, 0
    %p50 = por %p48, %p49
    %p51 = scmp.ne.s32.totalorder %s43, %s45
    %p52 = scmp.eq.s32.totalorder %s14, 1
    %p53 = por %p51, %p52
    %p54 = scmp.ne.s32.totalorder %s45, %s46
    %p55 = scmp.eq.s32.totalorder %s14, 0
    %p56 = por %p54, %p55
    %p57 = scmp.ne.s32.totalorder %s45, %s46
    %p58 = scmp.eq.s32.totalorder %s15, 1
    %p59 = por %p57, %p58
    %p61 = scmp.ne.s32.totalorder %s46, %s60
    %p62 = scmp.eq.s32.totalorder %s15, 0
    %p63 = por %p61, %p62
    %s65 = sadd.s32 %s64, 1
    %p68 = scmp.eq.s32.totalorder %s9, 1
    %p69 = scmp.ne.s32.totalorder %s64, %s66
    %p70 = scmp.eq.s32.totalorder %s9, 0
    %p71 = por %p69, %p70
    %p72 = scmp.ne.s32.totalorder %s64, %s66
    %p73 = scmp.eq.s32.totalorder %s14, 1
    %p74 = por %p72, %p73
    %p75 = scmp.ne.s32.totalorder %s66, %s67
    %p76 = scmp.eq.s32.totalorder %s14, 0
    %p77 = por %p75, %p76
    %p78 = scmp.ne.s32.totalorder %s66, %s67
    %p79 = scmp.eq.s32.totalorder %s15, 1
    %p80 = por %p78, %p79
    %p82 = scmp.ne.s32.totalorder %s67, %s81
    %p83 = scmp.eq.s32.totalorder %s15, 0
    %p84 = por %p82, %p83
    %s85 = ssub.s32 %s9, %s16
    %p86 = scmp.eq.s32.totalorder %s85, 0
    %s88 = sadd.s32 %s87, 1
    %s89 = scalar_select %p86, %s87, %s88
    %p92 = pneg %p86
    %p93 = scmp.eq.s32.totalorder %s9, 1
    %p94 = por %p92, %p93
    %p95 = scmp.ne.s32.totalorder %s87, %s90
    %p96 = scmp.eq.s32.totalorder %s9, 0
    %p97 = por %p95, %p96
    %p98 = scmp.ne.s32.totalorder %s87, %s90
    %p99 = scmp.eq.s32.totalorder %s14, 1
    %p100 = por %p98, %p99
    %p101 = scmp.ne.s32.totalorder %s90, %s91
    %p102 = scmp.eq.s32.totalorder %s14, 0
    %p103 = por %p101, %p102
    %p104 = scmp.ne.s32.totalorder %s90, %s91
    %p105 = scmp.eq.s32.totalorder %s15, 1
    %p106 = por %p104, %p105
    %p108 = scmp.ne.s32.totalorder %s91, %s107
    %p109 = scmp.eq.s32.totalorder %s15, 0
    %p110 = por %p108, %p109
    %p111 = scmp.le.s32.totalorder 1, %s9
    %p112 = scmp.lt.s32.totalorder %s9, 3
    %p113 = pnand %p111, %p112
    %p114 = pneg %p113
    // Predicated region
    $region9: #{resnet_dilated_forward.20} parent=5 // pred_check
      _
    $region10: #{resnet_dilated_forward.20} parent=5 // pred_check_branch
      %116 = sbr.rel (%p113) target = $region12
    $region11: #{resnet_dilated_forward.20} parent=5 // pred_region
      %s117 = ssub.s32 %s9, 1
      // Predicated region
      $region13: #{resnet_dilated_forward.20} parent=11 // pred_check
        %p118 = pneg %p56
      $region14: #{resnet_dilated_forward.20} parent=11 // pred_check_branch
        %120 = sbr.rel (%p118) target = $region16
      $region15: #{resnet_dilated_forward.20} parent=11 // pred_region
        _
      $region16: #{resnet_dilated_forward.20} parent=11 // pred_fallthru
        _
      // Predicated region
      $region17: #{resnet_dilated_forward.20} parent=11 // pred_check
        %p121 = pneg %p77
      $region18: #{resnet_dilated_forward.20} parent=11 // pred_check_branch
        %123 = sbr.rel (%p121) target = $region20
      $region19: #{resnet_dilated_forward.20} parent=11 // pred_region
        _
      $region20: #{resnet_dilated_forward.20} parent=11 // pred_fallthru
        _
    $region12: #{resnet_dilated_forward.20} parent=5 // pred_fallthru
      _
    %p124 = scmp.lt.s32.totalorder %s9, 2
    // Predicated region
    $region21: #{resnet_dilated_forward.20} parent=5 // pred_check
      %p125 = pneg %p124
    $region22: #{resnet_dilated_forward.20} parent=5 // pred_check_branch
      %127 = sbr.rel (%p125) target = $region24
    $region23: #{resnet_dilated_forward.20} parent=5 // pred_region
      // Predicated region
      $region25: #{resnet_dilated_forward.20} parent=23 // pred_check
        %p128 = pneg %p29
      $region26: #{resnet_dilated_forward.20} parent=23 // pred_check_branch
        %130 = sbr.rel (%p128) target = $region28
      $region27: #{resnet_dilated_forward.20} parent=23 // pred_region
        %s131 = smul.u32 2, %s9
        %p132 = scmp.lt.s32.totalorder %s131, 3
        %s133 = scalar_select %p132, %s131, 3
        %s134 = smul.addr %s133, 4
        %s135 = scalar_lea.vmem %s0, %s134
        %s136 = smul.u32 2, %s9
      $region28: #{resnet_dilated_forward.20} parent=23 // pred_fallthru
        _
    $region24: #{resnet_dilated_forward.20} parent=5 // pred_fallthru
      _
    %p137 = scmp.le.s32.totalorder 1, %s9
    %p138 = scmp.lt.s32.totalorder %s9, 3
    %p139 = pnand %p137, %p138
    %p140 = pneg %p139
    // Predicated region
    $region29: #{resnet_dilated_forward.20} parent=5 // pred_check
      _
    $region30: #{resnet_dilated_forward.20} parent=5 // pred_check_branch
      %142 = sbr.rel (%p139) target = $region32
    $region31: #{resnet_dilated_forward.20} parent=5 // pred_region
      %s143 = ssub.s32 %s9, 1
      %s144 = smul.u32 2, %s14
      %p145 = scmp.lt.s32.totalorder %s144, 3
      %s146 = scalar_select %p145, %s144, 3
      %s147 = smul.addr %s146, 4
      %s148 = scalar_lea.vmem %s0, %s147
      %p149 = pneg %p35
      %p150 = pneg %p32
      %p151 = pneg %p56
      %p152 = pneg %p53
      %p153 = pneg %p77
      %p154 = pneg %p74
      %p155 = pneg %p103
      %p156 = pneg %p100
      %s157 = smul.u32 2, %s14
      %p158 = scmp.lt.s32.totalorder %s157, 3
      %s159 = scalar_select %p158, %s157, 3
      %s160 = smul.addr %s159, 8
      %s161 = scalar_lea.vmem %s3, %s160
      %s162 = smul.u32 2, %s14
      %p163 = scmp.lt.s32.totalorder %s162, 3
      %s164 = scalar_select %p163, %s162, 3
      %s165 = smul.addr %s164, 4
      %s166 = scalar_lea.vmem %s0, %s165
      %s167 = smul.u32 2, %s14
      %s168 = smul.u32 2, %s14
      %p169 = scmp.lt.s32.totalorder %s168, 3
      %s170 = scalar_select %p169, %s168, 3
      %s171 = smul.addr %s170, 8
      %s172 = scalar_lea.vmem %s3, %s171
      %s173 = smul.u32 2, %s14
      %v174 = vld [vmem:[%s166] sm:$0xf]
      %v175 = vld [vmem:[%s166 + $0x4] sm:$0xf]
      %v176 = vld [vmem:[%s1] sm:$0xf]
      %v177 = vld [vmem:[%s1 + $0x4] sm:$0xf]
      %v178 = vld [vmem:[%s1 + $0x8] sm:$0xf]
      %v179 = vld [vmem:[%s1 + $0xc] sm:$0xf]
      %v180 = vld [vmem:[%s1 + $0x10] sm:$0xf]
      %v181 = vld [vmem:[%s1 + $0x14] sm:$0xf]
      %v182 = vld [vmem:[%s1 + $0x18] sm:$0xf]
      %v183 = vld [vmem:[%s1 + $0x1c] sm:$0xf]
      %v184 = vld [vmem:[%s1 + $0x20] sm:$0xf]
      %v185 = vld [vmem:[%s1 + $0x24] sm:$0xf]
      %v186 = vld [vmem:[%s1 + $0x28] sm:$0xf]
      %v187 = vld [vmem:[%s1 + $0x2c] sm:$0xf]
      %v188 = vld [vmem:[%s1 + $0x30] sm:$0xf]
      %v189 = vld [vmem:[%s1 + $0x34] sm:$0xf]
      %v190 = vld [vmem:[%s1 + $0x38] sm:$0xf]
      %v191 = vld [vmem:[%s1 + $0x3c] sm:$0xf]
      %v192 = vld [vmem:[%s2] sm:$0x1]
      %v194 = vperm.slane %v192, 0
      %v198 = vunpack.c.l.b16 %v174
      %v199 = vunpack.c.l.b16 %v175
      %v200 = vpack.c.b16 %v199, %v198
      %v218 = vunpack.c.l.b16 %v176
      %v219 = vunpack.c.l.b16 %v177
      %v220 = vunpack.c.l.b16 %v178
      %v221 = vunpack.c.l.b16 %v179
      %v222 = vunpack.c.l.b16 %v180
      %v223 = vunpack.c.l.b16 %v181
      %v224 = vunpack.c.l.b16 %v182
      %v225 = vunpack.c.l.b16 %v183
      %v226 = vunpack.c.l.b16 %v184
      %v227 = vunpack.c.l.b16 %v185
      %v228 = vunpack.c.l.b16 %v186
      %v229 = vunpack.c.l.b16 %v187
      %v230 = vunpack.c.l.b16 %v188
      %v231 = vunpack.c.l.b16 %v189
      %v232 = vunpack.c.l.b16 %v190
      %v233 = vunpack.c.l.b16 %v191
      %v234 = vpack.c.b16 %v219, %v218
      %v235 = vpack.c.b16 %v221, %v220
      %v236 = vpack.c.b16 %v223, %v222
      %v237 = vpack.c.b16 %v225, %v224
      %v238 = vpack.c.b16 %v227, %v226
      %v239 = vpack.c.b16 %v229, %v228
      %v240 = vpack.c.b16 %v231, %v230
      %v241 = vpack.c.b16 %v233, %v232
      %250 = vmatpush.bf16.msra.mxu0 %v241
      %251 = vmatpush.bf16.msra.mxu0 %v240
      %252 = vmatpush.bf16.msra.mxu0 %v239
      %253 = vmatpush.bf16.msra.mxu0 %v238
      %254 = vmatpush.bf16.msra.mxu0 %v237
      %255 = vmatpush.bf16.msra.mxu0 %v236
      %256 = vmatpush.bf16.msra.mxu0 %v235
      %257 = vmatpush.bf16.msra.mxu0 %v234
      %258 = vmatmul.bf16.gmra.mxu0 %v200
      %v259 = vpop.f32.mrf.mxu0
      %v260 = vadd.f32 %v194, %v259
      %v261 = vpop.f32.mrf.mxu0
      %v262 = vadd.f32 %v194, %v261
      %263 = vdwg.mxu0
      %v264 = vmax.f32 %v260, 0.0
      %v265 = vmax.f32 %v262, 0.0
      %266 = vst [vmem:[%s172] sm:$0xff] %v264
      %267 = vst [vmem:[%s172 + $0x8] sm:$0xff] %v265
      %s268 = smul.u32 2, %s14
      %p269 = scmp.lt.s32.totalorder %s268, 3
      %s270 = scalar_select %p269, %s268, 3
      %s271 = smul.addr %s270, 8
      %s272 = scalar_lea.vmem %s3, %s271
      // Predicated region
      $region33: #{resnet_dilated_forward.20} parent=31 // pred_check
        %p273 = pneg %p100
      $region34: #{resnet_dilated_forward.20} parent=31 // pred_check_branch
        %275 = sbr.rel (%p273) target = $region36
      $region35: #{resnet_dilated_forward.20} parent=31 // pred_region
        %s276 = smul.u32 2, %s14
      $region36: #{resnet_dilated_forward.20} parent=31 // pred_fallthru
        _
    $region32: #{resnet_dilated_forward.20} parent=5 // pred_fallthru
      _
    %p277 = scmp.le.s32.totalorder 2, %s9
    // Predicated region
    $region37: #{resnet_dilated_forward.20} parent=5 // pred_check
      %p278 = pneg %p277
    $region38: #{resnet_dilated_forward.20} parent=5 // pred_check_branch
      %280 = sbr.rel (%p278) target = $region40
    $region39: #{resnet_dilated_forward.20} parent=5 // pred_region
      %s281 = ssub.s32 %s9, 2
      // Predicated region
      $region41: #{resnet_dilated_forward.20} parent=39 // pred_check
        %p282 = pneg %p106
      $region42: #{resnet_dilated_forward.20} parent=39 // pred_check_branch
        %284 = sbr.rel (%p282) target = $region44
      $region43: #{resnet_dilated_forward.20} parent=39 // pred_region
        %s285 = smul.u32 2, %s15
        %p286 = scmp.lt.s32.totalorder %s285, 3
        %s287 = scalar_select %p286, %s285, 3
        %s288 = smul.addr %s287, 8
        %s289 = scalar_lea.vmem %s3, %s288
      $region44: #{resnet_dilated_forward.20} parent=39 // pred_fallthru
        _
    $region40: #{resnet_dilated_forward.20} parent=5 // pred_fallthru
      _
  $region6: #{resnet_dilated_forward.20} parent=0 // loop_footer
    %s13 = sadd.s32 1, %s9
  $region7: #{resnet_dilated_forward.20} parent=0 // loop_footer_branch
    %8 = sbr.rel target = $region3
  $region8: #{resnet_dilated_forward.20} parent=0 // loop_exit
    _

// kernel: resnet_dilated_forward.19
$region0: #{resnet_dilated_forward.19}
  #allocation0 [shape = 'u32[]', space=smem, size = 0x4, offset = 0x4, fixed_abs, tag = 'smem constant byte address 0x4 - core index']
  #allocation1 [shape = 'u32[72,128]{1,0:T(1,128)}', space=vmem, size = 0x9000, scoped, tag = 'internal scratch']
  %s0 = inlined_call_operand.vmem [shape: bf16[32,128], index: 0, kind: input, shape index: {}]
  %s1 = inlined_call_operand.vmem [shape: bf16[128,128], index: 1, kind: input, shape index: {}]
  %s2 = inlined_call_operand.vmem [shape: f32[1,128], index: 2, kind: input, shape index: {}]
  %s3 = inlined_call_operand.vmem [shape: f32[32,128], index: 3, kind: output, shape index: {}]
  %s4 = sld [smem:[#allocation0]]
  $region45: #{resnet_dilated_forward.19} parent=0
    _
  %s6 = ssub.s32 1, %s4
  %s7 = scalar_select 0, %s6, %s4
  loop: start=0, step=1, limit=4
  $region2: #{resnet_dilated_forward.19} parent=0 // loop_pre_header
    _
  $region3: #{resnet_dilated_forward.19} parent=0 // loop_header
    %s9 = sphi 0, %s13
    %p10 = scmp.ge.s32.totalorder %s9, 4
    %s19 = sphi 0, %s21
    %s22 = sphi 0, %s19
    %s23 = sphi 0, %s22
    %s39 = sphi 0, %s23
    %s43 = sphi 0, %s43
    %s45 = sphi 0, %s43
    %s46 = sphi 0, %s45
    %s60 = sphi 0, %s46
    %s64 = sphi 0, %s64
    %s66 = sphi 0, %s64
    %s67 = sphi 0, %s66
    %s81 = sphi 0, %s67
    %s87 = sphi 0, %s89
    %s90 = sphi 0, %s87
    %s91 = sphi 0, %s90
    %s107 = sphi 0, %s91
  $region4: #{resnet_dilated_forward.19} parent=0 // loop_header_branch
    %12 = sbr.rel (%p10) target = $region8
  $region5: #{resnet_dilated_forward.19} parent=0 // loop_body
    %s14 = ssub.s32 %s9, 1
    %s15 = ssub.s32 %s9, 2
    %s16 = sadd.s32 %s9, 1
    %s17 = ssub.s32 %s9, %s16
    %p18 = scmp.eq.s32.totalorder %s17, 0
    %s20 = sadd.s32 %s19, 1
    %s21 = scalar_select %p18, %s19, %s20
    %p24 = pneg %p18
    %p25 = scmp.eq.s32.totalorder %s9, 1
    %p26 = por %p24, %p25
    %p27 = scmp.ne.s32.totalorder %s19, %s22
    %p28 = scmp.eq.s32.totalorder %s9, 0
    %p29 = por %p27, %p28
    %p30 = scmp.ne.s32.totalorder %s19, %s22
    %p31 = scmp.eq.s32.totalorder %s14, 1
    %p32 = por %p30, %p31
    %p33 = scmp.ne.s32.totalorder %s22, %s23
    %p34 = scmp.eq.s32.totalorder %s14, 0
    %p35 = por %p33, %p34
    %p36 = scmp.ne.s32.totalorder %s22, %s23
    %p37 = scmp.eq.s32.totalorder %s15, 1
    %p38 = por %p36, %p37
    %p40 = scmp.ne.s32.totalorder %s23, %s39
    %p41 = scmp.eq.s32.totalorder %s15, 0
    %p42 = por %p40, %p41
    %s44 = sadd.s32 %s43, 1
    %p47 = scmp.eq.s32.totalorder %s9, 1
    %p48 = scmp.ne.s32.totalorder %s43, %s45
    %p49 = scmp.eq.s32.totalorder %s9, 0
    %p50 = por %p48, %p49
    %p51 = scmp.ne.s32.totalorder %s43, %s45
    %p52 = scmp.eq.s32.totalorder %s14, 1
    %p53 = por %p51, %p52
    %p54 = scmp.ne.s32.totalorder %s45, %s46
    %p55 = scmp.eq.s32.totalorder %s14, 0
    %p56 = por %p54, %p55
    %p57 = scmp.ne.s32.totalorder %s45, %s46
    %p58 = scmp.eq.s32.totalorder %s15, 1
    %p59 = por %p57, %p58
    %p61 = scmp.ne.s32.totalorder %s46, %s60
    %p62 = scmp.eq.s32.totalorder %s15, 0
    %p63 = por %p61, %p62
    %s65 = sadd.s32 %s64, 1
    %p68 = scmp.eq.s32.totalorder %s9, 1
    %p69 = scmp.ne.s32.totalorder %s64, %s66
    %p70 = scmp.eq.s32.totalorder %s9, 0
    %p71 = por %p69, %p70
    %p72 = scmp.ne.s32.totalorder %s64, %s66
    %p73 = scmp.eq.s32.totalorder %s14, 1
    %p74 = por %p72, %p73
    %p75 = scmp.ne.s32.totalorder %s66, %s67
    %p76 = scmp.eq.s32.totalorder %s14, 0
    %p77 = por %p75, %p76
    %p78 = scmp.ne.s32.totalorder %s66, %s67
    %p79 = scmp.eq.s32.totalorder %s15, 1
    %p80 = por %p78, %p79
    %p82 = scmp.ne.s32.totalorder %s67, %s81
    %p83 = scmp.eq.s32.totalorder %s15, 0
    %p84 = por %p82, %p83
    %s85 = ssub.s32 %s9, %s16
    %p86 = scmp.eq.s32.totalorder %s85, 0
    %s88 = sadd.s32 %s87, 1
    %s89 = scalar_select %p86, %s87, %s88
    %p92 = pneg %p86
    %p93 = scmp.eq.s32.totalorder %s9, 1
    %p94 = por %p92, %p93
    %p95 = scmp.ne.s32.totalorder %s87, %s90
    %p96 = scmp.eq.s32.totalorder %s9, 0
    %p97 = por %p95, %p96
    %p98 = scmp.ne.s32.totalorder %s87, %s90
    %p99 = scmp.eq.s32.totalorder %s14, 1
    %p100 = por %p98, %p99
    %p101 = scmp.ne.s32.totalorder %s90, %s91
    %p102 = scmp.eq.s32.totalorder %s14, 0
    %p103 = por %p101, %p102
    %p104 = scmp.ne.s32.totalorder %s90, %s91
    %p105 = scmp.eq.s32.totalorder %s15, 1
    %p106 = por %p104, %p105
    %p108 = scmp.ne.s32.totalorder %s91, %s107
    %p109 = scmp.eq.s32.totalorder %s15, 0
    %p110 = por %p108, %p109
    %p111 = scmp.le.s32.totalorder 1, %s9
    %p112 = scmp.lt.s32.totalorder %s9, 3
    %p113 = pnand %p111, %p112
    %p114 = pneg %p113
    // Predicated region
    $region9: #{resnet_dilated_forward.19} parent=5 // pred_check
      _
    $region10: #{resnet_dilated_forward.19} parent=5 // pred_check_branch
      %116 = sbr.rel (%p113) target = $region12
    $region11: #{resnet_dilated_forward.19} parent=5 // pred_region
      %s117 = ssub.s32 %s9, 1
      // Predicated region
      $region13: #{resnet_dilated_forward.19} parent=11 // pred_check
        %p118 = pneg %p56
      $region14: #{resnet_dilated_forward.19} parent=11 // pred_check_branch
        %120 = sbr.rel (%p118) target = $region16
      $region15: #{resnet_dilated_forward.19} parent=11 // pred_region
        _
      $region16: #{resnet_dilated_forward.19} parent=11 // pred_fallthru
        _
      // Predicated region
      $region17: #{resnet_dilated_forward.19} parent=11 // pred_check
        %p121 = pneg %p77
      $region18: #{resnet_dilated_forward.19} parent=11 // pred_check_branch
        %123 = sbr.rel (%p121) target = $region20
      $region19: #{resnet_dilated_forward.19} parent=11 // pred_region
        _
      $region20: #{resnet_dilated_forward.19} parent=11 // pred_fallthru
        _
    $region12: #{resnet_dilated_forward.19} parent=5 // pred_fallthru
      _
    %p124 = scmp.lt.s32.totalorder %s9, 2
    // Predicated region
    $region21: #{resnet_dilated_forward.19} parent=5 // pred_check
      %p125 = pneg %p124
    $region22: #{resnet_dilated_forward.19} parent=5 // pred_check_branch
      %127 = sbr.rel (%p125) target = $region24
    $region23: #{resnet_dilated_forward.19} parent=5 // pred_region
      // Predicated region
      $region25: #{resnet_dilated_forward.19} parent=23 // pred_check
        %p128 = pneg %p29
      $region26: #{resnet_dilated_forward.19} parent=23 // pred_check_branch
        %130 = sbr.rel (%p128) target = $region28
      $region27: #{resnet_dilated_forward.19} parent=23 // pred_region
        %s131 = smul.u32 2, %s9
        %p132 = scmp.lt.s32.totalorder %s131, 3
        %s133 = scalar_select %p132, %s131, 3
        %s134 = smul.addr %s133, 4
        %s135 = scalar_lea.vmem %s0, %s134
        %s136 = smul.u32 2, %s9
      $region28: #{resnet_dilated_forward.19} parent=23 // pred_fallthru
        _
    $region24: #{resnet_dilated_forward.19} parent=5 // pred_fallthru
      _
    %p137 = scmp.le.s32.totalorder 1, %s9
    %p138 = scmp.lt.s32.totalorder %s9, 3
    %p139 = pnand %p137, %p138
    %p140 = pneg %p139
    // Predicated region
    $region29: #{resnet_dilated_forward.19} parent=5 // pred_check
      _
    $region30: #{resnet_dilated_forward.19} parent=5 // pred_check_branch
      %142 = sbr.rel (%p139) target = $region32
    $region31: #{resnet_dilated_forward.19} parent=5 // pred_region
      %s143 = ssub.s32 %s9, 1
      %s144 = smul.u32 2, %s14
      %p145 = scmp.lt.s32.totalorder %s144, 3
      %s146 = scalar_select %p145, %s144, 3
      %s147 = smul.addr %s146, 4
      %s148 = scalar_lea.vmem %s0, %s147
      %p149 = pneg %p35
      %p150 = pneg %p32
      %p151 = pneg %p56
      %p152 = pneg %p53
      %p153 = pneg %p77
      %p154 = pneg %p74
      %p155 = pneg %p103
      %p156 = pneg %p100
      %s157 = smul.u32 2, %s14
      %p158 = scmp.lt.s32.totalorder %s157, 3
      %s159 = scalar_select %p158, %s157, 3
      %s160 = smul.addr %s159, 8
      %s161 = scalar_lea.vmem %s3, %s160
      %s162 = smul.u32 2, %s14
      %p163 = scmp.lt.s32.totalorder %s162, 3
      %s164 = scalar_select %p163, %s162, 3
      %s165 = smul.addr %s164, 4
      %s166 = scalar_lea.vmem %s0, %s165
      %s167 = smul.u32 2, %s14
      %s168 = smul.u32 2, %s14
      %p169 = scmp.lt.s32.totalorder %s168, 3
      %s170 = scalar_select %p169, %s168, 3
      %s171 = smul.addr %s170, 8
      %s172 = scalar_lea.vmem %s3, %s171
      %s173 = smul.u32 2, %s14
      %v174 = vld [vmem:[%s166] sm:$0xf]
      %v175 = vld [vmem:[%s166 + $0x4] sm:$0xf]
      %v176 = vld [vmem:[%s1] sm:$0xf]
      %v177 = vld [vmem:[%s1 + $0x4] sm:$0xf]
      %v178 = vld [vmem:[%s1 + $0x8] sm:$0xf]
      %v179 = vld [vmem:[%s1 + $0xc] sm:$0xf]
      %v180 = vld [vmem:[%s1 + $0x10] sm:$0xf]
      %v181 = vld [vmem:[%s1 + $0x14] sm:$0xf]
      %v182 = vld [vmem:[%s1 + $0x18] sm:$0xf]
      %v183 = vld [vmem:[%s1 + $0x1c] sm:$0xf]
      %v184 = vld [vmem:[%s1 + $0x20] sm:$0xf]
      %v185 = vld [vmem:[%s1 + $0x24] sm:$0xf]
      %v186 = vld [vmem:[%s1 + $0x28] sm:$0xf]
      %v187 = vld [vmem:[%s1 + $0x2c] sm:$0xf]
      %v188 = vld [vmem:[%s1 + $0x30] sm:$0xf]
      %v189 = vld [vmem:[%s1 + $0x34] sm:$0xf]
      %v190 = vld [vmem:[%s1 + $0x38] sm:$0xf]
      %v191 = vld [vmem:[%s1 + $0x3c] sm:$0xf]
      %v192 = vld [vmem:[%s2] sm:$0x1]
      %v194 = vperm.slane %v192, 0
      %v198 = vunpack.c.l.b16 %v174
      %v199 = vunpack.c.l.b16 %v175
      %v200 = vpack.c.b16 %v199, %v198
      %v218 = vunpack.c.l.b16 %v176
      %v219 = vunpack.c.l.b16 %v177
      %v220 = vunpack.c.l.b16 %v178
      %v221 = vunpack.c.l.b16 %v179
      %v222 = vunpack.c.l.b16 %v180
      %v223 = vunpack.c.l.b16 %v181
      %v224 = vunpack.c.l.b16 %v182
      %v225 = vunpack.c.l.b16 %v183
      %v226 = vunpack.c.l.b16 %v184
      %v227 = vunpack.c.l.b16 %v185
      %v228 = vunpack.c.l.b16 %v186
      %v229 = vunpack.c.l.b16 %v187
      %v230 = vunpack.c.l.b16 %v188
      %v231 = vunpack.c.l.b16 %v189
      %v232 = vunpack.c.l.b16 %v190
      %v233 = vunpack.c.l.b16 %v191
      %v234 = vpack.c.b16 %v219, %v218
      %v235 = vpack.c.b16 %v221, %v220
      %v236 = vpack.c.b16 %v223, %v222
      %v237 = vpack.c.b16 %v225, %v224
      %v238 = vpack.c.b16 %v227, %v226
      %v239 = vpack.c.b16 %v229, %v228
      %v240 = vpack.c.b16 %v231, %v230
      %v241 = vpack.c.b16 %v233, %v232
      %250 = vmatpush.bf16.msra.mxu0 %v241
      %251 = vmatpush.bf16.msra.mxu0 %v240
      %252 = vmatpush.bf16.msra.mxu0 %v239
      %253 = vmatpush.bf16.msra.mxu0 %v238
      %254 = vmatpush.bf16.msra.mxu0 %v237
      %255 = vmatpush.bf16.msra.mxu0 %v236
      %256 = vmatpush.bf16.msra.mxu0 %v235
      %257 = vmatpush.bf16.msra.mxu0 %v234
      %258 = vmatmul.bf16.gmra.mxu0 %v200
      %v259 = vpop.f32.mrf.mxu0
      %v260 = vadd.f32 %v194, %v259
      %v261 = vpop.f32.mrf.mxu0
      %v262 = vadd.f32 %v194, %v261
      %263 = vdwg.mxu0
      %264 = vst [vmem:[%s172] sm:$0xff] %v260
      %265 = vst [vmem:[%s172 + $0x8] sm:$0xff] %v262
      %s266 = smul.u32 2, %s14
      %p267 = scmp.lt.s32.totalorder %s266, 3
      %s268 = scalar_select %p267, %s266, 3
      %s269 = smul.addr %s268, 8
      %s270 = scalar_lea.vmem %s3, %s269
      // Predicated region
      $region33: #{resnet_dilated_forward.19} parent=31 // pred_check
        %p271 = pneg %p100
      $region34: #{resnet_dilated_forward.19} parent=31 // pred_check_branch
        %273 = sbr.rel (%p271) target = $region36
      $region35: #{resnet_dilated_forward.19} parent=31 // pred_region
        %s274 = smul.u32 2, %s14
      $region36: #{resnet_dilated_forward.19} parent=31 // pred_fallthru
        _
    $region32: #{resnet_dilated_forward.19} parent=5 // pred_fallthru
      _
    %p275 = scmp.le.s32.totalorder 2, %s9
    // Predicated region
    $region37: #{resnet_dilated_forward.19} parent=5 // pred_check
      %p276 = pneg %p275
    $region38: #{resnet_dilated_forward.19} parent=5 // pred_check_branch
      %278 = sbr.rel (%p276) target = $region40
    $region39: #{resnet_dilated_forward.19} parent=5 // pred_region
      %s279 = ssub.s32 %s9, 2
      // Predicated region
      $region41: #{resnet_dilated_forward.19} parent=39 // pred_check
        %p280 = pneg %p106
      $region42: #{resnet_dilated_forward.19} parent=39 // pred_check_branch
        %282 = sbr.rel (%p280) target = $region44
      $region43: #{resnet_dilated_forward.19} parent=39 // pred_region
        %s283 = smul.u32 2, %s15
        %p284 = scmp.lt.s32.totalorder %s283, 3
        %s285 = scalar_select %p284, %s283, 3
        %s286 = smul.addr %s285, 8
        %s287 = scalar_lea.vmem %s3, %s286
      $region44: #{resnet_dilated_forward.19} parent=39 // pred_fallthru
        _
    $region40: #{resnet_dilated_forward.19} parent=5 // pred_fallthru
      _
  $region6: #{resnet_dilated_forward.19} parent=0 // loop_footer
    %s13 = sadd.s32 1, %s9
  $region7: #{resnet_dilated_forward.19} parent=0 // loop_footer_branch
    %8 = sbr.rel target = $region3
  $region8: #{resnet_dilated_forward.19} parent=0 // loop_exit
    _

// kernel: resnet_dilated_forward.21
$region0: #{resnet_dilated_forward.21}
  #allocation0 [shape = 'u32[]', space=smem, size = 0x4, offset = 0x4, fixed_abs, tag = 'smem constant byte address 0x4 - core index']
  #allocation1 [shape = 'u32[72,128]{1,0:T(1,128)}', space=vmem, size = 0x9000, scoped, tag = 'internal scratch']
  %s0 = inlined_call_operand.vmem [shape: bf16[32,256], index: 0, kind: input, shape index: {}]
  %s1 = inlined_call_operand.vmem [shape: bf16[256,128], index: 1, kind: input, shape index: {}]
  %s2 = inlined_call_operand.vmem [shape: f32[1,128], index: 2, kind: input, shape index: {}]
  %s3 = inlined_call_operand.vmem [shape: f32[32,128], index: 3, kind: input, shape index: {}]
  %s4 = inlined_call_operand.vmem [shape: f32[32,128], index: 4, kind: output, shape index: {}]
  %s5 = sld [smem:[#allocation0]]
  $region49: #{resnet_dilated_forward.21} parent=0
    _
  %s7 = ssub.s32 1, %s5
  %s8 = scalar_select 0, %s7, %s5
  loop: start=0, step=1, limit=4
  $region2: #{resnet_dilated_forward.21} parent=0 // loop_pre_header
    _
  $region3: #{resnet_dilated_forward.21} parent=0 // loop_header
    %s10 = sphi 0, %s14
    %p11 = scmp.ge.s32.totalorder %s10, 4
    %s20 = sphi 0, %s22
    %s23 = sphi 0, %s20
    %s24 = sphi 0, %s23
    %s40 = sphi 0, %s24
    %s44 = sphi 0, %s44
    %s46 = sphi 0, %s44
    %s47 = sphi 0, %s46
    %s61 = sphi 0, %s47
    %s65 = sphi 0, %s65
    %s67 = sphi 0, %s65
    %s68 = sphi 0, %s67
    %s82 = sphi 0, %s68
    %s88 = sphi 0, %s90
    %s91 = sphi 0, %s88
    %s92 = sphi 0, %s91
    %s108 = sphi 0, %s92
    %s114 = sphi 0, %s116
    %s117 = sphi 0, %s114
    %s118 = sphi 0, %s117
    %s134 = sphi 0, %s118
  $region4: #{resnet_dilated_forward.21} parent=0 // loop_header_branch
    %13 = sbr.rel (%p11) target = $region8
  $region5: #{resnet_dilated_forward.21} parent=0 // loop_body
    %s15 = ssub.s32 %s10, 1
    %s16 = ssub.s32 %s10, 2
    %s17 = sadd.s32 %s10, 1
    %s18 = ssub.s32 %s10, %s17
    %p19 = scmp.eq.s32.totalorder %s18, 0
    %s21 = sadd.s32 %s20, 1
    %s22 = scalar_select %p19, %s20, %s21
    %p25 = pneg %p19
    %p26 = scmp.eq.s32.totalorder %s10, 1
    %p27 = por %p25, %p26
    %p28 = scmp.ne.s32.totalorder %s20, %s23
    %p29 = scmp.eq.s32.totalorder %s10, 0
    %p30 = por %p28, %p29
    %p31 = scmp.ne.s32.totalorder %s20, %s23
    %p32 = scmp.eq.s32.totalorder %s15, 1
    %p33 = por %p31, %p32
    %p34 = scmp.ne.s32.totalorder %s23, %s24
    %p35 = scmp.eq.s32.totalorder %s15, 0
    %p36 = por %p34, %p35
    %p37 = scmp.ne.s32.totalorder %s23, %s24
    %p38 = scmp.eq.s32.totalorder %s16, 1
    %p39 = por %p37, %p38
    %p41 = scmp.ne.s32.totalorder %s24, %s40
    %p42 = scmp.eq.s32.totalorder %s16, 0
    %p43 = por %p41, %p42
    %s45 = sadd.s32 %s44, 1
    %p48 = scmp.eq.s32.totalorder %s10, 1
    %p49 = scmp.ne.s32.totalorder %s44, %s46
    %p50 = scmp.eq.s32.totalorder %s10, 0
    %p51 = por %p49, %p50
    %p52 = scmp.ne.s32.totalorder %s44, %s46
    %p53 = scmp.eq.s32.totalorder %s15, 1
    %p54 = por %p52, %p53
    %p55 = scmp.ne.s32.totalorder %s46, %s47
    %p56 = scmp.eq.s32.totalorder %s15, 0
    %p57 = por %p55, %p56
    %p58 = scmp.ne.s32.totalorder %s46, %s47
    %p59 = scmp.eq.s32.totalorder %s16, 1
    %p60 = por %p58, %p59
    %p62 = scmp.ne.s32.totalorder %s47, %s61
    %p63 = scmp.eq.s32.totalorder %s16, 0
    %p64 = por %p62, %p63
    %s66 = sadd.s32 %s65, 1
    %p69 = scmp.eq.s32.totalorder %s10, 1
    %p70 = scmp.ne.s32.totalorder %s65, %s67
    %p71 = scmp.eq.s32.totalorder %s10, 0
    %p72 = por %p70, %p71
    %p73 = scmp.ne.s32.totalorder %s65, %s67
    %p74 = scmp.eq.s32.totalorder %s15, 1
    %p75 = por %p73, %p74
    %p76 = scmp.ne.s32.totalorder %s67, %s68
    %p77 = scmp.eq.s32.totalorder %s15, 0
    %p78 = por %p76, %p77
    %p79 = scmp.ne.s32.totalorder %s67, %s68
    %p80 = scmp.eq.s32.totalorder %s16, 1
    %p81 = por %p79, %p80
    %p83 = scmp.ne.s32.totalorder %s68, %s82
    %p84 = scmp.eq.s32.totalorder %s16, 0
    %p85 = por %p83, %p84
    %s86 = ssub.s32 %s10, %s17
    %p87 = scmp.eq.s32.totalorder %s86, 0
    %s89 = sadd.s32 %s88, 1
    %s90 = scalar_select %p87, %s88, %s89
    %p93 = pneg %p87
    %p94 = scmp.eq.s32.totalorder %s10, 1
    %p95 = por %p93, %p94
    %p96 = scmp.ne.s32.totalorder %s88, %s91
    %p97 = scmp.eq.s32.totalorder %s10, 0
    %p98 = por %p96, %p97
    %p99 = scmp.ne.s32.totalorder %s88, %s91
    %p100 = scmp.eq.s32.totalorder %s15, 1
    %p101 = por %p99, %p100
    %p102 = scmp.ne.s32.totalorder %s91, %s92
    %p103 = scmp.eq.s32.totalorder %s15, 0
    %p104 = por %p102, %p103
    %p105 = scmp.ne.s32.totalorder %s91, %s92
    %p106 = scmp.eq.s32.totalorder %s16, 1
    %p107 = por %p105, %p106
    %p109 = scmp.ne.s32.totalorder %s92, %s108
    %p110 = scmp.eq.s32.totalorder %s16, 0
    %p111 = por %p109, %p110
    %s112 = ssub.s32 %s10, %s17
    %p113 = scmp.eq.s32.totalorder %s112, 0
    %s115 = sadd.s32 %s114, 1
    %s116 = scalar_select %p113, %s114, %s115
    %p119 = pneg %p113
    %p120 = scmp.eq.s32.totalorder %s10, 1
    %p121 = por %p119, %p120
    %p122 = scmp.ne.s32.totalorder %s114, %s117
    %p123 = scmp.eq.s32.totalorder %s10, 0
    %p124 = por %p122, %p123
    %p125 = scmp.ne.s32.totalorder %s114, %s117
    %p126 = scmp.eq.s32.totalorder %s15, 1
    %p127 = por %p125, %p126
    %p128 = scmp.ne.s32.totalorder %s117, %s118
    %p129 = scmp.eq.s32.totalorder %s15, 0
    %p130 = por %p128, %p129
    %p131 = scmp.ne.s32.totalorder %s117, %s118
    %p132 = scmp.eq.s32.totalorder %s16, 1
    %p133 = por %p131, %p132
    %p135 = scmp.ne.s32.totalorder %s118, %s134
    %p136 = scmp.eq.s32.totalorder %s16, 0
    %p137 = por %p135, %p136
    %p138 = scmp.le.s32.totalorder 1, %s10
    %p139 = scmp.lt.s32.totalorder %s10, 3
    %p140 = pnand %p138, %p139
    %p141 = pneg %p140
    // Predicated region
    $region9: #{resnet_dilated_forward.21} parent=5 // pred_check
      _
    $region10: #{resnet_dilated_forward.21} parent=5 // pred_check_branch
      %143 = sbr.rel (%p140) target = $region12
    $region11: #{resnet_dilated_forward.21} parent=5 // pred_region
      %s144 = ssub.s32 %s10, 1
      // Predicated region
      $region13: #{resnet_dilated_forward.21} parent=11 // pred_check
        %p145 = pneg %p57
      $region14: #{resnet_dilated_forward.21} parent=11 // pred_check_branch
        %147 = sbr.rel (%p145) target = $region16
      $region15: #{resnet_dilated_forward.21} parent=11 // pred_region
        _
      $region16: #{resnet_dilated_forward.21} parent=11 // pred_fallthru
        _
      // Predicated region
      $region17: #{resnet_dilated_forward.21} parent=11 // pred_check
        %p148 = pneg %p78
      $region18: #{resnet_dilated_forward.21} parent=11 // pred_check_branch
        %150 = sbr.rel (%p148) target = $region20
      $region19: #{resnet_dilated_forward.21} parent=11 // pred_region
        _
      $region20: #{resnet_dilated_forward.21} parent=11 // pred_fallthru
        _
    $region12: #{resnet_dilated_forward.21} parent=5 // pred_fallthru
      _
    %p151 = scmp.lt.s32.totalorder %s10, 2
    // Predicated region
    $region21: #{resnet_dilated_forward.21} parent=5 // pred_check
      %p152 = pneg %p151
    $region22: #{resnet_dilated_forward.21} parent=5 // pred_check_branch
      %154 = sbr.rel (%p152) target = $region24
    $region23: #{resnet_dilated_forward.21} parent=5 // pred_region
      // Predicated region
      $region25: #{resnet_dilated_forward.21} parent=23 // pred_check
        %p155 = pneg %p30
      $region26: #{resnet_dilated_forward.21} parent=23 // pred_check_branch
        %157 = sbr.rel (%p155) target = $region28
      $region27: #{resnet_dilated_forward.21} parent=23 // pred_region
        %s158 = smul.u32 2, %s10
        %p159 = scmp.lt.s32.totalorder %s158, 3
        %s160 = scalar_select %p159, %s158, 3
        %s161 = smul.addr %s160, 2
        %s162 = smul.addr %s161, 4
        %s163 = scalar_lea.vmem %s0, %s162
        %s164 = smul.u32 2, %s10
      $region28: #{resnet_dilated_forward.21} parent=23 // pred_fallthru
        _
      // Predicated region
      $region29: #{resnet_dilated_forward.21} parent=23 // pred_check
        %p165 = pneg %p98
      $region30: #{resnet_dilated_forward.21} parent=23 // pred_check_branch
        %167 = sbr.rel (%p165) target = $region32
      $region31: #{resnet_dilated_forward.21} parent=23 // pred_region
        %s168 = smul.u32 2, %s10
        %p169 = scmp.lt.s32.totalorder %s168, 3
        %s170 = scalar_select %p169, %s168, 3
        %s171 = smul.addr %s170, 8
        %s172 = scalar_lea.vmem %s3, %s171
        %s173 = smul.u32 2, %s10
      $region32: #{resnet_dilated_forward.21} parent=23 // pred_fallthru
        _
    $region24: #{resnet_dilated_forward.21} parent=5 // pred_fallthru
      _
    %p174 = scmp.le.s32.totalorder 1, %s10
    %p175 = scmp.lt.s32.totalorder %s10, 3
    %p176 = pnand %p174, %p175
    %p177 = pneg %p176
    // Predicated region
    $region33: #{resnet_dilated_forward.21} parent=5 // pred_check
      _
    $region34: #{resnet_dilated_forward.21} parent=5 // pred_check_branch
      %179 = sbr.rel (%p176) target = $region36
    $region35: #{resnet_dilated_forward.21} parent=5 // pred_region
      %s180 = ssub.s32 %s10, 1
      %s181 = smul.u32 2, %s15
      %p182 = scmp.lt.s32.totalorder %s181, 3
      %s183 = scalar_select %p182, %s181, 3
      %s184 = smul.addr %s183, 2
      %s185 = smul.addr %s184, 4
      %s186 = scalar_lea.vmem %s0, %s185
      %p187 = pneg %p36
      %p188 = pneg %p33
      %p189 = pneg %p57
      %p190 = pneg %p54
      %p191 = pneg %p78
      %p192 = pneg %p75
      %s193 = smul.u32 2, %s15
      %p194 = scmp.lt.s32.totalorder %s193, 3
      %s195 = scalar_select %p194, %s193, 3
      %s196 = smul.addr %s195, 8
      %s197 = scalar_lea.vmem %s3, %s196
      %p198 = pneg %p104
      %p199 = pneg %p101
      %p200 = pneg %p130
      %p201 = pneg %p127
      %s202 = smul.u32 2, %s15
      %p203 = scmp.lt.s32.totalorder %s202, 3
      %s204 = scalar_select %p203, %s202, 3
      %s205 = smul.addr %s204, 8
      %s206 = scalar_lea.vmem %s4, %s205
      %s207 = smul.u32 2, %s15
      %p208 = scmp.lt.s32.totalorder %s207, 3
      %s209 = scalar_select %p208, %s207, 3
      %s210 = smul.addr %s209, 2
      %s211 = smul.addr %s210, 4
      %s212 = scalar_lea.vmem %s0, %s211
      %s213 = smul.u32 2, %s15
      %s214 = smul.u32 2, %s15
      %p215 = scmp.lt.s32.totalorder %s214, 3
      %s216 = scalar_select %p215, %s214, 3
      %s217 = smul.addr %s216, 8
      %s218 = scalar_lea.vmem %s3, %s217
      %s219 = smul.u32 2, %s15
      %s220 = smul.u32 2, %s15
      %p221 = scmp.lt.s32.totalorder %s220, 3
      %s222 = scalar_select %p221, %s220, 3
      %s223 = smul.addr %s222, 8
      %s224 = scalar_lea.vmem %s4, %s223
      %s225 = smul.u32 2, %s15
      %v226 = vld [vmem:[%s212] sm:$0xff]
      %v227 = vld [vmem:[%s212 + $0x8] sm:$0xff]
      %v228 = vld [vmem:[%s1] sm:$0xf]
      %v229 = vld [vmem:[%s1 + $0x4] sm:$0xf]
      %v230 = vld [vmem:[%s1 + $0x8] sm:$0xf]
      %v231 = vld [vmem:[%s1 + $0xc] sm:$0xf]
      %v232 = vld [vmem:[%s1 + $0x10] sm:$0xf]
      %v233 = vld [vmem:[%s1 + $0x14] sm:$0xf]
      %v234 = vld [vmem:[%s1 + $0x18] sm:$0xf]
      %v235 = vld [vmem:[%s1 + $0x1c] sm:$0xf]
      %v236 = vld [vmem:[%s1 + $0x20] sm:$0xf]
      %v237 = vld [vmem:[%s1 + $0x24] sm:$0xf]
      %v238 = vld [vmem:[%s1 + $0x28] sm:$0xf]
      %v239 = vld [vmem:[%s1 + $0x2c] sm:$0xf]
      %v240 = vld [vmem:[%s1 + $0x30] sm:$0xf]
      %v241 = vld [vmem:[%s1 + $0x34] sm:$0xf]
      %v242 = vld [vmem:[%s1 + $0x38] sm:$0xf]
      %v243 = vld [vmem:[%s1 + $0x3c] sm:$0xf]
      %v244 = vld [vmem:[%s1 + $0x40] sm:$0xf]
      %v245 = vld [vmem:[%s1 + $0x44] sm:$0xf]
      %v246 = vld [vmem:[%s1 + $0x48] sm:$0xf]
      %v247 = vld [vmem:[%s1 + $0x4c] sm:$0xf]
      %v248 = vld [vmem:[%s1 + $0x50] sm:$0xf]
      %v249 = vld [vmem:[%s1 + $0x54] sm:$0xf]
      %v250 = vld [vmem:[%s1 + $0x58] sm:$0xf]
      %v251 = vld [vmem:[%s1 + $0x5c] sm:$0xf]
      %v252 = vld [vmem:[%s1 + $0x60] sm:$0xf]
      %v253 = vld [vmem:[%s1 + $0x64] sm:$0xf]
      %v254 = vld [vmem:[%s1 + $0x68] sm:$0xf]
      %v255 = vld [vmem:[%s1 + $0x6c] sm:$0xf]
      %v256 = vld [vmem:[%s1 + $0x70] sm:$0xf]
      %v257 = vld [vmem:[%s1 + $0x74] sm:$0xf]
      %v258 = vld [vmem:[%s1 + $0x78] sm:$0xf]
      %v259 = vld [vmem:[%s1 + $0x7c] sm:$0xf]
      %v260 = vld [vmem:[%s2] sm:$0x1]
      %v262 = vperm.slane %v260, 0
      %v266 = vunpack.c.l.b16 %v226
      %v267 = vunpack.c.h.b16 %v226
      %v268 = vunpack.c.l.b16 %v227
      %v269 = vunpack.c.h.b16 %v227
      %v270 = vpack.c.b16 %v268, %v266
      %v271 = vpack.c.b16 %v269, %v267
      %v306 = vunpack.c.l.b16 %v228
      %v307 = vunpack.c.l.b16 %v229
      %v308 = vunpack.c.l.b16 %v230
      %v309 = vunpack.c.l.b16 %v231
      %v310 = vunpack.c.l.b16 %v232
      %v311 = vunpack.c.l.b16 %v233
      %v312 = vunpack.c.l.b16 %v234
      %v313 = vunpack.c.l.b16 %v235
      %v314 = vunpack.c.l.b16 %v236
      %v315 = vunpack.c.l.b16 %v237
      %v316 = vunpack.c.l.b16 %v238
      %v317 = vunpack.c.l.b16 %v239
      %v318 = vunpack.c.l.b16 %v240
      %v319 = vunpack.c.l.b16 %v241
      %v320 = vunpack.c.l.b16 %v242
      %v321 = vunpack.c.l.b16 %v243
      %v322 = vunpack.c.l.b16 %v244
      %v323 = vunpack.c.l.b16 %v245
      %v324 = vunpack.c.l.b16 %v246
      %v325 = vunpack.c.l.b16 %v247
      %v326 = vunpack.c.l.b16 %v248
      %v327 = vunpack.c.l.b16 %v249
      %v328 = vunpack.c.l.b16 %v250
      %v329 = vunpack.c.l.b16 %v251
      %v330 = vunpack.c.l.b16 %v252
      %v331 = vunpack.c.l.b16 %v253
      %v332 = vunpack.c.l.b16 %v254
      %v333 = vunpack.c.l.b16 %v255
      %v334 = vunpack.c.l.b16 %v256
      %v335 = vunpack.c.l.b16 %v257
      %v336 = vunpack.c.l.b16 %v258
      %v337 = vunpack.c.l.b16 %v259
      %v338 = vpack.c.b16 %v307, %v306
      %v339 = vpack.c.b16 %v309, %v308
      %v340 = vpack.c.b16 %v311, %v310
      %v341 = vpack.c.b16 %v313, %v312
      %v342 = vpack.c.b16 %v315, %v314
      %v343 = vpack.c.b16 %v317, %v316
      %v344 = vpack.c.b16 %v319, %v318
      %v345 = vpack.c.b16 %v321, %v320
      %v346 = vpack.c.b16 %v323, %v322
      %v347 = vpack.c.b16 %v325, %v324
      %v348 = vpack.c.b16 %v327, %v326
      %v349 = vpack.c.b16 %v329, %v328
      %v350 = vpack.c.b16 %v331, %v330
      %v351 = vpack.c.b16 %v333, %v332
      %v352 = vpack.c.b16 %v335, %v334
      %v353 = vpack.c.b16 %v337, %v336
      %370 = vmatpush.bf16.msra.mxu0 %v345
      %371 = vmatpush.bf16.msra.mxu0 %v344
      %372 = vmatpush.bf16.msra.mxu0 %v343
      %373 = vmatpush.bf16.msra.mxu0 %v342
      %374 = vmatpush.bf16.msra.mxu0 %v341
      %375 = vmatpush.bf16.msra.mxu0 %v340
      %376 = vmatpush.bf16.msra.mxu0 %v339
      %377 = vmatpush.bf16.msra.mxu0 %v338
      %378 = vmatmul.bf16.gmra.mxu0 %v270
      %v379 = vpop.f32.mrf.mxu0
      %v380 = vadd.f32 %v262, %v379
      %v381 = vpop.f32.mrf.mxu0
      %v382 = vadd.f32 %v262, %v381
      %383 = vdwg.mxu0
      %384 = vmatpush.bf16.msra.mxu0 %v353
      %385 = vmatpush.bf16.msra.mxu0 %v352
      %386 = vmatpush.bf16.msra.mxu0 %v351
      %387 = vmatpush.bf16.msra.mxu0 %v350
      %388 = vmatpush.bf16.msra.mxu0 %v349
      %389 = vmatpush.bf16.msra.mxu0 %v348
      %390 = vmatpush.bf16.msra.mxu0 %v347
      %391 = vmatpush.bf16.msra.mxu0 %v346
      %392 = vmatmul.bf16.gmra.mxu0 %v271
      %v393 = vpop.f32.mrf.mxu0
      %v394 = vadd.f32 %v380, %v393
      %v395 = vpop.f32.mrf.mxu0
      %v396 = vadd.f32 %v382, %v395
      %397 = vdwg.mxu0
      %v398 = vld [vmem:[%s218] sm:$0xff]
      %v399 = vld [vmem:[%s218 + $0x8] sm:$0xff]
      %v400 = vadd.f32 %v394, %v398
      %v401 = vadd.f32 %v396, %v399
      %v402 = vmax.f32 %v400, 0.0
      %v403 = vmax.f32 %v401, 0.0
      %404 = vst [vmem:[%s224] sm:$0xff] %v402
      %405 = vst [vmem:[%s224 + $0x8] sm:$0xff] %v403
      %s406 = smul.u32 2, %s15
      %p407 = scmp.lt.s32.totalorder %s406, 3
      %s408 = scalar_select %p407, %s406, 3
      %s409 = smul.addr %s408, 8
      %s410 = scalar_lea.vmem %s4, %s409
      // Predicated region
      $region37: #{resnet_dilated_forward.21} parent=35 // pred_check
        %p411 = pneg %p127
      $region38: #{resnet_dilated_forward.21} parent=35 // pred_check_branch
        %413 = sbr.rel (%p411) target = $region40
      $region39: #{resnet_dilated_forward.21} parent=35 // pred_region
        %s414 = smul.u32 2, %s15
      $region40: #{resnet_dilated_forward.21} parent=35 // pred_fallthru
        _
    $region36: #{resnet_dilated_forward.21} parent=5 // pred_fallthru
      _
    %p415 = scmp.le.s32.totalorder 2, %s10
    // Predicated region
    $region41: #{resnet_dilated_forward.21} parent=5 // pred_check
      %p416 = pneg %p415
    $region42: #{resnet_dilated_forward.21} parent=5 // pred_check_branch
      %418 = sbr.rel (%p416) target = $region44
    $region43: #{resnet_dilated_forward.21} parent=5 // pred_region
      %s419 = ssub.s32 %s10, 2
      // Predicated region
      $region45: #{resnet_dilated_forward.21} parent=43 // pred_check
        %p420 = pneg %p133
      $region46: #{resnet_dilated_forward.21} parent=43 // pred_check_branch
        %422 = sbr.rel (%p420) target = $region48
      $region47: #{resnet_dilated_forward.21} parent=43 // pred_region
        %s423 = smul.u32 2, %s16
        %p424 = scmp.lt.s32.totalorder %s423, 3
        %s425 = scalar_select %p424, %s423, 3
        %s426 = smul.addr %s425, 8
        %s427 = scalar_lea.vmem %s4, %s426
      $region48: #{resnet_dilated_forward.21} parent=43 // pred_fallthru
        _
    $region44: #{resnet_dilated_forward.21} parent=5 // pred_fallthru
      _
  $region6: #{resnet_dilated_forward.21} parent=0 // loop_footer
    %s14 = sadd.s32 1, %s10
  $region7: #{resnet_dilated_forward.21} parent=0 // loop_footer_branch
    %9 = sbr.rel target = $region3
  $region8: #{resnet_dilated_forward.21} parent=0 // loop_exit
    _

// kernel: resnet_dilated_forward.23
$region0: #{resnet_dilated_forward.23}
  #allocation0 [shape = 'u32[]', space=smem, size = 0x4, offset = 0x4, fixed_abs, tag = 'smem constant byte address 0x4 - core index']
  #allocation1 [shape = 'u32[72,128]{1,0:T(1,128)}', space=vmem, size = 0x9000, scoped, tag = 'internal scratch']
  %s0 = inlined_call_operand.vmem [shape: bf16[16,256], index: 0, kind: input, shape index: {}]
  %s1 = inlined_call_operand.vmem [shape: bf16[256,128], index: 1, kind: input, shape index: {}]
  %s2 = inlined_call_operand.vmem [shape: f32[1,128], index: 2, kind: input, shape index: {}]
  %s3 = inlined_call_operand.vmem [shape: f32[16,128], index: 3, kind: output, shape index: {}]
  %s4 = sld [smem:[#allocation0]]
  $region22: #{resnet_dilated_forward.23} parent=0
    _
  %s6 = ssub.s32 1, %s4
  %s7 = scalar_select 0, %s6, %s4
  // Predicated region
  $region2: #{resnet_dilated_forward.23} parent=0 // pred_check
    _
  $region3: #{resnet_dilated_forward.23} parent=0 // pred_check_branch
    %9 = sbr.rel (0) target = $region5
  $region4: #{resnet_dilated_forward.23} parent=0 // pred_region
    _
  $region5: #{resnet_dilated_forward.23} parent=0 // pred_fallthru
    _
  // Predicated region
  $region6: #{resnet_dilated_forward.23} parent=0 // pred_check
    _
  $region7: #{resnet_dilated_forward.23} parent=0 // pred_check_branch
    %11 = sbr.rel (0) target = $region9
  $region8: #{resnet_dilated_forward.23} parent=0 // pred_region
    _
  $region9: #{resnet_dilated_forward.23} parent=0 // pred_fallthru
    _
  // Predicated region
  $region10: #{resnet_dilated_forward.23} parent=0 // pred_check
    _
  $region11: #{resnet_dilated_forward.23} parent=0 // pred_check_branch
    %13 = sbr.rel (0) target = $region13
  $region12: #{resnet_dilated_forward.23} parent=0 // pred_region
    _
  $region13: #{resnet_dilated_forward.23} parent=0 // pred_fallthru
    _
  %v14 = vld [vmem:[%s0] sm:$0xff]
  %v15 = vld [vmem:[%s0 + $0x8] sm:$0xff]
  %v16 = vld [vmem:[%s1] sm:$0xf]
  %v17 = vld [vmem:[%s1 + $0x4] sm:$0xf]
  %v18 = vld [vmem:[%s1 + $0x8] sm:$0xf]
  %v19 = vld [vmem:[%s1 + $0xc] sm:$0xf]
  %v20 = vld [vmem:[%s1 + $0x10] sm:$0xf]
  %v21 = vld [vmem:[%s1 + $0x14] sm:$0xf]
  %v22 = vld [vmem:[%s1 + $0x18] sm:$0xf]
  %v23 = vld [vmem:[%s1 + $0x1c] sm:$0xf]
  %v24 = vld [vmem:[%s1 + $0x20] sm:$0xf]
  %v25 = vld [vmem:[%s1 + $0x24] sm:$0xf]
  %v26 = vld [vmem:[%s1 + $0x28] sm:$0xf]
  %v27 = vld [vmem:[%s1 + $0x2c] sm:$0xf]
  %v28 = vld [vmem:[%s1 + $0x30] sm:$0xf]
  %v29 = vld [vmem:[%s1 + $0x34] sm:$0xf]
  %v30 = vld [vmem:[%s1 + $0x38] sm:$0xf]
  %v31 = vld [vmem:[%s1 + $0x3c] sm:$0xf]
  %v32 = vld [vmem:[%s1 + $0x40] sm:$0xf]
  %v33 = vld [vmem:[%s1 + $0x44] sm:$0xf]
  %v34 = vld [vmem:[%s1 + $0x48] sm:$0xf]
  %v35 = vld [vmem:[%s1 + $0x4c] sm:$0xf]
  %v36 = vld [vmem:[%s1 + $0x50] sm:$0xf]
  %v37 = vld [vmem:[%s1 + $0x54] sm:$0xf]
  %v38 = vld [vmem:[%s1 + $0x58] sm:$0xf]
  %v39 = vld [vmem:[%s1 + $0x5c] sm:$0xf]
  %v40 = vld [vmem:[%s1 + $0x60] sm:$0xf]
  %v41 = vld [vmem:[%s1 + $0x64] sm:$0xf]
  %v42 = vld [vmem:[%s1 + $0x68] sm:$0xf]
  %v43 = vld [vmem:[%s1 + $0x6c] sm:$0xf]
  %v44 = vld [vmem:[%s1 + $0x70] sm:$0xf]
  %v45 = vld [vmem:[%s1 + $0x74] sm:$0xf]
  %v46 = vld [vmem:[%s1 + $0x78] sm:$0xf]
  %v47 = vld [vmem:[%s1 + $0x7c] sm:$0xf]
  %v48 = vld [vmem:[%s2] sm:$0x1]
  %v50 = vperm.slane %v48, 0
  %v54 = vunpack.c.l.b16 %v14
  %v55 = vunpack.c.h.b16 %v14
  %v56 = vunpack.c.l.b16 %v15
  %v57 = vunpack.c.h.b16 %v15
  %v58 = vpack.c.b16 %v56, %v54
  %v59 = vpack.c.b16 %v57, %v55
  %v94 = vunpack.c.l.b16 %v16
  %v95 = vunpack.c.l.b16 %v17
  %v96 = vunpack.c.l.b16 %v18
  %v97 = vunpack.c.l.b16 %v19
  %v98 = vunpack.c.l.b16 %v20
  %v99 = vunpack.c.l.b16 %v21
  %v100 = vunpack.c.l.b16 %v22
  %v101 = vunpack.c.l.b16 %v23
  %v102 = vunpack.c.l.b16 %v24
  %v103 = vunpack.c.l.b16 %v25
  %v104 = vunpack.c.l.b16 %v26
  %v105 = vunpack.c.l.b16 %v27
  %v106 = vunpack.c.l.b16 %v28
  %v107 = vunpack.c.l.b16 %v29
  %v108 = vunpack.c.l.b16 %v30
  %v109 = vunpack.c.l.b16 %v31
  %v110 = vunpack.c.l.b16 %v32
  %v111 = vunpack.c.l.b16 %v33
  %v112 = vunpack.c.l.b16 %v34
  %v113 = vunpack.c.l.b16 %v35
  %v114 = vunpack.c.l.b16 %v36
  %v115 = vunpack.c.l.b16 %v37
  %v116 = vunpack.c.l.b16 %v38
  %v117 = vunpack.c.l.b16 %v39
  %v118 = vunpack.c.l.b16 %v40
  %v119 = vunpack.c.l.b16 %v41
  %v120 = vunpack.c.l.b16 %v42
  %v121 = vunpack.c.l.b16 %v43
  %v122 = vunpack.c.l.b16 %v44
  %v123 = vunpack.c.l.b16 %v45
  %v124 = vunpack.c.l.b16 %v46
  %v125 = vunpack.c.l.b16 %v47
  %v126 = vpack.c.b16 %v95, %v94
  %v127 = vpack.c.b16 %v97, %v96
  %v128 = vpack.c.b16 %v99, %v98
  %v129 = vpack.c.b16 %v101, %v100
  %v130 = vpack.c.b16 %v103, %v102
  %v131 = vpack.c.b16 %v105, %v104
  %v132 = vpack.c.b16 %v107, %v106
  %v133 = vpack.c.b16 %v109, %v108
  %v134 = vpack.c.b16 %v111, %v110
  %v135 = vpack.c.b16 %v113, %v112
  %v136 = vpack.c.b16 %v115, %v114
  %v137 = vpack.c.b16 %v117, %v116
  %v138 = vpack.c.b16 %v119, %v118
  %v139 = vpack.c.b16 %v121, %v120
  %v140 = vpack.c.b16 %v123, %v122
  %v141 = vpack.c.b16 %v125, %v124
  %158 = vmatpush.bf16.msra.mxu0 %v133
  %159 = vmatpush.bf16.msra.mxu0 %v132
  %160 = vmatpush.bf16.msra.mxu0 %v131
  %161 = vmatpush.bf16.msra.mxu0 %v130
  %162 = vmatpush.bf16.msra.mxu0 %v129
  %163 = vmatpush.bf16.msra.mxu0 %v128
  %164 = vmatpush.bf16.msra.mxu0 %v127
  %165 = vmatpush.bf16.msra.mxu0 %v126
  %166 = vmatmul.bf16.gmra.mxu0 %v58
  %v167 = vpop.f32.mrf.mxu0
  %v168 = vadd.f32 %v50, %v167
  %v169 = vpop.f32.mrf.mxu0
  %v170 = vadd.f32 %v50, %v169
  %171 = vdwg.mxu0
  %172 = vmatpush.bf16.msra.mxu0 %v141
  %173 = vmatpush.bf16.msra.mxu0 %v140
  %174 = vmatpush.bf16.msra.mxu0 %v139
  %175 = vmatpush.bf16.msra.mxu0 %v138
  %176 = vmatpush.bf16.msra.mxu0 %v137
  %177 = vmatpush.bf16.msra.mxu0 %v136
  %178 = vmatpush.bf16.msra.mxu0 %v135
  %179 = vmatpush.bf16.msra.mxu0 %v134
  %180 = vmatmul.bf16.gmra.mxu0 %v59
  %v181 = vpop.f32.mrf.mxu0
  %v182 = vadd.f32 %v168, %v181
  %v183 = vpop.f32.mrf.mxu0
  %v184 = vadd.f32 %v170, %v183
  %185 = vdwg.mxu0
  %v186 = vmax.f32 %v182, 0.0
  %v187 = vmax.f32 %v184, 0.0
  %188 = vst [vmem:[%s3] sm:$0xff] %v186
  %189 = vst [vmem:[%s3 + $0x8] sm:$0xff] %v187
  // Predicated region
  $region14: #{resnet_dilated_forward.23} parent=0 // pred_check
    _
  $region15: #{resnet_dilated_forward.23} parent=0 // pred_check_branch
    %191 = sbr.rel (0) target = $region17
  $region16: #{resnet_dilated_forward.23} parent=0 // pred_region
    _
  $region17: #{resnet_dilated_forward.23} parent=0 // pred_fallthru
    _
  // Predicated region
  $region18: #{resnet_dilated_forward.23} parent=0 // pred_check
    _
  $region19: #{resnet_dilated_forward.23} parent=0 // pred_check_branch
    %193 = sbr.rel (0) target = $region21
  $region20: #{resnet_dilated_forward.23} parent=0 // pred_region
    _
  $region21: #{resnet_dilated_forward.23} parent=0 // pred_fallthru
    _

// kernel: resnet_dilated_forward.22
$region0: #{resnet_dilated_forward.22}
  #allocation0 [shape = 'u32[]', space=smem, size = 0x4, offset = 0x4, fixed_abs, tag = 'smem constant byte address 0x4 - core index']
  #allocation1 [shape = 'u32[72,128]{1,0:T(1,128)}', space=vmem, size = 0x9000, scoped, tag = 'internal scratch']
  %s0 = inlined_call_operand.vmem [shape: bf16[16,128], index: 0, kind: input, shape index: {}]
  %s1 = inlined_call_operand.vmem [shape: bf16[128,128], index: 1, kind: input, shape index: {}]
  %s2 = inlined_call_operand.vmem [shape: f32[1,128], index: 2, kind: input, shape index: {}]
  %s3 = inlined_call_operand.vmem [shape: f32[16,128], index: 3, kind: output, shape index: {}]
  %s4 = sld [smem:[#allocation0]]
  $region22: #{resnet_dilated_forward.22} parent=0
    _
  %s6 = ssub.s32 1, %s4
  %s7 = scalar_select 0, %s6, %s4
  // Predicated region
  $region2: #{resnet_dilated_forward.22} parent=0 // pred_check
    _
  $region3: #{resnet_dilated_forward.22} parent=0 // pred_check_branch
    %9 = sbr.rel (0) target = $region5
  $region4: #{resnet_dilated_forward.22} parent=0 // pred_region
    _
  $region5: #{resnet_dilated_forward.22} parent=0 // pred_fallthru
    _
  // Predicated region
  $region6: #{resnet_dilated_forward.22} parent=0 // pred_check
    _
  $region7: #{resnet_dilated_forward.22} parent=0 // pred_check_branch
    %11 = sbr.rel (0) target = $region9
  $region8: #{resnet_dilated_forward.22} parent=0 // pred_region
    _
  $region9: #{resnet_dilated_forward.22} parent=0 // pred_fallthru
    _
  // Predicated region
  $region10: #{resnet_dilated_forward.22} parent=0 // pred_check
    _
  $region11: #{resnet_dilated_forward.22} parent=0 // pred_check_branch
    %13 = sbr.rel (0) target = $region13
  $region12: #{resnet_dilated_forward.22} parent=0 // pred_region
    _
  $region13: #{resnet_dilated_forward.22} parent=0 // pred_fallthru
    _
  %v14 = vld [vmem:[%s0] sm:$0xf]
  %v15 = vld [vmem:[%s0 + $0x4] sm:$0xf]
  %v16 = vld [vmem:[%s1] sm:$0xf]
  %v17 = vld [vmem:[%s1 + $0x4] sm:$0xf]
  %v18 = vld [vmem:[%s1 + $0x8] sm:$0xf]
  %v19 = vld [vmem:[%s1 + $0xc] sm:$0xf]
  %v20 = vld [vmem:[%s1 + $0x10] sm:$0xf]
  %v21 = vld [vmem:[%s1 + $0x14] sm:$0xf]
  %v22 = vld [vmem:[%s1 + $0x18] sm:$0xf]
  %v23 = vld [vmem:[%s1 + $0x1c] sm:$0xf]
  %v24 = vld [vmem:[%s1 + $0x20] sm:$0xf]
  %v25 = vld [vmem:[%s1 + $0x24] sm:$0xf]
  %v26 = vld [vmem:[%s1 + $0x28] sm:$0xf]
  %v27 = vld [vmem:[%s1 + $0x2c] sm:$0xf]
  %v28 = vld [vmem:[%s1 + $0x30] sm:$0xf]
  %v29 = vld [vmem:[%s1 + $0x34] sm:$0xf]
  %v30 = vld [vmem:[%s1 + $0x38] sm:$0xf]
  %v31 = vld [vmem:[%s1 + $0x3c] sm:$0xf]
  %v32 = vld [vmem:[%s2] sm:$0x1]
  %v34 = vperm.slane %v32, 0
  %v38 = vunpack.c.l.b16 %v14
  %v39 = vunpack.c.l.b16 %v15
  %v40 = vpack.c.b16 %v39, %v38
  %v58 = vunpack.c.l.b16 %v16
  %v59 = vunpack.c.l.b16 %v17
  %v60 = vunpack.c.l.b16 %v18
  %v61 = vunpack.c.l.b16 %v19
  %v62 = vunpack.c.l.b16 %v20
  %v63 = vunpack.c.l.b16 %v21
  %v64 = vunpack.c.l.b16 %v22
  %v65 = vunpack.c.l.b16 %v23
  %v66 = vunpack.c.l.b16 %v24
  %v67 = vunpack.c.l.b16 %v25
  %v68 = vunpack.c.l.b16 %v26
  %v69 = vunpack.c.l.b16 %v27
  %v70 = vunpack.c.l.b16 %v28
  %v71 = vunpack.c.l.b16 %v29
  %v72 = vunpack.c.l.b16 %v30
  %v73 = vunpack.c.l.b16 %v31
  %v74 = vpack.c.b16 %v59, %v58
  %v75 = vpack.c.b16 %v61, %v60
  %v76 = vpack.c.b16 %v63, %v62
  %v77 = vpack.c.b16 %v65, %v64
  %v78 = vpack.c.b16 %v67, %v66
  %v79 = vpack.c.b16 %v69, %v68
  %v80 = vpack.c.b16 %v71, %v70
  %v81 = vpack.c.b16 %v73, %v72
  %90 = vmatpush.bf16.msra.mxu0 %v81
  %91 = vmatpush.bf16.msra.mxu0 %v80
  %92 = vmatpush.bf16.msra.mxu0 %v79
  %93 = vmatpush.bf16.msra.mxu0 %v78
  %94 = vmatpush.bf16.msra.mxu0 %v77
  %95 = vmatpush.bf16.msra.mxu0 %v76
  %96 = vmatpush.bf16.msra.mxu0 %v75
  %97 = vmatpush.bf16.msra.mxu0 %v74
  %98 = vmatmul.bf16.gmra.mxu0 %v40
  %v99 = vpop.f32.mrf.mxu0
  %v100 = vadd.f32 %v34, %v99
  %v101 = vpop.f32.mrf.mxu0
  %v102 = vadd.f32 %v34, %v101
  %103 = vdwg.mxu0
  %104 = vst [vmem:[%s3] sm:$0xff] %v100
  %105 = vst [vmem:[%s3 + $0x8] sm:$0xff] %v102
  // Predicated region
  $region14: #{resnet_dilated_forward.22} parent=0 // pred_check
    _
  $region15: #{resnet_dilated_forward.22} parent=0 // pred_check_branch
    %107 = sbr.rel (0) target = $region17
  $region16: #{resnet_dilated_forward.22} parent=0 // pred_region
    _
  $region17: #{resnet_dilated_forward.22} parent=0 // pred_fallthru
    _
  // Predicated region
  $region18: #{resnet_dilated_forward.22} parent=0 // pred_check
    _
  $region19: #{resnet_dilated_forward.22} parent=0 // pred_check_branch
    %109 = sbr.rel (0) target = $region21
  $region20: #{resnet_dilated_forward.22} parent=0 // pred_region
    _
  $region21: #{resnet_dilated_forward.22} parent=0 // pred_fallthru
    _

// kernel: resnet_dilated_forward.24
$region0: #{resnet_dilated_forward.24}
  #allocation0 [shape = 'u32[]', space=smem, size = 0x4, offset = 0x4, fixed_abs, tag = 'smem constant byte address 0x4 - core index']
  #allocation1 [shape = 'u32[72,128]{1,0:T(1,128)}', space=vmem, size = 0x9000, scoped, tag = 'internal scratch']
  %s0 = inlined_call_operand.vmem [shape: bf16[16,384], index: 0, kind: input, shape index: {}]
  %s1 = inlined_call_operand.vmem [shape: bf16[384,128], index: 1, kind: input, shape index: {}]
  %s2 = inlined_call_operand.vmem [shape: f32[1,128], index: 2, kind: input, shape index: {}]
  %s3 = inlined_call_operand.vmem [shape: f32[16,128], index: 3, kind: input, shape index: {}]
  %s4 = inlined_call_operand.vmem [shape: f32[16,128], index: 4, kind: output, shape index: {}]
  %s5 = sld [smem:[#allocation0]]
  $region26: #{resnet_dilated_forward.24} parent=0
    _
  %s7 = ssub.s32 1, %s5
  %s8 = scalar_select 0, %s7, %s5
  // Predicated region
  $region2: #{resnet_dilated_forward.24} parent=0 // pred_check
    _
  $region3: #{resnet_dilated_forward.24} parent=0 // pred_check_branch
    %10 = sbr.rel (0) target = $region5
  $region4: #{resnet_dilated_forward.24} parent=0 // pred_region
    _
  $region5: #{resnet_dilated_forward.24} parent=0 // pred_fallthru
    _
  // Predicated region
  $region6: #{resnet_dilated_forward.24} parent=0 // pred_check
    _
  $region7: #{resnet_dilated_forward.24} parent=0 // pred_check_branch
    %12 = sbr.rel (0) target = $region9
  $region8: #{resnet_dilated_forward.24} parent=0 // pred_region
    _
  $region9: #{resnet_dilated_forward.24} parent=0 // pred_fallthru
    _
  // Predicated region
  $region10: #{resnet_dilated_forward.24} parent=0 // pred_check
    _
  $region11: #{resnet_dilated_forward.24} parent=0 // pred_check_branch
    %14 = sbr.rel (0) target = $region13
  $region12: #{resnet_dilated_forward.24} parent=0 // pred_region
    _
  $region13: #{resnet_dilated_forward.24} parent=0 // pred_fallthru
    _
  // Predicated region
  $region14: #{resnet_dilated_forward.24} parent=0 // pred_check
    _
  $region15: #{resnet_dilated_forward.24} parent=0 // pred_check_branch
    %16 = sbr.rel (0) target = $region17
  $region16: #{resnet_dilated_forward.24} parent=0 // pred_region
    _
  $region17: #{resnet_dilated_forward.24} parent=0 // pred_fallthru
    _
  %v17 = vld [vmem:[%s0] sm:$0xff]
  %v18 = vld [vmem:[%s0 + $0x8] sm:$0xf]
  %v19 = vld [vmem:[%s0 + $0xc] sm:$0xff]
  %v20 = vld [vmem:[%s0 + $0x14] sm:$0xf]
  %v21 = vld [vmem:[%s1] sm:$0xf]
  %v22 = vld [vmem:[%s1 + $0x4] sm:$0xf]
  %v23 = vld [vmem:[%s1 + $0x8] sm:$0xf]
  %v24 = vld [vmem:[%s1 + $0xc] sm:$0xf]
  %v25 = vld [vmem:[%s1 + $0x10] sm:$0xf]
  %v26 = vld [vmem:[%s1 + $0x14] sm:$0xf]
  %v27 = vld [vmem:[%s1 + $0x18] sm:$0xf]
  %v28 = vld [vmem:[%s1 + $0x1c] sm:$0xf]
  %v29 = vld [vmem:[%s1 + $0x20] sm:$0xf]
  %v30 = vld [vmem:[%s1 + $0x24] sm:$0xf]
  %v31 = vld [vmem:[%s1 + $0x28] sm:$0xf]
  %v32 = vld [vmem:[%s1 + $0x2c] sm:$0xf]
  %v33 = vld [vmem:[%s1 + $0x30] sm:$0xf]
  %v34 = vld [vmem:[%s1 + $0x34] sm:$0xf]
  %v35 = vld [vmem:[%s1 + $0x38] sm:$0xf]
  %v36 = vld [vmem:[%s1 + $0x3c] sm:$0xf]
  %v37 = vld [vmem:[%s1 + $0x40] sm:$0xf]
  %v38 = vld [vmem:[%s1 + $0x44] sm:$0xf]
  %v39 = vld [vmem:[%s1 + $0x48] sm:$0xf]
  %v40 = vld [vmem:[%s1 + $0x4c] sm:$0xf]
  %v41 = vld [vmem:[%s1 + $0x50] sm:$0xf]
  %v42 = vld [vmem:[%s1 + $0x54] sm:$0xf]
  %v43 = vld [vmem:[%s1 + $0x58] sm:$0xf]
  %v44 = vld [vmem:[%s1 + $0x5c] sm:$0xf]
  %v45 = vld [vmem:[%s1 + $0x60] sm:$0xf]
  %v46 = vld [vmem:[%s1 + $0x64] sm:$0xf]
  %v47 = vld [vmem:[%s1 + $0x68] sm:$0xf]
  %v48 = vld [vmem:[%s1 + $0x6c] sm:$0xf]
  %v49 = vld [vmem:[%s1 + $0x70] sm:$0xf]
  %v50 = vld [vmem:[%s1 + $0x74] sm:$0xf]
  %v51 = vld [vmem:[%s1 + $0x78] sm:$0xf]
  %v52 = vld [vmem:[%s1 + $0x7c] sm:$0xf]
  %v53 = vld [vmem:[%s1 + $0x80] sm:$0xf]
  %v54 = vld [vmem:[%s1 + $0x84] sm:$0xf]
  %v55 = vld [vmem:[%s1 + $0x88] sm:$0xf]
  %v56 = vld [vmem:[%s1 + $0x8c] sm:$0xf]
  %v57 = vld [vmem:[%s1 + $0x90] sm:$0xf]
  %v58 = vld [vmem:[%s1 + $0x94] sm:$0xf]
  %v59 = vld [vmem:[%s1 + $0x98] sm:$0xf]
  %v60 = vld [vmem:[%s1 + $0x9c] sm:$0xf]
  %v61 = vld [vmem:[%s1 + $0xa0] sm:$0xf]
  %v62 = vld [vmem:[%s1 + $0xa4] sm:$0xf]
  %v63 = vld [vmem:[%s1 + $0xa8] sm:$0xf]
  %v64 = vld [vmem:[%s1 + $0xac] sm:$0xf]
  %v65 = vld [vmem:[%s1 + $0xb0] sm:$0xf]
  %v66 = vld [vmem:[%s1 + $0xb4] sm:$0xf]
  %v67 = vld [vmem:[%s1 + $0xb8] sm:$0xf]
  %v68 = vld [vmem:[%s1 + $0xbc] sm:$0xf]
  %v69 = vld [vmem:[%s2] sm:$0x1]
  %v71 = vperm.slane %v69, 0
  %v77 = vunpack.c.l.b16 %v17
  %v78 = vunpack.c.h.b16 %v17
  %v79 = vunpack.c.l.b16 %v18
  %v80 = vunpack.c.l.b16 %v19
  %v81 = vunpack.c.h.b16 %v19
  %v82 = vunpack.c.l.b16 %v20
  %v83 = vpack.c.b16 %v80, %v77
  %v84 = vpack.c.b16 %v81, %v78
  %v85 = vpack.c.b16 %v82, %v79
  %v137 = vunpack.c.l.b16 %v21
  %v138 = vunpack.c.l.b16 %v22
  %v139 = vunpack.c.l.b16 %v23
  %v140 = vunpack.c.l.b16 %v24
  %v141 = vunpack.c.l.b16 %v25
  %v142 = vunpack.c.l.b16 %v26
  %v143 = vunpack.c.l.b16 %v27
  %v144 = vunpack.c.l.b16 %v28
  %v145 = vunpack.c.l.b16 %v29
  %v146 = vunpack.c.l.b16 %v30
  %v147 = vunpack.c.l.b16 %v31
  %v148 = vunpack.c.l.b16 %v32
  %v149 = vunpack.c.l.b16 %v33
  %v150 = vunpack.c.l.b16 %v34
  %v151 = vunpack.c.l.b16 %v35
  %v152 = vunpack.c.l.b16 %v36
  %v153 = vunpack.c.l.b16 %v37
  %v154 = vunpack.c.l.b16 %v38
  %v155 = vunpack.c.l.b16 %v39
  %v156 = vunpack.c.l.b16 %v40
  %v157 = vunpack.c.l.b16 %v41
  %v158 = vunpack.c.l.b16 %v42
  %v159 = vunpack.c.l.b16 %v43
  %v160 = vunpack.c.l.b16 %v44
  %v161 = vunpack.c.l.b16 %v45
  %v162 = vunpack.c.l.b16 %v46
  %v163 = vunpack.c.l.b16 %v47
  %v164 = vunpack.c.l.b16 %v48
  %v165 = vunpack.c.l.b16 %v49
  %v166 = vunpack.c.l.b16 %v50
  %v167 = vunpack.c.l.b16 %v51
  %v168 = vunpack.c.l.b16 %v52
  %v169 = vunpack.c.l.b16 %v53
  %v170 = vunpack.c.l.b16 %v54
  %v171 = vunpack.c.l.b16 %v55
  %v172 = vunpack.c.l.b16 %v56
  %v173 = vunpack.c.l.b16 %v57
  %v174 = vunpack.c.l.b16 %v58
  %v175 = vunpack.c.l.b16 %v59
  %v176 = vunpack.c.l.b16 %v60
  %v177 = vunpack.c.l.b16 %v61
  %v178 = vunpack.c.l.b16 %v62
  %v179 = vunpack.c.l.b16 %v63
  %v180 = vunpack.c.l.b16 %v64
  %v181 = vunpack.c.l.b16 %v65
  %v182 = vunpack.c.l.b16 %v66
  %v183 = vunpack.c.l.b16 %v67
  %v184 = vunpack.c.l.b16 %v68
  %v185 = vpack.c.b16 %v138, %v137
  %v186 = vpack.c.b16 %v140, %v139
  %v187 = vpack.c.b16 %v142, %v141
  %v188 = vpack.c.b16 %v144, %v143
  %v189 = vpack.c.b16 %v146, %v145
  %v190 = vpack.c.b16 %v148, %v147
  %v191 = vpack.c.b16 %v150, %v149
  %v192 = vpack.c.b16 %v152, %v151
  %v193 = vpack.c.b16 %v154, %v153
  %v194 = vpack.c.b16 %v156, %v155
  %v195 = vpack.c.b16 %v158, %v157
  %v196 = vpack.c.b16 %v160, %v159
  %v197 = vpack.c.b16 %v162, %v161
  %v198 = vpack.c.b16 %v164, %v163
  %v199 = vpack.c.b16 %v166, %v165
  %v200 = vpack.c.b16 %v168, %v167
  %v201 = vpack.c.b16 %v170, %v169
  %v202 = vpack.c.b16 %v172, %v171
  %v203 = vpack.c.b16 %v174, %v173
  %v204 = vpack.c.b16 %v176, %v175
  %v205 = vpack.c.b16 %v178, %v177
  %v206 = vpack.c.b16 %v180, %v179
  %v207 = vpack.c.b16 %v182, %v181
  %v208 = vpack.c.b16 %v184, %v183
  %233 = vmatpush.bf16.msra.mxu0 %v192
  %234 = vmatpush.bf16.msra.mxu0 %v191
  %235 = vmatpush.bf16.msra.mxu0 %v190
  %236 = vmatpush.bf16.msra.mxu0 %v189
  %237 = vmatpush.bf16.msra.mxu0 %v188
  %238 = vmatpush.bf16.msra.mxu0 %v187
  %239 = vmatpush.bf16.msra.mxu0 %v186
  %240 = vmatpush.bf16.msra.mxu0 %v185
  %241 = vmatmul.bf16.gmra.mxu0 %v83
  %v242 = vpop.f32.mrf.mxu0
  %v243 = vadd.f32 %v71, %v242
  %v244 = vpop.f32.mrf.mxu0
  %v245 = vadd.f32 %v71, %v244
  %246 = vdwg.mxu0
  %247 = vmatpush.bf16.msra.mxu0 %v200
  %248 = vmatpush.bf16.msra.mxu0 %v199
  %249 = vmatpush.bf16.msra.mxu0 %v198
  %250 = vmatpush.bf16.msra.mxu0 %v197
  %251 = vmatpush.bf16.msra.mxu0 %v196
  %252 = vmatpush.bf16.msra.mxu0 %v195
  %253 = vmatpush.bf16.msra.mxu0 %v194
  %254 = vmatpush.bf16.msra.mxu0 %v193
  %255 = vmatmul.bf16.gmra.mxu0 %v84
  %v256 = vpop.f32.mrf.mxu0
  %v257 = vadd.f32 %v243, %v256
  %v258 = vpop.f32.mrf.mxu0
  %v259 = vadd.f32 %v245, %v258
  %260 = vdwg.mxu0
  %261 = vmatpush.bf16.msra.mxu0 %v208
  %262 = vmatpush.bf16.msra.mxu0 %v207
  %263 = vmatpush.bf16.msra.mxu0 %v206
  %264 = vmatpush.bf16.msra.mxu0 %v205
  %265 = vmatpush.bf16.msra.mxu0 %v204
  %266 = vmatpush.bf16.msra.mxu0 %v203
  %267 = vmatpush.bf16.msra.mxu0 %v202
  %268 = vmatpush.bf16.msra.mxu0 %v201
  %269 = vmatmul.bf16.gmra.mxu0 %v85
  %v270 = vpop.f32.mrf.mxu0
  %v271 = vadd.f32 %v257, %v270
  %v272 = vpop.f32.mrf.mxu0
  %v273 = vadd.f32 %v259, %v272
  %274 = vdwg.mxu0
  %v275 = vld [vmem:[%s3] sm:$0xff]
  %v276 = vld [vmem:[%s3 + $0x8] sm:$0xff]
  %v277 = vadd.f32 %v271, %v275
  %v278 = vadd.f32 %v273, %v276
  %v279 = vmax.f32 %v277, 0.0
  %v280 = vmax.f32 %v278, 0.0
  %281 = vst [vmem:[%s4] sm:$0xff] %v279
  %282 = vst [vmem:[%s4 + $0x8] sm:$0xff] %v280
  // Predicated region
  $region18: #{resnet_dilated_forward.24} parent=0 // pred_check
    _
  $region19: #{resnet_dilated_forward.24} parent=0 // pred_check_branch
    %284 = sbr.rel (0) target = $region21
  $region20: #{resnet_dilated_forward.24} parent=0 // pred_region
    _
  $region21: #{resnet_dilated_forward.24} parent=0 // pred_fallthru
    _
  // Predicated region
  $region22: #{resnet_dilated_forward.24} parent=0 // pred_check
    _
  $region23: #{resnet_dilated_forward.24} parent=0 // pred_check_branch
    %286 = sbr.rel (0) target = $region25
  $region24: #{resnet_dilated_forward.24} parent=0 // pred_region
    _
  $region25: #{resnet_dilated_forward.24} parent=0 // pred_fallthru
    _

// kernel: resnet_dilated_forward.26
$region0: #{resnet_dilated_forward.26}
  #allocation0 [shape = 'u32[]', space=smem, size = 0x4, offset = 0x4, fixed_abs, tag = 'smem constant byte address 0x4 - core index']
  #allocation1 [shape = 'u32[72,128]{1,0:T(1,128)}', space=vmem, size = 0x9000, scoped, tag = 'internal scratch']
  %s0 = inlined_call_operand.vmem [shape: bf16[16,384], index: 0, kind: input, shape index: {}]
  %s1 = inlined_call_operand.vmem [shape: bf16[384,128], index: 1, kind: input, shape index: {}]
  %s2 = inlined_call_operand.vmem [shape: f32[1,128], index: 2, kind: input, shape index: {}]
  %s3 = inlined_call_operand.vmem [shape: f32[16,128], index: 3, kind: output, shape index: {}]
  %s4 = sld [smem:[#allocation0]]
  $region22: #{resnet_dilated_forward.26} parent=0
    _
  %s6 = ssub.s32 1, %s4
  %s7 = scalar_select 0, %s6, %s4
  // Predicated region
  $region2: #{resnet_dilated_forward.26} parent=0 // pred_check
    _
  $region3: #{resnet_dilated_forward.26} parent=0 // pred_check_branch
    %9 = sbr.rel (0) target = $region5
  $region4: #{resnet_dilated_forward.26} parent=0 // pred_region
    _
  $region5: #{resnet_dilated_forward.26} parent=0 // pred_fallthru
    _
  // Predicated region
  $region6: #{resnet_dilated_forward.26} parent=0 // pred_check
    _
  $region7: #{resnet_dilated_forward.26} parent=0 // pred_check_branch
    %11 = sbr.rel (0) target = $region9
  $region8: #{resnet_dilated_forward.26} parent=0 // pred_region
    _
  $region9: #{resnet_dilated_forward.26} parent=0 // pred_fallthru
    _
  // Predicated region
  $region10: #{resnet_dilated_forward.26} parent=0 // pred_check
    _
  $region11: #{resnet_dilated_forward.26} parent=0 // pred_check_branch
    %13 = sbr.rel (0) target = $region13
  $region12: #{resnet_dilated_forward.26} parent=0 // pred_region
    _
  $region13: #{resnet_dilated_forward.26} parent=0 // pred_fallthru
    _
  %v14 = vld [vmem:[%s0] sm:$0xff]
  %v15 = vld [vmem:[%s0 + $0x8] sm:$0xf]
  %v16 = vld [vmem:[%s0 + $0xc] sm:$0xff]
  %v17 = vld [vmem:[%s0 + $0x14] sm:$0xf]
  %v18 = vld [vmem:[%s1] sm:$0xf]
  %v19 = vld [vmem:[%s1 + $0x4] sm:$0xf]
  %v20 = vld [vmem:[%s1 + $0x8] sm:$0xf]
  %v21 = vld [vmem:[%s1 + $0xc] sm:$0xf]
  %v22 = vld [vmem:[%s1 + $0x10] sm:$0xf]
  %v23 = vld [vmem:[%s1 + $0x14] sm:$0xf]
  %v24 = vld [vmem:[%s1 + $0x18] sm:$0xf]
  %v25 = vld [vmem:[%s1 + $0x1c] sm:$0xf]
  %v26 = vld [vmem:[%s1 + $0x20] sm:$0xf]
  %v27 = vld [vmem:[%s1 + $0x24] sm:$0xf]
  %v28 = vld [vmem:[%s1 + $0x28] sm:$0xf]
  %v29 = vld [vmem:[%s1 + $0x2c] sm:$0xf]
  %v30 = vld [vmem:[%s1 + $0x30] sm:$0xf]
  %v31 = vld [vmem:[%s1 + $0x34] sm:$0xf]
  %v32 = vld [vmem:[%s1 + $0x38] sm:$0xf]
  %v33 = vld [vmem:[%s1 + $0x3c] sm:$0xf]
  %v34 = vld [vmem:[%s1 + $0x40] sm:$0xf]
  %v35 = vld [vmem:[%s1 + $0x44] sm:$0xf]
  %v36 = vld [vmem:[%s1 + $0x48] sm:$0xf]
  %v37 = vld [vmem:[%s1 + $0x4c] sm:$0xf]
  %v38 = vld [vmem:[%s1 + $0x50] sm:$0xf]
  %v39 = vld [vmem:[%s1 + $0x54] sm:$0xf]
  %v40 = vld [vmem:[%s1 + $0x58] sm:$0xf]
  %v41 = vld [vmem:[%s1 + $0x5c] sm:$0xf]
  %v42 = vld [vmem:[%s1 + $0x60] sm:$0xf]
  %v43 = vld [vmem:[%s1 + $0x64] sm:$0xf]
  %v44 = vld [vmem:[%s1 + $0x68] sm:$0xf]
  %v45 = vld [vmem:[%s1 + $0x6c] sm:$0xf]
  %v46 = vld [vmem:[%s1 + $0x70] sm:$0xf]
  %v47 = vld [vmem:[%s1 + $0x74] sm:$0xf]
  %v48 = vld [vmem:[%s1 + $0x78] sm:$0xf]
  %v49 = vld [vmem:[%s1 + $0x7c] sm:$0xf]
  %v50 = vld [vmem:[%s1 + $0x80] sm:$0xf]
  %v51 = vld [vmem:[%s1 + $0x84] sm:$0xf]
  %v52 = vld [vmem:[%s1 + $0x88] sm:$0xf]
  %v53 = vld [vmem:[%s1 + $0x8c] sm:$0xf]
  %v54 = vld [vmem:[%s1 + $0x90] sm:$0xf]
  %v55 = vld [vmem:[%s1 + $0x94] sm:$0xf]
  %v56 = vld [vmem:[%s1 + $0x98] sm:$0xf]
  %v57 = vld [vmem:[%s1 + $0x9c] sm:$0xf]
  %v58 = vld [vmem:[%s1 + $0xa0] sm:$0xf]
  %v59 = vld [vmem:[%s1 + $0xa4] sm:$0xf]
  %v60 = vld [vmem:[%s1 + $0xa8] sm:$0xf]
  %v61 = vld [vmem:[%s1 + $0xac] sm:$0xf]
  %v62 = vld [vmem:[%s1 + $0xb0] sm:$0xf]
  %v63 = vld [vmem:[%s1 + $0xb4] sm:$0xf]
  %v64 = vld [vmem:[%s1 + $0xb8] sm:$0xf]
  %v65 = vld [vmem:[%s1 + $0xbc] sm:$0xf]
  %v66 = vld [vmem:[%s2] sm:$0x1]
  %v68 = vperm.slane %v66, 0
  %v74 = vunpack.c.l.b16 %v14
  %v75 = vunpack.c.h.b16 %v14
  %v76 = vunpack.c.l.b16 %v15
  %v77 = vunpack.c.l.b16 %v16
  %v78 = vunpack.c.h.b16 %v16
  %v79 = vunpack.c.l.b16 %v17
  %v80 = vpack.c.b16 %v77, %v74
  %v81 = vpack.c.b16 %v78, %v75
  %v82 = vpack.c.b16 %v79, %v76
  %v134 = vunpack.c.l.b16 %v18
  %v135 = vunpack.c.l.b16 %v19
  %v136 = vunpack.c.l.b16 %v20
  %v137 = vunpack.c.l.b16 %v21
  %v138 = vunpack.c.l.b16 %v22
  %v139 = vunpack.c.l.b16 %v23
  %v140 = vunpack.c.l.b16 %v24
  %v141 = vunpack.c.l.b16 %v25
  %v142 = vunpack.c.l.b16 %v26
  %v143 = vunpack.c.l.b16 %v27
  %v144 = vunpack.c.l.b16 %v28
  %v145 = vunpack.c.l.b16 %v29
  %v146 = vunpack.c.l.b16 %v30
  %v147 = vunpack.c.l.b16 %v31
  %v148 = vunpack.c.l.b16 %v32
  %v149 = vunpack.c.l.b16 %v33
  %v150 = vunpack.c.l.b16 %v34
  %v151 = vunpack.c.l.b16 %v35
  %v152 = vunpack.c.l.b16 %v36
  %v153 = vunpack.c.l.b16 %v37
  %v154 = vunpack.c.l.b16 %v38
  %v155 = vunpack.c.l.b16 %v39
  %v156 = vunpack.c.l.b16 %v40
  %v157 = vunpack.c.l.b16 %v41
  %v158 = vunpack.c.l.b16 %v42
  %v159 = vunpack.c.l.b16 %v43
  %v160 = vunpack.c.l.b16 %v44
  %v161 = vunpack.c.l.b16 %v45
  %v162 = vunpack.c.l.b16 %v46
  %v163 = vunpack.c.l.b16 %v47
  %v164 = vunpack.c.l.b16 %v48
  %v165 = vunpack.c.l.b16 %v49
  %v166 = vunpack.c.l.b16 %v50
  %v167 = vunpack.c.l.b16 %v51
  %v168 = vunpack.c.l.b16 %v52
  %v169 = vunpack.c.l.b16 %v53
  %v170 = vunpack.c.l.b16 %v54
  %v171 = vunpack.c.l.b16 %v55
  %v172 = vunpack.c.l.b16 %v56
  %v173 = vunpack.c.l.b16 %v57
  %v174 = vunpack.c.l.b16 %v58
  %v175 = vunpack.c.l.b16 %v59
  %v176 = vunpack.c.l.b16 %v60
  %v177 = vunpack.c.l.b16 %v61
  %v178 = vunpack.c.l.b16 %v62
  %v179 = vunpack.c.l.b16 %v63
  %v180 = vunpack.c.l.b16 %v64
  %v181 = vunpack.c.l.b16 %v65
  %v182 = vpack.c.b16 %v135, %v134
  %v183 = vpack.c.b16 %v137, %v136
  %v184 = vpack.c.b16 %v139, %v138
  %v185 = vpack.c.b16 %v141, %v140
  %v186 = vpack.c.b16 %v143, %v142
  %v187 = vpack.c.b16 %v145, %v144
  %v188 = vpack.c.b16 %v147, %v146
  %v189 = vpack.c.b16 %v149, %v148
  %v190 = vpack.c.b16 %v151, %v150
  %v191 = vpack.c.b16 %v153, %v152
  %v192 = vpack.c.b16 %v155, %v154
  %v193 = vpack.c.b16 %v157, %v156
  %v194 = vpack.c.b16 %v159, %v158
  %v195 = vpack.c.b16 %v161, %v160
  %v196 = vpack.c.b16 %v163, %v162
  %v197 = vpack.c.b16 %v165, %v164
  %v198 = vpack.c.b16 %v167, %v166
  %v199 = vpack.c.b16 %v169, %v168
  %v200 = vpack.c.b16 %v171, %v170
  %v201 = vpack.c.b16 %v173, %v172
  %v202 = vpack.c.b16 %v175, %v174
  %v203 = vpack.c.b16 %v177, %v176
  %v204 = vpack.c.b16 %v179, %v178
  %v205 = vpack.c.b16 %v181, %v180
  %230 = vmatpush.bf16.msra.mxu0 %v189
  %231 = vmatpush.bf16.msra.mxu0 %v188
  %232 = vmatpush.bf16.msra.mxu0 %v187
  %233 = vmatpush.bf16.msra.mxu0 %v186
  %234 = vmatpush.bf16.msra.mxu0 %v185
  %235 = vmatpush.bf16.msra.mxu0 %v184
  %236 = vmatpush.bf16.msra.mxu0 %v183
  %237 = vmatpush.bf16.msra.mxu0 %v182
  %238 = vmatmul.bf16.gmra.mxu0 %v80
  %v239 = vpop.f32.mrf.mxu0
  %v240 = vadd.f32 %v68, %v239
  %v241 = vpop.f32.mrf.mxu0
  %v242 = vadd.f32 %v68, %v241
  %243 = vdwg.mxu0
  %244 = vmatpush.bf16.msra.mxu0 %v197
  %245 = vmatpush.bf16.msra.mxu0 %v196
  %246 = vmatpush.bf16.msra.mxu0 %v195
  %247 = vmatpush.bf16.msra.mxu0 %v194
  %248 = vmatpush.bf16.msra.mxu0 %v193
  %249 = vmatpush.bf16.msra.mxu0 %v192
  %250 = vmatpush.bf16.msra.mxu0 %v191
  %251 = vmatpush.bf16.msra.mxu0 %v190
  %252 = vmatmul.bf16.gmra.mxu0 %v81
  %v253 = vpop.f32.mrf.mxu0
  %v254 = vadd.f32 %v240, %v253
  %v255 = vpop.f32.mrf.mxu0
  %v256 = vadd.f32 %v242, %v255
  %257 = vdwg.mxu0
  %258 = vmatpush.bf16.msra.mxu0 %v205
  %259 = vmatpush.bf16.msra.mxu0 %v204
  %260 = vmatpush.bf16.msra.mxu0 %v203
  %261 = vmatpush.bf16.msra.mxu0 %v202
  %262 = vmatpush.bf16.msra.mxu0 %v201
  %263 = vmatpush.bf16.msra.mxu0 %v200
  %264 = vmatpush.bf16.msra.mxu0 %v199
  %265 = vmatpush.bf16.msra.mxu0 %v198
  %266 = vmatmul.bf16.gmra.mxu0 %v82
  %v267 = vpop.f32.mrf.mxu0
  %v268 = vadd.f32 %v254, %v267
  %v269 = vpop.f32.mrf.mxu0
  %v270 = vadd.f32 %v256, %v269
  %271 = vdwg.mxu0
  %v272 = vmax.f32 %v268, 0.0
  %v273 = vmax.f32 %v270, 0.0
  %274 = vst [vmem:[%s3] sm:$0xff] %v272
  %275 = vst [vmem:[%s3 + $0x8] sm:$0xff] %v273
  // Predicated region
  $region14: #{resnet_dilated_forward.26} parent=0 // pred_check
    _
  $region15: #{resnet_dilated_forward.26} parent=0 // pred_check_branch
    %277 = sbr.rel (0) target = $region17
  $region16: #{resnet_dilated_forward.26} parent=0 // pred_region
    _
  $region17: #{resnet_dilated_forward.26} parent=0 // pred_fallthru
    _
  // Predicated region
  $region18: #{resnet_dilated_forward.26} parent=0 // pred_check
    _
  $region19: #{resnet_dilated_forward.26} parent=0 // pred_check_branch
    %279 = sbr.rel (0) target = $region21
  $region20: #{resnet_dilated_forward.26} parent=0 // pred_region
    _
  $region21: #{resnet_dilated_forward.26} parent=0 // pred_fallthru
    _

// kernel: resnet_dilated_forward.29
$region0: #{resnet_dilated_forward.29}
  #allocation0 [shape = 'u32[]', space=smem, size = 0x4, offset = 0x4, fixed_abs, tag = 'smem constant byte address 0x4 - core index']
  #allocation1 [shape = 'u32[72,128]{1,0:T(1,128)}', space=vmem, size = 0x9000, scoped, tag = 'internal scratch']
  %s0 = inlined_call_operand.vmem [shape: f32[16,4,128], index: 0, kind: input, shape index: {}]
  %s1 = inlined_call_operand.vmem [shape: f32[16,128], index: 1, kind: output, shape index: {}]
  %s2 = sld [smem:[#allocation0]]
  $region14: #{resnet_dilated_forward.29} parent=0
    _
  %s4 = ssub.s32 1, %s2
  %s5 = scalar_select 0, %s4, %s2
  // Predicated region
  $region2: #{resnet_dilated_forward.29} parent=0 // pred_check
    _
  $region3: #{resnet_dilated_forward.29} parent=0 // pred_check_branch
    %7 = sbr.rel (0) target = $region5
  $region4: #{resnet_dilated_forward.29} parent=0 // pred_region
    _
  $region5: #{resnet_dilated_forward.29} parent=0 // pred_fallthru
    _
  %v8 = vld [vmem:[%s0] sm:$0x1]
  %v9 = vld [vmem:[%s0 + $0x4] sm:$0x1]
  %v10 = vld [vmem:[%s0 + $0x8] sm:$0x1]
  %v11 = vld [vmem:[%s0 + $0xc] sm:$0x1]
  %v12 = vld [vmem:[%s0 + $0x10] sm:$0x1]
  %v13 = vld [vmem:[%s0 + $0x14] sm:$0x1]
  %v14 = vld [vmem:[%s0 + $0x18] sm:$0x1]
  %v15 = vld [vmem:[%s0 + $0x1c] sm:$0x1]
  %v16 = vld [vmem:[%s0 + $0x20] sm:$0x1]
  %v17 = vld [vmem:[%s0 + $0x24] sm:$0x1]
  %v18 = vld [vmem:[%s0 + $0x28] sm:$0x1]
  %v19 = vld [vmem:[%s0 + $0x2c] sm:$0x1]
  %v20 = vld [vmem:[%s0 + $0x30] sm:$0x1]
  %v21 = vld [vmem:[%s0 + $0x34] sm:$0x1]
  %v22 = vld [vmem:[%s0 + $0x38] sm:$0x1]
  %v23 = vld [vmem:[%s0 + $0x3c] sm:$0x1]
  %v24 = vld [vmem:[%s0 + $0x1] sm:$0x1]
  %v25 = vld [vmem:[%s0 + $0x5] sm:$0x1]
  %v26 = vld [vmem:[%s0 + $0x9] sm:$0x1]
  %v27 = vld [vmem:[%s0 + $0xd] sm:$0x1]
  %v28 = vld [vmem:[%s0 + $0x11] sm:$0x1]
  %v29 = vld [vmem:[%s0 + $0x15] sm:$0x1]
  %v30 = vld [vmem:[%s0 + $0x19] sm:$0x1]
  %v31 = vld [vmem:[%s0 + $0x1d] sm:$0x1]
  %v32 = vld [vmem:[%s0 + $0x21] sm:$0x1]
  %v33 = vld [vmem:[%s0 + $0x25] sm:$0x1]
  %v34 = vld [vmem:[%s0 + $0x29] sm:$0x1]
  %v35 = vld [vmem:[%s0 + $0x2d] sm:$0x1]
  %v36 = vld [vmem:[%s0 + $0x31] sm:$0x1]
  %v37 = vld [vmem:[%s0 + $0x35] sm:$0x1]
  %v38 = vld [vmem:[%s0 + $0x39] sm:$0x1]
  %v39 = vld [vmem:[%s0 + $0x3d] sm:$0x1]
  %v40 = vmax.f32 %v8, %v24
  %v41 = vmax.f32 %v9, %v25
  %v42 = vmax.f32 %v10, %v26
  %v43 = vmax.f32 %v11, %v27
  %v44 = vmax.f32 %v12, %v28
  %v45 = vmax.f32 %v13, %v29
  %v46 = vmax.f32 %v14, %v30
  %v47 = vmax.f32 %v15, %v31
  %v48 = vmax.f32 %v16, %v32
  %v49 = vmax.f32 %v17, %v33
  %v50 = vmax.f32 %v18, %v34
  %v51 = vmax.f32 %v19, %v35
  %v52 = vmax.f32 %v20, %v36
  %v53 = vmax.f32 %v21, %v37
  %v54 = vmax.f32 %v22, %v38
  %v55 = vmax.f32 %v23, %v39
  %v56 = vld [vmem:[%s0 + $0x2] sm:$0x1]
  %v57 = vld [vmem:[%s0 + $0x6] sm:$0x1]
  %v58 = vld [vmem:[%s0 + $0xa] sm:$0x1]
  %v59 = vld [vmem:[%s0 + $0xe] sm:$0x1]
  %v60 = vld [vmem:[%s0 + $0x12] sm:$0x1]
  %v61 = vld [vmem:[%s0 + $0x16] sm:$0x1]
  %v62 = vld [vmem:[%s0 + $0x1a] sm:$0x1]
  %v63 = vld [vmem:[%s0 + $0x1e] sm:$0x1]
  %v64 = vld [vmem:[%s0 + $0x22] sm:$0x1]
  %v65 = vld [vmem:[%s0 + $0x26] sm:$0x1]
  %v66 = vld [vmem:[%s0 + $0x2a] sm:$0x1]
  %v67 = vld [vmem:[%s0 + $0x2e] sm:$0x1]
  %v68 = vld [vmem:[%s0 + $0x32] sm:$0x1]
  %v69 = vld [vmem:[%s0 + $0x36] sm:$0x1]
  %v70 = vld [vmem:[%s0 + $0x3a] sm:$0x1]
  %v71 = vld [vmem:[%s0 + $0x3e] sm:$0x1]
  %v72 = vmax.f32 %v40, %v56
  %v73 = vmax.f32 %v41, %v57
  %v74 = vmax.f32 %v42, %v58
  %v75 = vmax.f32 %v43, %v59
  %v76 = vmax.f32 %v44, %v60
  %v77 = vmax.f32 %v45, %v61
  %v78 = vmax.f32 %v46, %v62
  %v79 = vmax.f32 %v47, %v63
  %v80 = vmax.f32 %v48, %v64
  %v81 = vmax.f32 %v49, %v65
  %v82 = vmax.f32 %v50, %v66
  %v83 = vmax.f32 %v51, %v67
  %v84 = vmax.f32 %v52, %v68
  %v85 = vmax.f32 %v53, %v69
  %v86 = vmax.f32 %v54, %v70
  %v87 = vmax.f32 %v55, %v71
  %v88 = vld [vmem:[%s0 + $0x3] sm:$0x1]
  %v89 = vld [vmem:[%s0 + $0x7] sm:$0x1]
  %v90 = vld [vmem:[%s0 + $0xb] sm:$0x1]
  %v91 = vld [vmem:[%s0 + $0xf] sm:$0x1]
  %v92 = vld [vmem:[%s0 + $0x13] sm:$0x1]
  %v93 = vld [vmem:[%s0 + $0x17] sm:$0x1]
  %v94 = vld [vmem:[%s0 + $0x1b] sm:$0x1]
  %v95 = vld [vmem:[%s0 + $0x1f] sm:$0x1]
  %v96 = vld [vmem:[%s0 + $0x23] sm:$0x1]
  %v97 = vld [vmem:[%s0 + $0x27] sm:$0x1]
  %v98 = vld [vmem:[%s0 + $0x2b] sm:$0x1]
  %v99 = vld [vmem:[%s0 + $0x2f] sm:$0x1]
  %v100 = vld [vmem:[%s0 + $0x33] sm:$0x1]
  %v101 = vld [vmem:[%s0 + $0x37] sm:$0x1]
  %v102 = vld [vmem:[%s0 + $0x3b] sm:$0x1]
  %v103 = vld [vmem:[%s0 + $0x3f] sm:$0x1]
  %v104 = vmax.f32 %v72, %v88
  %v105 = vmax.f32 %v73, %v89
  %v106 = vmax.f32 %v74, %v90
  %v107 = vmax.f32 %v75, %v91
  %v108 = vmax.f32 %v76, %v92
  %v109 = vmax.f32 %v77, %v93
  %v110 = vmax.f32 %v78, %v94
  %v111 = vmax.f32 %v79, %v95
  %v112 = vmax.f32 %v80, %v96
  %v113 = vmax.f32 %v81, %v97
  %v114 = vmax.f32 %v82, %v98
  %v115 = vmax.f32 %v83, %v99
  %v116 = vmax.f32 %v84, %v100
  %v117 = vmax.f32 %v85, %v101
  %v118 = vmax.f32 %v86, %v102
  %v119 = vmax.f32 %v87, %v103
  %v136 = vrot.slane %v105, 7
  %vm137 = vcmask 1041409
  %v138 = vsel %vm137, %v136, %v104
  %v139 = vrot.slane %v106, 6
  %vm140 = vcmask 1042434
  %v141 = vsel %vm140, %v139, %v138
  %v142 = vrot.slane %v107, 5
  %vm143 = vcmask 1043459
  %v144 = vsel %vm143, %v142, %v141
  %v145 = vrot.slane %v108, 4
  %vm146 = vcmask 1044484
  %v147 = vsel %vm146, %v145, %v144
  %v148 = vrot.slane %v109, 3
  %vm149 = vcmask 1045509
  %v150 = vsel %vm149, %v148, %v147
  %v151 = vrot.slane %v110, 2
  %vm152 = vcmask 1046534
  %v153 = vsel %vm152, %v151, %v150
  %v154 = vrot.slane %v111, 1
  %vm155 = vcmask 1047559
  %v156 = vsel %vm155, %v154, %v153
  %v157 = vrot.slane %v113, 7
  %v158 = vsel %vm137, %v157, %v112
  %v159 = vrot.slane %v114, 6
  %v160 = vsel %vm140, %v159, %v158
  %v161 = vrot.slane %v115, 5
  %v162 = vsel %vm143, %v161, %v160
  %v163 = vrot.slane %v116, 4
  %v164 = vsel %vm146, %v163, %v162
  %v165 = vrot.slane %v117, 3
  %v166 = vsel %vm149, %v165, %v164
  %v167 = vrot.slane %v118, 2
  %v168 = vsel %vm152, %v167, %v166
  %v169 = vrot.slane %v119, 1
  %v170 = vsel %vm155, %v169, %v168
  %173 = vst [vmem:[%s1] sm:$0xff] %v156
  %174 = vst [vmem:[%s1 + $0x8] sm:$0xff] %v170
  // Predicated region
  $region6: #{resnet_dilated_forward.29} parent=0 // pred_check
    _
  $region7: #{resnet_dilated_forward.29} parent=0 // pred_check_branch
    %176 = sbr.rel (0) target = $region9
  $region8: #{resnet_dilated_forward.29} parent=0 // pred_region
    _
  $region9: #{resnet_dilated_forward.29} parent=0 // pred_fallthru
    _
  // Predicated region
  $region10: #{resnet_dilated_forward.29} parent=0 // pred_check
    _
  $region11: #{resnet_dilated_forward.29} parent=0 // pred_check_branch
    %178 = sbr.rel (0) target = $region13
  $region12: #{resnet_dilated_forward.29} parent=0 // pred_region
    _
  $region13: #{resnet_dilated_forward.29} parent=0 // pred_fallthru
    _

// kernel: resnet_dilated_forward.27
$region0: #{resnet_dilated_forward.27}
  #allocation0 [shape = 'u32[]', space=smem, size = 0x4, offset = 0x4, fixed_abs, tag = 'smem constant byte address 0x4 - core index']
  #allocation1 [shape = 'u32[72,128]{1,0:T(1,128)}', space=vmem, size = 0x9000, scoped, tag = 'internal scratch']
  %s0 = inlined_call_operand.vmem [shape: bf16[16,640], index: 0, kind: input, shape index: {}]
  %s1 = inlined_call_operand.vmem [shape: bf16[640,128], index: 1, kind: input, shape index: {}]
  %s2 = inlined_call_operand.vmem [shape: f32[1,128], index: 2, kind: input, shape index: {}]
  %s3 = inlined_call_operand.vmem [shape: f32[16,128], index: 3, kind: input, shape index: {}]
  %s4 = inlined_call_operand.vmem [shape: f32[16,128], index: 4, kind: output, shape index: {}]
  %s5 = sld [smem:[#allocation0]]
  $region26: #{resnet_dilated_forward.27} parent=0
    _
  %s7 = ssub.s32 1, %s5
  %s8 = scalar_select 0, %s7, %s5
  // Predicated region
  $region2: #{resnet_dilated_forward.27} parent=0 // pred_check
    _
  $region3: #{resnet_dilated_forward.27} parent=0 // pred_check_branch
    %10 = sbr.rel (0) target = $region5
  $region4: #{resnet_dilated_forward.27} parent=0 // pred_region
    _
  $region5: #{resnet_dilated_forward.27} parent=0 // pred_fallthru
    _
  // Predicated region
  $region6: #{resnet_dilated_forward.27} parent=0 // pred_check
    _
  $region7: #{resnet_dilated_forward.27} parent=0 // pred_check_branch
    %12 = sbr.rel (0) target = $region9
  $region8: #{resnet_dilated_forward.27} parent=0 // pred_region
    _
  $region9: #{resnet_dilated_forward.27} parent=0 // pred_fallthru
    _
  // Predicated region
  $region10: #{resnet_dilated_forward.27} parent=0 // pred_check
    _
  $region11: #{resnet_dilated_forward.27} parent=0 // pred_check_branch
    %14 = sbr.rel (0) target = $region13
  $region12: #{resnet_dilated_forward.27} parent=0 // pred_region
    _
  $region13: #{resnet_dilated_forward.27} parent=0 // pred_fallthru
    _
  // Predicated region
  $region14: #{resnet_dilated_forward.27} parent=0 // pred_check
    _
  $region15: #{resnet_dilated_forward.27} parent=0 // pred_check_branch
    %16 = sbr.rel (0) target = $region17
  $region16: #{resnet_dilated_forward.27} parent=0 // pred_region
    _
  $region17: #{resnet_dilated_forward.27} parent=0 // pred_fallthru
    _
  %v17 = vld [vmem:[%s0] sm:$0xff]
  %v18 = vld [vmem:[%s0 + $0x8] sm:$0xff]
  %v19 = vld [vmem:[%s0 + $0x10] sm:$0xf]
  %v20 = vld [vmem:[%s0 + $0x14] sm:$0xff]
  %v21 = vld [vmem:[%s0 + $0x1c] sm:$0xff]
  %v22 = vld [vmem:[%s0 + $0x24] sm:$0xf]
  %v23 = vld [vmem:[%s1] sm:$0xf]
  %v24 = vld [vmem:[%s1 + $0x4] sm:$0xf]
  %v25 = vld [vmem:[%s1 + $0x8] sm:$0xf]
  %v26 = vld [vmem:[%s1 + $0xc] sm:$0xf]
  %v27 = vld [vmem:[%s1 + $0x10] sm:$0xf]
  %v28 = vld [vmem:[%s1 + $0x14] sm:$0xf]
  %v29 = vld [vmem:[%s1 + $0x18] sm:$0xf]
  %v30 = vld [vmem:[%s1 + $0x1c] sm:$0xf]
  %v31 = vld [vmem:[%s1 + $0x20] sm:$0xf]
  %v32 = vld [vmem:[%s1 + $0x24] sm:$0xf]
  %v33 = vld [vmem:[%s1 + $0x28] sm:$0xf]
  %v34 = vld [vmem:[%s1 + $0x2c] sm:$0xf]
  %v35 = vld [vmem:[%s1 + $0x30] sm:$0xf]
  %v36 = vld [vmem:[%s1 + $0x34] sm:$0xf]
  %v37 = vld [vmem:[%s1 + $0x38] sm:$0xf]
  %v38 = vld [vmem:[%s1 + $0x3c] sm:$0xf]
  %v39 = vld [vmem:[%s1 + $0x40] sm:$0xf]
  %v40 = vld [vmem:[%s1 + $0x44] sm:$0xf]
  %v41 = vld [vmem:[%s1 + $0x48] sm:$0xf]
  %v42 = vld [vmem:[%s1 + $0x4c] sm:$0xf]
  %v43 = vld [vmem:[%s1 + $0x50] sm:$0xf]
  %v44 = vld [vmem:[%s1 + $0x54] sm:$0xf]
  %v45 = vld [vmem:[%s1 + $0x58] sm:$0xf]
  %v46 = vld [vmem:[%s1 + $0x5c] sm:$0xf]
  %v47 = vld [vmem:[%s1 + $0x60] sm:$0xf]
  %v48 = vld [vmem:[%s1 + $0x64] sm:$0xf]
  %v49 = vld [vmem:[%s1 + $0x68] sm:$0xf]
  %v50 = vld [vmem:[%s1 + $0x6c] sm:$0xf]
  %v51 = vld [vmem:[%s1 + $0x70] sm:$0xf]
  %v52 = vld [vmem:[%s1 + $0x74] sm:$0xf]
  %v53 = vld [vmem:[%s1 + $0x78] sm:$0xf]
  %v54 = vld [vmem:[%s1 + $0x7c] sm:$0xf]
  %v55 = vld [vmem:[%s1 + $0x80] sm:$0xf]
  %v56 = vld [vmem:[%s1 + $0x84] sm:$0xf]
  %v57 = vld [vmem:[%s1 + $0x88] sm:$0xf]
  %v58 = vld [vmem:[%s1 + $0x8c] sm:$0xf]
  %v59 = vld [vmem:[%s1 + $0x90] sm:$0xf]
  %v60 = vld [vmem:[%s1 + $0x94] sm:$0xf]
  %v61 = vld [vmem:[%s1 + $0x98] sm:$0xf]
  %v62 = vld [vmem:[%s1 + $0x9c] sm:$0xf]
  %v63 = vld [vmem:[%s1 + $0xa0] sm:$0xf]
  %v64 = vld [vmem:[%s1 + $0xa4] sm:$0xf]
  %v65 = vld [vmem:[%s1 + $0xa8] sm:$0xf]
  %v66 = vld [vmem:[%s1 + $0xac] sm:$0xf]
  %v67 = vld [vmem:[%s1 + $0xb0] sm:$0xf]
  %v68 = vld [vmem:[%s1 + $0xb4] sm:$0xf]
  %v69 = vld [vmem:[%s1 + $0xb8] sm:$0xf]
  %v70 = vld [vmem:[%s1 + $0xbc] sm:$0xf]
  %v71 = vld [vmem:[%s1 + $0xc0] sm:$0xf]
  %v72 = vld [vmem:[%s1 + $0xc4] sm:$0xf]
  %v73 = vld [vmem:[%s1 + $0xc8] sm:$0xf]
  %v74 = vld [vmem:[%s1 + $0xcc] sm:$0xf]
  %v75 = vld [vmem:[%s1 + $0xd0] sm:$0xf]
  %v76 = vld [vmem:[%s1 + $0xd4] sm:$0xf]
  %v77 = vld [vmem:[%s1 + $0xd8] sm:$0xf]
  %v78 = vld [vmem:[%s1 + $0xdc] sm:$0xf]
  %v79 = vld [vmem:[%s1 + $0xe0] sm:$0xf]
  %v80 = vld [vmem:[%s1 + $0xe4] sm:$0xf]
  %v81 = vld [vmem:[%s1 + $0xe8] sm:$0xf]
  %v82 = vld [vmem:[%s1 + $0xec] sm:$0xf]
  %v83 = vld [vmem:[%s1 + $0xf0] sm:$0xf]
  %v84 = vld [vmem:[%s1 + $0xf4] sm:$0xf]
  %v85 = vld [vmem:[%s1 + $0xf8] sm:$0xf]
  %v86 = vld [vmem:[%s1 + $0xfc] sm:$0xf]
  %v87 = vld [vmem:[%s1 + $0x100] sm:$0xf]
  %v88 = vld [vmem:[%s1 + $0x104] sm:$0xf]
  %v89 = vld [vmem:[%s1 + $0x108] sm:$0xf]
  %v90 = vld [vmem:[%s1 + $0x10c] sm:$0xf]
  %v91 = vld [vmem:[%s1 + $0x110] sm:$0xf]
  %v92 = vld [vmem:[%s1 + $0x114] sm:$0xf]
  %v93 = vld [vmem:[%s1 + $0x118] sm:$0xf]
  %v94 = vld [vmem:[%s1 + $0x11c] sm:$0xf]
  %v95 = vld [vmem:[%s1 + $0x120] sm:$0xf]
  %v96 = vld [vmem:[%s1 + $0x124] sm:$0xf]
  %v97 = vld [vmem:[%s1 + $0x128] sm:$0xf]
  %v98 = vld [vmem:[%s1 + $0x12c] sm:$0xf]
  %v99 = vld [vmem:[%s1 + $0x130] sm:$0xf]
  %v100 = vld [vmem:[%s1 + $0x134] sm:$0xf]
  %v101 = vld [vmem:[%s1 + $0x138] sm:$0xf]
  %v102 = vld [vmem:[%s1 + $0x13c] sm:$0xf]
  %v103 = vld [vmem:[%s2] sm:$0x1]
  %v105 = vperm.slane %v103, 0
  %v113 = vunpack.c.l.b16 %v17
  %v114 = vunpack.c.h.b16 %v17
  %v115 = vunpack.c.l.b16 %v18
  %v116 = vunpack.c.h.b16 %v18
  %v117 = vunpack.c.l.b16 %v19
  %v118 = vunpack.c.l.b16 %v20
  %v119 = vunpack.c.h.b16 %v20
  %v120 = vunpack.c.l.b16 %v21
  %v121 = vunpack.c.h.b16 %v21
  %v122 = vunpack.c.l.b16 %v22
  %v123 = vpack.c.b16 %v118, %v113
  %v124 = vpack.c.b16 %v119, %v114
  %v125 = vpack.c.b16 %v120, %v115
  %v126 = vpack.c.b16 %v121, %v116
  %v127 = vpack.c.b16 %v122, %v117
  %v213 = vunpack.c.l.b16 %v23
  %v214 = vunpack.c.l.b16 %v24
  %v215 = vunpack.c.l.b16 %v25
  %v216 = vunpack.c.l.b16 %v26
  %v217 = vunpack.c.l.b16 %v27
  %v218 = vunpack.c.l.b16 %v28
  %v219 = vunpack.c.l.b16 %v29
  %v220 = vunpack.c.l.b16 %v30
  %v221 = vunpack.c.l.b16 %v31
  %v222 = vunpack.c.l.b16 %v32
  %v223 = vunpack.c.l.b16 %v33
  %v224 = vunpack.c.l.b16 %v34
  %v225 = vunpack.c.l.b16 %v35
  %v226 = vunpack.c.l.b16 %v36
  %v227 = vunpack.c.l.b16 %v37
  %v228 = vunpack.c.l.b16 %v38
  %v229 = vunpack.c.l.b16 %v39
  %v230 = vunpack.c.l.b16 %v40
  %v231 = vunpack.c.l.b16 %v41
  %v232 = vunpack.c.l.b16 %v42
  %v233 = vunpack.c.l.b16 %v43
  %v234 = vunpack.c.l.b16 %v44
  %v235 = vunpack.c.l.b16 %v45
  %v236 = vunpack.c.l.b16 %v46
  %v237 = vunpack.c.l.b16 %v47
  %v238 = vunpack.c.l.b16 %v48
  %v239 = vunpack.c.l.b16 %v49
  %v240 = vunpack.c.l.b16 %v50
  %v241 = vunpack.c.l.b16 %v51
  %v242 = vunpack.c.l.b16 %v52
  %v243 = vunpack.c.l.b16 %v53
  %v244 = vunpack.c.l.b16 %v54
  %v245 = vunpack.c.l.b16 %v55
  %v246 = vunpack.c.l.b16 %v56
  %v247 = vunpack.c.l.b16 %v57
  %v248 = vunpack.c.l.b16 %v58
  %v249 = vunpack.c.l.b16 %v59
  %v250 = vunpack.c.l.b16 %v60
  %v251 = vunpack.c.l.b16 %v61
  %v252 = vunpack.c.l.b16 %v62
  %v253 = vunpack.c.l.b16 %v63
  %v254 = vunpack.c.l.b16 %v64
  %v255 = vunpack.c.l.b16 %v65
  %v256 = vunpack.c.l.b16 %v66
  %v257 = vunpack.c.l.b16 %v67
  %v258 = vunpack.c.l.b16 %v68
  %v259 = vunpack.c.l.b16 %v69
  %v260 = vunpack.c.l.b16 %v70
  %v261 = vunpack.c.l.b16 %v71
  %v262 = vunpack.c.l.b16 %v72
  %v263 = vunpack.c.l.b16 %v73
  %v264 = vunpack.c.l.b16 %v74
  %v265 = vunpack.c.l.b16 %v75
  %v266 = vunpack.c.l.b16 %v76
  %v267 = vunpack.c.l.b16 %v77
  %v268 = vunpack.c.l.b16 %v78
  %v269 = vunpack.c.l.b16 %v79
  %v270 = vunpack.c.l.b16 %v80
  %v271 = vunpack.c.l.b16 %v81
  %v272 = vunpack.c.l.b16 %v82
  %v273 = vunpack.c.l.b16 %v83
  %v274 = vunpack.c.l.b16 %v84
  %v275 = vunpack.c.l.b16 %v85
  %v276 = vunpack.c.l.b16 %v86
  %v277 = vunpack.c.l.b16 %v87
  %v278 = vunpack.c.l.b16 %v88
  %v279 = vunpack.c.l.b16 %v89
  %v280 = vunpack.c.l.b16 %v90
  %v281 = vunpack.c.l.b16 %v91
  %v282 = vunpack.c.l.b16 %v92
  %v283 = vunpack.c.l.b16 %v93
  %v284 = vunpack.c.l.b16 %v94
  %v285 = vunpack.c.l.b16 %v95
  %v286 = vunpack.c.l.b16 %v96
  %v287 = vunpack.c.l.b16 %v97
  %v288 = vunpack.c.l.b16 %v98
  %v289 = vunpack.c.l.b16 %v99
  %v290 = vunpack.c.l.b16 %v100
  %v291 = vunpack.c.l.b16 %v101
  %v292 = vunpack.c.l.b16 %v102
  %v293 = vpack.c.b16 %v214, %v213
  %v294 = vpack.c.b16 %v216, %v215
  %v295 = vpack.c.b16 %v218, %v217
  %v296 = vpack.c.b16 %v220, %v219
  %v297 = vpack.c.b16 %v222, %v221
  %v298 = vpack.c.b16 %v224, %v223
  %v299 = vpack.c.b16 %v226, %v225
  %v300 = vpack.c.b16 %v228, %v227
  %v301 = vpack.c.b16 %v230, %v229
  %v302 = vpack.c.b16 %v232, %v231
  %v303 = vpack.c.b16 %v234, %v233
  %v304 = vpack.c.b16 %v236, %v235
  %v305 = vpack.c.b16 %v238, %v237
  %v306 = vpack.c.b16 %v240, %v239
  %v307 = vpack.c.b16 %v242, %v241
  %v308 = vpack.c.b16 %v244, %v243
  %v309 = vpack.c.b16 %v246, %v245
  %v310 = vpack.c.b16 %v248, %v247
  %v311 = vpack.c.b16 %v250, %v249
  %v312 = vpack.c.b16 %v252, %v251
  %v313 = vpack.c.b16 %v254, %v253
  %v314 = vpack.c.b16 %v256, %v255
  %v315 = vpack.c.b16 %v258, %v257
  %v316 = vpack.c.b16 %v260, %v259
  %v317 = vpack.c.b16 %v262, %v261
  %v318 = vpack.c.b16 %v264, %v263
  %v319 = vpack.c.b16 %v266, %v265
  %v320 = vpack.c.b16 %v268, %v267
  %v321 = vpack.c.b16 %v270, %v269
  %v322 = vpack.c.b16 %v272, %v271
  %v323 = vpack.c.b16 %v274, %v273
  %v324 = vpack.c.b16 %v276, %v275
  %v325 = vpack.c.b16 %v278, %v277
  %v326 = vpack.c.b16 %v280, %v279
  %v327 = vpack.c.b16 %v282, %v281
  %v328 = vpack.c.b16 %v284, %v283
  %v329 = vpack.c.b16 %v286, %v285
  %v330 = vpack.c.b16 %v288, %v287
  %v331 = vpack.c.b16 %v290, %v289
  %v332 = vpack.c.b16 %v292, %v291
  %373 = vmatpush.bf16.msra.mxu0 %v300
  %374 = vmatpush.bf16.msra.mxu0 %v299
  %375 = vmatpush.bf16.msra.mxu0 %v298
  %376 = vmatpush.bf16.msra.mxu0 %v297
  %377 = vmatpush.bf16.msra.mxu0 %v296
  %378 = vmatpush.bf16.msra.mxu0 %v295
  %379 = vmatpush.bf16.msra.mxu0 %v294
  %380 = vmatpush.bf16.msra.mxu0 %v293
  %381 = vmatmul.bf16.gmra.mxu0 %v123
  %v382 = vpop.f32.mrf.mxu0
  %v383 = vadd.f32 %v105, %v382
  %v384 = vpop.f32.mrf.mxu0
  %v385 = vadd.f32 %v105, %v384
  %386 = vdwg.mxu0
  %387 = vmatpush.bf16.msra.mxu0 %v308
  %388 = vmatpush.bf16.msra.mxu0 %v307
  %389 = vmatpush.bf16.msra.mxu0 %v306
  %390 = vmatpush.bf16.msra.mxu0 %v305
  %391 = vmatpush.bf16.msra.mxu0 %v304
  %392 = vmatpush.bf16.msra.mxu0 %v303
  %393 = vmatpush.bf16.msra.mxu0 %v302
  %394 = vmatpush.bf16.msra.mxu0 %v301
  %395 = vmatmul.bf16.gmra.mxu0 %v124
  %v396 = vpop.f32.mrf.mxu0
  %v397 = vadd.f32 %v383, %v396
  %v398 = vpop.f32.mrf.mxu0
  %v399 = vadd.f32 %v385, %v398
  %400 = vdwg.mxu0
  %401 = vmatpush.bf16.msra.mxu0 %v316
  %402 = vmatpush.bf16.msra.mxu0 %v315
  %403 = vmatpush.bf16.msra.mxu0 %v314
  %404 = vmatpush.bf16.msra.mxu0 %v313
  %405 = vmatpush.bf16.msra.mxu0 %v312
  %406 = vmatpush.bf16.msra.mxu0 %v311
  %407 = vmatpush.bf16.msra.mxu0 %v310
  %408 = vmatpush.bf16.msra.mxu0 %v309
  %409 = vmatmul.bf16.gmra.mxu0 %v125
  %v410 = vpop.f32.mrf.mxu0
  %v411 = vadd.f32 %v397, %v410
  %v412 = vpop.f32.mrf.mxu0
  %v413 = vadd.f32 %v399, %v412
  %414 = vdwg.mxu0
  %415 = vmatpush.bf16.msra.mxu0 %v324
  %416 = vmatpush.bf16.msra.mxu0 %v323
  %417 = vmatpush.bf16.msra.mxu0 %v322
  %418 = vmatpush.bf16.msra.mxu0 %v321
  %419 = vmatpush.bf16.msra.mxu0 %v320
  %420 = vmatpush.bf16.msra.mxu0 %v319
  %421 = vmatpush.bf16.msra.mxu0 %v318
  %422 = vmatpush.bf16.msra.mxu0 %v317
  %423 = vmatmul.bf16.gmra.mxu0 %v126
  %v424 = vpop.f32.mrf.mxu0
  %v425 = vadd.f32 %v411, %v424
  %v426 = vpop.f32.mrf.mxu0
  %v427 = vadd.f32 %v413, %v426
  %428 = vdwg.mxu0
  %429 = vmatpush.bf16.msra.mxu0 %v332
  %430 = vmatpush.bf16.msra.mxu0 %v331
  %431 = vmatpush.bf16.msra.mxu0 %v330
  %432 = vmatpush.bf16.msra.mxu0 %v329
  %433 = vmatpush.bf16.msra.mxu0 %v328
  %434 = vmatpush.bf16.msra.mxu0 %v327
  %435 = vmatpush.bf16.msra.mxu0 %v326
  %436 = vmatpush.bf16.msra.mxu0 %v325
  %437 = vmatmul.bf16.gmra.mxu0 %v127
  %v438 = vpop.f32.mrf.mxu0
  %v439 = vadd.f32 %v425, %v438
  %v440 = vpop.f32.mrf.mxu0
  %v441 = vadd.f32 %v427, %v440
  %442 = vdwg.mxu0
  %v443 = vld [vmem:[%s3] sm:$0xff]
  %v444 = vld [vmem:[%s3 + $0x8] sm:$0xff]
  %v445 = vadd.f32 %v439, %v443
  %v446 = vadd.f32 %v441, %v444
  %v447 = vmax.f32 %v445, 0.0
  %v448 = vmax.f32 %v446, 0.0
  %449 = vst [vmem:[%s4] sm:$0xff] %v447
  %450 = vst [vmem:[%s4 + $0x8] sm:$0xff] %v448
  // Predicated region
  $region18: #{resnet_dilated_forward.27} parent=0 // pred_check
    _
  $region19: #{resnet_dilated_forward.27} parent=0 // pred_check_branch
    %452 = sbr.rel (0) target = $region21
  $region20: #{resnet_dilated_forward.27} parent=0 // pred_region
    _
  $region21: #{resnet_dilated_forward.27} parent=0 // pred_fallthru
    _
  // Predicated region
  $region22: #{resnet_dilated_forward.27} parent=0 // pred_check
    _
  $region23: #{resnet_dilated_forward.27} parent=0 // pred_check_branch
    %454 = sbr.rel (0) target = $region25
  $region24: #{resnet_dilated_forward.27} parent=0 // pred_region
    _
  $region25: #{resnet_dilated_forward.27} parent=0 // pred_fallthru
    _

// kernel: resnet_dilated_forward.28
$region0: #{resnet_dilated_forward.28}
  #allocation0 [shape = 'u32[]', space=smem, size = 0x4, offset = 0x4, fixed_abs, tag = 'smem constant byte address 0x4 - core index']
  #allocation1 [shape = 'u32[72,128]{1,0:T(1,128)}', space=vmem, size = 0x9000, scoped, tag = 'internal scratch']
  %s0 = inlined_call_operand.vmem [shape: bf16[16,640], index: 0, kind: input, shape index: {}]
  %s1 = inlined_call_operand.vmem [shape: bf16[640,128], index: 1, kind: input, shape index: {}]
  %s2 = inlined_call_operand.vmem [shape: f32[1,128], index: 2, kind: input, shape index: {}]
  %s3 = inlined_call_operand.vmem [shape: f32[16,128], index: 3, kind: output, shape index: {}]
  %s4 = sld [smem:[#allocation0]]
  $region22: #{resnet_dilated_forward.28} parent=0
    _
  %s6 = ssub.s32 1, %s4
  %s7 = scalar_select 0, %s6, %s4
  // Predicated region
  $region2: #{resnet_dilated_forward.28} parent=0 // pred_check
    _
  $region3: #{resnet_dilated_forward.28} parent=0 // pred_check_branch
    %9 = sbr.rel (0) target = $region5
  $region4: #{resnet_dilated_forward.28} parent=0 // pred_region
    _
  $region5: #{resnet_dilated_forward.28} parent=0 // pred_fallthru
    _
  // Predicated region
  $region6: #{resnet_dilated_forward.28} parent=0 // pred_check
    _
  $region7: #{resnet_dilated_forward.28} parent=0 // pred_check_branch
    %11 = sbr.rel (0) target = $region9
  $region8: #{resnet_dilated_forward.28} parent=0 // pred_region
    _
  $region9: #{resnet_dilated_forward.28} parent=0 // pred_fallthru
    _
  // Predicated region
  $region10: #{resnet_dilated_forward.28} parent=0 // pred_check
    _
  $region11: #{resnet_dilated_forward.28} parent=0 // pred_check_branch
    %13 = sbr.rel (0) target = $region13
  $region12: #{resnet_dilated_forward.28} parent=0 // pred_region
    _
  $region13: #{resnet_dilated_forward.28} parent=0 // pred_fallthru
    _
  %v14 = vld [vmem:[%s0] sm:$0xff]
  %v15 = vld [vmem:[%s0 + $0x8] sm:$0xff]
  %v16 = vld [vmem:[%s0 + $0x10] sm:$0xf]
  %v17 = vld [vmem:[%s0 + $0x14] sm:$0xff]
  %v18 = vld [vmem:[%s0 + $0x1c] sm:$0xff]
  %v19 = vld [vmem:[%s0 + $0x24] sm:$0xf]
  %v20 = vld [vmem:[%s1] sm:$0xf]
  %v21 = vld [vmem:[%s1 + $0x4] sm:$0xf]
  %v22 = vld [vmem:[%s1 + $0x8] sm:$0xf]
  %v23 = vld [vmem:[%s1 + $0xc] sm:$0xf]
  %v24 = vld [vmem:[%s1 + $0x10] sm:$0xf]
  %v25 = vld [vmem:[%s1 + $0x14] sm:$0xf]
  %v26 = vld [vmem:[%s1 + $0x18] sm:$0xf]
  %v27 = vld [vmem:[%s1 + $0x1c] sm:$0xf]
  %v28 = vld [vmem:[%s1 + $0x20] sm:$0xf]
  %v29 = vld [vmem:[%s1 + $0x24] sm:$0xf]
  %v30 = vld [vmem:[%s1 + $0x28] sm:$0xf]
  %v31 = vld [vmem:[%s1 + $0x2c] sm:$0xf]
  %v32 = vld [vmem:[%s1 + $0x30] sm:$0xf]
  %v33 = vld [vmem:[%s1 + $0x34] sm:$0xf]
  %v34 = vld [vmem:[%s1 + $0x38] sm:$0xf]
  %v35 = vld [vmem:[%s1 + $0x3c] sm:$0xf]
  %v36 = vld [vmem:[%s1 + $0x40] sm:$0xf]
  %v37 = vld [vmem:[%s1 + $0x44] sm:$0xf]
  %v38 = vld [vmem:[%s1 + $0x48] sm:$0xf]
  %v39 = vld [vmem:[%s1 + $0x4c] sm:$0xf]
  %v40 = vld [vmem:[%s1 + $0x50] sm:$0xf]
  %v41 = vld [vmem:[%s1 + $0x54] sm:$0xf]
  %v42 = vld [vmem:[%s1 + $0x58] sm:$0xf]
  %v43 = vld [vmem:[%s1 + $0x5c] sm:$0xf]
  %v44 = vld [vmem:[%s1 + $0x60] sm:$0xf]
  %v45 = vld [vmem:[%s1 + $0x64] sm:$0xf]
  %v46 = vld [vmem:[%s1 + $0x68] sm:$0xf]
  %v47 = vld [vmem:[%s1 + $0x6c] sm:$0xf]
  %v48 = vld [vmem:[%s1 + $0x70] sm:$0xf]
  %v49 = vld [vmem:[%s1 + $0x74] sm:$0xf]
  %v50 = vld [vmem:[%s1 + $0x78] sm:$0xf]
  %v51 = vld [vmem:[%s1 + $0x7c] sm:$0xf]
  %v52 = vld [vmem:[%s1 + $0x80] sm:$0xf]
  %v53 = vld [vmem:[%s1 + $0x84] sm:$0xf]
  %v54 = vld [vmem:[%s1 + $0x88] sm:$0xf]
  %v55 = vld [vmem:[%s1 + $0x8c] sm:$0xf]
  %v56 = vld [vmem:[%s1 + $0x90] sm:$0xf]
  %v57 = vld [vmem:[%s1 + $0x94] sm:$0xf]
  %v58 = vld [vmem:[%s1 + $0x98] sm:$0xf]
  %v59 = vld [vmem:[%s1 + $0x9c] sm:$0xf]
  %v60 = vld [vmem:[%s1 + $0xa0] sm:$0xf]
  %v61 = vld [vmem:[%s1 + $0xa4] sm:$0xf]
  %v62 = vld [vmem:[%s1 + $0xa8] sm:$0xf]
  %v63 = vld [vmem:[%s1 + $0xac] sm:$0xf]
  %v64 = vld [vmem:[%s1 + $0xb0] sm:$0xf]
  %v65 = vld [vmem:[%s1 + $0xb4] sm:$0xf]
  %v66 = vld [vmem:[%s1 + $0xb8] sm:$0xf]
  %v67 = vld [vmem:[%s1 + $0xbc] sm:$0xf]
  %v68 = vld [vmem:[%s1 + $0xc0] sm:$0xf]
  %v69 = vld [vmem:[%s1 + $0xc4] sm:$0xf]
  %v70 = vld [vmem:[%s1 + $0xc8] sm:$0xf]
  %v71 = vld [vmem:[%s1 + $0xcc] sm:$0xf]
  %v72 = vld [vmem:[%s1 + $0xd0] sm:$0xf]
  %v73 = vld [vmem:[%s1 + $0xd4] sm:$0xf]
  %v74 = vld [vmem:[%s1 + $0xd8] sm:$0xf]
  %v75 = vld [vmem:[%s1 + $0xdc] sm:$0xf]
  %v76 = vld [vmem:[%s1 + $0xe0] sm:$0xf]
  %v77 = vld [vmem:[%s1 + $0xe4] sm:$0xf]
  %v78 = vld [vmem:[%s1 + $0xe8] sm:$0xf]
  %v79 = vld [vmem:[%s1 + $0xec] sm:$0xf]
  %v80 = vld [vmem:[%s1 + $0xf0] sm:$0xf]
  %v81 = vld [vmem:[%s1 + $0xf4] sm:$0xf]
  %v82 = vld [vmem:[%s1 + $0xf8] sm:$0xf]
  %v83 = vld [vmem:[%s1 + $0xfc] sm:$0xf]
  %v84 = vld [vmem:[%s1 + $0x100] sm:$0xf]
  %v85 = vld [vmem:[%s1 + $0x104] sm:$0xf]
  %v86 = vld [vmem:[%s1 + $0x108] sm:$0xf]
  %v87 = vld [vmem:[%s1 + $0x10c] sm:$0xf]
  %v88 = vld [vmem:[%s1 + $0x110] sm:$0xf]
  %v89 = vld [vmem:[%s1 + $0x114] sm:$0xf]
  %v90 = vld [vmem:[%s1 + $0x118] sm:$0xf]
  %v91 = vld [vmem:[%s1 + $0x11c] sm:$0xf]
  %v92 = vld [vmem:[%s1 + $0x120] sm:$0xf]
  %v93 = vld [vmem:[%s1 + $0x124] sm:$0xf]
  %v94 = vld [vmem:[%s1 + $0x128] sm:$0xf]
  %v95 = vld [vmem:[%s1 + $0x12c] sm:$0xf]
  %v96 = vld [vmem:[%s1 + $0x130] sm:$0xf]
  %v97 = vld [vmem:[%s1 + $0x134] sm:$0xf]
  %v98 = vld [vmem:[%s1 + $0x138] sm:$0xf]
  %v99 = vld [vmem:[%s1 + $0x13c] sm:$0xf]
  %v100 = vld [vmem:[%s2] sm:$0x1]
  %v102 = vperm.slane %v100, 0
  %v110 = vunpack.c.l.b16 %v14
  %v111 = vunpack.c.h.b16 %v14
  %v112 = vunpack.c.l.b16 %v15
  %v113 = vunpack.c.h.b16 %v15
  %v114 = vunpack.c.l.b16 %v16
  %v115 = vunpack.c.l.b16 %v17
  %v116 = vunpack.c.h.b16 %v17
  %v117 = vunpack.c.l.b16 %v18
  %v118 = vunpack.c.h.b16 %v18
  %v119 = vunpack.c.l.b16 %v19
  %v120 = vpack.c.b16 %v115, %v110
  %v121 = vpack.c.b16 %v116, %v111
  %v122 = vpack.c.b16 %v117, %v112
  %v123 = vpack.c.b16 %v118, %v113
  %v124 = vpack.c.b16 %v119, %v114
  %v210 = vunpack.c.l.b16 %v20
  %v211 = vunpack.c.l.b16 %v21
  %v212 = vunpack.c.l.b16 %v22
  %v213 = vunpack.c.l.b16 %v23
  %v214 = vunpack.c.l.b16 %v24
  %v215 = vunpack.c.l.b16 %v25
  %v216 = vunpack.c.l.b16 %v26
  %v217 = vunpack.c.l.b16 %v27
  %v218 = vunpack.c.l.b16 %v28
  %v219 = vunpack.c.l.b16 %v29
  %v220 = vunpack.c.l.b16 %v30
  %v221 = vunpack.c.l.b16 %v31
  %v222 = vunpack.c.l.b16 %v32
  %v223 = vunpack.c.l.b16 %v33
  %v224 = vunpack.c.l.b16 %v34
  %v225 = vunpack.c.l.b16 %v35
  %v226 = vunpack.c.l.b16 %v36
  %v227 = vunpack.c.l.b16 %v37
  %v228 = vunpack.c.l.b16 %v38
  %v229 = vunpack.c.l.b16 %v39
  %v230 = vunpack.c.l.b16 %v40
  %v231 = vunpack.c.l.b16 %v41
  %v232 = vunpack.c.l.b16 %v42
  %v233 = vunpack.c.l.b16 %v43
  %v234 = vunpack.c.l.b16 %v44
  %v235 = vunpack.c.l.b16 %v45
  %v236 = vunpack.c.l.b16 %v46
  %v237 = vunpack.c.l.b16 %v47
  %v238 = vunpack.c.l.b16 %v48
  %v239 = vunpack.c.l.b16 %v49
  %v240 = vunpack.c.l.b16 %v50
  %v241 = vunpack.c.l.b16 %v51
  %v242 = vunpack.c.l.b16 %v52
  %v243 = vunpack.c.l.b16 %v53
  %v244 = vunpack.c.l.b16 %v54
  %v245 = vunpack.c.l.b16 %v55
  %v246 = vunpack.c.l.b16 %v56
  %v247 = vunpack.c.l.b16 %v57
  %v248 = vunpack.c.l.b16 %v58
  %v249 = vunpack.c.l.b16 %v59
  %v250 = vunpack.c.l.b16 %v60
  %v251 = vunpack.c.l.b16 %v61
  %v252 = vunpack.c.l.b16 %v62
  %v253 = vunpack.c.l.b16 %v63
  %v254 = vunpack.c.l.b16 %v64
  %v255 = vunpack.c.l.b16 %v65
  %v256 = vunpack.c.l.b16 %v66
  %v257 = vunpack.c.l.b16 %v67
  %v258 = vunpack.c.l.b16 %v68
  %v259 = vunpack.c.l.b16 %v69
  %v260 = vunpack.c.l.b16 %v70
  %v261 = vunpack.c.l.b16 %v71
  %v262 = vunpack.c.l.b16 %v72
  %v263 = vunpack.c.l.b16 %v73
  %v264 = vunpack.c.l.b16 %v74
  %v265 = vunpack.c.l.b16 %v75
  %v266 = vunpack.c.l.b16 %v76
  %v267 = vunpack.c.l.b16 %v77
  %v268 = vunpack.c.l.b16 %v78
  %v269 = vunpack.c.l.b16 %v79
  %v270 = vunpack.c.l.b16 %v80
  %v271 = vunpack.c.l.b16 %v81
  %v272 = vunpack.c.l.b16 %v82
  %v273 = vunpack.c.l.b16 %v83
  %v274 = vunpack.c.l.b16 %v84
  %v275 = vunpack.c.l.b16 %v85
  %v276 = vunpack.c.l.b16 %v86
  %v277 = vunpack.c.l.b16 %v87
  %v278 = vunpack.c.l.b16 %v88
  %v279 = vunpack.c.l.b16 %v89
  %v280 = vunpack.c.l.b16 %v90
  %v281 = vunpack.c.l.b16 %v91
  %v282 = vunpack.c.l.b16 %v92
  %v283 = vunpack.c.l.b16 %v93
  %v284 = vunpack.c.l.b16 %v94
  %v285 = vunpack.c.l.b16 %v95
  %v286 = vunpack.c.l.b16 %v96
  %v287 = vunpack.c.l.b16 %v97
  %v288 = vunpack.c.l.b16 %v98
  %v289 = vunpack.c.l.b16 %v99
  %v290 = vpack.c.b16 %v211, %v210
  %v291 = vpack.c.b16 %v213, %v212
  %v292 = vpack.c.b16 %v215, %v214
  %v293 = vpack.c.b16 %v217, %v216
  %v294 = vpack.c.b16 %v219, %v218
  %v295 = vpack.c.b16 %v221, %v220
  %v296 = vpack.c.b16 %v223, %v222
  %v297 = vpack.c.b16 %v225, %v224
  %v298 = vpack.c.b16 %v227, %v226
  %v299 = vpack.c.b16 %v229, %v228
  %v300 = vpack.c.b16 %v231, %v230
  %v301 = vpack.c.b16 %v233, %v232
  %v302 = vpack.c.b16 %v235, %v234
  %v303 = vpack.c.b16 %v237, %v236
  %v304 = vpack.c.b16 %v239, %v238
  %v305 = vpack.c.b16 %v241, %v240
  %v306 = vpack.c.b16 %v243, %v242
  %v307 = vpack.c.b16 %v245, %v244
  %v308 = vpack.c.b16 %v247, %v246
  %v309 = vpack.c.b16 %v249, %v248
  %v310 = vpack.c.b16 %v251, %v250
  %v311 = vpack.c.b16 %v253, %v252
  %v312 = vpack.c.b16 %v255, %v254
  %v313 = vpack.c.b16 %v257, %v256
  %v314 = vpack.c.b16 %v259, %v258
  %v315 = vpack.c.b16 %v261, %v260
  %v316 = vpack.c.b16 %v263, %v262
  %v317 = vpack.c.b16 %v265, %v264
  %v318 = vpack.c.b16 %v267, %v266
  %v319 = vpack.c.b16 %v269, %v268
  %v320 = vpack.c.b16 %v271, %v270
  %v321 = vpack.c.b16 %v273, %v272
  %v322 = vpack.c.b16 %v275, %v274
  %v323 = vpack.c.b16 %v277, %v276
  %v324 = vpack.c.b16 %v279, %v278
  %v325 = vpack.c.b16 %v281, %v280
  %v326 = vpack.c.b16 %v283, %v282
  %v327 = vpack.c.b16 %v285, %v284
  %v328 = vpack.c.b16 %v287, %v286
  %v329 = vpack.c.b16 %v289, %v288
  %370 = vmatpush.bf16.msra.mxu0 %v297
  %371 = vmatpush.bf16.msra.mxu0 %v296
  %372 = vmatpush.bf16.msra.mxu0 %v295
  %373 = vmatpush.bf16.msra.mxu0 %v294
  %374 = vmatpush.bf16.msra.mxu0 %v293
  %375 = vmatpush.bf16.msra.mxu0 %v292
  %376 = vmatpush.bf16.msra.mxu0 %v291
  %377 = vmatpush.bf16.msra.mxu0 %v290
  %378 = vmatmul.bf16.gmra.mxu0 %v120
  %v379 = vpop.f32.mrf.mxu0
  %v380 = vadd.f32 %v102, %v379
  %v381 = vpop.f32.mrf.mxu0
  %v382 = vadd.f32 %v102, %v381
  %383 = vdwg.mxu0
  %384 = vmatpush.bf16.msra.mxu0 %v305
  %385 = vmatpush.bf16.msra.mxu0 %v304
  %386 = vmatpush.bf16.msra.mxu0 %v303
  %387 = vmatpush.bf16.msra.mxu0 %v302
  %388 = vmatpush.bf16.msra.mxu0 %v301
  %389 = vmatpush.bf16.msra.mxu0 %v300
  %390 = vmatpush.bf16.msra.mxu0 %v299
  %391 = vmatpush.bf16.msra.mxu0 %v298
  %392 = vmatmul.bf16.gmra.mxu0 %v121
  %v393 = vpop.f32.mrf.mxu0
  %v394 = vadd.f32 %v380, %v393
  %v395 = vpop.f32.mrf.mxu0
  %v396 = vadd.f32 %v382, %v395
  %397 = vdwg.mxu0
  %398 = vmatpush.bf16.msra.mxu0 %v313
  %399 = vmatpush.bf16.msra.mxu0 %v312
  %400 = vmatpush.bf16.msra.mxu0 %v311
  %401 = vmatpush.bf16.msra.mxu0 %v310
  %402 = vmatpush.bf16.msra.mxu0 %v309
  %403 = vmatpush.bf16.msra.mxu0 %v308
  %404 = vmatpush.bf16.msra.mxu0 %v307
  %405 = vmatpush.bf16.msra.mxu0 %v306
  %406 = vmatmul.bf16.gmra.mxu0 %v122
  %v407 = vpop.f32.mrf.mxu0
  %v408 = vadd.f32 %v394, %v407
  %v409 = vpop.f32.mrf.mxu0
  %v410 = vadd.f32 %v396, %v409
  %411 = vdwg.mxu0
  %412 = vmatpush.bf16.msra.mxu0 %v321
  %413 = vmatpush.bf16.msra.mxu0 %v320
  %414 = vmatpush.bf16.msra.mxu0 %v319
  %415 = vmatpush.bf16.msra.mxu0 %v318
  %416 = vmatpush.bf16.msra.mxu0 %v317
  %417 = vmatpush.bf16.msra.mxu0 %v316
  %418 = vmatpush.bf16.msra.mxu0 %v315
  %419 = vmatpush.bf16.msra.mxu0 %v314
  %420 = vmatmul.bf16.gmra.mxu0 %v123
  %v421 = vpop.f32.mrf.mxu0
  %v422 = vadd.f32 %v408, %v421
  %v423 = vpop.f32.mrf.mxu0
  %v424 = vadd.f32 %v410, %v423
  %425 = vdwg.mxu0
  %426 = vmatpush.bf16.msra.mxu0 %v329
  %427 = vmatpush.bf16.msra.mxu0 %v328
  %428 = vmatpush.bf16.msra.mxu0 %v327
  %429 = vmatpush.bf16.msra.mxu0 %v326
  %430 = vmatpush.bf16.msra.mxu0 %v325
  %431 = vmatpush.bf16.msra.mxu0 %v324
  %432 = vmatpush.bf16.msra.mxu0 %v323
  %433 = vmatpush.bf16.msra.mxu0 %v322
  %434 = vmatmul.bf16.gmra.mxu0 %v124
  %v435 = vpop.f32.mrf.mxu0
  %v436 = vadd.f32 %v422, %v435
  %v437 = vpop.f32.mrf.mxu0
  %v438 = vadd.f32 %v424, %v437
  %439 = vdwg.mxu0
  %440 = vst [vmem:[%s3] sm:$0xff] %v436
  %441 = vst [vmem:[%s3 + $0x8] sm:$0xff] %v438
  // Predicated region
  $region14: #{resnet_dilated_forward.28} parent=0 // pred_check
    _
  $region15: #{resnet_dilated_forward.28} parent=0 // pred_check_branch
    %443 = sbr.rel (0) target = $region17
  $region16: #{resnet_dilated_forward.28} parent=0 // pred_region
    _
  $region17: #{resnet_dilated_forward.28} parent=0 // pred_fallthru
    _
  // Predicated region
  $region18: #{resnet_dilated_forward.28} parent=0 // pred_check
    _
  $region19: #{resnet_dilated_forward.28} parent=0 // pred_check_branch
    %445 = sbr.rel (0) target = $region21
  $region20: #{resnet_dilated_forward.28} parent=0 // pred_region
    _
  $region21: #{resnet_dilated_forward.28} parent=0 // pred_fallthru
    _

</llo_original>
